<compile_context>
chip_gen: v7x
topology: tpu7x:2x2x1
jax: 0.10.0
libtpu: 0.0.40
codegen_flags: <defaults>
</compile_context>

<pallas_src>
import math
import functools

import jax
import jax.numpy as jnp
from jax import lax
from jax.experimental import pallas as pl
from jax.experimental.pallas import tpu as pltpu

LN_EPS = 1e-5                       # PyTorch nn.LayerNorm default eps
INV_SQRT2 = 1.0 / math.sqrt(2.0)
_NEG_BIG = -1e30                    # softmax mask value for padded keys


# ----------------------------- small helpers ---------------------------------

def _vmem_limit_bytes():
    """Per-generation scoped-VMEM budget derived from physical capacity."""
    default = 64 * 1024 * 1024
    try:
        cap = getattr(pltpu.get_tpu_info(), "vmem_capacity_bytes", None)
    except Exception:            # emulation / older runtimes
        cap = None
    if not cap:
        return default
    # ~85% of physical: v5e/v6e ~108 MiB of 128, v7x ~54 MiB of 64, capped.
    return int(min(int(cap * 0.85), 112 * 1024 * 1024))


def _pick_batch_tile(batch, target=4):
    """Largest divisor of `batch` <= target; amortizes per-layer weight DMA."""
    for d in range(min(batch, target), 0, -1):
        if batch % d == 0:
            return d
    return 1


def _round_up(x, m):
    return (x + m - 1) // m * m


def _normalize(x):
    """LayerNorm statistics only (affine folded into the following matmul)."""
    mu = jnp.mean(x, axis=-1, keepdims=True)
    xc = x - mu
    var = jnp.mean(xc * xc, axis=-1, keepdims=True)
    return xc * lax.rsqrt(var + LN_EPS)


def _layernorm(x, g, b):
    return _normalize(x) * g + b


def _dot(a, b):
    return jnp.dot(a, b, preferred_element_type=jnp.float32)


# ----------------------------- kernels ---------------------------------------

def embed_kernel(x_ref, w_ref, b_ref, ln2g_ref, ln2b_ref, cls_ref, pos_ref,
                 o_ref):
    # x_ref: (BT, N, patch_dim) block; o_ref: (BT, S_pad, D) block.
    BT, N, _ = x_ref.shape
    S_pad, D = o_ref.shape[1], o_ref.shape[2]
    S = N + 1

    cls_row = cls_ref[...] + pos_ref[0:1, :]           # (1, D), hoisted
    pos_patches = pos_ref[1:S, :]                      # (N, D), hoisted

    # Small static loop: weights are loaded once and reused for all BT rows.
    for bt in range(BT):
        xn = _normalize(x_ref[bt])                     # LN(patch_dim), affine folded in w/b
        y = _dot(xn.astype(jnp.bfloat16), w_ref[...]) + b_ref[...]   # (N, D) f32
        y = _layernorm(y, ln2g_ref[...], ln2b_ref[...])              # LN(dim)
        o_ref[bt, 0:1, :] = cls_row                    # cls token + pos[0]
        o_ref[bt, 1:S, :] = y + pos_patches            # patches + pos[1:]
        if S_pad > S:                                  # zero the padded rows
            o_ref[bt, S:, :] = jnp.zeros((S_pad - S, D), jnp.float32)


def transformer_stack_kernel(x_ref,
                             wqkv_ref, bqkv_ref, wo_ref, bo_ref,
                             w1_ref, b1_ref, w2_ref, b2_ref,
                             fg_ref, fb_ref,
                             o_ref, x_sc,
                             *, heads, dim_head, seq_len, mlp_chunk):
    layer = pl.program_id(1)
    BT, S_pad, D = x_ref.shape
    inner = heads * dim_head

    # Load embedded tokens into the resident residual scratch once per batch tile.
    @pl.when(layer == 0)
    def _():
        x_sc[...] = x_ref[...].reshape(BT * S_pad, D)

    x = x_sc[...]                                      # (BT*S_pad, D) f32 residual

    # ---- Attention (pre-LN; LN affine and 1/sqrt(d) folded into w_qkv/b_qkv) ----
    xn = _normalize(x).astype(jnp.bfloat16)
    qkv = _dot(xn, wqkv_ref[0]) + bqkv_ref[0]          # (BT*S_pad, 3*inner) f32

    def split_heads(t):                                # 'b n (h d) -> (b h) n d'
        t = t.reshape(BT, S_pad, heads, dim_head)
        t = jnp.transpose(t, (0, 2, 1, 3))
        return t.reshape(BT * heads, S_pad, dim_head)

    qh = split_heads(qkv[:, :inner]).astype(jnp.bfloat16)
    kh = split_heads(qkv[:, inner:2 * inner]).astype(jnp.bfloat16)
    vh = split_heads(qkv[:, 2 * inner:]).astype(jnp.bfloat16)

    s = jnp.einsum('hqd,hkd->hqk', qh, kh,
                   preferred_element_type=jnp.float32)              # (BT*H, S_pad, S_pad)
    if S_pad > seq_len:                                # mask padded key columns
        kidx = lax.broadcasted_iota(jnp.int32, s.shape, 2)
        s = jnp.where(kidx < seq_len, s, _NEG_BIG)
    s = s - jnp.max(s, axis=-1, keepdims=True)
    e = jnp.exp(s)
    p = e * pl.reciprocal(jnp.sum(e, axis=-1, keepdims=True), approx=True)
    ctx = jnp.einsum('hqk,hkd->hqd', p.astype(jnp.bfloat16), vh,
                     preferred_element_type=jnp.float32)            # (BT*H, S_pad, d)
    ctx = ctx.reshape(BT, heads, S_pad, dim_head)
    out = jnp.transpose(ctx, (0, 2, 1, 3)).reshape(BT * S_pad, inner)
    x = x + _dot(out.astype(jnp.bfloat16), wo_ref[0]) + bo_ref[0]

    # ---- FeedForward (pre-LN folded into w1/b1), chunked along mlp_dim ----
    xn2 = _normalize(x).astype(jnp.bfloat16)
    mlp_dim = w1_ref.shape[-1]
    b1 = b1_ref[0]                                     # (1, mlp_dim)
    acc = jnp.zeros_like(x)
    for c0 in range(0, mlp_dim, mlp_chunk):
        c1 = min(c0 + mlp_chunk, mlp_dim)
        h = _dot(xn2, w1_ref[0, :, c0:c1]) + b1[:, c0:c1]
        h = 0.5 * h * (1.0 + lax.erf(h * INV_SQRT2))   # exact GELU (PyTorch default)
        acc = acc + _dot(h.astype(jnp.bfloat16), w2_ref[0, c0:c1, :])
    x = x + acc + b2_ref[0]

    x_sc[...] = x

    # Final Transformer LayerNorm folded into the last depth iteration.
    @pl.when(layer == pl.num_programs(1) - 1)
    def _():
        o_ref[...] = _layernorm(x, fg_ref[...], fb_ref[...]).reshape(BT, S_pad, D)


# ------------------------- pallas_call wrappers -------------------------------

def patch_embed(patches, pp, *, seq_pad, batch_tile, vmem_limit):
    B, N, P = patches.shape
    D = pp["w"].shape[1]
    BT = batch_tile
    weights = (pp["w"], pp["b"], pp["ln2_g"], pp["ln2_b"], pp["cls"], pp["pos"])

    def const_spec(arr):
        zeros = (0,) * arr.ndim
        return pl.BlockSpec(arr.shape, lambda b, _z=zeros: _z)

    weight_bytes = sum(int(w.size) * w.dtype.itemsize for w in weights)
    cost = pl.CostEstimate(
        flops=int(2 * B * N * P * D),
        transcendentals=0,
        bytes_accessed=int(patches.size * 4 + B * seq_pad * D * 4 + weight_bytes),
    )

    return pl.pallas_call(
        embed_kernel,
        out_shape=jax.ShapeDtypeStruct((B, seq_pad, D), jnp.float32),
        grid=(B // BT,),
        in_specs=[pl.BlockSpec((BT, N, P), lambda b: (b, 0, 0))]
                 + [const_spec(w) for w in weights],
        out_specs=pl.BlockSpec((BT, seq_pad, D), lambda b: (b, 0, 0)),
        cost_estimate=cost,
        compiler_params=pltpu.CompilerParams(
            dimension_semantics=("parallel",),
            vmem_limit_bytes=vmem_limit),
    )(patches, *weights)


def transformer_stack(x, lw, final_g, final_b, *, heads, dim_head, seq_len,
                      batch_tile, mlp_chunk, vmem_limit):
    B, S_pad, D = x.shape
    depth = lw["w1"].shape[0]
    mlp_dim = lw["w1"].shape[-1]
    inner = heads * dim_head
    BT = batch_tile

    weights = (lw["w_qkv"], lw["b_qkv"], lw["w_o"], lw["b_o"],
               lw["w1"], lw["b1"], lw["w2"], lw["b2"])

    def layer_spec(shape):
        rest = tuple(int(s) for s in shape[1:])
        nd = len(rest)
        return pl.BlockSpec((1,) + rest, lambda b, l, _nd=nd: (l,) + (0,) * _nd)

    def const_spec(arr):
        zeros = (0,) * arr.ndim
        return pl.BlockSpec(arr.shape, lambda b, l, _z=zeros: _z)

    kernel = functools.partial(transformer_stack_kernel, heads=heads,
                               dim_head=dim_head, seq_len=seq_len,
                               mlp_chunk=mlp_chunk)

    per_elem_flops = (2 * S_pad * D * 3 * inner               # fused qkv
                      + 4 * heads * S_pad * S_pad * dim_head  # scores + PV
                      + 2 * S_pad * inner * D                 # output proj
                      + 4 * S_pad * D * mlp_dim)              # feed-forward
    weight_bytes = sum(int(w.size) * w.dtype.itemsize for w in weights)
    cost = pl.CostEstimate(
        flops=int(B * depth * per_elem_flops),
        transcendentals=int(B * depth * (heads * S_pad * S_pad + S_pad * mlp_dim)),
        bytes_accessed=int((B // BT) * weight_bytes + 2 * B * S_pad * D * 4),
    )

    return pl.pallas_call(
        kernel,
        out_shape=jax.ShapeDtypeStruct((B, S_pad, D), jnp.float32),
        grid=(B // BT, depth),
        in_specs=[pl.BlockSpec((BT, S_pad, D), lambda b, l: (b, 0, 0))]
                 + [layer_spec(w.shape) for w in weights]
                 + [const_spec(final_g), const_spec(final_b)],
        out_specs=pl.BlockSpec((BT, S_pad, D), lambda b, l: (b, 0, 0)),
        scratch_shapes=[pltpu.VMEM((BT * S_pad, D), jnp.float32)],
        cost_estimate=cost,
        compiler_params=pltpu.CompilerParams(
            dimension_semantics=("parallel", "arbitrary"),
            vmem_limit_bytes=vmem_limit),
    )(x, *weights, final_g, final_b)


# ----------------------------- forward pass -----------------------------------

def vit_encoder_forward(img, params, *, patch_size, heads, dim_head,
                        batch_tile=None):
    B, C, H, W = img.shape
    p1 = p2 = patch_size
    h, w = H // p1, W // p2
    # einops 'b c (h p1) (w p2) -> b (h w) (p1 p2 c)'  (pure layout glue)
    x = img.reshape(B, C, h, p1, w, p2)
    x = jnp.transpose(x, (0, 2, 4, 3, 5, 1))
    x = x.reshape(B, h * w, p1 * p2 * C)

    S = params["patch"]["pos"].shape[0]          # num_patches + 1
    S_pad = _round_up(S, 8)                      # sublane-align for in-kernel reshapes
    BT = batch_tile if batch_tile is not None else _pick_batch_tile(B)
    vmem_limit = _vmem_limit_bytes()
    mlp_dim = params["layers"]["w1"].shape[-1]
    mlp_chunk = mlp_dim if mlp_dim <= 1024 else 1024

    # Patch embedding + cls token + pos embedding (fused, batch-blocked).
    x = patch_embed(x, params["patch"], seq_pad=S_pad, batch_tile=BT,
                    vmem_limit=vmem_limit)
    # emb_dropout / dropout: p = 0.0 at inference -> identity.

    # All transformer layers + final LayerNorm (fused, batch-blocked).
    x = transformer_stack(x, params["layers"], params["final_g"],
                          params["final_b"], heads=heads, dim_head=dim_head,
                          seq_len=S, batch_tile=BT, mlp_chunk=mlp_chunk,
                          vmem_limit=vmem_limit)
    return x[:, :S, :]                           # drop seq padding


# ----------------------------- parameters -------------------------------------

def init_raw_params(key, *, image_size, patch_size, dim, depth, heads, dim_head,
                    mlp_dim, channels):
    """PyTorch-layout (f32, un-folded) parameters."""
    num_patches = (image_size // patch_size) ** 2
    patch_dim = channels * patch_size * patch_size
    inner = heads * dim_head
    S = num_patches + 1
    ks = jax.random.split(key, 8)

    def w_init(k, shape):
        return jax.random.normal(k, shape, jnp.float32) * 0.02

    return {
        "patch": {
            "ln1_g": jnp.ones((patch_dim,), jnp.float32),
            "ln1_b": jnp.zeros((patch_dim,), jnp.float32),
            "w": w_init(ks[0], (patch_dim, dim)),
            "b": jnp.zeros((dim,), jnp.float32),
            "ln2_g": jnp.ones((dim,), jnp.float32),
            "ln2_b": jnp.zeros((dim,), jnp.float32),
            "cls": jax.random.normal(ks[1], (1, dim), jnp.float32),
            "pos": jax.random.normal(ks[2], (S, dim), jnp.float32),
        },
        "layers": {
            "ln1_g": jnp.ones((depth, dim), jnp.float32),
            "ln1_b": jnp.zeros((depth, dim), jnp.float32),
            "w_qkv": w_init(ks[3], (depth, dim, 3 * inner)),   # to_qkv (bias=False)
            "w_o": w_init(ks[4], (depth, inner, dim)),
            "b_o": jnp.zeros((depth, dim), jnp.float32),
            "ln2_g": jnp.ones((depth, dim), jnp.float32),
            "ln2_b": jnp.zeros((depth, dim), jnp.float32),
            "w1": w_init(ks[5], (depth, dim, mlp_dim)),
            "b1": jnp.zeros((depth, mlp_dim), jnp.float32),
            "w2": w_init(ks[6], (depth, mlp_dim, dim)),
            "b2": jnp.zeros((depth, dim), jnp.float32),
        },
        "final_g": jnp.ones((dim,), jnp.float32),
        "final_b": jnp.zeros((dim,), jnp.float32),
    }


def prepare_params(raw, *, heads, dim_head):
    """Host-side weight prep: fold pre-LN affines into the next matmul, fold the
    attention scale into the Q columns, cast big matmul weights to bf16."""
    inner = heads * dim_head
    scale = dim_head ** -0.5

    p = raw["patch"]
    w = p["ln1_g"][:, None] * p["w"]                       # LN1 gamma -> linear
    b = p["b"] + p["ln1_b"] @ p["w"]                       # LN1 beta  -> bias
    patch = {
        "w": w.astype(jnp.bfloat16),
        "b": b.reshape(1, -1),
        "ln2_g": p["ln2_g"].reshape(1, -1),
        "ln2_b": p["ln2_b"].reshape(1, -1),
        "cls": p["cls"],
        "pos": p["pos"],
    }

    l = raw["layers"]
    wqkv = l["ln1_g"][:, :, None] * l["w_qkv"]                       # (L, D, 3I)
    bqkv = jnp.einsum("ld,ldf->lf", l["ln1_b"], l["w_qkv"])          # (L, 3I)
    col_scale = jnp.concatenate([jnp.full((inner,), scale, jnp.float32),
                                 jnp.ones((2 * inner,), jnp.float32)])
    wqkv = wqkv * col_scale                                          # fold 1/sqrt(d) into Q
    bqkv = bqkv * col_scale
    w1 = l["ln2_g"][:, :, None] * l["w1"]
    b1 = l["b1"] + jnp.einsum("ld,ldm->lm", l["ln2_b"], l["w1"])
    layers = {
        "w_qkv": wqkv.astype(jnp.bfloat16),
        "b_qkv": bqkv[:, None, :],
        "w_o": l["w_o"].astype(jnp.bfloat16),
        "b_o": l["b_o"][:, None, :],
        "w1": w1.astype(jnp.bfloat16),
        "b1": b1[:, None, :],
        "w2": l["w2"].astype(jnp.bfloat16),
        "b2": l["b2"][:, None, :],
    }
    return {"patch": patch, "layers": layers,
            "final_g": raw["final_g"].reshape(1, -1),
            "final_b": raw["final_b"].reshape(1, -1)}


# ----------------------------- demo / smoke test ------------------------------

if __name__ == "__main__":
    cfg = dict(image_size=16, patch_size=4, dim=32, depth=2, heads=4, dim_head=8,
               mlp_dim=64, channels=3)
    key = jax.random.PRNGKey(0)
    k_img, k_par = jax.random.split(key)

    img = jax.random.normal(
        k_img, (2, cfg["channels"], cfg["image_size"], cfg["image_size"]),
        jnp.float32)
    raw = init_raw_params(k_par, **cfg)
    params = prepare_params(raw, heads=cfg["heads"], dim_head=cfg["dim_head"])

    fwd = jax.jit(functools.partial(
        vit_encoder_forward, patch_size=cfg["patch_size"],
        heads=cfg["heads"], dim_head=cfg["dim_head"]))
    out = jax.block_until_ready(fwd(img, params))

    n_tokens = (cfg["image_size"] // cfg["patch_size"]) ** 2 + 1
    assert out.shape == (2, n_tokens, cfg["dim"]), out.shape
    assert bool(jnp.all(jnp.isfinite(out)))
    print("KERNEL_OK")
</pallas_src>

<mosaic_0001>
module attributes {stable_mosaic.version = 11 : i64} {
  func.func @embed_kernel(%arg0: i32, %arg1: memref<2x16x48xf32, #tpu.memory_space<vmem>>, %arg2: memref<48x32xbf16, #tpu.memory_space<vmem>>, %arg3: memref<1x32xf32, #tpu.memory_space<vmem>>, %arg4: memref<1x32xf32, #tpu.memory_space<vmem>>, %arg5: memref<1x32xf32, #tpu.memory_space<vmem>>, %arg6: memref<1x32xf32, #tpu.memory_space<vmem>>, %arg7: memref<17x32xf32, #tpu.memory_space<vmem>>, %arg8: memref<2x24x32xf32, #tpu.memory_space<vmem>>) attributes {dimension_semantics = [#tpu.dimension_semantics<parallel>], iteration_bounds = array<i64: 1>, scalar_prefetch = 0 : i64, scratch_operands = 0 : i64, tpu.core_type = #tpu.core_type<tc>, window_params = [{transform_indices = @transform_0, window_bounds = array<i64: 2, 16, 48>}, {pipeline_mode = #tpu.pipeline_mode<synchronous>, transform_indices = @transform_1, window_bounds = array<i64: 48, 32>}, {pipeline_mode = #tpu.pipeline_mode<synchronous>, transform_indices = @transform_2, window_bounds = array<i64: 1, 32>}, {pipeline_mode = #tpu.pipeline_mode<synchronous>, transform_indices = @transform_3, window_bounds = array<i64: 1, 32>}, {pipeline_mode = #tpu.pipeline_mode<synchronous>, transform_indices = @transform_4, window_bounds = array<i64: 1, 32>}, {pipeline_mode = #tpu.pipeline_mode<synchronous>, transform_indices = @transform_5, window_bounds = array<i64: 1, 32>}, {pipeline_mode = #tpu.pipeline_mode<synchronous>, transform_indices = @transform_6, window_bounds = array<i64: 17, 32>}, {transform_indices = @transform_7, window_bounds = array<i64: 2, 24, 32>}]} {
    %c0 = arith.constant 0 : index
    %c0_0 = arith.constant 0 : index
    %0 = vector.load %arg6[%c0, %c0_0] : memref<1x32xf32, #tpu.memory_space<vmem>>, vector<1x32xf32>
    %c0_1 = arith.constant 0 : index
    %c0_2 = arith.constant 0 : index
    %1 = vector.load %arg7[%c0_1, %c0_2] : memref<17x32xf32, #tpu.memory_space<vmem>>, vector<1x32xf32>
    %2 = arith.addf %0, %1 : vector<1x32xf32>
    %c1 = arith.constant 1 : index
    %c0_3 = arith.constant 0 : index
    %3 = vector.load %arg7[%c1, %c0_3] : memref<17x32xf32, #tpu.memory_space<vmem>>, vector<16x32xf32>
    %c0_4 = arith.constant 0 : index
    %c0_5 = arith.constant 0 : index
    %c0_6 = arith.constant 0 : index
    %4 = vector.load %arg1[%c0_4, %c0_5, %c0_6] : memref<2x16x48xf32, #tpu.memory_space<vmem>>, vector<1x16x48xf32>
    %5 = vector.shape_cast %4 : vector<1x16x48xf32> to vector<16x48xf32>
    %cst = arith.constant dense<0.000000e+00> : vector<16xf32>
    %6 = vector.multi_reduction <add>, %5, %cst [1] : vector<16x48xf32> to vector<16xf32>
    %7 = vector.shape_cast %6 : vector<16xf32> to vector<16x1xf32>
    %cst_7 = arith.constant 4.800000e+01 : f32
    %8 = vector.broadcast %cst_7 : f32 to vector<16x1xf32>
    %9 = arith.divf %7, %8 : vector<16x1xf32>
    %10 = vector.broadcast %9 : vector<16x1xf32> to vector<16x48xf32>
    %11 = arith.subf %5, %10 : vector<16x48xf32>
    %12 = arith.mulf %11, %11 : vector<16x48xf32>
    %cst_8 = arith.constant dense<0.000000e+00> : vector<16xf32>
    %13 = vector.multi_reduction <add>, %12, %cst_8 [1] : vector<16x48xf32> to vector<16xf32>
    %14 = vector.shape_cast %13 : vector<16xf32> to vector<16x1xf32>
    %cst_9 = arith.constant 4.800000e+01 : f32
    %15 = vector.broadcast %cst_9 : f32 to vector<16x1xf32>
    %16 = arith.divf %14, %15 : vector<16x1xf32>
    %cst_10 = arith.constant 9.99999974E-6 : f32
    %17 = vector.broadcast %cst_10 : f32 to vector<16x1xf32>
    %18 = arith.addf %16, %17 : vector<16x1xf32>
    %19 = math.rsqrt %18 : vector<16x1xf32>
    %20 = vector.broadcast %19 : vector<16x1xf32> to vector<16x48xf32>
    %21 = arith.mulf %11, %20 : vector<16x48xf32>
    %22 = arith.truncf %21 : vector<16x48xf32> to vector<16x48xbf16>
    %c0_11 = arith.constant 0 : index
    %c0_12 = arith.constant 0 : index
    %23 = vector.load %arg2[%c0_11, %c0_12] : memref<48x32xbf16, #tpu.memory_space<vmem>>, vector<48x32xbf16>
    %cst_13 = arith.constant dense<0.000000e+00> : vector<16x32xf32>
    %24 = tpu.matmul %22, %23, %cst_13 {dimension_numbers = #tpu.dot_dimension_numbers<[1], [0], [0], [1], [0, 0, 1, 1], [], []>} : vector<16x48xbf16>, vector<48x32xbf16>, vector<16x32xf32> -> vector<16x32xf32>
    %c0_14 = arith.constant 0 : index
    %c0_15 = arith.constant 0 : index
    %25 = vector.load %arg3[%c0_14, %c0_15] : memref<1x32xf32, #tpu.memory_space<vmem>>, vector<1x32xf32>
    %26 = vector.broadcast %25 : vector<1x32xf32> to vector<16x32xf32>
    %27 = arith.addf %24, %26 : vector<16x32xf32>
    %c0_16 = arith.constant 0 : index
    %c0_17 = arith.constant 0 : index
    %28 = vector.load %arg4[%c0_16, %c0_17] : memref<1x32xf32, #tpu.memory_space<vmem>>, vector<1x32xf32>
    %c0_18 = arith.constant 0 : index
    %c0_19 = arith.constant 0 : index
    %29 = vector.load %arg5[%c0_18, %c0_19] : memref<1x32xf32, #tpu.memory_space<vmem>>, vector<1x32xf32>
    %cst_20 = arith.constant dense<0.000000e+00> : vector<16xf32>
    %30 = vector.multi_reduction <add>, %27, %cst_20 [1] : vector<16x32xf32> to vector<16xf32>
    %31 = vector.shape_cast %30 : vector<16xf32> to vector<16x1xf32>
    %cst_21 = arith.constant 3.200000e+01 : f32
    %32 = vector.broadcast %cst_21 : f32 to vector<16x1xf32>
    %33 = arith.divf %31, %32 : vector<16x1xf32>
    %34 = vector.broadcast %33 : vector<16x1xf32> to vector<16x32xf32>
    %35 = arith.subf %27, %34 : vector<16x32xf32>
    %36 = arith.mulf %35, %35 : vector<16x32xf32>
    %cst_22 = arith.constant dense<0.000000e+00> : vector<16xf32>
    %37 = vector.multi_reduction <add>, %36, %cst_22 [1] : vector<16x32xf32> to vector<16xf32>
    %38 = vector.shape_cast %37 : vector<16xf32> to vector<16x1xf32>
    %cst_23 = arith.constant 3.200000e+01 : f32
    %39 = vector.broadcast %cst_23 : f32 to vector<16x1xf32>
    %40 = arith.divf %38, %39 : vector<16x1xf32>
    %cst_24 = arith.constant 9.99999974E-6 : f32
    %41 = vector.broadcast %cst_24 : f32 to vector<16x1xf32>
    %42 = arith.addf %40, %41 : vector<16x1xf32>
    %43 = math.rsqrt %42 : vector<16x1xf32>
    %44 = vector.broadcast %43 : vector<16x1xf32> to vector<16x32xf32>
    %45 = arith.mulf %35, %44 : vector<16x32xf32>
    %46 = vector.broadcast %28 : vector<1x32xf32> to vector<16x32xf32>
    %47 = arith.mulf %45, %46 : vector<16x32xf32>
    %48 = vector.broadcast %29 : vector<1x32xf32> to vector<16x32xf32>
    %49 = arith.addf %47, %48 : vector<16x32xf32>
    %c0_25 = arith.constant 0 : index
    %c0_26 = arith.constant 0 : index
    %c0_27 = arith.constant 0 : index
    %50 = vector.load %arg8[%c0_25, %c0_26, %c0_27] : memref<2x24x32xf32, #tpu.memory_space<vmem>>, vector<1x1x32xf32>
    %51 = vector.shape_cast %50 : vector<1x1x32xf32> to vector<1x32xf32>
    %52 = vector.shape_cast %2 : vector<1x32xf32> to vector<1x1x32xf32>
    tpu.vector_store %arg8[%c0_25, %c0_26, %c0_27], %52 {strides = array<i32>} : memref<2x24x32xf32, #tpu.memory_space<vmem>>, vector<1x1x32xf32>,
    %53 = arith.addf %49, %3 : vector<16x32xf32>
    %c0_28 = arith.constant 0 : index
    %c1_29 = arith.constant 1 : index
    %c0_30 = arith.constant 0 : index
    %54 = vector.load %arg8[%c0_28, %c1_29, %c0_30] : memref<2x24x32xf32, #tpu.memory_space<vmem>>, vector<1x16x32xf32>
    %55 = vector.shape_cast %54 : vector<1x16x32xf32> to vector<16x32xf32>
    %56 = vector.shape_cast %53 : vector<16x32xf32> to vector<1x16x32xf32>
    tpu.vector_store %arg8[%c0_28, %c1_29, %c0_30], %56 {strides = array<i32>} : memref<2x24x32xf32, #tpu.memory_space<vmem>>, vector<1x16x32xf32>,
    %cst_31 = arith.constant 0.000000e+00 : f32
    %57 = vector.broadcast %cst_31 : f32 to vector<7x32xf32>
    %c0_32 = arith.constant 0 : index
    %c17 = arith.constant 17 : index
    %c0_33 = arith.constant 0 : index
    %58 = vector.load %arg8[%c0_32, %c17, %c0_33] : memref<2x24x32xf32, #tpu.memory_space<vmem>>, vector<1x7x32xf32>
    %59 = vector.shape_cast %58 : vector<1x7x32xf32> to vector<7x32xf32>
    %60 = vector.shape_cast %57 : vector<7x32xf32> to vector<1x7x32xf32>
    tpu.vector_store %arg8[%c0_32, %c17, %c0_33], %60 {strides = array<i32>} : memref<2x24x32xf32, #tpu.memory_space<vmem>>, vector<1x7x32xf32>,
    %c1_34 = arith.constant 1 : index
    %c0_35 = arith.constant 0 : index
    %c0_36 = arith.constant 0 : index
    %61 = vector.load %arg1[%c1_34, %c0_35, %c0_36] : memref<2x16x48xf32, #tpu.memory_space<vmem>>, vector<1x16x48xf32>
    %62 = vector.shape_cast %61 : vector<1x16x48xf32> to vector<16x48xf32>
    %cst_37 = arith.constant dense<0.000000e+00> : vector<16xf32>
    %63 = vector.multi_reduction <add>, %62, %cst_37 [1] : vector<16x48xf32> to vector<16xf32>
    %64 = vector.shape_cast %63 : vector<16xf32> to vector<16x1xf32>
    %cst_38 = arith.constant 4.800000e+01 : f32
    %65 = vector.broadcast %cst_38 : f32 to vector<16x1xf32>
    %66 = arith.divf %64, %65 : vector<16x1xf32>
    %67 = vector.broadcast %66 : vector<16x1xf32> to vector<16x48xf32>
    %68 = arith.subf %62, %67 : vector<16x48xf32>
    %69 = arith.mulf %68, %68 : vector<16x48xf32>
    %cst_39 = arith.constant dense<0.000000e+00> : vector<16xf32>
    %70 = vector.multi_reduction <add>, %69, %cst_39 [1] : vector<16x48xf32> to vector<16xf32>
    %71 = vector.shape_cast %70 : vector<16xf32> to vector<16x1xf32>
    %cst_40 = arith.constant 4.800000e+01 : f32
    %72 = vector.broadcast %cst_40 : f32 to vector<16x1xf32>
    %73 = arith.divf %71, %72 : vector<16x1xf32>
    %cst_41 = arith.constant 9.99999974E-6 : f32
    %74 = vector.broadcast %cst_41 : f32 to vector<16x1xf32>
    %75 = arith.addf %73, %74 : vector<16x1xf32>
    %76 = math.rsqrt %75 : vector<16x1xf32>
    %77 = vector.broadcast %76 : vector<16x1xf32> to vector<16x48xf32>
    %78 = arith.mulf %68, %77 : vector<16x48xf32>
    %79 = arith.truncf %78 : vector<16x48xf32> to vector<16x48xbf16>
    %c0_42 = arith.constant 0 : index
    %c0_43 = arith.constant 0 : index
    %80 = vector.load %arg2[%c0_42, %c0_43] : memref<48x32xbf16, #tpu.memory_space<vmem>>, vector<48x32xbf16>
    %cst_44 = arith.constant dense<0.000000e+00> : vector<16x32xf32>
    %81 = tpu.matmul %79, %80, %cst_44 {dimension_numbers = #tpu.dot_dimension_numbers<[1], [0], [0], [1], [0, 0, 1, 1], [], []>} : vector<16x48xbf16>, vector<48x32xbf16>, vector<16x32xf32> -> vector<16x32xf32>
    %c0_45 = arith.constant 0 : index
    %c0_46 = arith.constant 0 : index
    %82 = vector.load %arg3[%c0_45, %c0_46] : memref<1x32xf32, #tpu.memory_space<vmem>>, vector<1x32xf32>
    %83 = vector.broadcast %82 : vector<1x32xf32> to vector<16x32xf32>
    %84 = arith.addf %81, %83 : vector<16x32xf32>
    %c0_47 = arith.constant 0 : index
    %c0_48 = arith.constant 0 : index
    %85 = vector.load %arg4[%c0_47, %c0_48] : memref<1x32xf32, #tpu.memory_space<vmem>>, vector<1x32xf32>
    %c0_49 = arith.constant 0 : index
    %c0_50 = arith.constant 0 : index
    %86 = vector.load %arg5[%c0_49, %c0_50] : memref<1x32xf32, #tpu.memory_space<vmem>>, vector<1x32xf32>
    %cst_51 = arith.constant dense<0.000000e+00> : vector<16xf32>
    %87 = vector.multi_reduction <add>, %84, %cst_51 [1] : vector<16x32xf32> to vector<16xf32>
    %88 = vector.shape_cast %87 : vector<16xf32> to vector<16x1xf32>
    %cst_52 = arith.constant 3.200000e+01 : f32
    %89 = vector.broadcast %cst_52 : f32 to vector<16x1xf32>
    %90 = arith.divf %88, %89 : vector<16x1xf32>
    %91 = vector.broadcast %90 : vector<16x1xf32> to vector<16x32xf32>
    %92 = arith.subf %84, %91 : vector<16x32xf32>
    %93 = arith.mulf %92, %92 : vector<16x32xf32>
    %cst_53 = arith.constant dense<0.000000e+00> : vector<16xf32>
    %94 = vector.multi_reduction <add>, %93, %cst_53 [1] : vector<16x32xf32> to vector<16xf32>
    %95 = vector.shape_cast %94 : vector<16xf32> to vector<16x1xf32>
    %cst_54 = arith.constant 3.200000e+01 : f32
    %96 = vector.broadcast %cst_54 : f32 to vector<16x1xf32>
    %97 = arith.divf %95, %96 : vector<16x1xf32>
    %cst_55 = arith.constant 9.99999974E-6 : f32
    %98 = vector.broadcast %cst_55 : f32 to vector<16x1xf32>
    %99 = arith.addf %97, %98 : vector<16x1xf32>
    %100 = math.rsqrt %99 : vector<16x1xf32>
    %101 = vector.broadcast %100 : vector<16x1xf32> to vector<16x32xf32>
    %102 = arith.mulf %92, %101 : vector<16x32xf32>
    %103 = vector.broadcast %85 : vector<1x32xf32> to vector<16x32xf32>
    %104 = arith.mulf %102, %103 : vector<16x32xf32>
    %105 = vector.broadcast %86 : vector<1x32xf32> to vector<16x32xf32>
    %106 = arith.addf %104, %105 : vector<16x32xf32>
    %c1_56 = arith.constant 1 : index
    %c0_57 = arith.constant 0 : index
    %c0_58 = arith.constant 0 : index
    %107 = vector.load %arg8[%c1_56, %c0_57, %c0_58] : memref<2x24x32xf32, #tpu.memory_space<vmem>>, vector<1x1x32xf32>
    %108 = vector.shape_cast %107 : vector<1x1x32xf32> to vector<1x32xf32>
    %109 = vector.shape_cast %2 : vector<1x32xf32> to vector<1x1x32xf32>
    tpu.vector_store %arg8[%c1_56, %c0_57, %c0_58], %109 {strides = array<i32>} : memref<2x24x32xf32, #tpu.memory_space<vmem>>, vector<1x1x32xf32>,
    %110 = arith.addf %106, %3 : vector<16x32xf32>
    %c1_59 = arith.constant 1 : index
    %c1_60 = arith.constant 1 : index
    %c0_61 = arith.constant 0 : index
    %111 = vector.load %arg8[%c1_59, %c1_60, %c0_61] : memref<2x24x32xf32, #tpu.memory_space<vmem>>, vector<1x16x32xf32>
    %112 = vector.shape_cast %111 : vector<1x16x32xf32> to vector<16x32xf32>
    %113 = vector.shape_cast %110 : vector<16x32xf32> to vector<1x16x32xf32>
    tpu.vector_store %arg8[%c1_59, %c1_60, %c0_61], %113 {strides = array<i32>} : memref<2x24x32xf32, #tpu.memory_space<vmem>>, vector<1x16x32xf32>,
    %cst_62 = arith.constant 0.000000e+00 : f32
    %114 = vector.broadcast %cst_62 : f32 to vector<7x32xf32>
    %c1_63 = arith.constant 1 : index
    %c17_64 = arith.constant 17 : index
    %c0_65 = arith.constant 0 : index
    %115 = vector.load %arg8[%c1_63, %c17_64, %c0_65] : memref<2x24x32xf32, #tpu.memory_space<vmem>>, vector<1x7x32xf32>
    %116 = vector.shape_cast %115 : vector<1x7x32xf32> to vector<7x32xf32>
    %117 = vector.shape_cast %114 : vector<7x32xf32> to vector<1x7x32xf32>
    tpu.vector_store %arg8[%c1_63, %c17_64, %c0_65], %117 {strides = array<i32>} : memref<2x24x32xf32, #tpu.memory_space<vmem>>, vector<1x7x32xf32>,
    return
  }
  func.func @transform_0(%arg0: i32) -> (i32, i32, i32) {
    %c0_i32 = arith.constant 0 : i32
    %c0_i32_0 = arith.constant 0 : i32
    %c0_i32_1 = arith.constant 0 : i32
    return %arg0, %c0_i32, %c0_i32_0 : i32, i32, i32
  }
  func.func @transform_1(%arg0: i32) -> (i32, i32) {
    %c0_i32 = arith.constant 0 : i32
    %c0_i32_0 = arith.constant 0 : i32
    %c0_i32_1 = arith.constant 0 : i32
    return %c0_i32, %c0_i32_0 : i32, i32
  }
  func.func @transform_2(%arg0: i32) -> (i32, i32) {
    %c0_i32 = arith.constant 0 : i32
    %c0_i32_0 = arith.constant 0 : i32
    %c0_i32_1 = arith.constant 0 : i32
    return %c0_i32, %c0_i32_0 : i32, i32
  }
  func.func @transform_3(%arg0: i32) -> (i32, i32) {
    %c0_i32 = arith.constant 0 : i32
    %c0_i32_0 = arith.constant 0 : i32
    %c0_i32_1 = arith.constant 0 : i32
    return %c0_i32, %c0_i32_0 : i32, i32
  }
  func.func @transform_4(%arg0: i32) -> (i32, i32) {
    %c0_i32 = arith.constant 0 : i32
    %c0_i32_0 = arith.constant 0 : i32
    %c0_i32_1 = arith.constant 0 : i32
    return %c0_i32, %c0_i32_0 : i32, i32
  }
  func.func @transform_5(%arg0: i32) -> (i32, i32) {
    %c0_i32 = arith.constant 0 : i32
    %c0_i32_0 = arith.constant 0 : i32
    %c0_i32_1 = arith.constant 0 : i32
    return %c0_i32, %c0_i32_0 : i32, i32
  }
  func.func @transform_6(%arg0: i32) -> (i32, i32) {
    %c0_i32 = arith.constant 0 : i32
    %c0_i32_0 = arith.constant 0 : i32
    %c0_i32_1 = arith.constant 0 : i32
    return %c0_i32, %c0_i32_0 : i32, i32
  }
  func.func @transform_7(%arg0: i32) -> (i32, i32, i32) {
    %c0_i32 = arith.constant 0 : i32
    %c0_i32_0 = arith.constant 0 : i32
    %c0_i32_1 = arith.constant 0 : i32
    return %arg0, %c0_i32, %c0_i32_0 : i32, i32, i32
  }
}

module attributes {stable_mosaic.version = 11 : i64} {
  func.func @transformer_stack_kernel(%arg0: i32, %arg1: i32, %arg2: memref<2x24x32xf32, #tpu.memory_space<vmem>>, %arg3: memref<1x32x96xbf16, #tpu.memory_space<vmem>>, %arg4: memref<1x1x96xf32, #tpu.memory_space<vmem>>, %arg5: memref<1x32x32xbf16, #tpu.memory_space<vmem>>, %arg6: memref<1x1x32xf32, #tpu.memory_space<vmem>>, %arg7: memref<1x32x64xbf16, #tpu.memory_space<vmem>>, %arg8: memref<1x1x64xf32, #tpu.memory_space<vmem>>, %arg9: memref<1x64x32xbf16, #tpu.memory_space<vmem>>, %arg10: memref<1x1x32xf32, #tpu.memory_space<vmem>>, %arg11: memref<1x32xf32, #tpu.memory_space<vmem>>, %arg12: memref<1x32xf32, #tpu.memory_space<vmem>>, %arg13: memref<2x24x32xf32, #tpu.memory_space<vmem>>, %arg14: memref<48x32xf32, #tpu.memory_space<vmem>>) attributes {dimension_semantics = [#tpu.dimension_semantics<parallel>, #tpu.dimension_semantics<arbitrary>], iteration_bounds = array<i64: 1, 2>, scalar_prefetch = 0 : i64, scratch_operands = 1 : i64, tpu.core_type = #tpu.core_type<tc>, window_params = [{transform_indices = @transform_0, window_bounds = array<i64: 2, 24, 32>}, {transform_indices = @transform_1, window_bounds = array<i64: 1, 32, 96>}, {transform_indices = @transform_2, window_bounds = array<i64: 1, 1, 96>}, {transform_indices = @transform_3, window_bounds = array<i64: 1, 32, 32>}, {transform_indices = @transform_4, window_bounds = array<i64: 1, 1, 32>}, {transform_indices = @transform_5, window_bounds = array<i64: 1, 32, 64>}, {transform_indices = @transform_6, window_bounds = array<i64: 1, 1, 64>}, {transform_indices = @transform_7, window_bounds = array<i64: 1, 64, 32>}, {transform_indices = @transform_8, window_bounds = array<i64: 1, 1, 32>}, {pipeline_mode = #tpu.pipeline_mode<synchronous>, transform_indices = @transform_9, window_bounds = array<i64: 1, 32>}, {pipeline_mode = #tpu.pipeline_mode<synchronous>, transform_indices = @transform_10, window_bounds = array<i64: 1, 32>}, {transform_indices = @transform_11, window_bounds = array<i64: 2, 24, 32>}]} {
    %c0_i32 = arith.constant 0 : i32
    %0 = arith.cmpi eq, %arg1, %c0_i32 : i32
    %1 = arith.extui %0 : i1 to i32
    %c0_i32_0 = arith.constant 0 : i32
    %2 = arith.cmpi ne, %1, %c0_i32_0 : i32
    scf.if %2 {
      %c0_51 = arith.constant 0 : index
      %c0_52 = arith.constant 0 : index
      %c0_53 = arith.constant 0 : index
      %120 = vector.load %arg2[%c0_51, %c0_52, %c0_53] : memref<2x24x32xf32, #tpu.memory_space<vmem>>, vector<2x24x32xf32>
      %121 = vector.shape_cast %120 : vector<2x24x32xf32> to vector<48x32xf32>
      %c0_54 = arith.constant 0 : index
      %c0_55 = arith.constant 0 : index
      %122 = vector.load %arg14[%c0_54, %c0_55] : memref<48x32xf32, #tpu.memory_space<vmem>>, vector<48x32xf32>
      tpu.vector_store %arg14[%c0_54, %c0_55], %121 {strides = array<i32>} : memref<48x32xf32, #tpu.memory_space<vmem>>, vector<48x32xf32>,
    } else {
    }
    %c0 = arith.constant 0 : index
    %c0_1 = arith.constant 0 : index
    %3 = vector.load %arg14[%c0, %c0_1] : memref<48x32xf32, #tpu.memory_space<vmem>>, vector<48x32xf32>
    %cst = arith.constant dense<0.000000e+00> : vector<48xf32>
    %4 = vector.multi_reduction <add>, %3, %cst [1] : vector<48x32xf32> to vector<48xf32>
    %5 = vector.shape_cast %4 : vector<48xf32> to vector<48x1xf32>
    %cst_2 = arith.constant 3.200000e+01 : f32
    %6 = vector.broadcast %cst_2 : f32 to vector<48x1xf32>
    %7 = arith.divf %5, %6 : vector<48x1xf32>
    %8 = vector.broadcast %7 : vector<48x1xf32> to vector<48x32xf32>
    %9 = arith.subf %3, %8 : vector<48x32xf32>
    %10 = arith.mulf %9, %9 : vector<48x32xf32>
    %cst_3 = arith.constant dense<0.000000e+00> : vector<48xf32>
    %11 = vector.multi_reduction <add>, %10, %cst_3 [1] : vector<48x32xf32> to vector<48xf32>
    %12 = vector.shape_cast %11 : vector<48xf32> to vector<48x1xf32>
    %cst_4 = arith.constant 3.200000e+01 : f32
    %13 = vector.broadcast %cst_4 : f32 to vector<48x1xf32>
    %14 = arith.divf %12, %13 : vector<48x1xf32>
    %cst_5 = arith.constant 9.99999974E-6 : f32
    %15 = vector.broadcast %cst_5 : f32 to vector<48x1xf32>
    %16 = arith.addf %14, %15 : vector<48x1xf32>
    %17 = math.rsqrt %16 : vector<48x1xf32>
    %18 = vector.broadcast %17 : vector<48x1xf32> to vector<48x32xf32>
    %19 = arith.mulf %9, %18 : vector<48x32xf32>
    %20 = arith.truncf %19 : vector<48x32xf32> to vector<48x32xbf16>
    %c0_6 = arith.constant 0 : index
    %c0_7 = arith.constant 0 : index
    %c0_8 = arith.constant 0 : index
    %21 = vector.load %arg3[%c0_6, %c0_7, %c0_8] : memref<1x32x96xbf16, #tpu.memory_space<vmem>>, vector<1x32x96xbf16>
    %22 = vector.shape_cast %21 : vector<1x32x96xbf16> to vector<32x96xbf16>
    %cst_9 = arith.constant dense<0.000000e+00> : vector<48x96xf32>
    %23 = tpu.matmul %20, %22, %cst_9 {dimension_numbers = #tpu.dot_dimension_numbers<[1], [0], [0], [1], [0, 0, 1, 1], [], []>} : vector<48x32xbf16>, vector<32x96xbf16>, vector<48x96xf32> -> vector<48x96xf32>
    %c0_10 = arith.constant 0 : index
    %c0_11 = arith.constant 0 : index
    %c0_12 = arith.constant 0 : index
    %24 = vector.load %arg4[%c0_10, %c0_11, %c0_12] : memref<1x1x96xf32, #tpu.memory_space<vmem>>, vector<1x1x96xf32>
    %25 = vector.shape_cast %24 : vector<1x1x96xf32> to vector<1x96xf32>
    %26 = vector.broadcast %25 : vector<1x96xf32> to vector<48x96xf32>
    %27 = arith.addf %23, %26 : vector<48x96xf32>
    %28 = vector.extract_strided_slice %27 {offsets = [0, 0], sizes = [48, 32], strides = [1, 1]} : vector<48x96xf32> to vector<48x32xf32>
    %29 = vector.shape_cast %28 : vector<48x32xf32> to vector<2x24x4x8xf32>
    %30 = tpu.transpose %29, [0, 2, 1, 3] : vector<2x24x4x8xf32> -> vector<2x4x24x8xf32>
    %31 = vector.shape_cast %30 : vector<2x4x24x8xf32> to vector<8x24x8xf32>
    %32 = arith.truncf %31 : vector<8x24x8xf32> to vector<8x24x8xbf16>
    %33 = vector.extract_strided_slice %27 {offsets = [0, 32], sizes = [48, 32], strides = [1, 1]} : vector<48x96xf32> to vector<48x32xf32>
    %34 = vector.shape_cast %33 : vector<48x32xf32> to vector<2x24x4x8xf32>
    %35 = tpu.transpose %34, [0, 2, 1, 3] : vector<2x24x4x8xf32> -> vector<2x4x24x8xf32>
    %36 = vector.shape_cast %35 : vector<2x4x24x8xf32> to vector<8x24x8xf32>
    %37 = arith.truncf %36 : vector<8x24x8xf32> to vector<8x24x8xbf16>
    %38 = vector.extract_strided_slice %27 {offsets = [0, 64], sizes = [48, 32], strides = [1, 1]} : vector<48x96xf32> to vector<48x32xf32>
    %39 = vector.shape_cast %38 : vector<48x32xf32> to vector<2x24x4x8xf32>
    %40 = tpu.transpose %39, [0, 2, 1, 3] : vector<2x24x4x8xf32> -> vector<2x4x24x8xf32>
    %41 = vector.shape_cast %40 : vector<2x4x24x8xf32> to vector<8x24x8xf32>
    %42 = arith.truncf %41 : vector<8x24x8xf32> to vector<8x24x8xbf16>
    "tpu.trace_start"() <{level = 10 : i32, message = "hqd,hkd->hqk"}> : () -> ()
    %cst_13 = arith.constant dense<0.000000e+00> : vector<8x24x24xf32>
    %43 = tpu.matmul %32, %37, %cst_13 {dimension_numbers = #tpu.dot_dimension_numbers<[2], [2], [1], [1], [0, 0, 0, 1, 1, 1], [0], [0]>} : vector<8x24x8xbf16>, vector<8x24x8xbf16>, vector<8x24x24xf32> -> vector<8x24x24xf32>
    "tpu.trace_stop"() : () -> ()
    %44 = tpu.iota {dimensions = array<i32: 2>} : vector<8x24x24xi32>
    %c17_i32 = arith.constant 17 : i32
    %45 = vector.broadcast %c17_i32 : i32 to vector<8x24x24xi32>
    %46 = arith.cmpi slt, %44, %45 : vector<8x24x24xi32>
    %cst_14 = arith.constant -1.000000e+30 : f32
    %47 = vector.broadcast %cst_14 : f32 to vector<8x24x24xf32>
    %48 = arith.select %46, %43, %47 : vector<8x24x24xi1>, vector<8x24x24xf32>
    %cst_15 = arith.constant dense<0xFF800000> : vector<8x24xf32>
    %49 = vector.multi_reduction <maximumf>, %48, %cst_15 [2] : vector<8x24x24xf32> to vector<8x24xf32>
    %50 = vector.shape_cast %49 : vector<8x24xf32> to vector<8x24x1xf32>
    %51 = vector.broadcast %50 : vector<8x24x1xf32> to vector<8x24x24xf32>
    %52 = arith.subf %48, %51 : vector<8x24x24xf32>
    %53 = math.exp %52 : vector<8x24x24xf32>
    %cst_16 = arith.constant dense<0.000000e+00> : vector<8x24xf32>
    %54 = vector.multi_reduction <add>, %53, %cst_16 [2] : vector<8x24x24xf32> to vector<8x24xf32>
    %55 = vector.shape_cast %54 : vector<8x24xf32> to vector<8x24x1xf32>
    %56 = tpu.reciprocal %55 {approx = true} : vector<8x24x1xf32> -> vector<8x24x1xf32>
    %57 = vector.broadcast %56 : vector<8x24x1xf32> to vector<8x24x24xf32>
    %58 = arith.mulf %53, %57 : vector<8x24x24xf32>
    %59 = arith.truncf %58 : vector<8x24x24xf32> to vector<8x24x24xbf16>
    "tpu.trace_start"() <{level = 10 : i32, message = "hqk,hkd->hqd"}> : () -> ()
    %cst_17 = arith.constant dense<0.000000e+00> : vector<8x24x8xf32>
    %60 = tpu.matmul %59, %42, %cst_17 {dimension_numbers = #tpu.dot_dimension_numbers<[2], [1], [1], [2], [0, 0, 0, 1, 1, 2], [0], [0]>} : vector<8x24x24xbf16>, vector<8x24x8xbf16>, vector<8x24x8xf32> -> vector<8x24x8xf32>
    "tpu.trace_stop"() : () -> ()
    %61 = vector.shape_cast %60 : vector<8x24x8xf32> to vector<2x4x24x8xf32>
    %62 = tpu.transpose %61, [0, 2, 1, 3] : vector<2x4x24x8xf32> -> vector<2x24x4x8xf32>
    %63 = vector.shape_cast %62 : vector<2x24x4x8xf32> to vector<48x32xf32>
    %64 = arith.truncf %63 : vector<48x32xf32> to vector<48x32xbf16>
    %c0_18 = arith.constant 0 : index
    %c0_19 = arith.constant 0 : index
    %c0_20 = arith.constant 0 : index
    %65 = vector.load %arg5[%c0_18, %c0_19, %c0_20] : memref<1x32x32xbf16, #tpu.memory_space<vmem>>, vector<1x32x32xbf16>
    %66 = vector.shape_cast %65 : vector<1x32x32xbf16> to vector<32x32xbf16>
    %cst_21 = arith.constant dense<0.000000e+00> : vector<48x32xf32>
    %67 = tpu.matmul %64, %66, %cst_21 {dimension_numbers = #tpu.dot_dimension_numbers<[1], [0], [0], [1], [0, 0, 1, 1], [], []>} : vector<48x32xbf16>, vector<32x32xbf16>, vector<48x32xf32> -> vector<48x32xf32>
    %68 = arith.addf %3, %67 : vector<48x32xf32>
    %c0_22 = arith.constant 0 : index
    %c0_23 = arith.constant 0 : index
    %c0_24 = arith.constant 0 : index
    %69 = vector.load %arg6[%c0_22, %c0_23, %c0_24] : memref<1x1x32xf32, #tpu.memory_space<vmem>>, vector<1x1x32xf32>
    %70 = vector.shape_cast %69 : vector<1x1x32xf32> to vector<1x32xf32>
    %71 = vector.broadcast %70 : vector<1x32xf32> to vector<48x32xf32>
    %72 = arith.addf %68, %71 : vector<48x32xf32>
    %cst_25 = arith.constant dense<0.000000e+00> : vector<48xf32>
    %73 = vector.multi_reduction <add>, %72, %cst_25 [1] : vector<48x32xf32> to vector<48xf32>
    %74 = vector.shape_cast %73 : vector<48xf32> to vector<48x1xf32>
    %cst_26 = arith.constant 3.200000e+01 : f32
    %75 = vector.broadcast %cst_26 : f32 to vector<48x1xf32>
    %76 = arith.divf %74, %75 : vector<48x1xf32>
    %77 = vector.broadcast %76 : vector<48x1xf32> to vector<48x32xf32>
    %78 = arith.subf %72, %77 : vector<48x32xf32>
    %79 = arith.mulf %78, %78 : vector<48x32xf32>
    %cst_27 = arith.constant dense<0.000000e+00> : vector<48xf32>
    %80 = vector.multi_reduction <add>, %79, %cst_27 [1] : vector<48x32xf32> to vector<48xf32>
    %81 = vector.shape_cast %80 : vector<48xf32> to vector<48x1xf32>
    %cst_28 = arith.constant 3.200000e+01 : f32
    %82 = vector.broadcast %cst_28 : f32 to vector<48x1xf32>
    %83 = arith.divf %81, %82 : vector<48x1xf32>
    %cst_29 = arith.constant 9.99999974E-6 : f32
    %84 = vector.broadcast %cst_29 : f32 to vector<48x1xf32>
    %85 = arith.addf %83, %84 : vector<48x1xf32>
    %86 = math.rsqrt %85 : vector<48x1xf32>
    %87 = vector.broadcast %86 : vector<48x1xf32> to vector<48x32xf32>
    %88 = arith.mulf %78, %87 : vector<48x32xf32>
    %89 = arith.truncf %88 : vector<48x32xf32> to vector<48x32xbf16>
    %c0_30 = arith.constant 0 : index
    %c0_31 = arith.constant 0 : index
    %c0_32 = arith.constant 0 : index
    %90 = vector.load %arg8[%c0_30, %c0_31, %c0_32] : memref<1x1x64xf32, #tpu.memory_space<vmem>>, vector<1x1x64xf32>
    %91 = vector.shape_cast %90 : vector<1x1x64xf32> to vector<1x64xf32>
    %cst_33 = arith.constant 0.000000e+00 : f32
    %92 = vector.broadcast %cst_33 : f32 to vector<48x32xf32>
    %c0_34 = arith.constant 0 : index
    %c0_35 = arith.constant 0 : index
    %c0_36 = arith.constant 0 : index
    %93 = vector.load %arg7[%c0_34, %c0_35, %c0_36] : memref<1x32x64xbf16, #tpu.memory_space<vmem>>, vector<1x32x64xbf16>
    %94 = vector.shape_cast %93 : vector<1x32x64xbf16> to vector<32x64xbf16>
    %cst_37 = arith.constant dense<0.000000e+00> : vector<48x64xf32>
    %95 = tpu.matmul %89, %94, %cst_37 {dimension_numbers = #tpu.dot_dimension_numbers<[1], [0], [0], [1], [0, 0, 1, 1], [], []>} : vector<48x32xbf16>, vector<32x64xbf16>, vector<48x64xf32> -> vector<48x64xf32>
    %96 = vector.broadcast %91 : vector<1x64xf32> to vector<48x64xf32>
    %97 = arith.addf %95, %96 : vector<48x64xf32>
    %cst_38 = arith.constant 5.000000e-01 : f32
    %98 = vector.broadcast %cst_38 : f32 to vector<48x64xf32>
    %99 = arith.mulf %98, %97 : vector<48x64xf32>
    %cst_39 = arith.constant 0.707106769 : f32
    %100 = vector.broadcast %cst_39 : f32 to vector<48x64xf32>
    %101 = arith.mulf %97, %100 : vector<48x64xf32>
    %102 = math.erf %101 : vector<48x64xf32>
    %cst_40 = arith.constant 1.000000e+00 : f32
    %103 = vector.broadcast %cst_40 : f32 to vector<48x64xf32>
    %104 = arith.addf %103, %102 : vector<48x64xf32>
    %105 = arith.mulf %99, %104 : vector<48x64xf32>
    %106 = arith.truncf %105 : vector<48x64xf32> to vector<48x64xbf16>
    %c0_41 = arith.constant 0 : index
    %c0_42 = arith.constant 0 : index
    %c0_43 = arith.constant 0 : index
    %107 = vector.load %arg9[%c0_41, %c0_42, %c0_43] : memref<1x64x32xbf16, #tpu.memory_space<vmem>>, vector<1x64x32xbf16>
    %108 = vector.shape_cast %107 : vector<1x64x32xbf16> to vector<64x32xbf16>
    %cst_44 = arith.constant dense<0.000000e+00> : vector<48x32xf32>
    %109 = tpu.matmul %106, %108, %cst_44 {dimension_numbers = #tpu.dot_dimension_numbers<[1], [0], [0], [1], [0, 0, 1, 1], [], []>} : vector<48x64xbf16>, vector<64x32xbf16>, vector<48x32xf32> -> vector<48x32xf32>
    %110 = arith.addf %92, %109 : vector<48x32xf32>
    %111 = arith.addf %72, %110 : vector<48x32xf32>
    %c0_45 = arith.constant 0 : index
    %c0_46 = arith.constant 0 : index
    %c0_47 = arith.constant 0 : index
    %112 = vector.load %arg10[%c0_45, %c0_46, %c0_47] : memref<1x1x32xf32, #tpu.memory_space<vmem>>, vector<1x1x32xf32>
    %113 = vector.shape_cast %112 : vector<1x1x32xf32> to vector<1x32xf32>
    %114 = vector.broadcast %113 : vector<1x32xf32> to vector<48x32xf32>
    %115 = arith.addf %111, %114 : vector<48x32xf32>
    %c0_48 = arith.constant 0 : index
    %c0_49 = arith.constant 0 : index
    %116 = vector.load %arg14[%c0_48, %c0_49] : memref<48x32xf32, #tpu.memory_space<vmem>>, vector<48x32xf32>
    tpu.vector_store %arg14[%c0_48, %c0_49], %115 {strides = array<i32>} : memref<48x32xf32, #tpu.memory_space<vmem>>, vector<48x32xf32>,
    %c1_i32 = arith.constant 1 : i32
    %117 = arith.cmpi eq, %arg1, %c1_i32 : i32
    %118 = arith.extui %117 : i1 to i32
    %c0_i32_50 = arith.constant 0 : i32
    %119 = arith.cmpi ne, %118, %c0_i32_50 : i32
    scf.if %119 {
      %c0_51 = arith.constant 0 : index
      %c0_52 = arith.constant 0 : index
      %120 = vector.load %arg11[%c0_51, %c0_52] : memref<1x32xf32, #tpu.memory_space<vmem>>, vector<1x32xf32>
      %c0_53 = arith.constant 0 : index
      %c0_54 = arith.constant 0 : index
      %121 = vector.load %arg12[%c0_53, %c0_54] : memref<1x32xf32, #tpu.memory_space<vmem>>, vector<1x32xf32>
      %cst_55 = arith.constant dense<0.000000e+00> : vector<48xf32>
      %122 = vector.multi_reduction <add>, %115, %cst_55 [1] : vector<48x32xf32> to vector<48xf32>
      %123 = vector.shape_cast %122 : vector<48xf32> to vector<48x1xf32>
      %cst_56 = arith.constant 3.200000e+01 : f32
      %124 = vector.broadcast %cst_56 : f32 to vector<48x1xf32>
      %125 = arith.divf %123, %124 : vector<48x1xf32>
      %126 = vector.broadcast %125 : vector<48x1xf32> to vector<48x32xf32>
      %127 = arith.subf %115, %126 : vector<48x32xf32>
      %128 = arith.mulf %127, %127 : vector<48x32xf32>
      %cst_57 = arith.constant dense<0.000000e+00> : vector<48xf32>
      %129 = vector.multi_reduction <add>, %128, %cst_57 [1] : vector<48x32xf32> to vector<48xf32>
      %130 = vector.shape_cast %129 : vector<48xf32> to vector<48x1xf32>
      %cst_58 = arith.constant 3.200000e+01 : f32
      %131 = vector.broadcast %cst_58 : f32 to vector<48x1xf32>
      %132 = arith.divf %130, %131 : vector<48x1xf32>
      %cst_59 = arith.constant 9.99999974E-6 : f32
      %133 = vector.broadcast %cst_59 : f32 to vector<48x1xf32>
      %134 = arith.addf %132, %133 : vector<48x1xf32>
      %135 = math.rsqrt %134 : vector<48x1xf32>
      %136 = vector.broadcast %135 : vector<48x1xf32> to vector<48x32xf32>
      %137 = arith.mulf %127, %136 : vector<48x32xf32>
      %138 = vector.broadcast %120 : vector<1x32xf32> to vector<48x32xf32>
      %139 = arith.mulf %137, %138 : vector<48x32xf32>
      %140 = vector.broadcast %121 : vector<1x32xf32> to vector<48x32xf32>
      %141 = arith.addf %139, %140 : vector<48x32xf32>
      %142 = vector.shape_cast %141 : vector<48x32xf32> to vector<2x24x32xf32>
      %c0_60 = arith.constant 0 : index
      %c0_61 = arith.constant 0 : index
      %c0_62 = arith.constant 0 : index
      %143 = vector.load %arg13[%c0_60, %c0_61, %c0_62] : memref<2x24x32xf32, #tpu.memory_space<vmem>>, vector<2x24x32xf32>
      tpu.vector_store %arg13[%c0_60, %c0_61, %c0_62], %142 {strides = array<i32>} : memref<2x24x32xf32, #tpu.memory_space<vmem>>, vector<2x24x32xf32>,
    } else {
    }
    return
  }
  func.func @transform_0(%arg0: i32, %arg1: i32) -> (i32, i32, i32) {
    %c0_i32 = arith.constant 0 : i32
    %c0_i32_0 = arith.constant 0 : i32
    %c0_i32_1 = arith.constant 0 : i32
    return %arg0, %c0_i32, %c0_i32_0 : i32, i32, i32
  }
  func.func @transform_1(%arg0: i32, %arg1: i32) -> (i32, i32, i32) {
    %c0_i32 = arith.constant 0 : i32
    %c0_i32_0 = arith.constant 0 : i32
    %c0_i32_1 = arith.constant 0 : i32
    return %arg1, %c0_i32, %c0_i32_0 : i32, i32, i32
  }
  func.func @transform_2(%arg0: i32, %arg1: i32) -> (i32, i32, i32) {
    %c0_i32 = arith.constant 0 : i32
    %c0_i32_0 = arith.constant 0 : i32
    %c0_i32_1 = arith.constant 0 : i32
    return %arg1, %c0_i32, %c0_i32_0 : i32, i32, i32
  }
  func.func @transform_3(%arg0: i32, %arg1: i32) -> (i32, i32, i32) {
    %c0_i32 = arith.constant 0 : i32
    %c0_i32_0 = arith.constant 0 : i32
    %c0_i32_1 = arith.constant 0 : i32
    return %arg1, %c0_i32, %c0_i32_0 : i32, i32, i32
  }
  func.func @transform_4(%arg0: i32, %arg1: i32) -> (i32, i32, i32) {
    %c0_i32 = arith.constant 0 : i32
    %c0_i32_0 = arith.constant 0 : i32
    %c0_i32_1 = arith.constant 0 : i32
    return %arg1, %c0_i32, %c0_i32_0 : i32, i32, i32
  }
  func.func @transform_5(%arg0: i32, %arg1: i32) -> (i32, i32, i32) {
    %c0_i32 = arith.constant 0 : i32
    %c0_i32_0 = arith.constant 0 : i32
    %c0_i32_1 = arith.constant 0 : i32
    return %arg1, %c0_i32, %c0_i32_0 : i32, i32, i32
  }
  func.func @transform_6(%arg0: i32, %arg1: i32) -> (i32, i32, i32) {
    %c0_i32 = arith.constant 0 : i32
    %c0_i32_0 = arith.constant 0 : i32
    %c0_i32_1 = arith.constant 0 : i32
    return %arg1, %c0_i32, %c0_i32_0 : i32, i32, i32
  }
  func.func @transform_7(%arg0: i32, %arg1: i32) -> (i32, i32, i32) {
    %c0_i32 = arith.constant 0 : i32
    %c0_i32_0 = arith.constant 0 : i32
    %c0_i32_1 = arith.constant 0 : i32
    return %arg1, %c0_i32, %c0_i32_0 : i32, i32, i32
  }
  func.func @transform_8(%arg0: i32, %arg1: i32) -> (i32, i32, i32) {
    %c0_i32 = arith.constant 0 : i32
    %c0_i32_0 = arith.constant 0 : i32
    %c0_i32_1 = arith.constant 0 : i32
    return %arg1, %c0_i32, %c0_i32_0 : i32, i32, i32
  }
  func.func @transform_9(%arg0: i32, %arg1: i32) -> (i32, i32) {
    %c0_i32 = arith.constant 0 : i32
    %c0_i32_0 = arith.constant 0 : i32
    %c0_i32_1 = arith.constant 0 : i32
    return %c0_i32, %c0_i32_0 : i32, i32
  }
  func.func @transform_10(%arg0: i32, %arg1: i32) -> (i32, i32) {
    %c0_i32 = arith.constant 0 : i32
    %c0_i32_0 = arith.constant 0 : i32
    %c0_i32_1 = arith.constant 0 : i32
    return %c0_i32, %c0_i32_0 : i32, i32
  }
  func.func @transform_11(%arg0: i32, %arg1: i32) -> (i32, i32, i32) {
    %c0_i32 = arith.constant 0 : i32
    %c0_i32_0 = arith.constant 0 : i32
    %c0_i32_1 = arith.constant 0 : i32
    return %arg0, %c0_i32, %c0_i32_0 : i32, i32, i32
  }
}

</mosaic_0001>

<llo_original>
// kernel: vit_encoder_forward.2
$region0: #{vit_encoder_forward.2}
  #allocation0 [shape = 'u32[]', space=smem, size = 0x4, offset = 0x4, fixed_abs, tag = 'smem constant byte address 0x4 - core index']
  #allocation1 [shape = 'u32[144,128]{1,0:T(1,128)}', space=vmem, size = 0x12000, scoped, tag = 'internal scratch']
  %s0 = inlined_call_operand.hbm [shape: f32[2,16,48], index: 0, kind: input, shape index: {}]
  %s1 = inlined_call_operand.hbm [shape: bf16[48,32], index: 1, kind: input, shape index: {}]
  %s2 = inlined_call_operand.hbm [shape: f32[1,32], index: 2, kind: input, shape index: {}]
  %s3 = inlined_call_operand.hbm [shape: f32[1,32], index: 3, kind: input, shape index: {}]
  %s4 = inlined_call_operand.hbm [shape: f32[1,32], index: 4, kind: input, shape index: {}]
  %s5 = inlined_call_operand.hbm [shape: f32[1,32], index: 5, kind: input, shape index: {}]
  %s6 = inlined_call_operand.hbm [shape: f32[17,32], index: 6, kind: input, shape index: {}]
  %s7 = inlined_call_operand.hbm [shape: f32[2,24,32], index: 7, kind: output, shape index: {}]
  %s8 = sld [smem:[#allocation0]]
  $region66: #{vit_encoder_forward.2} parent=0
    _
  %s10 = ssub.s32 1, %s8
  %s11 = scalar_select 0, %s10, %s8
  $region1: #{vit_encoder_forward.2} parent=0
    #allocation2 [shape = 'u8[16384]{0}', space=vmem, size = 0x4000, scoped, tag = 'input window, operand 0, single buffered']
    #allocation3 [shape = 's32[1]{0}', space=sflag, size = 0x4, scoped, tag = 'scoped memory for vit_encoder_forward.2']
    #allocation4 [shape = 's32[1]{0}', space=sflag, size = 0x4, scoped, tag = 'scoped memory for vit_encoder_forward.2']
    #allocation5 [shape = 'u8[12288]{0}', space=vmem, size = 0x3000, scoped, tag = 'input window, operand 1, single buffered']
    #allocation6 [shape = 's32[1]{0}', space=sflag, size = 0x4, scoped, tag = 'scoped memory for vit_encoder_forward.2']
    #allocation7 [shape = 'u8[512]{0}', space=vmem, size = 0x400, scoped, tag = 'input window, operand 2, single buffered']
    #allocation8 [shape = 'u8[512]{0}', space=vmem, size = 0x400, scoped, tag = 'input window, operand 3, single buffered']
    #allocation9 [shape = 's32[1]{0}', space=sflag, size = 0x4, scoped, tag = 'scoped memory for vit_encoder_forward.2']
    #allocation10 [shape = 'u8[512]{0}', space=vmem, size = 0x400, scoped, tag = 'input window, operand 4, single buffered']
    #allocation11 [shape = 'u8[512]{0}', space=vmem, size = 0x400, scoped, tag = 'input window, operand 5, single buffered']
    #allocation12 [shape = 's32[1]{0}', space=sflag, size = 0x4, scoped, tag = 'scoped memory for vit_encoder_forward.2']
    #allocation13 [shape = 'u8[12288]{0}', space=vmem, size = 0x3000, scoped, tag = 'input window, operand 6, single buffered']
    #allocation14 [shape = 'u8[24576]{0}', space=vmem, size = 0x6000, scoped, tag = 'output window, operand 0, single buffered']
    %12 = vsyncpa [#allocation3], 0
    %13 = vsyncpa [#allocation6], 0
    %14 = vsyncpa [#allocation9], 0
    %15 = vsyncpa [#allocation12], 0
    %16 = vsyncpa [#allocation4], 0
    // Predicated region
    $region2: #{vit_encoder_forward.2} parent=1 // pred_check
      _
    $region3: #{vit_encoder_forward.2} parent=1 // pred_check_branch
      %18 = sbr.rel (0) target = $region5
    $region4: #{vit_encoder_forward.2} parent=1 // pred_region
      %s20 = ssub.s32 512, 512
      %21 = vsyncadd [#allocation3], %s20
      %s22 = sshll.u32 [#allocation2], 4
      %s23 = int_to_ptr.vmem [resolvable:$true] %s22
      %28 = dma.hbm_to_vmem [thread:$0]  %s0, 512, %s23, [#allocation3], 128, 128, 8
    $region5: #{vit_encoder_forward.2} parent=1 // pred_fallthru
      _
    // Predicated region
    $region6: #{vit_encoder_forward.2} parent=1 // pred_check
      _
    $region7: #{vit_encoder_forward.2} parent=1 // pred_check_branch
      %30 = sbr.rel (0) target = $region9
    $region8: #{vit_encoder_forward.2} parent=1 // pred_region
      %s32 = ssub.s32 384, 384
      %33 = vsyncadd [#allocation6], %s32
      %s34 = sshll.u32 [#allocation5], 4
      %s35 = int_to_ptr.vmem [resolvable:$true] %s34
      %40 = dma.hbm_to_vmem [thread:$0]  %s1, 384, %s35, [#allocation6], 64, 64, 4
    $region9: #{vit_encoder_forward.2} parent=1 // pred_fallthru
      _
    // Predicated region
    $region10: #{vit_encoder_forward.2} parent=1 // pred_check
      _
    $region11: #{vit_encoder_forward.2} parent=1 // pred_check_branch
      %42 = sbr.rel (0) target = $region13
    $region12: #{vit_encoder_forward.2} parent=1 // pred_region
      %s44 = ssub.s32 16, 16
      %45 = vsyncadd [#allocation6], %s44
      %s47 = sshll.u32 [#allocation7], 4
      %s48 = int_to_ptr.vmem [resolvable:$true] %s47
      %50 = dma.hbm_to_vmem [thread:$0]  %s2, 16, %s48, [#allocation6]
    $region13: #{vit_encoder_forward.2} parent=1 // pred_fallthru
      _
    // Predicated region
    $region14: #{vit_encoder_forward.2} parent=1 // pred_check
      _
    $region15: #{vit_encoder_forward.2} parent=1 // pred_check_branch
      %52 = sbr.rel (0) target = $region17
    $region16: #{vit_encoder_forward.2} parent=1 // pred_region
      %s54 = ssub.s32 16, 16
      %55 = vsyncadd [#allocation9], %s54
      %s57 = sshll.u32 [#allocation8], 4
      %s58 = int_to_ptr.vmem [resolvable:$true] %s57
      %60 = dma.hbm_to_vmem [thread:$0]  %s3, 16, %s58, [#allocation9]
    $region17: #{vit_encoder_forward.2} parent=1 // pred_fallthru
      _
    // Predicated region
    $region18: #{vit_encoder_forward.2} parent=1 // pred_check
      _
    $region19: #{vit_encoder_forward.2} parent=1 // pred_check_branch
      %62 = sbr.rel (0) target = $region21
    $region20: #{vit_encoder_forward.2} parent=1 // pred_region
      %s64 = ssub.s32 16, 16
      %65 = vsyncadd [#allocation9], %s64
      %s67 = sshll.u32 [#allocation10], 4
      %s68 = int_to_ptr.vmem [resolvable:$true] %s67
      %70 = dma.hbm_to_vmem [thread:$0]  %s4, 16, %s68, [#allocation9]
    $region21: #{vit_encoder_forward.2} parent=1 // pred_fallthru
      _
    // Predicated region
    $region22: #{vit_encoder_forward.2} parent=1 // pred_check
      _
    $region23: #{vit_encoder_forward.2} parent=1 // pred_check_branch
      %72 = sbr.rel (0) target = $region25
    $region24: #{vit_encoder_forward.2} parent=1 // pred_region
      %s74 = ssub.s32 16, 16
      %75 = vsyncadd [#allocation12], %s74
      %s77 = sshll.u32 [#allocation11], 4
      %s78 = int_to_ptr.vmem [resolvable:$true] %s77
      %80 = dma.hbm_to_vmem [thread:$0]  %s5, 16, %s78, [#allocation12]
    $region25: #{vit_encoder_forward.2} parent=1 // pred_fallthru
      _
    // Predicated region
    $region26: #{vit_encoder_forward.2} parent=1 // pred_check
      _
    $region27: #{vit_encoder_forward.2} parent=1 // pred_check_branch
      %82 = sbr.rel (0) target = $region29
    $region28: #{vit_encoder_forward.2} parent=1 // pred_region
      %s84 = ssub.s32 384, 384
      %85 = vsyncadd [#allocation12], %s84
      %s86 = sshll.u32 [#allocation13], 4
      %s87 = int_to_ptr.vmem [resolvable:$true] %s86
      %92 = dma.hbm_to_vmem [thread:$0]  %s6, 384, %s87, [#allocation12], 128, 128, 8
    $region29: #{vit_encoder_forward.2} parent=1 // pred_fallthru
      _
    // Predicated region
    $region30: #{vit_encoder_forward.2} parent=1 // pred_check
      _
    $region31: #{vit_encoder_forward.2} parent=1 // pred_check_branch
      %94 = sbr.rel (0) target = $region33
    $region32: #{vit_encoder_forward.2} parent=1 // pred_region
      %95 = dma.done [#allocation3], 512
    $region33: #{vit_encoder_forward.2} parent=1 // pred_fallthru
      _
    // Predicated region
    $region34: #{vit_encoder_forward.2} parent=1 // pred_check
      _
    $region35: #{vit_encoder_forward.2} parent=1 // pred_check_branch
      %97 = sbr.rel (0) target = $region37
    $region36: #{vit_encoder_forward.2} parent=1 // pred_region
      %98 = dma.done [#allocation6], 384
    $region37: #{vit_encoder_forward.2} parent=1 // pred_fallthru
      _
    // Predicated region
    $region38: #{vit_encoder_forward.2} parent=1 // pred_check
      _
    $region39: #{vit_encoder_forward.2} parent=1 // pred_check_branch
      %100 = sbr.rel (0) target = $region41
    $region40: #{vit_encoder_forward.2} parent=1 // pred_region
      %101 = dma.done [#allocation6], 16
    $region41: #{vit_encoder_forward.2} parent=1 // pred_fallthru
      _
    // Predicated region
    $region42: #{vit_encoder_forward.2} parent=1 // pred_check
      _
    $region43: #{vit_encoder_forward.2} parent=1 // pred_check_branch
      %103 = sbr.rel (0) target = $region45
    $region44: #{vit_encoder_forward.2} parent=1 // pred_region
      %104 = dma.done [#allocation9], 16
    $region45: #{vit_encoder_forward.2} parent=1 // pred_fallthru
      _
    // Predicated region
    $region46: #{vit_encoder_forward.2} parent=1 // pred_check
      _
    $region47: #{vit_encoder_forward.2} parent=1 // pred_check_branch
      %106 = sbr.rel (0) target = $region49
    $region48: #{vit_encoder_forward.2} parent=1 // pred_region
      %107 = dma.done [#allocation9], 16
    $region49: #{vit_encoder_forward.2} parent=1 // pred_fallthru
      _
    // Predicated region
    $region50: #{vit_encoder_forward.2} parent=1 // pred_check
      _
    $region51: #{vit_encoder_forward.2} parent=1 // pred_check_branch
      %109 = sbr.rel (0) target = $region53
    $region52: #{vit_encoder_forward.2} parent=1 // pred_region
      %110 = dma.done [#allocation12], 16
    $region53: #{vit_encoder_forward.2} parent=1 // pred_fallthru
      _
    // Predicated region
    $region54: #{vit_encoder_forward.2} parent=1 // pred_check
      _
    $region55: #{vit_encoder_forward.2} parent=1 // pred_check_branch
      %112 = sbr.rel (0) target = $region57
    $region56: #{vit_encoder_forward.2} parent=1 // pred_region
      %113 = dma.done [#allocation12], 384
    $region57: #{vit_encoder_forward.2} parent=1 // pred_fallthru
      _
    %v115 = vld [vmem:[#allocation11] sm:$0x1]
    %v116 = vld [vmem:[#allocation13] sm:$0x1]
    %v117 = vadd.f32 %v115, %v116
    %v118 = vld [vmem:[#allocation13 + $0x1] sm:$0xff]
    %v119 = vld [vmem:[#allocation13 + $0x9] sm:$0xff]
    %v120 = vld [vmem:[#allocation2] sm:$0xff]
    %v121 = vld [vmem:[#allocation2 + $0x8] sm:$0xff]
    %vm122 = vcmask 392192
    %v123 = vsel %vm122, %v120, 0.0
    %124 = vadd.xlane.f32.xlu0 %v123
    %v125 = vpop.xlane.xlu0 %124
    %v126 = vsel %vm122, %v121, 0.0
    %127 = vadd.xlane.f32.xlu0 %v126
    %v128 = vpop.xlane.xlu0 %127
    %v129 = vrcp.pop 48.0
    %v130 = vmul.f32 %v125, %v129
    %v131 = vmul.f32 %v128, %v129
    %v132 = vsub.f32 %v120, %v130
    %v133 = vsub.f32 %v121, %v131
    %v134 = vmul.f32 %v132, %v132
    %v135 = vmul.f32 %v133, %v133
    %v136 = vsel %vm122, %v134, 0.0
    %137 = vadd.xlane.f32.xlu0 %v136
    %v138 = vpop.xlane.xlu0 %137
    %v139 = vsel %vm122, %v135, 0.0
    %140 = vadd.xlane.f32.xlu0 %v139
    %v141 = vpop.xlane.xlu0 %140
    %v142 = vmul.f32 %v138, %v129
    %v143 = vmul.f32 %v141, %v129
    %v144 = vadd.f32 %v142, 1e-05
    %v145 = vadd.f32 %v143, 1e-05
    %v146 = vrsqrt.pop %v144
    %v147 = vrsqrt.pop %v145
    %v148 = vmul.f32 %v132, %v146
    %v149 = vmul.f32 %v133, %v147
    %v150 = vpack.c.bf16 %v149, %v148
    %v151 = vld [vmem:[#allocation5] sm:$0xf]
    %v152 = vld [vmem:[#allocation5 + $0x4] sm:$0xf]
    %v153 = vld [vmem:[#allocation5 + $0x8] sm:$0xf]
    %v154 = vld [vmem:[#allocation5 + $0xc] sm:$0xf]
    %v155 = vld [vmem:[#allocation5 + $0x10] sm:$0xf]
    %v156 = vld [vmem:[#allocation5 + $0x14] sm:$0xf]
    %v157 = vld [vmem:[#allocation7] sm:$0x1]
    %v159 = vlaneseq
    %v160 = vshrl.u32 %v159, 7
    %v161 = vsub.s32 0, %v160
    %v162 = vrot.slane %v157, %v161
    %v170 = vunpack.c.l.b16 %v151
    %v171 = vunpack.c.l.b16 %v152
    %v172 = vunpack.c.l.b16 %v153
    %v173 = vunpack.c.l.b16 %v154
    %v174 = vunpack.c.l.b16 %v155
    %v175 = vunpack.c.l.b16 %v156
    %v176 = vpack.c.b16 %v171, %v170
    %v177 = vpack.c.b16 %v173, %v172
    %v178 = vpack.c.b16 %v175, %v174
    %v183 = vsel %vm122, %v150, 0
    %185 = vmatprep.subr.bf16.mxu0 0
    %186 = vmatpush1.bf16.msra.mxu0 %v176
    %187 = vmatprep.subr.bf16.mxu0 0
    %188 = vmatpush1.bf16.msra.mxu0 %v177
    %189 = vmatprep.subr.bf16.mxu0 0
    %190 = vmatpush1.bf16.msra.mxu0 %v178
    %191 = vmatprep.subr.bf16.mxu0 0
    %192 = vmatpush1.bf16.msra.mxu0 0
    %193 = vmatprep.subr.bf16.mxu0 0
    %194 = vmatpush1.bf16.msra.mxu0 0
    %195 = vmatprep.subr.bf16.mxu0 0
    %196 = vmatpush1.bf16.msra.mxu0 0
    %197 = vmatprep.subr.bf16.mxu0 0
    %198 = vmatpush1.bf16.msra.mxu0 0
    %199 = vmatprep.subr.bf16.mxu0 0
    %200 = vmatpush1.bf16.msra.mxu0 0
    %201 = vmatprep.subr.bf16.mxu0 0
    %202 = vmatpush1.bf16.msra.mxu0 0
    %203 = vmatprep.subr.bf16.mxu0 0
    %204 = vmatpush1.bf16.msra.mxu0 0
    %205 = vmatprep.subr.bf16.mxu0 0
    %206 = vmatpush1.bf16.msra.mxu0 0
    %207 = vmatprep.subr.bf16.mxu0 0
    %208 = vmatpush1.bf16.msra.mxu0 0
    %209 = vmatprep.subr.bf16.mxu0 0
    %210 = vmatpush1.bf16.msra.mxu0 0
    %211 = vmatprep.subr.bf16.mxu0 0
    %212 = vmatpush1.bf16.msra.mxu0 0
    %213 = vmatprep.subr.bf16.mxu0 0
    %214 = vmatpush1.bf16.msra.mxu0 0
    %215 = vmatprep.subr.bf16.mxu0 0
    %216 = vmatpush1.bf16.msra.mxu0 0
    %217 = vmatprep.mubr.bf16.mxu0 0
    %218 = vmatmul.mubr.bf16.gmra.mrb[0].mxu0 %v183
    %v219 = vpop.f32.mrb[0].mxu0
    %v220 = vadd.f32 %v162, %v219
    %v221 = vpop.f32.mrb[0].mxu0
    %v222 = vpop.f32.mrb[0].mxu0
    %v223 = vadd.f32 %v162, %v222
    %v224 = vpop.f32.mrb[0].mxu0
    %225 = vdwg.mxu0
    %v226 = vld [vmem:[#allocation8] sm:$0x1]
    %v227 = vld [vmem:[#allocation10] sm:$0x1]
    %vm228 = vcmask 261120
    %v229 = vsel %vm228, %v220, 0.0
    %230 = vadd.xlane.f32.xlu0 %v229
    %v231 = vpop.xlane.xlu0 %230
    %v232 = vsel %vm228, %v223, 0.0
    %233 = vadd.xlane.f32.xlu0 %v232
    %v234 = vpop.xlane.xlu0 %233
    %v235 = vrcp.pop 32.0
    %v236 = vmul.f32 %v231, %v235
    %v237 = vmul.f32 %v234, %v235
    %v238 = vsub.f32 %v220, %v236
    %v239 = vsub.f32 %v223, %v237
    %v240 = vmul.f32 %v238, %v238
    %v241 = vmul.f32 %v239, %v239
    %v242 = vsel %vm228, %v240, 0.0
    %243 = vadd.xlane.f32.xlu0 %v242
    %v244 = vpop.xlane.xlu0 %243
    %v245 = vsel %vm228, %v241, 0.0
    %246 = vadd.xlane.f32.xlu0 %v245
    %v247 = vpop.xlane.xlu0 %246
    %v248 = vmul.f32 %v244, %v235
    %v249 = vmul.f32 %v247, %v235
    %v250 = vadd.f32 %v248, 1e-05
    %v251 = vadd.f32 %v249, 1e-05
    %v252 = vrsqrt.pop %v250
    %v253 = vrsqrt.pop %v251
    %v254 = vmul.f32 %v238, %v252
    %v255 = vmul.f32 %v239, %v253
    %v257 = vlaneseq
    %v258 = vshrl.u32 %v257, 7
    %v259 = vsub.s32 0, %v258
    %v260 = vrot.slane %v226, %v259
    %v262 = vmul.f32 %v254, %v260
    %v263 = vmul.f32 %v255, %v260
    %v265 = vlaneseq
    %v266 = vshrl.u32 %v265, 7
    %v267 = vsub.s32 0, %v266
    %v268 = vrot.slane %v227, %v267
    %v270 = vadd.f32 %v262, %v268
    %v271 = vadd.f32 %v263, %v268
    %vm272 = vcmask 253952
    %273 = vst.msk [vmem:[#allocation14] sm:$0x1] %vm272, %v117
    %v274 = vadd.f32 %v270, %v118
    %v275 = vadd.f32 %v271, %v119
    %276 = vst.msk [vmem:[#allocation14 + $0x1] sm:$0xff] %vm228, %v274
    %277 = vst.msk [vmem:[#allocation14 + $0x9] sm:$0xff] %vm228, %v275
    %vm278 = vcmask 260096
    %279 = vst.msk [vmem:[#allocation14 + $0x11] sm:$0x7f] %vm278, 0.0
    %s280 = scalar_lea.vmem [#allocation2], 16
    %v281 = vld [vmem:[%s280] sm:$0xff]
    %v282 = vld [vmem:[%s280 + $0x8] sm:$0xff]
    %v283 = vsel %vm122, %v281, 0.0
    %284 = vadd.xlane.f32.xlu0 %v283
    %v285 = vpop.xlane.xlu0 %284
    %v286 = vsel %vm122, %v282, 0.0
    %287 = vadd.xlane.f32.xlu0 %v286
    %v288 = vpop.xlane.xlu0 %287
    %v289 = vmul.f32 %v285, %v129
    %v290 = vmul.f32 %v288, %v129
    %v291 = vsub.f32 %v281, %v289
    %v292 = vsub.f32 %v282, %v290
    %v293 = vmul.f32 %v291, %v291
    %v294 = vmul.f32 %v292, %v292
    %v295 = vsel %vm122, %v293, 0.0
    %296 = vadd.xlane.f32.xlu0 %v295
    %v297 = vpop.xlane.xlu0 %296
    %v298 = vsel %vm122, %v294, 0.0
    %299 = vadd.xlane.f32.xlu0 %v298
    %v300 = vpop.xlane.xlu0 %299
    %v301 = vmul.f32 %v297, %v129
    %v302 = vmul.f32 %v300, %v129
    %v303 = vadd.f32 %v301, 1e-05
    %v304 = vadd.f32 %v302, 1e-05
    %v305 = vrsqrt.pop %v303
    %v306 = vrsqrt.pop %v304
    %v307 = vmul.f32 %v291, %v305
    %v308 = vmul.f32 %v292, %v306
    %v309 = vpack.c.bf16 %v308, %v307
    %v310 = vld [vmem:[#allocation5] sm:$0xf]
    %v311 = vld [vmem:[#allocation5 + $0x4] sm:$0xf]
    %v312 = vld [vmem:[#allocation5 + $0x8] sm:$0xf]
    %v313 = vld [vmem:[#allocation5 + $0xc] sm:$0xf]
    %v314 = vld [vmem:[#allocation5 + $0x10] sm:$0xf]
    %v315 = vld [vmem:[#allocation5 + $0x14] sm:$0xf]
    %v316 = vld [vmem:[#allocation7] sm:$0x1]
    %v318 = vlaneseq
    %v319 = vshrl.u32 %v318, 7
    %v320 = vsub.s32 0, %v319
    %v321 = vrot.slane %v316, %v320
    %v329 = vunpack.c.l.b16 %v310
    %v330 = vunpack.c.l.b16 %v311
    %v331 = vunpack.c.l.b16 %v312
    %v332 = vunpack.c.l.b16 %v313
    %v333 = vunpack.c.l.b16 %v314
    %v334 = vunpack.c.l.b16 %v315
    %v335 = vpack.c.b16 %v330, %v329
    %v336 = vpack.c.b16 %v332, %v331
    %v337 = vpack.c.b16 %v334, %v333
    %v342 = vsel %vm122, %v309, 0
    %344 = vmatprep.subr.bf16.mxu0 0
    %345 = vmatpush1.bf16.msra.mxu0 %v335
    %346 = vmatprep.subr.bf16.mxu0 0
    %347 = vmatpush1.bf16.msra.mxu0 %v336
    %348 = vmatprep.subr.bf16.mxu0 0
    %349 = vmatpush1.bf16.msra.mxu0 %v337
    %350 = vmatprep.subr.bf16.mxu0 0
    %351 = vmatpush1.bf16.msra.mxu0 0
    %352 = vmatprep.subr.bf16.mxu0 0
    %353 = vmatpush1.bf16.msra.mxu0 0
    %354 = vmatprep.subr.bf16.mxu0 0
    %355 = vmatpush1.bf16.msra.mxu0 0
    %356 = vmatprep.subr.bf16.mxu0 0
    %357 = vmatpush1.bf16.msra.mxu0 0
    %358 = vmatprep.subr.bf16.mxu0 0
    %359 = vmatpush1.bf16.msra.mxu0 0
    %360 = vmatprep.subr.bf16.mxu0 0
    %361 = vmatpush1.bf16.msra.mxu0 0
    %362 = vmatprep.subr.bf16.mxu0 0
    %363 = vmatpush1.bf16.msra.mxu0 0
    %364 = vmatprep.subr.bf16.mxu0 0
    %365 = vmatpush1.bf16.msra.mxu0 0
    %366 = vmatprep.subr.bf16.mxu0 0
    %367 = vmatpush1.bf16.msra.mxu0 0
    %368 = vmatprep.subr.bf16.mxu0 0
    %369 = vmatpush1.bf16.msra.mxu0 0
    %370 = vmatprep.subr.bf16.mxu0 0
    %371 = vmatpush1.bf16.msra.mxu0 0
    %372 = vmatprep.subr.bf16.mxu0 0
    %373 = vmatpush1.bf16.msra.mxu0 0
    %374 = vmatprep.subr.bf16.mxu0 0
    %375 = vmatpush1.bf16.msra.mxu0 0
    %376 = vmatprep.mubr.bf16.mxu0 0
    %377 = vmatmul.mubr.bf16.gmra.mrb[0].mxu0 %v342
    %v378 = vpop.f32.mrb[0].mxu0
    %v379 = vadd.f32 %v321, %v378
    %v380 = vpop.f32.mrb[0].mxu0
    %v381 = vpop.f32.mrb[0].mxu0
    %v382 = vadd.f32 %v321, %v381
    %v383 = vpop.f32.mrb[0].mxu0
    %384 = vdwg.mxu0
    %v385 = vld [vmem:[#allocation8] sm:$0x1]
    %v386 = vld [vmem:[#allocation10] sm:$0x1]
    %v387 = vsel %vm228, %v379, 0.0
    %388 = vadd.xlane.f32.xlu0 %v387
    %v389 = vpop.xlane.xlu0 %388
    %v390 = vsel %vm228, %v382, 0.0
    %391 = vadd.xlane.f32.xlu0 %v390
    %v392 = vpop.xlane.xlu0 %391
    %v393 = vmul.f32 %v389, %v235
    %v394 = vmul.f32 %v392, %v235
    %v395 = vsub.f32 %v379, %v393
    %v396 = vsub.f32 %v382, %v394
    %v397 = vmul.f32 %v395, %v395
    %v398 = vmul.f32 %v396, %v396
    %v399 = vsel %vm228, %v397, 0.0
    %400 = vadd.xlane.f32.xlu0 %v399
    %v401 = vpop.xlane.xlu0 %400
    %v402 = vsel %vm228, %v398, 0.0
    %403 = vadd.xlane.f32.xlu0 %v402
    %v404 = vpop.xlane.xlu0 %403
    %v405 = vmul.f32 %v401, %v235
    %v406 = vmul.f32 %v404, %v235
    %v407 = vadd.f32 %v405, 1e-05
    %v408 = vadd.f32 %v406, 1e-05
    %v409 = vrsqrt.pop %v407
    %v410 = vrsqrt.pop %v408
    %v411 = vmul.f32 %v395, %v409
    %v412 = vmul.f32 %v396, %v410
    %v414 = vlaneseq
    %v415 = vshrl.u32 %v414, 7
    %v416 = vsub.s32 0, %v415
    %v417 = vrot.slane %v385, %v416
    %v419 = vmul.f32 %v411, %v417
    %v420 = vmul.f32 %v412, %v417
    %v422 = vlaneseq
    %v423 = vshrl.u32 %v422, 7
    %v424 = vsub.s32 0, %v423
    %v425 = vrot.slane %v386, %v424
    %v427 = vadd.f32 %v419, %v425
    %v428 = vadd.f32 %v420, %v425
    %s429 = scalar_lea.vmem [#allocation14], 24
    %430 = vst.msk [vmem:[%s429] sm:$0x1] %vm272, %v117
    %v431 = vadd.f32 %v427, %v118
    %v432 = vadd.f32 %v428, %v119
    %433 = vst.msk [vmem:[%s429 + $0x1] sm:$0xff] %vm228, %v431
    %434 = vst.msk [vmem:[%s429 + $0x9] sm:$0xff] %vm228, %v432
    %435 = vst.msk [vmem:[%s429 + $0x11] sm:$0x7f] %vm278, 0.0
    // Predicated region
    $region58: #{vit_encoder_forward.2} parent=1 // pred_check
      _
    $region59: #{vit_encoder_forward.2} parent=1 // pred_check_branch
      %437 = sbr.rel (0) target = $region61
    $region60: #{vit_encoder_forward.2} parent=1 // pred_region
      %s439 = ssub.s32 768, 768
      %440 = vsyncadd [#allocation4], %s439
      %s441 = sshll.u32 [#allocation14], 4
      %s442 = int_to_ptr.vmem [resolvable:$true] %s441
      %447 = dma.vmem_to_hbm [thread:$0]  %s442, 768, %s7, [#allocation4], 128, 128, 8
    $region61: #{vit_encoder_forward.2} parent=1 // pred_fallthru
      _
    // Predicated region
    $region62: #{vit_encoder_forward.2} parent=1 // pred_check
      _
    $region63: #{vit_encoder_forward.2} parent=1 // pred_check_branch
      %449 = sbr.rel (0) target = $region65
    $region64: #{vit_encoder_forward.2} parent=1 // pred_region
      %450 = dma.done [#allocation4], 768
    $region65: #{vit_encoder_forward.2} parent=1 // pred_fallthru
      _
    %451 = vsyncpa [#allocation3], 1
    %452 = vsyncpa [#allocation6], 1
    %453 = vsyncpa [#allocation9], 1
    %454 = vsyncpa [#allocation12], 1
    %455 = vsyncpa [#allocation4], 1

// kernel: vit_encoder_forward.3
$region0: #{vit_encoder_forward.3}
  #allocation0 [shape = 'u32[]', space=smem, size = 0x4, offset = 0x4, fixed_abs, tag = 'smem constant byte address 0x4 - core index']
  #allocation1 [shape = 'u32[144,128]{1,0:T(1,128)}', space=vmem, size = 0x12000, scoped, tag = 'internal scratch']
  #allocation2 [shape = 'f32[48,32]{1,0:T(8,128)}', space=vmem, size = 0x6000, scoped, tag = 'scratch operand']
  %s0 = inlined_call_operand.hbm [shape: f32[2,24,32], index: 0, kind: input, shape index: {}]
  %s1 = inlined_call_operand.hbm [shape: bf16[2,32,96], index: 1, kind: input, shape index: {}]
  %s2 = inlined_call_operand.hbm [shape: f32[2,1,96], index: 2, kind: input, shape index: {}]
  %s3 = inlined_call_operand.hbm [shape: bf16[2,32,32], index: 3, kind: input, shape index: {}]
  %s4 = inlined_call_operand.hbm [shape: f32[2,1,32], index: 4, kind: input, shape index: {}]
  %s5 = inlined_call_operand.hbm [shape: bf16[2,32,64], index: 5, kind: input, shape index: {}]
  %s6 = inlined_call_operand.hbm [shape: f32[2,1,64], index: 6, kind: input, shape index: {}]
  %s7 = inlined_call_operand.hbm [shape: bf16[2,64,32], index: 7, kind: input, shape index: {}]
  %s8 = inlined_call_operand.hbm [shape: f32[2,1,32], index: 8, kind: input, shape index: {}]
  %s9 = inlined_call_operand.hbm [shape: f32[1,32], index: 9, kind: input, shape index: {}]
  %s10 = inlined_call_operand.hbm [shape: f32[1,32], index: 10, kind: input, shape index: {}]
  %s11 = inlined_call_operand.hbm [shape: f32[2,24,32], index: 11, kind: output, shape index: {}]
  %s12 = sld [smem:[#allocation0]]
  $region129: #{vit_encoder_forward.3} parent=0
    _
  %s14 = ssub.s32 1, %s12
  %s15 = scalar_select 0, %s14, %s12
  $region1: #{vit_encoder_forward.3} parent=0
    #allocation3 [shape = 'u8[24576]{0}', space=vmem, size = 0x6000, scoped, tag = 'input window, operand 0, single buffered']
    #allocation4 [shape = 's32[2]{0}', space=sflag, size = 0x8, scoped, tag = 'scoped memory for vit_encoder_forward.3']
    #allocation5 [shape = 's32[2]{0}', space=sflag, size = 0x8, scoped, tag = 'scoped memory for vit_encoder_forward.3']
    #allocation6 [shape = 'u8[16384]{0}', space=vmem, size = 0x4000, scoped, tag = 'input window, operand 1']
    #allocation7 [shape = 's32[2]{0}', space=sflag, size = 0x8, scoped, tag = 'scoped memory for vit_encoder_forward.3']
    #allocation8 [shape = 'u8[1024]{0}', space=vmem, size = 0x400, scoped, tag = 'input window, operand 2']
    #allocation9 [shape = 'u8[16384]{0}', space=vmem, size = 0x4000, scoped, tag = 'input window, operand 3']
    #allocation10 [shape = 's32[2]{0}', space=sflag, size = 0x8, scoped, tag = 'scoped memory for vit_encoder_forward.3']
    #allocation11 [shape = 'u8[1024]{0}', space=vmem, size = 0x400, scoped, tag = 'input window, operand 4']
    #allocation12 [shape = 'u8[16384]{0}', space=vmem, size = 0x4000, scoped, tag = 'input window, operand 5']
    #allocation13 [shape = 's32[2]{0}', space=sflag, size = 0x8, scoped, tag = 'scoped memory for vit_encoder_forward.3']
    #allocation14 [shape = 'u8[1024]{0}', space=vmem, size = 0x400, scoped, tag = 'input window, operand 6']
    #allocation15 [shape = 'u8[32768]{0}', space=vmem, size = 0x8000, scoped, tag = 'input window, operand 7']
    #allocation16 [shape = 's32[2]{0}', space=sflag, size = 0x8, scoped, tag = 'scoped memory for vit_encoder_forward.3']
    #allocation17 [shape = 'u8[1024]{0}', space=vmem, size = 0x400, scoped, tag = 'input window, operand 8']
    #allocation18 [shape = 'u8[512]{0}', space=vmem, size = 0x400, scoped, tag = 'input window, operand 9, single buffered']
    #allocation19 [shape = 's32[1]{0}', space=sflag, size = 0x4, scoped, tag = 'scoped memory for vit_encoder_forward.3']
    #allocation20 [shape = 'u8[512]{0}', space=vmem, size = 0x400, scoped, tag = 'input window, operand 10, single buffered']
    #allocation21 [shape = 'u8[24576]{0}', space=vmem, size = 0x6000, scoped, tag = 'output window, operand 0, single buffered']
    %16 = vsyncpa [#allocation4], 0
    %17 = vsyncpa [#allocation7], 0
    %s18 = scalar_lea.sflag [#allocation7], 1
    %19 = vsyncpa %s18, 0
    %20 = vsyncpa [#allocation10], 0
    %s21 = scalar_lea.sflag [#allocation10], 1
    %22 = vsyncpa %s21, 0
    %23 = vsyncpa [#allocation13], 0
    %s24 = scalar_lea.sflag [#allocation13], 1
    %25 = vsyncpa %s24, 0
    %26 = vsyncpa [#allocation16], 0
    %s27 = scalar_lea.sflag [#allocation16], 1
    %28 = vsyncpa %s27, 0
    %29 = vsyncpa [#allocation19], 0
    %30 = vsyncpa [#allocation5], 0
    loop: start=0, step=1, limit=4
    $region2: #{vit_encoder_forward.3} parent=1 // loop_pre_header
      _
    $region3: #{vit_encoder_forward.3} parent=1 // loop_header
      %s32 = sphi 0, %s36
      %p33 = scmp.ge.s32.totalorder %s32, 4
      %s39 = sphi 0, %s51
      %s40 = sphi 0, %s47
      %s41 = sphi 0, %s39
      %s42 = sphi 0, %s40
      %s43 = sphi 0, %s41
      %s44 = sphi 0, %s42
      %s54 = sphi 0, %s56
      %s57 = sphi 0, %s54
      %s58 = sphi 0, %s57
      %s74 = sphi 0, %s58
      %s80 = sphi 0, %s82
      %s83 = sphi 0, %s80
      %s84 = sphi 0, %s83
      %s100 = sphi 0, %s84
      %s106 = sphi 0, %s108
      %s109 = sphi 0, %s106
      %s110 = sphi 0, %s109
      %s126 = sphi 0, %s110
      %s132 = sphi 0, %s134
      %s135 = sphi 0, %s132
      %s136 = sphi 0, %s135
      %s152 = sphi 0, %s136
      %s158 = sphi 0, %s160
      %s161 = sphi 0, %s158
      %s162 = sphi 0, %s161
      %s178 = sphi 0, %s162
      %s184 = sphi 0, %s186
      %s187 = sphi 0, %s184
      %s188 = sphi 0, %s187
      %s204 = sphi 0, %s188
      %s210 = sphi 0, %s212
      %s213 = sphi 0, %s210
      %s214 = sphi 0, %s213
      %s230 = sphi 0, %s214
      %s236 = sphi 0, %s238
      %s239 = sphi 0, %s236
      %s240 = sphi 0, %s239
      %s256 = sphi 0, %s240
      %s262 = sphi 0, %s264
      %s265 = sphi 0, %s262
      %s266 = sphi 0, %s265
      %s282 = sphi 0, %s266
      %s286 = sphi 0, %s286
      %s288 = sphi 0, %s286
      %s289 = sphi 0, %s288
      %s303 = sphi 0, %s289
      %s307 = sphi 0, %s307
      %s309 = sphi 0, %s307
      %s310 = sphi 0, %s309
      %s324 = sphi 0, %s310
      %s330 = sphi 0, %s332
      %s333 = sphi 0, %s330
      %s334 = sphi 0, %s333
      %s350 = sphi 0, %s334
    $region4: #{vit_encoder_forward.3} parent=1 // loop_header_branch
      %35 = sbr.rel (%p33) target = $region8
    $region5: #{vit_encoder_forward.3} parent=1 // loop_body
      %s37 = ssub.s32 %s32, 1
      %s38 = ssub.s32 %s32, 2
      %s45 = sadd.s32 1, %s40
      %p46 = scmp.ge.s32.totalorder %s45, 2
      %s47 = scalar_select %p46, 0, %s45
      %s48 = sadd.s32 1, %s39
      %s49 = scalar_select %p46, %s48, %s39
      %p50 = scmp.ge.s32.totalorder %s49, 1
      %s51 = scalar_select %p50, 0, %s49
      %s52 = ssub.s32 %s39, %s51
      %p53 = scmp.eq.s32.totalorder %s52, 0
      %s55 = sadd.s32 %s54, 1
      %s56 = scalar_select %p53, %s54, %s55
      %p59 = pneg %p53
      %p60 = scmp.eq.s32.totalorder %s32, 1
      %p61 = por %p59, %p60
      %p62 = scmp.ne.s32.totalorder %s54, %s57
      %p63 = scmp.eq.s32.totalorder %s32, 0
      %p64 = por %p62, %p63
      %p65 = scmp.ne.s32.totalorder %s54, %s57
      %p66 = scmp.eq.s32.totalorder %s37, 1
      %p67 = por %p65, %p66
      %p68 = scmp.ne.s32.totalorder %s57, %s58
      %p69 = scmp.eq.s32.totalorder %s37, 0
      %p70 = por %p68, %p69
      %p71 = scmp.ne.s32.totalorder %s57, %s58
      %p72 = scmp.eq.s32.totalorder %s38, 1
      %p73 = por %p71, %p72
      %p75 = scmp.ne.s32.totalorder %s58, %s74
      %p76 = scmp.eq.s32.totalorder %s38, 0
      %p77 = por %p75, %p76
      %s78 = ssub.s32 %s40, %s47
      %p79 = scmp.eq.s32.totalorder %s78, 0
      %s81 = sadd.s32 %s80, 1
      %s82 = scalar_select %p79, %s80, %s81
      %p85 = pneg %p79
      %p86 = scmp.eq.s32.totalorder %s32, 1
      %p87 = por %p85, %p86
      %p88 = scmp.ne.s32.totalorder %s80, %s83
      %p89 = scmp.eq.s32.totalorder %s32, 0
      %p90 = por %p88, %p89
      %p91 = scmp.ne.s32.totalorder %s80, %s83
      %p92 = scmp.eq.s32.totalorder %s37, 1
      %p93 = por %p91, %p92
      %p94 = scmp.ne.s32.totalorder %s83, %s84
      %p95 = scmp.eq.s32.totalorder %s37, 0
      %p96 = por %p94, %p95
      %p97 = scmp.ne.s32.totalorder %s83, %s84
      %p98 = scmp.eq.s32.totalorder %s38, 1
      %p99 = por %p97, %p98
      %p101 = scmp.ne.s32.totalorder %s84, %s100
      %p102 = scmp.eq.s32.totalorder %s38, 0
      %p103 = por %p101, %p102
      %s104 = ssub.s32 %s40, %s47
      %p105 = scmp.eq.s32.totalorder %s104, 0
      %s107 = sadd.s32 %s106, 1
      %s108 = scalar_select %p105, %s106, %s107
      %p111 = pneg %p105
      %p112 = scmp.eq.s32.totalorder %s32, 1
      %p113 = por %p111, %p112
      %p114 = scmp.ne.s32.totalorder %s106, %s109
      %p115 = scmp.eq.s32.totalorder %s32, 0
      %p116 = por %p114, %p115
      %p117 = scmp.ne.s32.totalorder %s106, %s109
      %p118 = scmp.eq.s32.totalorder %s37, 1
      %p119 = por %p117, %p118
      %p120 = scmp.ne.s32.totalorder %s109, %s110
      %p121 = scmp.eq.s32.totalorder %s37, 0
      %p122 = por %p120, %p121
      %p123 = scmp.ne.s32.totalorder %s109, %s110
      %p124 = scmp.eq.s32.totalorder %s38, 1
      %p125 = por %p123, %p124
      %p127 = scmp.ne.s32.totalorder %s110, %s126
      %p128 = scmp.eq.s32.totalorder %s38, 0
      %p129 = por %p127, %p128
      %s130 = ssub.s32 %s40, %s47
      %p131 = scmp.eq.s32.totalorder %s130, 0
      %s133 = sadd.s32 %s132, 1
      %s134 = scalar_select %p131, %s132, %s133
      %p137 = pneg %p131
      %p138 = scmp.eq.s32.totalorder %s32, 1
      %p139 = por %p137, %p138
      %p140 = scmp.ne.s32.totalorder %s132, %s135
      %p141 = scmp.eq.s32.totalorder %s32, 0
      %p142 = por %p140, %p141
      %p143 = scmp.ne.s32.totalorder %s132, %s135
      %p144 = scmp.eq.s32.totalorder %s37, 1
      %p145 = por %p143, %p144
      %p146 = scmp.ne.s32.totalorder %s135, %s136
      %p147 = scmp.eq.s32.totalorder %s37, 0
      %p148 = por %p146, %p147
      %p149 = scmp.ne.s32.totalorder %s135, %s136
      %p150 = scmp.eq.s32.totalorder %s38, 1
      %p151 = por %p149, %p150
      %p153 = scmp.ne.s32.totalorder %s136, %s152
      %p154 = scmp.eq.s32.totalorder %s38, 0
      %p155 = por %p153, %p154
      %s156 = ssub.s32 %s40, %s47
      %p157 = scmp.eq.s32.totalorder %s156, 0
      %s159 = sadd.s32 %s158, 1
      %s160 = scalar_select %p157, %s158, %s159
      %p163 = pneg %p157
      %p164 = scmp.eq.s32.totalorder %s32, 1
      %p165 = por %p163, %p164
      %p166 = scmp.ne.s32.totalorder %s158, %s161
      %p167 = scmp.eq.s32.totalorder %s32, 0
      %p168 = por %p166, %p167
      %p169 = scmp.ne.s32.totalorder %s158, %s161
      %p170 = scmp.eq.s32.totalorder %s37, 1
      %p171 = por %p169, %p170
      %p172 = scmp.ne.s32.totalorder %s161, %s162
      %p173 = scmp.eq.s32.totalorder %s37, 0
      %p174 = por %p172, %p173
      %p175 = scmp.ne.s32.totalorder %s161, %s162
      %p176 = scmp.eq.s32.totalorder %s38, 1
      %p177 = por %p175, %p176
      %p179 = scmp.ne.s32.totalorder %s162, %s178
      %p180 = scmp.eq.s32.totalorder %s38, 0
      %p181 = por %p179, %p180
      %s182 = ssub.s32 %s40, %s47
      %p183 = scmp.eq.s32.totalorder %s182, 0
      %s185 = sadd.s32 %s184, 1
      %s186 = scalar_select %p183, %s184, %s185
      %p189 = pneg %p183
      %p190 = scmp.eq.s32.totalorder %s32, 1
      %p191 = por %p189, %p190
      %p192 = scmp.ne.s32.totalorder %s184, %s187
      %p193 = scmp.eq.s32.totalorder %s32, 0
      %p194 = por %p192, %p193
      %p195 = scmp.ne.s32.totalorder %s184, %s187
      %p196 = scmp.eq.s32.totalorder %s37, 1
      %p197 = por %p195, %p196
      %p198 = scmp.ne.s32.totalorder %s187, %s188
      %p199 = scmp.eq.s32.totalorder %s37, 0
      %p200 = por %p198, %p199
      %p201 = scmp.ne.s32.totalorder %s187, %s188
      %p202 = scmp.eq.s32.totalorder %s38, 1
      %p203 = por %p201, %p202
      %p205 = scmp.ne.s32.totalorder %s188, %s204
      %p206 = scmp.eq.s32.totalorder %s38, 0
      %p207 = por %p205, %p206
      %s208 = ssub.s32 %s40, %s47
      %p209 = scmp.eq.s32.totalorder %s208, 0
      %s211 = sadd.s32 %s210, 1
      %s212 = scalar_select %p209, %s210, %s211
      %p215 = pneg %p209
      %p216 = scmp.eq.s32.totalorder %s32, 1
      %p217 = por %p215, %p216
      %p218 = scmp.ne.s32.totalorder %s210, %s213
      %p219 = scmp.eq.s32.totalorder %s32, 0
      %p220 = por %p218, %p219
      %p221 = scmp.ne.s32.totalorder %s210, %s213
      %p222 = scmp.eq.s32.totalorder %s37, 1
      %p223 = por %p221, %p222
      %p224 = scmp.ne.s32.totalorder %s213, %s214
      %p225 = scmp.eq.s32.totalorder %s37, 0
      %p226 = por %p224, %p225
      %p227 = scmp.ne.s32.totalorder %s213, %s214
      %p228 = scmp.eq.s32.totalorder %s38, 1
      %p229 = por %p227, %p228
      %p231 = scmp.ne.s32.totalorder %s214, %s230
      %p232 = scmp.eq.s32.totalorder %s38, 0
      %p233 = por %p231, %p232
      %s234 = ssub.s32 %s40, %s47
      %p235 = scmp.eq.s32.totalorder %s234, 0
      %s237 = sadd.s32 %s236, 1
      %s238 = scalar_select %p235, %s236, %s237
      %p241 = pneg %p235
      %p242 = scmp.eq.s32.totalorder %s32, 1
      %p243 = por %p241, %p242
      %p244 = scmp.ne.s32.totalorder %s236, %s239
      %p245 = scmp.eq.s32.totalorder %s32, 0
      %p246 = por %p244, %p245
      %p247 = scmp.ne.s32.totalorder %s236, %s239
      %p248 = scmp.eq.s32.totalorder %s37, 1
      %p249 = por %p247, %p248
      %p250 = scmp.ne.s32.totalorder %s239, %s240
      %p251 = scmp.eq.s32.totalorder %s37, 0
      %p252 = por %p250, %p251
      %p253 = scmp.ne.s32.totalorder %s239, %s240
      %p254 = scmp.eq.s32.totalorder %s38, 1
      %p255 = por %p253, %p254
      %p257 = scmp.ne.s32.totalorder %s240, %s256
      %p258 = scmp.eq.s32.totalorder %s38, 0
      %p259 = por %p257, %p258
      %s260 = ssub.s32 %s40, %s47
      %p261 = scmp.eq.s32.totalorder %s260, 0
      %s263 = sadd.s32 %s262, 1
      %s264 = scalar_select %p261, %s262, %s263
      %p267 = pneg %p261
      %p268 = scmp.eq.s32.totalorder %s32, 1
      %p269 = por %p267, %p268
      %p270 = scmp.ne.s32.totalorder %s262, %s265
      %p271 = scmp.eq.s32.totalorder %s32, 0
      %p272 = por %p270, %p271
      %p273 = scmp.ne.s32.totalorder %s262, %s265
      %p274 = scmp.eq.s32.totalorder %s37, 1
      %p275 = por %p273, %p274
      %p276 = scmp.ne.s32.totalorder %s265, %s266
      %p277 = scmp.eq.s32.totalorder %s37, 0
      %p278 = por %p276, %p277
      %p279 = scmp.ne.s32.totalorder %s265, %s266
      %p280 = scmp.eq.s32.totalorder %s38, 1
      %p281 = por %p279, %p280
      %p283 = scmp.ne.s32.totalorder %s266, %s282
      %p284 = scmp.eq.s32.totalorder %s38, 0
      %p285 = por %p283, %p284
      %s287 = sadd.s32 %s286, 1
      %p290 = scmp.eq.s32.totalorder %s32, 1
      %p291 = scmp.ne.s32.totalorder %s286, %s288
      %p292 = scmp.eq.s32.totalorder %s32, 0
      %p293 = por %p291, %p292
      %p294 = scmp.ne.s32.totalorder %s286, %s288
      %p295 = scmp.eq.s32.totalorder %s37, 1
      %p296 = por %p294, %p295
      %p297 = scmp.ne.s32.totalorder %s288, %s289
      %p298 = scmp.eq.s32.totalorder %s37, 0
      %p299 = por %p297, %p298
      %p300 = scmp.ne.s32.totalorder %s288, %s289
      %p301 = scmp.eq.s32.totalorder %s38, 1
      %p302 = por %p300, %p301
      %p304 = scmp.ne.s32.totalorder %s289, %s303
      %p305 = scmp.eq.s32.totalorder %s38, 0
      %p306 = por %p304, %p305
      %s308 = sadd.s32 %s307, 1
      %p311 = scmp.eq.s32.totalorder %s32, 1
      %p312 = scmp.ne.s32.totalorder %s307, %s309
      %p313 = scmp.eq.s32.totalorder %s32, 0
      %p314 = por %p312, %p313
      %p315 = scmp.ne.s32.totalorder %s307, %s309
      %p316 = scmp.eq.s32.totalorder %s37, 1
      %p317 = por %p315, %p316
      %p318 = scmp.ne.s32.totalorder %s309, %s310
      %p319 = scmp.eq.s32.totalorder %s37, 0
      %p320 = por %p318, %p319
      %p321 = scmp.ne.s32.totalorder %s309, %s310
      %p322 = scmp.eq.s32.totalorder %s38, 1
      %p323 = por %p321, %p322
      %p325 = scmp.ne.s32.totalorder %s310, %s324
      %p326 = scmp.eq.s32.totalorder %s38, 0
      %p327 = por %p325, %p326
      %s328 = ssub.s32 %s39, %s51
      %p329 = scmp.eq.s32.totalorder %s328, 0
      %s331 = sadd.s32 %s330, 1
      %s332 = scalar_select %p329, %s330, %s331
      %p335 = pneg %p329
      %p336 = scmp.eq.s32.totalorder %s32, 1
      %p337 = por %p335, %p336
      %p338 = scmp.ne.s32.totalorder %s330, %s333
      %p339 = scmp.eq.s32.totalorder %s32, 0
      %p340 = por %p338, %p339
      %p341 = scmp.ne.s32.totalorder %s330, %s333
      %p342 = scmp.eq.s32.totalorder %s37, 1
      %p343 = por %p341, %p342
      %p344 = scmp.ne.s32.totalorder %s333, %s334
      %p345 = scmp.eq.s32.totalorder %s37, 0
      %p346 = por %p344, %p345
      %p347 = scmp.ne.s32.totalorder %s333, %s334
      %p348 = scmp.eq.s32.totalorder %s38, 1
      %p349 = por %p347, %p348
      %p351 = scmp.ne.s32.totalorder %s334, %s350
      %p352 = scmp.eq.s32.totalorder %s38, 0
      %p353 = por %p351, %p352
      %p354 = scmp.le.s32.totalorder 1, %s32
      %p355 = scmp.lt.s32.totalorder %s32, 3
      %p356 = pnand %p354, %p355
      %p357 = pneg %p356
      // Predicated region
      $region9: #{vit_encoder_forward.3} parent=5 // pred_check
        _
      $region10: #{vit_encoder_forward.3} parent=5 // pred_check_branch
        %359 = sbr.rel (%p356) target = $region12
      $region11: #{vit_encoder_forward.3} parent=5 // pred_region
        %s360 = ssub.s32 %s32, 1
        // Predicated region
        $region13: #{vit_encoder_forward.3} parent=11 // pred_check
          %p361 = pneg %p70
        $region14: #{vit_encoder_forward.3} parent=11 // pred_check_branch
          %363 = sbr.rel (%p361) target = $region16
        $region15: #{vit_encoder_forward.3} parent=11 // pred_region
          %s364 = smul.u32 2, %s41
          %s366 = ssub.s32 768, 768
          %367 = vsyncadd [#allocation4], %s366
          %s368 = smul.addr %s364, 3
          %s369 = smul.addr %s368, 128
          %s370 = scalar_lea.hbm %s0, %s369
          %s371 = sshll.u32 [#allocation3], 4
          %s372 = int_to_ptr.vmem [resolvable:$true] %s371
          %377 = dma.hbm_to_vmem [thread:$0]  %s370, 768, %s372, [#allocation4], 128, 128, 8
        $region16: #{vit_encoder_forward.3} parent=11 // pred_fallthru
          _
        // Predicated region
        $region17: #{vit_encoder_forward.3} parent=11 // pred_check
          %p378 = pneg %p299
        $region18: #{vit_encoder_forward.3} parent=11 // pred_check_branch
          %380 = sbr.rel (%p378) target = $region20
        $region19: #{vit_encoder_forward.3} parent=11 // pred_region
          %s382 = ssub.s32 16, 16
          %383 = vsyncadd [#allocation19], %s382
          %s385 = sshll.u32 [#allocation18], 4
          %s386 = int_to_ptr.vmem [resolvable:$true] %s385
          %388 = dma.hbm_to_vmem [thread:$0]  %s9, 16, %s386, [#allocation19]
        $region20: #{vit_encoder_forward.3} parent=11 // pred_fallthru
          _
        // Predicated region
        $region21: #{vit_encoder_forward.3} parent=11 // pred_check
          %p389 = pneg %p320
        $region22: #{vit_encoder_forward.3} parent=11 // pred_check_branch
          %391 = sbr.rel (%p389) target = $region24
        $region23: #{vit_encoder_forward.3} parent=11 // pred_region
          %s393 = ssub.s32 16, 16
          %394 = vsyncadd [#allocation19], %s393
          %s396 = sshll.u32 [#allocation20], 4
          %s397 = int_to_ptr.vmem [resolvable:$true] %s396
          %399 = dma.hbm_to_vmem [thread:$0]  %s10, 16, %s397, [#allocation19]
        $region24: #{vit_encoder_forward.3} parent=11 // pred_fallthru
          _
      $region12: #{vit_encoder_forward.3} parent=5 // pred_fallthru
        _
      %p400 = scmp.lt.s32.totalorder %s32, 2
      // Predicated region
      $region25: #{vit_encoder_forward.3} parent=5 // pred_check
        %p401 = pneg %p400
      $region26: #{vit_encoder_forward.3} parent=5 // pred_check_branch
        %403 = sbr.rel (%p401) target = $region28
      $region27: #{vit_encoder_forward.3} parent=5 // pred_region
        // Predicated region
        $region29: #{vit_encoder_forward.3} parent=27 // pred_check
          %p404 = pneg %p90
        $region30: #{vit_encoder_forward.3} parent=27 // pred_check_branch
          %406 = sbr.rel (%p404) target = $region32
        $region31: #{vit_encoder_forward.3} parent=27 // pred_region
          %s407 = sand.u32 %s32, 1
          %s408 = scalar_lea.sflag [#allocation7], %s407
          %s409 = sand.u32 %s80, 1
          %s410 = smul.addr %s409, 16
          %s411 = scalar_lea.vmem [#allocation6], %s410
          %s413 = ssub.s32 256, 256
          %414 = vsyncadd %s408, %s413
          %s415 = smul.addr %s40, 4
          %s416 = smul.addr %s415, 64
          %s417 = scalar_lea.hbm %s1, %s416
          %s418 = sshll.u32 %s411, 4
          %s419 = int_to_ptr.vmem [resolvable:$true] %s418
          %424 = dma.hbm_to_vmem [thread:$0]  %s417, 256, %s419, %s408, 64, 64, 4
        $region32: #{vit_encoder_forward.3} parent=27 // pred_fallthru
          _
        // Predicated region
        $region33: #{vit_encoder_forward.3} parent=27 // pred_check
          %p425 = pneg %p116
        $region34: #{vit_encoder_forward.3} parent=27 // pred_check_branch
          %427 = sbr.rel (%p425) target = $region36
        $region35: #{vit_encoder_forward.3} parent=27 // pred_region
          %s428 = sand.u32 %s32, 1
          %s429 = scalar_lea.sflag [#allocation7], %s428
          %s430 = sand.u32 %s106, 1
          %s431 = scalar_lea.vmem [#allocation8], %s430
          %s433 = ssub.s32 16, 16
          %434 = vsyncadd %s429, %s433
          %s435 = smul.addr %s40, 16
          %s436 = scalar_lea.hbm %s2, %s435
          %s438 = sshll.u32 %s431, 4
          %s439 = int_to_ptr.vmem [resolvable:$true] %s438
          %441 = dma.hbm_to_vmem [thread:$0]  %s436, 16, %s439, %s429
        $region36: #{vit_encoder_forward.3} parent=27 // pred_fallthru
          _
        // Predicated region
        $region37: #{vit_encoder_forward.3} parent=27 // pred_check
          %p442 = pneg %p142
        $region38: #{vit_encoder_forward.3} parent=27 // pred_check_branch
          %444 = sbr.rel (%p442) target = $region40
        $region39: #{vit_encoder_forward.3} parent=27 // pred_region
          %s445 = sand.u32 %s32, 1
          %s446 = scalar_lea.sflag [#allocation10], %s445
          %s447 = sand.u32 %s132, 1
          %s448 = smul.addr %s447, 16
          %s449 = scalar_lea.vmem [#allocation9], %s448
          %s451 = ssub.s32 256, 256
          %452 = vsyncadd %s446, %s451
          %s453 = smul.addr %s40, 4
          %s454 = smul.addr %s453, 64
          %s455 = scalar_lea.hbm %s3, %s454
          %s456 = sshll.u32 %s449, 4
          %s457 = int_to_ptr.vmem [resolvable:$true] %s456
          %462 = dma.hbm_to_vmem [thread:$0]  %s455, 256, %s457, %s446, 64, 64, 4
        $region40: #{vit_encoder_forward.3} parent=27 // pred_fallthru
          _
        // Predicated region
        $region41: #{vit_encoder_forward.3} parent=27 // pred_check
          %p463 = pneg %p168
        $region42: #{vit_encoder_forward.3} parent=27 // pred_check_branch
          %465 = sbr.rel (%p463) target = $region44
        $region43: #{vit_encoder_forward.3} parent=27 // pred_region
          %s466 = sand.u32 %s32, 1
          %s467 = scalar_lea.sflag [#allocation10], %s466
          %s468 = sand.u32 %s158, 1
          %s469 = scalar_lea.vmem [#allocation11], %s468
          %s471 = ssub.s32 16, 16
          %472 = vsyncadd %s467, %s471
          %s473 = smul.addr %s40, 16
          %s474 = scalar_lea.hbm %s4, %s473
          %s476 = sshll.u32 %s469, 4
          %s477 = int_to_ptr.vmem [resolvable:$true] %s476
          %479 = dma.hbm_to_vmem [thread:$0]  %s474, 16, %s477, %s467
        $region44: #{vit_encoder_forward.3} parent=27 // pred_fallthru
          _
        // Predicated region
        $region45: #{vit_encoder_forward.3} parent=27 // pred_check
          %p480 = pneg %p194
        $region46: #{vit_encoder_forward.3} parent=27 // pred_check_branch
          %482 = sbr.rel (%p480) target = $region48
        $region47: #{vit_encoder_forward.3} parent=27 // pred_region
          %s483 = sand.u32 %s32, 1
          %s484 = scalar_lea.sflag [#allocation13], %s483
          %s485 = sand.u32 %s184, 1
          %s486 = smul.addr %s485, 16
          %s487 = scalar_lea.vmem [#allocation12], %s486
          %s489 = ssub.s32 256, 256
          %490 = vsyncadd %s484, %s489
          %s491 = smul.addr %s40, 4
          %s492 = smul.addr %s491, 64
          %s493 = scalar_lea.hbm %s5, %s492
          %s494 = sshll.u32 %s487, 4
          %s495 = int_to_ptr.vmem [resolvable:$true] %s494
          %500 = dma.hbm_to_vmem [thread:$0]  %s493, 256, %s495, %s484, 64, 64, 4
        $region48: #{vit_encoder_forward.3} parent=27 // pred_fallthru
          _
        // Predicated region
        $region49: #{vit_encoder_forward.3} parent=27 // pred_check
          %p501 = pneg %p220
        $region50: #{vit_encoder_forward.3} parent=27 // pred_check_branch
          %503 = sbr.rel (%p501) target = $region52
        $region51: #{vit_encoder_forward.3} parent=27 // pred_region
          %s504 = sand.u32 %s32, 1
          %s505 = scalar_lea.sflag [#allocation13], %s504
          %s506 = sand.u32 %s210, 1
          %s507 = scalar_lea.vmem [#allocation14], %s506
          %s509 = ssub.s32 16, 16
          %510 = vsyncadd %s505, %s509
          %s511 = smul.addr %s40, 16
          %s512 = scalar_lea.hbm %s6, %s511
          %s514 = sshll.u32 %s507, 4
          %s515 = int_to_ptr.vmem [resolvable:$true] %s514
          %517 = dma.hbm_to_vmem [thread:$0]  %s512, 16, %s515, %s505
        $region52: #{vit_encoder_forward.3} parent=27 // pred_fallthru
          _
        // Predicated region
        $region53: #{vit_encoder_forward.3} parent=27 // pred_check
          %p518 = pneg %p246
        $region54: #{vit_encoder_forward.3} parent=27 // pred_check_branch
          %520 = sbr.rel (%p518) target = $region56
        $region55: #{vit_encoder_forward.3} parent=27 // pred_region
          %s521 = sand.u32 %s32, 1
          %s522 = scalar_lea.sflag [#allocation16], %s521
          %s523 = sand.u32 %s236, 1
          %s524 = smul.addr %s523, 32
          %s525 = scalar_lea.vmem [#allocation15], %s524
          %s527 = ssub.s32 512, 512
          %528 = vsyncadd %s522, %s527
          %s529 = smul.addr %s40, 8
          %s530 = smul.addr %s529, 64
          %s531 = scalar_lea.hbm %s7, %s530
          %s532 = sshll.u32 %s525, 4
          %s533 = int_to_ptr.vmem [resolvable:$true] %s532
          %538 = dma.hbm_to_vmem [thread:$0]  %s531, 512, %s533, %s522, 64, 64, 4
        $region56: #{vit_encoder_forward.3} parent=27 // pred_fallthru
          _
        // Predicated region
        $region57: #{vit_encoder_forward.3} parent=27 // pred_check
          %p539 = pneg %p272
        $region58: #{vit_encoder_forward.3} parent=27 // pred_check_branch
          %541 = sbr.rel (%p539) target = $region60
        $region59: #{vit_encoder_forward.3} parent=27 // pred_region
          %s542 = sand.u32 %s32, 1
          %s543 = scalar_lea.sflag [#allocation16], %s542
          %s544 = sand.u32 %s262, 1
          %s545 = scalar_lea.vmem [#allocation17], %s544
          %s547 = ssub.s32 16, 16
          %548 = vsyncadd %s543, %s547
          %s549 = smul.addr %s40, 16
          %s550 = scalar_lea.hbm %s8, %s549
          %s552 = sshll.u32 %s545, 4
          %s553 = int_to_ptr.vmem [resolvable:$true] %s552
          %555 = dma.hbm_to_vmem [thread:$0]  %s550, 16, %s553, %s543
        $region60: #{vit_encoder_forward.3} parent=27 // pred_fallthru
          _
      $region28: #{vit_encoder_forward.3} parent=5 // pred_fallthru
        _
      %p556 = scmp.le.s32.totalorder 1, %s32
      %p557 = scmp.lt.s32.totalorder %s32, 3
      %p558 = pnand %p556, %p557
      %p559 = pneg %p558
      // Predicated region
      $region61: #{vit_encoder_forward.3} parent=5 // pred_check
        _
      $region62: #{vit_encoder_forward.3} parent=5 // pred_check_branch
        %561 = sbr.rel (%p558) target = $region64
      $region63: #{vit_encoder_forward.3} parent=5 // pred_region
        %s562 = ssub.s32 %s32, 1
        // Predicated region
        $region65: #{vit_encoder_forward.3} parent=63 // pred_check
          %p563 = pneg %p70
        $region66: #{vit_encoder_forward.3} parent=63 // pred_check_branch
          %565 = sbr.rel (%p563) target = $region68
        $region67: #{vit_encoder_forward.3} parent=63 // pred_region
          %566 = dma.done [#allocation4], 768
        $region68: #{vit_encoder_forward.3} parent=63 // pred_fallthru
          _
        %s567 = sand.u32 %s37, 1
        %s568 = scalar_lea.sflag [#allocation7], %s567
        %s569 = sand.u32 %s83, 1
        %s570 = smul.addr %s569, 16
        %s571 = scalar_lea.vmem [#allocation6], %s570
        // Predicated region
        $region69: #{vit_encoder_forward.3} parent=63 // pred_check
          %p572 = pneg %p96
        $region70: #{vit_encoder_forward.3} parent=63 // pred_check_branch
          %574 = sbr.rel (%p572) target = $region72
        $region71: #{vit_encoder_forward.3} parent=63 // pred_region
          %575 = dma.done %s568, 256
        $region72: #{vit_encoder_forward.3} parent=63 // pred_fallthru
          _
        %s576 = sand.u32 %s37, 1
        %s577 = scalar_lea.sflag [#allocation7], %s576
        %s578 = sand.u32 %s109, 1
        %s579 = scalar_lea.vmem [#allocation8], %s578
        // Predicated region
        $region73: #{vit_encoder_forward.3} parent=63 // pred_check
          %p580 = pneg %p122
        $region74: #{vit_encoder_forward.3} parent=63 // pred_check_branch
          %582 = sbr.rel (%p580) target = $region76
        $region75: #{vit_encoder_forward.3} parent=63 // pred_region
          %583 = dma.done %s577, 16
        $region76: #{vit_encoder_forward.3} parent=63 // pred_fallthru
          _
        %s584 = sand.u32 %s37, 1
        %s585 = scalar_lea.sflag [#allocation10], %s584
        %s586 = sand.u32 %s135, 1
        %s587 = smul.addr %s586, 16
        %s588 = scalar_lea.vmem [#allocation9], %s587
        // Predicated region
        $region77: #{vit_encoder_forward.3} parent=63 // pred_check
          %p589 = pneg %p148
        $region78: #{vit_encoder_forward.3} parent=63 // pred_check_branch
          %591 = sbr.rel (%p589) target = $region80
        $region79: #{vit_encoder_forward.3} parent=63 // pred_region
          %592 = dma.done %s585, 256
        $region80: #{vit_encoder_forward.3} parent=63 // pred_fallthru
          _
        %s593 = sand.u32 %s37, 1
        %s594 = scalar_lea.sflag [#allocation10], %s593
        %s595 = sand.u32 %s161, 1
        %s596 = scalar_lea.vmem [#allocation11], %s595
        // Predicated region
        $region81: #{vit_encoder_forward.3} parent=63 // pred_check
          %p597 = pneg %p174
        $region82: #{vit_encoder_forward.3} parent=63 // pred_check_branch
          %599 = sbr.rel (%p597) target = $region84
        $region83: #{vit_encoder_forward.3} parent=63 // pred_region
          %600 = dma.done %s594, 16
        $region84: #{vit_encoder_forward.3} parent=63 // pred_fallthru
          _
        %s601 = sand.u32 %s37, 1
        %s602 = scalar_lea.sflag [#allocation13], %s601
        %s603 = sand.u32 %s187, 1
        %s604 = smul.addr %s603, 16
        %s605 = scalar_lea.vmem [#allocation12], %s604
        // Predicated region
        $region85: #{vit_encoder_forward.3} parent=63 // pred_check
          %p606 = pneg %p200
        $region86: #{vit_encoder_forward.3} parent=63 // pred_check_branch
          %608 = sbr.rel (%p606) target = $region88
        $region87: #{vit_encoder_forward.3} parent=63 // pred_region
          %609 = dma.done %s602, 256
        $region88: #{vit_encoder_forward.3} parent=63 // pred_fallthru
          _
        %s610 = sand.u32 %s37, 1
        %s611 = scalar_lea.sflag [#allocation13], %s610
        %s612 = sand.u32 %s213, 1
        %s613 = scalar_lea.vmem [#allocation14], %s612
        // Predicated region
        $region89: #{vit_encoder_forward.3} parent=63 // pred_check
          %p614 = pneg %p226
        $region90: #{vit_encoder_forward.3} parent=63 // pred_check_branch
          %616 = sbr.rel (%p614) target = $region92
        $region91: #{vit_encoder_forward.3} parent=63 // pred_region
          %617 = dma.done %s611, 16
        $region92: #{vit_encoder_forward.3} parent=63 // pred_fallthru
          _
        %s618 = sand.u32 %s37, 1
        %s619 = scalar_lea.sflag [#allocation16], %s618
        %s620 = sand.u32 %s239, 1
        %s621 = smul.addr %s620, 32
        %s622 = scalar_lea.vmem [#allocation15], %s621
        // Predicated region
        $region93: #{vit_encoder_forward.3} parent=63 // pred_check
          %p623 = pneg %p252
        $region94: #{vit_encoder_forward.3} parent=63 // pred_check_branch
          %625 = sbr.rel (%p623) target = $region96
        $region95: #{vit_encoder_forward.3} parent=63 // pred_region
          %626 = dma.done %s619, 512
        $region96: #{vit_encoder_forward.3} parent=63 // pred_fallthru
          _
        %s627 = sand.u32 %s37, 1
        %s628 = scalar_lea.sflag [#allocation16], %s627
        %s629 = sand.u32 %s265, 1
        %s630 = scalar_lea.vmem [#allocation17], %s629
        // Predicated region
        $region97: #{vit_encoder_forward.3} parent=63 // pred_check
          %p631 = pneg %p278
        $region98: #{vit_encoder_forward.3} parent=63 // pred_check_branch
          %633 = sbr.rel (%p631) target = $region100
        $region99: #{vit_encoder_forward.3} parent=63 // pred_region
          %634 = dma.done %s628, 16
        $region100: #{vit_encoder_forward.3} parent=63 // pred_fallthru
          _
        // Predicated region
        $region101: #{vit_encoder_forward.3} parent=63 // pred_check
          %p635 = pneg %p299
        $region102: #{vit_encoder_forward.3} parent=63 // pred_check_branch
          %637 = sbr.rel (%p635) target = $region104
        $region103: #{vit_encoder_forward.3} parent=63 // pred_region
          %638 = dma.done [#allocation19], 16
        $region104: #{vit_encoder_forward.3} parent=63 // pred_fallthru
          _
        // Predicated region
        $region105: #{vit_encoder_forward.3} parent=63 // pred_check
          %p639 = pneg %p320
        $region106: #{vit_encoder_forward.3} parent=63 // pred_check_branch
          %641 = sbr.rel (%p639) target = $region108
        $region107: #{vit_encoder_forward.3} parent=63 // pred_region
          %642 = dma.done [#allocation19], 16
        $region108: #{vit_encoder_forward.3} parent=63 // pred_fallthru
          _
        %p643 = pneg %p70
        %p644 = pneg %p67
        %s645 = sand.u32 %s37, 1
        %s646 = scalar_lea.sflag [#allocation7], %s645
        %s647 = sand.u32 %s83, 1
        %s648 = smul.addr %s647, 16
        %s649 = scalar_lea.vmem [#allocation6], %s648
        %p650 = pneg %p96
        %p651 = pneg %p93
        %s652 = sand.u32 %s37, 1
        %s653 = scalar_lea.sflag [#allocation7], %s652
        %s654 = sand.u32 %s109, 1
        %s655 = scalar_lea.vmem [#allocation8], %s654
        %p656 = pneg %p122
        %p657 = pneg %p119
        %s658 = sand.u32 %s37, 1
        %s659 = scalar_lea.sflag [#allocation10], %s658
        %s660 = sand.u32 %s135, 1
        %s661 = smul.addr %s660, 16
        %s662 = scalar_lea.vmem [#allocation9], %s661
        %p663 = pneg %p148
        %p664 = pneg %p145
        %s665 = sand.u32 %s37, 1
        %s666 = scalar_lea.sflag [#allocation10], %s665
        %s667 = sand.u32 %s161, 1
        %s668 = scalar_lea.vmem [#allocation11], %s667
        %p669 = pneg %p174
        %p670 = pneg %p171
        %s671 = sand.u32 %s37, 1
        %s672 = scalar_lea.sflag [#allocation13], %s671
        %s673 = sand.u32 %s187, 1
        %s674 = smul.addr %s673, 16
        %s675 = scalar_lea.vmem [#allocation12], %s674
        %p676 = pneg %p200
        %p677 = pneg %p197
        %s678 = sand.u32 %s37, 1
        %s679 = scalar_lea.sflag [#allocation13], %s678
        %s680 = sand.u32 %s213, 1
        %s681 = scalar_lea.vmem [#allocation14], %s680
        %p682 = pneg %p226
        %p683 = pneg %p223
        %s684 = sand.u32 %s37, 1
        %s685 = scalar_lea.sflag [#allocation16], %s684
        %s686 = sand.u32 %s239, 1
        %s687 = smul.addr %s686, 32
        %s688 = scalar_lea.vmem [#allocation15], %s687
        %p689 = pneg %p252
        %p690 = pneg %p249
        %s691 = sand.u32 %s37, 1
        %s692 = scalar_lea.sflag [#allocation16], %s691
        %s693 = sand.u32 %s265, 1
        %s694 = scalar_lea.vmem [#allocation17], %s693
        %p695 = pneg %p278
        %p696 = pneg %p275
        %p697 = pneg %p299
        %p698 = pneg %p296
        %p699 = pneg %p320
        %p700 = pneg %p317
        %p701 = pneg %p346
        %p702 = pneg %p343
        %s703 = smul.u32 2, %s41
        %s704 = smul.u32 2, %s41
        %p706 = scmp.eq.s32.totalorder %s42, 0
        // Predicated region
        $region109: #{vit_encoder_forward.3} parent=63 // pred_check
          %p707 = pneg %p706
        $region110: #{vit_encoder_forward.3} parent=63 // pred_check_branch
          %709 = sbr.rel (%p707) target = $region112
        $region111: #{vit_encoder_forward.3} parent=63 // pred_region
          %v710 = vld [vmem:[#allocation3] sm:$0xff]
          %v711 = vld [vmem:[#allocation3 + $0x8] sm:$0xff]
          %v712 = vld [vmem:[#allocation3 + $0x10] sm:$0xff]
          %v713 = vld [vmem:[#allocation3 + $0x18] sm:$0xff]
          %v714 = vld [vmem:[#allocation3 + $0x20] sm:$0xff]
          %v715 = vld [vmem:[#allocation3 + $0x28] sm:$0xff]
          %vm716 = vcmask 261120
          %717 = vst.msk [vmem:[#allocation2] sm:$0xff] %vm716, %v710
          %718 = vst.msk [vmem:[#allocation2 + $0x8] sm:$0xff] %vm716, %v711
          %719 = vst.msk [vmem:[#allocation2 + $0x10] sm:$0xff] %vm716, %v712
          %720 = vst.msk [vmem:[#allocation2 + $0x18] sm:$0xff] %vm716, %v713
          %721 = vst.msk [vmem:[#allocation2 + $0x20] sm:$0xff] %vm716, %v714
          %722 = vst.msk [vmem:[#allocation2 + $0x28] sm:$0xff] %vm716, %v715
        $region112: #{vit_encoder_forward.3} parent=63 // pred_fallthru
          _
        %v723 = vld [vmem:[#allocation2] sm:$0xff]
        %v724 = vld [vmem:[#allocation2 + $0x8] sm:$0xff]
        %v725 = vld [vmem:[#allocation2 + $0x10] sm:$0xff]
        %v726 = vld [vmem:[#allocation2 + $0x18] sm:$0xff]
        %v727 = vld [vmem:[#allocation2 + $0x20] sm:$0xff]
        %v728 = vld [vmem:[#allocation2 + $0x28] sm:$0xff]
        %vm729 = vcmask 261120
        %v730 = vsel %vm729, %v723, 0.0
        %731 = vadd.xlane.f32.xlu0 %v730
        %v732 = vpop.xlane.xlu0 %731
        %v733 = vsel %vm729, %v724, 0.0
        %734 = vadd.xlane.f32.xlu0 %v733
        %v735 = vpop.xlane.xlu0 %734
        %v736 = vsel %vm729, %v725, 0.0
        %737 = vadd.xlane.f32.xlu0 %v736
        %v738 = vpop.xlane.xlu0 %737
        %v739 = vsel %vm729, %v726, 0.0
        %740 = vadd.xlane.f32.xlu0 %v739
        %v741 = vpop.xlane.xlu0 %740
        %v742 = vsel %vm729, %v727, 0.0
        %743 = vadd.xlane.f32.xlu0 %v742
        %v744 = vpop.xlane.xlu0 %743
        %v745 = vsel %vm729, %v728, 0.0
        %746 = vadd.xlane.f32.xlu0 %v745
        %v747 = vpop.xlane.xlu0 %746
        %v748 = vrcp.pop 32.0
        %v749 = vmul.f32 %v732, %v748
        %v750 = vmul.f32 %v735, %v748
        %v751 = vmul.f32 %v738, %v748
        %v752 = vmul.f32 %v741, %v748
        %v753 = vmul.f32 %v744, %v748
        %v754 = vmul.f32 %v747, %v748
        %v755 = vsub.f32 %v723, %v749
        %v756 = vsub.f32 %v724, %v750
        %v757 = vsub.f32 %v725, %v751
        %v758 = vsub.f32 %v726, %v752
        %v759 = vsub.f32 %v727, %v753
        %v760 = vsub.f32 %v728, %v754
        %v761 = vmul.f32 %v755, %v755
        %v762 = vmul.f32 %v756, %v756
        %v763 = vmul.f32 %v757, %v757
        %v764 = vmul.f32 %v758, %v758
        %v765 = vmul.f32 %v759, %v759
        %v766 = vmul.f32 %v760, %v760
        %v767 = vsel %vm729, %v761, 0.0
        %768 = vadd.xlane.f32.xlu0 %v767
        %v769 = vpop.xlane.xlu0 %768
        %v770 = vsel %vm729, %v762, 0.0
        %771 = vadd.xlane.f32.xlu0 %v770
        %v772 = vpop.xlane.xlu0 %771
        %v773 = vsel %vm729, %v763, 0.0
        %774 = vadd.xlane.f32.xlu0 %v773
        %v775 = vpop.xlane.xlu0 %774
        %v776 = vsel %vm729, %v764, 0.0
        %777 = vadd.xlane.f32.xlu0 %v776
        %v778 = vpop.xlane.xlu0 %777
        %v779 = vsel %vm729, %v765, 0.0
        %780 = vadd.xlane.f32.xlu0 %v779
        %v781 = vpop.xlane.xlu0 %780
        %v782 = vsel %vm729, %v766, 0.0
        %783 = vadd.xlane.f32.xlu0 %v782
        %v784 = vpop.xlane.xlu0 %783
        %v785 = vmul.f32 %v769, %v748
        %v786 = vmul.f32 %v772, %v748
        %v787 = vmul.f32 %v775, %v748
        %v788 = vmul.f32 %v778, %v748
        %v789 = vmul.f32 %v781, %v748
        %v790 = vmul.f32 %v784, %v748
        %v791 = vadd.f32 %v785, 1e-05
        %v792 = vadd.f32 %v786, 1e-05
        %v793 = vadd.f32 %v787, 1e-05
        %v794 = vadd.f32 %v788, 1e-05
        %v795 = vadd.f32 %v789, 1e-05
        %v796 = vadd.f32 %v790, 1e-05
        %v797 = vrsqrt.pop %v791
        %v798 = vrsqrt.pop %v792
        %v799 = vrsqrt.pop %v793
        %v800 = vrsqrt.pop %v794
        %v801 = vrsqrt.pop %v795
        %v802 = vrsqrt.pop %v796
        %v803 = vmul.f32 %v755, %v797
        %v804 = vmul.f32 %v756, %v798
        %v805 = vmul.f32 %v757, %v799
        %v806 = vmul.f32 %v758, %v800
        %v807 = vmul.f32 %v759, %v801
        %v808 = vmul.f32 %v760, %v802
        %v809 = vpack.c.bf16 %v804, %v803
        %v810 = vpack.c.bf16 %v806, %v805
        %v811 = vpack.c.bf16 %v808, %v807
        %v812 = vld [vmem:[%s571] sm:$0xf]
        %v813 = vld [vmem:[%s571 + $0x4] sm:$0xf]
        %v814 = vld [vmem:[%s571 + $0x8] sm:$0xf]
        %v815 = vld [vmem:[%s571 + $0xc] sm:$0xf]
        %v816 = vld [vmem:[%s579] sm:$0x1]
        %v818 = vlaneseq
        %v819 = vshrl.u32 %v818, 7
        %v820 = vsub.s32 0, %v819
        %v821 = vrot.slane %v816, %v820
        %v827 = vunpack.c.l.b16 %v812
        %v828 = vunpack.c.l.b16 %v813
        %v829 = vunpack.c.l.b16 %v814
        %v830 = vunpack.c.l.b16 %v815
        %v831 = vpack.c.b16 %v828, %v827
        %v832 = vpack.c.b16 %v830, %v829
        %v836 = vsel %vm729, %v809, 0
        %v839 = vsel %vm729, %v810, 0
        %v842 = vsel %vm729, %v811, 0
        %844 = vmatprep.subr.bf16.mxu0 0
        %845 = vmatpush1.bf16.msra.mxu0 %v831
        %846 = vmatprep.subr.bf16.mxu0 0
        %847 = vmatpush1.bf16.msra.mxu0 %v832
        %848 = vmatprep.subr.bf16.mxu0 0
        %849 = vmatpush1.bf16.msra.mxu0 0
        %850 = vmatprep.subr.bf16.mxu0 0
        %851 = vmatpush1.bf16.msra.mxu0 0
        %852 = vmatprep.subr.bf16.mxu0 0
        %853 = vmatpush1.bf16.msra.mxu0 0
        %854 = vmatprep.subr.bf16.mxu0 0
        %855 = vmatpush1.bf16.msra.mxu0 0
        %856 = vmatprep.subr.bf16.mxu0 0
        %857 = vmatpush1.bf16.msra.mxu0 0
        %858 = vmatprep.subr.bf16.mxu0 0
        %859 = vmatpush1.bf16.msra.mxu0 0
        %860 = vmatprep.subr.bf16.mxu0 0
        %861 = vmatpush1.bf16.msra.mxu0 0
        %862 = vmatprep.subr.bf16.mxu0 0
        %863 = vmatpush1.bf16.msra.mxu0 0
        %864 = vmatprep.subr.bf16.mxu0 0
        %865 = vmatpush1.bf16.msra.mxu0 0
        %866 = vmatprep.subr.bf16.mxu0 0
        %867 = vmatpush1.bf16.msra.mxu0 0
        %868 = vmatprep.subr.bf16.mxu0 0
        %869 = vmatpush1.bf16.msra.mxu0 0
        %870 = vmatprep.subr.bf16.mxu0 0
        %871 = vmatpush1.bf16.msra.mxu0 0
        %872 = vmatprep.subr.bf16.mxu0 0
        %873 = vmatpush1.bf16.msra.mxu0 0
        %874 = vmatprep.subr.bf16.mxu0 0
        %875 = vmatpush1.bf16.msra.mxu0 0
        %876 = vmatprep.mubr.bf16.mxu0 0
        %877 = vmatmul.mubr.bf16.gmra.mrb[0].mxu0 %v836
        %v878 = vpop.f32.mrb[0].mxu0
        %v879 = vadd.f32 %v821, %v878
        %v880 = vpop.f32.mrb[0].mxu0
        %v881 = vpop.f32.mrb[0].mxu0
        %v882 = vadd.f32 %v821, %v881
        %v883 = vpop.f32.mrb[0].mxu0
        %884 = vmatprep.mubr.bf16.mxu0 0
        %885 = vmatmul.mubr.bf16.gmra.mrb[0].mxu0 %v839
        %v886 = vpop.f32.mrb[0].mxu0
        %v887 = vadd.f32 %v821, %v886
        %v888 = vpop.f32.mrb[0].mxu0
        %v889 = vpop.f32.mrb[0].mxu0
        %v890 = vadd.f32 %v821, %v889
        %v891 = vpop.f32.mrb[0].mxu0
        %892 = vmatprep.mubr.bf16.mxu0 0
        %893 = vmatmul.mubr.bf16.gmra.mrb[0].mxu0 %v842
        %v894 = vpop.f32.mrb[0].mxu0
        %v895 = vadd.f32 %v821, %v894
        %v896 = vpop.f32.mrb[0].mxu0
        %v897 = vpop.f32.mrb[0].mxu0
        %v898 = vadd.f32 %v821, %v897
        %v899 = vpop.f32.mrb[0].mxu0
        %900 = vdwg.mxu0
        %907 = vrot.lane.b32.xlu0 %v879, 120
        %v908 = vpop.permute.xlu0 %907
        %909 = vrot.lane.b32.xlu0 %v882, 120
        %v910 = vpop.permute.xlu0 %909
        %911 = vrot.lane.b32.xlu0 %v887, 120
        %v912 = vpop.permute.xlu0 %911
        %913 = vrot.lane.b32.xlu0 %v890, 120
        %v914 = vpop.permute.xlu0 %913
        %915 = vrot.lane.b32.xlu0 %v895, 120
        %v916 = vpop.permute.xlu0 %915
        %917 = vrot.lane.b32.xlu0 %v898, 120
        %v918 = vpop.permute.xlu0 %917
        %925 = vrot.lane.b32.xlu0 %v879, 112
        %v926 = vpop.permute.xlu0 %925
        %927 = vrot.lane.b32.xlu0 %v882, 112
        %v928 = vpop.permute.xlu0 %927
        %929 = vrot.lane.b32.xlu0 %v887, 112
        %v930 = vpop.permute.xlu0 %929
        %931 = vrot.lane.b32.xlu0 %v890, 112
        %v932 = vpop.permute.xlu0 %931
        %933 = vrot.lane.b32.xlu0 %v895, 112
        %v934 = vpop.permute.xlu0 %933
        %935 = vrot.lane.b32.xlu0 %v898, 112
        %v936 = vpop.permute.xlu0 %935
        %943 = vrot.lane.b32.xlu0 %v879, 104
        %v944 = vpop.permute.xlu0 %943
        %945 = vrot.lane.b32.xlu0 %v882, 104
        %v946 = vpop.permute.xlu0 %945
        %947 = vrot.lane.b32.xlu0 %v887, 104
        %v948 = vpop.permute.xlu0 %947
        %949 = vrot.lane.b32.xlu0 %v890, 104
        %v950 = vpop.permute.xlu0 %949
        %951 = vrot.lane.b32.xlu0 %v895, 104
        %v952 = vpop.permute.xlu0 %951
        %953 = vrot.lane.b32.xlu0 %v898, 104
        %v954 = vpop.permute.xlu0 %953
        %v961 = vcombine.low %v879, %v926
        %v962 = vcombine.high %v879, %v926
        %v964 = vunpack.c.l.s4 1983009808
        %v965 = vunpack.c.0.s8 %v964
        %v966 = vlaneseq
        %v967 = vshrl.u32 %v966, 7
        %v968 = vsub.s32 %v965, %v967
        %v969 = vrot.slane %v961, %v968
        %v971 = vunpack.c.l.s4 1983009808
        %v972 = vunpack.c.0.s8 %v971
        %v973 = vlaneseq
        %v974 = vshrl.u32 %v973, 7
        %v975 = vsub.s32 %v972, %v974
        %v976 = vrot.slane %v962, %v975
        %v977 = vcombine.low %v908, %v944
        %v978 = vcombine.high %v908, %v944
        %v980 = vunpack.c.l.s4 1983009808
        %v981 = vunpack.c.0.s8 %v980
        %v982 = vlaneseq
        %v983 = vshrl.u32 %v982, 7
        %v984 = vsub.s32 %v981, %v983
        %v985 = vrot.slane %v977, %v984
        %v987 = vunpack.c.l.s4 1983009808
        %v988 = vunpack.c.0.s8 %v987
        %v989 = vlaneseq
        %v990 = vshrl.u32 %v989, 7
        %v991 = vsub.s32 %v988, %v990
        %v992 = vrot.slane %v978, %v991
        %v993 = vcombine.low %v969, %v985
        %v994 = vcombine.high %v969, %v985
        %v996 = vunpack.c.l.s4 1934713408
        %v997 = vunpack.c.0.s8 %v996
        %v998 = vlaneseq
        %v999 = vshrl.u32 %v998, 7
        %v1000 = vsub.s32 %v997, %v999
        %v1001 = vrot.slane %v993, %v1000
        %v1003 = vunpack.c.l.s4 1934713408
        %v1004 = vunpack.c.0.s8 %v1003
        %v1005 = vlaneseq
        %v1006 = vshrl.u32 %v1005, 7
        %v1007 = vsub.s32 %v1004, %v1006
        %v1008 = vrot.slane %v994, %v1007
        %v1009 = vcombine.low %v976, %v992
        %v1010 = vcombine.high %v976, %v992
        %v1012 = vunpack.c.l.s4 1934713408
        %v1013 = vunpack.c.0.s8 %v1012
        %v1014 = vlaneseq
        %v1015 = vshrl.u32 %v1014, 7
        %v1016 = vsub.s32 %v1013, %v1015
        %v1017 = vrot.slane %v1009, %v1016
        %v1019 = vunpack.c.l.s4 1934713408
        %v1020 = vunpack.c.0.s8 %v1019
        %v1021 = vlaneseq
        %v1022 = vshrl.u32 %v1021, 7
        %v1023 = vsub.s32 %v1020, %v1022
        %v1024 = vrot.slane %v1010, %v1023
        %v1025 = vcombine.high %v1001, 0.0
        %v1026 = vcombine.high %v1008, 0.0
        %v1027 = vcombine.high %v1017, 0.0
        %v1028 = vcombine.high %v1024, 0.0
        %v1029 = vcombine.low %v882, %v928
        %v1030 = vcombine.high %v882, %v928
        %v1032 = vunpack.c.l.s4 1983009808
        %v1033 = vunpack.c.0.s8 %v1032
        %v1034 = vlaneseq
        %v1035 = vshrl.u32 %v1034, 7
        %v1036 = vsub.s32 %v1033, %v1035
        %v1037 = vrot.slane %v1029, %v1036
        %v1039 = vunpack.c.l.s4 1983009808
        %v1040 = vunpack.c.0.s8 %v1039
        %v1041 = vlaneseq
        %v1042 = vshrl.u32 %v1041, 7
        %v1043 = vsub.s32 %v1040, %v1042
        %v1044 = vrot.slane %v1030, %v1043
        %v1045 = vcombine.low %v910, %v946
        %v1046 = vcombine.high %v910, %v946
        %v1048 = vunpack.c.l.s4 1983009808
        %v1049 = vunpack.c.0.s8 %v1048
        %v1050 = vlaneseq
        %v1051 = vshrl.u32 %v1050, 7
        %v1052 = vsub.s32 %v1049, %v1051
        %v1053 = vrot.slane %v1045, %v1052
        %v1055 = vunpack.c.l.s4 1983009808
        %v1056 = vunpack.c.0.s8 %v1055
        %v1057 = vlaneseq
        %v1058 = vshrl.u32 %v1057, 7
        %v1059 = vsub.s32 %v1056, %v1058
        %v1060 = vrot.slane %v1046, %v1059
        %v1061 = vcombine.low %v1037, %v1053
        %v1062 = vcombine.high %v1037, %v1053
        %v1064 = vunpack.c.l.s4 1934713408
        %v1065 = vunpack.c.0.s8 %v1064
        %v1066 = vlaneseq
        %v1067 = vshrl.u32 %v1066, 7
        %v1068 = vsub.s32 %v1065, %v1067
        %v1069 = vrot.slane %v1061, %v1068
        %v1071 = vunpack.c.l.s4 1934713408
        %v1072 = vunpack.c.0.s8 %v1071
        %v1073 = vlaneseq
        %v1074 = vshrl.u32 %v1073, 7
        %v1075 = vsub.s32 %v1072, %v1074
        %v1076 = vrot.slane %v1062, %v1075
        %v1077 = vcombine.low %v1044, %v1060
        %v1078 = vcombine.high %v1044, %v1060
        %v1080 = vunpack.c.l.s4 1934713408
        %v1081 = vunpack.c.0.s8 %v1080
        %v1082 = vlaneseq
        %v1083 = vshrl.u32 %v1082, 7
        %v1084 = vsub.s32 %v1081, %v1083
        %v1085 = vrot.slane %v1077, %v1084
        %v1087 = vunpack.c.l.s4 1934713408
        %v1088 = vunpack.c.0.s8 %v1087
        %v1089 = vlaneseq
        %v1090 = vshrl.u32 %v1089, 7
        %v1091 = vsub.s32 %v1088, %v1090
        %v1092 = vrot.slane %v1078, %v1091
        %v1093 = vcombine.high %v1069, 0.0
        %v1094 = vcombine.high %v1076, 0.0
        %v1095 = vcombine.high %v1085, 0.0
        %v1096 = vcombine.high %v1092, 0.0
        %v1097 = vcombine.low %v887, %v930
        %v1098 = vcombine.high %v887, %v930
        %v1100 = vunpack.c.l.s4 1983009808
        %v1101 = vunpack.c.0.s8 %v1100
        %v1102 = vlaneseq
        %v1103 = vshrl.u32 %v1102, 7
        %v1104 = vsub.s32 %v1101, %v1103
        %v1105 = vrot.slane %v1097, %v1104
        %v1107 = vunpack.c.l.s4 1983009808
        %v1108 = vunpack.c.0.s8 %v1107
        %v1109 = vlaneseq
        %v1110 = vshrl.u32 %v1109, 7
        %v1111 = vsub.s32 %v1108, %v1110
        %v1112 = vrot.slane %v1098, %v1111
        %v1113 = vcombine.low %v912, %v948
        %v1114 = vcombine.high %v912, %v948
        %v1116 = vunpack.c.l.s4 1983009808
        %v1117 = vunpack.c.0.s8 %v1116
        %v1118 = vlaneseq
        %v1119 = vshrl.u32 %v1118, 7
        %v1120 = vsub.s32 %v1117, %v1119
        %v1121 = vrot.slane %v1113, %v1120
        %v1123 = vunpack.c.l.s4 1983009808
        %v1124 = vunpack.c.0.s8 %v1123
        %v1125 = vlaneseq
        %v1126 = vshrl.u32 %v1125, 7
        %v1127 = vsub.s32 %v1124, %v1126
        %v1128 = vrot.slane %v1114, %v1127
        %v1129 = vcombine.low %v1105, %v1121
        %v1130 = vcombine.high %v1105, %v1121
        %v1132 = vunpack.c.l.s4 1934713408
        %v1133 = vunpack.c.0.s8 %v1132
        %v1134 = vlaneseq
        %v1135 = vshrl.u32 %v1134, 7
        %v1136 = vsub.s32 %v1133, %v1135
        %v1137 = vrot.slane %v1129, %v1136
        %v1139 = vunpack.c.l.s4 1934713408
        %v1140 = vunpack.c.0.s8 %v1139
        %v1141 = vlaneseq
        %v1142 = vshrl.u32 %v1141, 7
        %v1143 = vsub.s32 %v1140, %v1142
        %v1144 = vrot.slane %v1130, %v1143
        %v1145 = vcombine.low %v1112, %v1128
        %v1146 = vcombine.high %v1112, %v1128
        %v1148 = vunpack.c.l.s4 1934713408
        %v1149 = vunpack.c.0.s8 %v1148
        %v1150 = vlaneseq
        %v1151 = vshrl.u32 %v1150, 7
        %v1152 = vsub.s32 %v1149, %v1151
        %v1153 = vrot.slane %v1145, %v1152
        %v1155 = vunpack.c.l.s4 1934713408
        %v1156 = vunpack.c.0.s8 %v1155
        %v1157 = vlaneseq
        %v1158 = vshrl.u32 %v1157, 7
        %v1159 = vsub.s32 %v1156, %v1158
        %v1160 = vrot.slane %v1146, %v1159
        %v1161 = vcombine.high %v1137, 0.0
        %v1162 = vcombine.high %v1144, 0.0
        %v1163 = vcombine.high %v1153, 0.0
        %v1164 = vcombine.high %v1160, 0.0
        %v1165 = vcombine.low %v890, %v932
        %v1166 = vcombine.high %v890, %v932
        %v1168 = vunpack.c.l.s4 1983009808
        %v1169 = vunpack.c.0.s8 %v1168
        %v1170 = vlaneseq
        %v1171 = vshrl.u32 %v1170, 7
        %v1172 = vsub.s32 %v1169, %v1171
        %v1173 = vrot.slane %v1165, %v1172
        %v1175 = vunpack.c.l.s4 1983009808
        %v1176 = vunpack.c.0.s8 %v1175
        %v1177 = vlaneseq
        %v1178 = vshrl.u32 %v1177, 7
        %v1179 = vsub.s32 %v1176, %v1178
        %v1180 = vrot.slane %v1166, %v1179
        %v1181 = vcombine.low %v914, %v950
        %v1182 = vcombine.high %v914, %v950
        %v1184 = vunpack.c.l.s4 1983009808
        %v1185 = vunpack.c.0.s8 %v1184
        %v1186 = vlaneseq
        %v1187 = vshrl.u32 %v1186, 7
        %v1188 = vsub.s32 %v1185, %v1187
        %v1189 = vrot.slane %v1181, %v1188
        %v1191 = vunpack.c.l.s4 1983009808
        %v1192 = vunpack.c.0.s8 %v1191
        %v1193 = vlaneseq
        %v1194 = vshrl.u32 %v1193, 7
        %v1195 = vsub.s32 %v1192, %v1194
        %v1196 = vrot.slane %v1182, %v1195
        %v1197 = vcombine.low %v1173, %v1189
        %v1198 = vcombine.high %v1173, %v1189
        %v1200 = vunpack.c.l.s4 1934713408
        %v1201 = vunpack.c.0.s8 %v1200
        %v1202 = vlaneseq
        %v1203 = vshrl.u32 %v1202, 7
        %v1204 = vsub.s32 %v1201, %v1203
        %v1205 = vrot.slane %v1197, %v1204
        %v1207 = vunpack.c.l.s4 1934713408
        %v1208 = vunpack.c.0.s8 %v1207
        %v1209 = vlaneseq
        %v1210 = vshrl.u32 %v1209, 7
        %v1211 = vsub.s32 %v1208, %v1210
        %v1212 = vrot.slane %v1198, %v1211
        %v1213 = vcombine.low %v1180, %v1196
        %v1214 = vcombine.high %v1180, %v1196
        %v1216 = vunpack.c.l.s4 1934713408
        %v1217 = vunpack.c.0.s8 %v1216
        %v1218 = vlaneseq
        %v1219 = vshrl.u32 %v1218, 7
        %v1220 = vsub.s32 %v1217, %v1219
        %v1221 = vrot.slane %v1213, %v1220
        %v1223 = vunpack.c.l.s4 1934713408
        %v1224 = vunpack.c.0.s8 %v1223
        %v1225 = vlaneseq
        %v1226 = vshrl.u32 %v1225, 7
        %v1227 = vsub.s32 %v1224, %v1226
        %v1228 = vrot.slane %v1214, %v1227
        %v1229 = vcombine.high %v1205, 0.0
        %v1230 = vcombine.high %v1212, 0.0
        %v1231 = vcombine.high %v1221, 0.0
        %v1232 = vcombine.high %v1228, 0.0
        %v1233 = vcombine.low %v895, %v934
        %v1234 = vcombine.high %v895, %v934
        %v1236 = vunpack.c.l.s4 1983009808
        %v1237 = vunpack.c.0.s8 %v1236
        %v1238 = vlaneseq
        %v1239 = vshrl.u32 %v1238, 7
        %v1240 = vsub.s32 %v1237, %v1239
        %v1241 = vrot.slane %v1233, %v1240
        %v1243 = vunpack.c.l.s4 1983009808
        %v1244 = vunpack.c.0.s8 %v1243
        %v1245 = vlaneseq
        %v1246 = vshrl.u32 %v1245, 7
        %v1247 = vsub.s32 %v1244, %v1246
        %v1248 = vrot.slane %v1234, %v1247
        %v1249 = vcombine.low %v916, %v952
        %v1250 = vcombine.high %v916, %v952
        %v1252 = vunpack.c.l.s4 1983009808
        %v1253 = vunpack.c.0.s8 %v1252
        %v1254 = vlaneseq
        %v1255 = vshrl.u32 %v1254, 7
        %v1256 = vsub.s32 %v1253, %v1255
        %v1257 = vrot.slane %v1249, %v1256
        %v1259 = vunpack.c.l.s4 1983009808
        %v1260 = vunpack.c.0.s8 %v1259
        %v1261 = vlaneseq
        %v1262 = vshrl.u32 %v1261, 7
        %v1263 = vsub.s32 %v1260, %v1262
        %v1264 = vrot.slane %v1250, %v1263
        %v1265 = vcombine.low %v1241, %v1257
        %v1266 = vcombine.high %v1241, %v1257
        %v1268 = vunpack.c.l.s4 1934713408
        %v1269 = vunpack.c.0.s8 %v1268
        %v1270 = vlaneseq
        %v1271 = vshrl.u32 %v1270, 7
        %v1272 = vsub.s32 %v1269, %v1271
        %v1273 = vrot.slane %v1265, %v1272
        %v1275 = vunpack.c.l.s4 1934713408
        %v1276 = vunpack.c.0.s8 %v1275
        %v1277 = vlaneseq
        %v1278 = vshrl.u32 %v1277, 7
        %v1279 = vsub.s32 %v1276, %v1278
        %v1280 = vrot.slane %v1266, %v1279
        %v1281 = vcombine.low %v1248, %v1264
        %v1282 = vcombine.high %v1248, %v1264
        %v1284 = vunpack.c.l.s4 1934713408
        %v1285 = vunpack.c.0.s8 %v1284
        %v1286 = vlaneseq
        %v1287 = vshrl.u32 %v1286, 7
        %v1288 = vsub.s32 %v1285, %v1287
        %v1289 = vrot.slane %v1281, %v1288
        %v1291 = vunpack.c.l.s4 1934713408
        %v1292 = vunpack.c.0.s8 %v1291
        %v1293 = vlaneseq
        %v1294 = vshrl.u32 %v1293, 7
        %v1295 = vsub.s32 %v1292, %v1294
        %v1296 = vrot.slane %v1282, %v1295
        %v1297 = vcombine.high %v1273, 0.0
        %v1298 = vcombine.high %v1280, 0.0
        %v1299 = vcombine.high %v1289, 0.0
        %v1300 = vcombine.high %v1296, 0.0
        %v1301 = vcombine.low %v898, %v936
        %v1302 = vcombine.high %v898, %v936
        %v1304 = vunpack.c.l.s4 1983009808
        %v1305 = vunpack.c.0.s8 %v1304
        %v1306 = vlaneseq
        %v1307 = vshrl.u32 %v1306, 7
        %v1308 = vsub.s32 %v1305, %v1307
        %v1309 = vrot.slane %v1301, %v1308
        %v1311 = vunpack.c.l.s4 1983009808
        %v1312 = vunpack.c.0.s8 %v1311
        %v1313 = vlaneseq
        %v1314 = vshrl.u32 %v1313, 7
        %v1315 = vsub.s32 %v1312, %v1314
        %v1316 = vrot.slane %v1302, %v1315
        %v1317 = vcombine.low %v918, %v954
        %v1318 = vcombine.high %v918, %v954
        %v1320 = vunpack.c.l.s4 1983009808
        %v1321 = vunpack.c.0.s8 %v1320
        %v1322 = vlaneseq
        %v1323 = vshrl.u32 %v1322, 7
        %v1324 = vsub.s32 %v1321, %v1323
        %v1325 = vrot.slane %v1317, %v1324
        %v1327 = vunpack.c.l.s4 1983009808
        %v1328 = vunpack.c.0.s8 %v1327
        %v1329 = vlaneseq
        %v1330 = vshrl.u32 %v1329, 7
        %v1331 = vsub.s32 %v1328, %v1330
        %v1332 = vrot.slane %v1318, %v1331
        %v1333 = vcombine.low %v1309, %v1325
        %v1334 = vcombine.high %v1309, %v1325
        %v1336 = vunpack.c.l.s4 1934713408
        %v1337 = vunpack.c.0.s8 %v1336
        %v1338 = vlaneseq
        %v1339 = vshrl.u32 %v1338, 7
        %v1340 = vsub.s32 %v1337, %v1339
        %v1341 = vrot.slane %v1333, %v1340
        %v1343 = vunpack.c.l.s4 1934713408
        %v1344 = vunpack.c.0.s8 %v1343
        %v1345 = vlaneseq
        %v1346 = vshrl.u32 %v1345, 7
        %v1347 = vsub.s32 %v1344, %v1346
        %v1348 = vrot.slane %v1334, %v1347
        %v1349 = vcombine.low %v1316, %v1332
        %v1350 = vcombine.high %v1316, %v1332
        %v1352 = vunpack.c.l.s4 1934713408
        %v1353 = vunpack.c.0.s8 %v1352
        %v1354 = vlaneseq
        %v1355 = vshrl.u32 %v1354, 7
        %v1356 = vsub.s32 %v1353, %v1355
        %v1357 = vrot.slane %v1349, %v1356
        %v1359 = vunpack.c.l.s4 1934713408
        %v1360 = vunpack.c.0.s8 %v1359
        %v1361 = vlaneseq
        %v1362 = vshrl.u32 %v1361, 7
        %v1363 = vsub.s32 %v1360, %v1362
        %v1364 = vrot.slane %v1350, %v1363
        %v1365 = vcombine.high %v1341, 0.0
        %v1366 = vcombine.high %v1348, 0.0
        %v1367 = vcombine.high %v1357, 0.0
        %v1368 = vcombine.high %v1364, 0.0
        %v1369 = vcombine.low %v1001, %v1008
        %v1371 = vunpack.c.l.s4 1983009808
        %v1372 = vunpack.c.0.s8 %v1371
        %v1373 = vlaneseq
        %v1374 = vshrl.u32 %v1373, 7
        %v1375 = vsub.s32 %v1372, %v1374
        %v1376 = vrot.slane %v1369, %v1375
        %v1377 = vcombine.low %v1025, %v1026
        %v1379 = vunpack.c.l.s4 1983009808
        %v1380 = vunpack.c.0.s8 %v1379
        %v1381 = vlaneseq
        %v1382 = vshrl.u32 %v1381, 7
        %v1383 = vsub.s32 %v1380, %v1382
        %v1384 = vrot.slane %v1377, %v1383
        %v1385 = vcombine.low %v1017, %v1024
        %v1387 = vunpack.c.l.s4 1983009808
        %v1388 = vunpack.c.0.s8 %v1387
        %v1389 = vlaneseq
        %v1390 = vshrl.u32 %v1389, 7
        %v1391 = vsub.s32 %v1388, %v1390
        %v1392 = vrot.slane %v1385, %v1391
        %v1393 = vcombine.low %v1027, %v1028
        %v1395 = vunpack.c.l.s4 1983009808
        %v1396 = vunpack.c.0.s8 %v1395
        %v1397 = vlaneseq
        %v1398 = vshrl.u32 %v1397, 7
        %v1399 = vsub.s32 %v1396, %v1398
        %v1400 = vrot.slane %v1393, %v1399
        %v1401 = vcombine.low %v1376, %v1384
        %v1402 = vcombine.high %v1376, %v1384
        %v1404 = vunpack.c.l.s4 1934713408
        %v1405 = vunpack.c.0.s8 %v1404
        %v1406 = vlaneseq
        %v1407 = vshrl.u32 %v1406, 7
        %v1408 = vsub.s32 %v1405, %v1407
        %v1409 = vrot.slane %v1401, %v1408
        %v1411 = vunpack.c.l.s4 1934713408
        %v1412 = vunpack.c.0.s8 %v1411
        %v1413 = vlaneseq
        %v1414 = vshrl.u32 %v1413, 7
        %v1415 = vsub.s32 %v1412, %v1414
        %v1416 = vrot.slane %v1402, %v1415
        %v1417 = vcombine.low %v1392, %v1400
        %v1418 = vcombine.high %v1392, %v1400
        %v1420 = vunpack.c.l.s4 1934713408
        %v1421 = vunpack.c.0.s8 %v1420
        %v1422 = vlaneseq
        %v1423 = vshrl.u32 %v1422, 7
        %v1424 = vsub.s32 %v1421, %v1423
        %v1425 = vrot.slane %v1417, %v1424
        %v1427 = vunpack.c.l.s4 1934713408
        %v1428 = vunpack.c.0.s8 %v1427
        %v1429 = vlaneseq
        %v1430 = vshrl.u32 %v1429, 7
        %v1431 = vsub.s32 %v1428, %v1430
        %v1432 = vrot.slane %v1418, %v1431
        %v1433 = vcombine.low %v1409, %v1425
        %v1434 = vcombine.high %v1409, %v1425
        %v1435 = vcombine.low %v1416, %v1432
        %v1436 = vcombine.high %v1416, %v1432
        %v1437 = vcombine.low %v1069, %v1076
        %v1439 = vunpack.c.l.s4 1983009808
        %v1440 = vunpack.c.0.s8 %v1439
        %v1441 = vlaneseq
        %v1442 = vshrl.u32 %v1441, 7
        %v1443 = vsub.s32 %v1440, %v1442
        %v1444 = vrot.slane %v1437, %v1443
        %v1445 = vcombine.low %v1093, %v1094
        %v1447 = vunpack.c.l.s4 1983009808
        %v1448 = vunpack.c.0.s8 %v1447
        %v1449 = vlaneseq
        %v1450 = vshrl.u32 %v1449, 7
        %v1451 = vsub.s32 %v1448, %v1450
        %v1452 = vrot.slane %v1445, %v1451
        %v1453 = vcombine.low %v1085, %v1092
        %v1455 = vunpack.c.l.s4 1983009808
        %v1456 = vunpack.c.0.s8 %v1455
        %v1457 = vlaneseq
        %v1458 = vshrl.u32 %v1457, 7
        %v1459 = vsub.s32 %v1456, %v1458
        %v1460 = vrot.slane %v1453, %v1459
        %v1461 = vcombine.low %v1095, %v1096
        %v1463 = vunpack.c.l.s4 1983009808
        %v1464 = vunpack.c.0.s8 %v1463
        %v1465 = vlaneseq
        %v1466 = vshrl.u32 %v1465, 7
        %v1467 = vsub.s32 %v1464, %v1466
        %v1468 = vrot.slane %v1461, %v1467
        %v1469 = vcombine.low %v1444, %v1452
        %v1470 = vcombine.high %v1444, %v1452
        %v1472 = vunpack.c.l.s4 1934713408
        %v1473 = vunpack.c.0.s8 %v1472
        %v1474 = vlaneseq
        %v1475 = vshrl.u32 %v1474, 7
        %v1476 = vsub.s32 %v1473, %v1475
        %v1477 = vrot.slane %v1469, %v1476
        %v1479 = vunpack.c.l.s4 1934713408
        %v1480 = vunpack.c.0.s8 %v1479
        %v1481 = vlaneseq
        %v1482 = vshrl.u32 %v1481, 7
        %v1483 = vsub.s32 %v1480, %v1482
        %v1484 = vrot.slane %v1470, %v1483
        %v1485 = vcombine.low %v1460, %v1468
        %v1486 = vcombine.high %v1460, %v1468
        %v1488 = vunpack.c.l.s4 1934713408
        %v1489 = vunpack.c.0.s8 %v1488
        %v1490 = vlaneseq
        %v1491 = vshrl.u32 %v1490, 7
        %v1492 = vsub.s32 %v1489, %v1491
        %v1493 = vrot.slane %v1485, %v1492
        %v1495 = vunpack.c.l.s4 1934713408
        %v1496 = vunpack.c.0.s8 %v1495
        %v1497 = vlaneseq
        %v1498 = vshrl.u32 %v1497, 7
        %v1499 = vsub.s32 %v1496, %v1498
        %v1500 = vrot.slane %v1486, %v1499
        %v1501 = vcombine.low %v1477, %v1493
        %v1502 = vcombine.high %v1477, %v1493
        %v1503 = vcombine.low %v1484, %v1500
        %v1504 = vcombine.high %v1484, %v1500
        %v1505 = vcombine.low %v1137, %v1144
        %v1507 = vunpack.c.l.s4 1983009808
        %v1508 = vunpack.c.0.s8 %v1507
        %v1509 = vlaneseq
        %v1510 = vshrl.u32 %v1509, 7
        %v1511 = vsub.s32 %v1508, %v1510
        %v1512 = vrot.slane %v1505, %v1511
        %v1513 = vcombine.low %v1161, %v1162
        %v1515 = vunpack.c.l.s4 1983009808
        %v1516 = vunpack.c.0.s8 %v1515
        %v1517 = vlaneseq
        %v1518 = vshrl.u32 %v1517, 7
        %v1519 = vsub.s32 %v1516, %v1518
        %v1520 = vrot.slane %v1513, %v1519
        %v1521 = vcombine.low %v1153, %v1160
        %v1523 = vunpack.c.l.s4 1983009808
        %v1524 = vunpack.c.0.s8 %v1523
        %v1525 = vlaneseq
        %v1526 = vshrl.u32 %v1525, 7
        %v1527 = vsub.s32 %v1524, %v1526
        %v1528 = vrot.slane %v1521, %v1527
        %v1529 = vcombine.low %v1163, %v1164
        %v1531 = vunpack.c.l.s4 1983009808
        %v1532 = vunpack.c.0.s8 %v1531
        %v1533 = vlaneseq
        %v1534 = vshrl.u32 %v1533, 7
        %v1535 = vsub.s32 %v1532, %v1534
        %v1536 = vrot.slane %v1529, %v1535
        %v1537 = vcombine.low %v1512, %v1520
        %v1538 = vcombine.high %v1512, %v1520
        %v1540 = vunpack.c.l.s4 1934713408
        %v1541 = vunpack.c.0.s8 %v1540
        %v1542 = vlaneseq
        %v1543 = vshrl.u32 %v1542, 7
        %v1544 = vsub.s32 %v1541, %v1543
        %v1545 = vrot.slane %v1537, %v1544
        %v1547 = vunpack.c.l.s4 1934713408
        %v1548 = vunpack.c.0.s8 %v1547
        %v1549 = vlaneseq
        %v1550 = vshrl.u32 %v1549, 7
        %v1551 = vsub.s32 %v1548, %v1550
        %v1552 = vrot.slane %v1538, %v1551
        %v1553 = vcombine.low %v1528, %v1536
        %v1554 = vcombine.high %v1528, %v1536
        %v1556 = vunpack.c.l.s4 1934713408
        %v1557 = vunpack.c.0.s8 %v1556
        %v1558 = vlaneseq
        %v1559 = vshrl.u32 %v1558, 7
        %v1560 = vsub.s32 %v1557, %v1559
        %v1561 = vrot.slane %v1553, %v1560
        %v1563 = vunpack.c.l.s4 1934713408
        %v1564 = vunpack.c.0.s8 %v1563
        %v1565 = vlaneseq
        %v1566 = vshrl.u32 %v1565, 7
        %v1567 = vsub.s32 %v1564, %v1566
        %v1568 = vrot.slane %v1554, %v1567
        %v1569 = vcombine.low %v1545, %v1561
        %v1570 = vcombine.high %v1545, %v1561
        %v1571 = vcombine.low %v1552, %v1568
        %v1572 = vcombine.high %v1552, %v1568
        %v1573 = vcombine.low %v1205, %v1212
        %v1575 = vunpack.c.l.s4 1983009808
        %v1576 = vunpack.c.0.s8 %v1575
        %v1577 = vlaneseq
        %v1578 = vshrl.u32 %v1577, 7
        %v1579 = vsub.s32 %v1576, %v1578
        %v1580 = vrot.slane %v1573, %v1579
        %v1581 = vcombine.low %v1229, %v1230
        %v1583 = vunpack.c.l.s4 1983009808
        %v1584 = vunpack.c.0.s8 %v1583
        %v1585 = vlaneseq
        %v1586 = vshrl.u32 %v1585, 7
        %v1587 = vsub.s32 %v1584, %v1586
        %v1588 = vrot.slane %v1581, %v1587
        %v1589 = vcombine.low %v1221, %v1228
        %v1591 = vunpack.c.l.s4 1983009808
        %v1592 = vunpack.c.0.s8 %v1591
        %v1593 = vlaneseq
        %v1594 = vshrl.u32 %v1593, 7
        %v1595 = vsub.s32 %v1592, %v1594
        %v1596 = vrot.slane %v1589, %v1595
        %v1597 = vcombine.low %v1231, %v1232
        %v1599 = vunpack.c.l.s4 1983009808
        %v1600 = vunpack.c.0.s8 %v1599
        %v1601 = vlaneseq
        %v1602 = vshrl.u32 %v1601, 7
        %v1603 = vsub.s32 %v1600, %v1602
        %v1604 = vrot.slane %v1597, %v1603
        %v1605 = vcombine.low %v1580, %v1588
        %v1606 = vcombine.high %v1580, %v1588
        %v1608 = vunpack.c.l.s4 1934713408
        %v1609 = vunpack.c.0.s8 %v1608
        %v1610 = vlaneseq
        %v1611 = vshrl.u32 %v1610, 7
        %v1612 = vsub.s32 %v1609, %v1611
        %v1613 = vrot.slane %v1605, %v1612
        %v1615 = vunpack.c.l.s4 1934713408
        %v1616 = vunpack.c.0.s8 %v1615
        %v1617 = vlaneseq
        %v1618 = vshrl.u32 %v1617, 7
        %v1619 = vsub.s32 %v1616, %v1618
        %v1620 = vrot.slane %v1606, %v1619
        %v1621 = vcombine.low %v1596, %v1604
        %v1622 = vcombine.high %v1596, %v1604
        %v1624 = vunpack.c.l.s4 1934713408
        %v1625 = vunpack.c.0.s8 %v1624
        %v1626 = vlaneseq
        %v1627 = vshrl.u32 %v1626, 7
        %v1628 = vsub.s32 %v1625, %v1627
        %v1629 = vrot.slane %v1621, %v1628
        %v1631 = vunpack.c.l.s4 1934713408
        %v1632 = vunpack.c.0.s8 %v1631
        %v1633 = vlaneseq
        %v1634 = vshrl.u32 %v1633, 7
        %v1635 = vsub.s32 %v1632, %v1634
        %v1636 = vrot.slane %v1622, %v1635
        %v1637 = vcombine.low %v1613, %v1629
        %v1638 = vcombine.high %v1613, %v1629
        %v1639 = vcombine.low %v1620, %v1636
        %v1640 = vcombine.high %v1620, %v1636
        %v1641 = vcombine.low %v1273, %v1280
        %v1643 = vunpack.c.l.s4 1983009808
        %v1644 = vunpack.c.0.s8 %v1643
        %v1645 = vlaneseq
        %v1646 = vshrl.u32 %v1645, 7
        %v1647 = vsub.s32 %v1644, %v1646
        %v1648 = vrot.slane %v1641, %v1647
        %v1649 = vcombine.low %v1297, %v1298
        %v1651 = vunpack.c.l.s4 1983009808
        %v1652 = vunpack.c.0.s8 %v1651
        %v1653 = vlaneseq
        %v1654 = vshrl.u32 %v1653, 7
        %v1655 = vsub.s32 %v1652, %v1654
        %v1656 = vrot.slane %v1649, %v1655
        %v1657 = vcombine.low %v1289, %v1296
        %v1659 = vunpack.c.l.s4 1983009808
        %v1660 = vunpack.c.0.s8 %v1659
        %v1661 = vlaneseq
        %v1662 = vshrl.u32 %v1661, 7
        %v1663 = vsub.s32 %v1660, %v1662
        %v1664 = vrot.slane %v1657, %v1663
        %v1665 = vcombine.low %v1299, %v1300
        %v1667 = vunpack.c.l.s4 1983009808
        %v1668 = vunpack.c.0.s8 %v1667
        %v1669 = vlaneseq
        %v1670 = vshrl.u32 %v1669, 7
        %v1671 = vsub.s32 %v1668, %v1670
        %v1672 = vrot.slane %v1665, %v1671
        %v1673 = vcombine.low %v1648, %v1656
        %v1674 = vcombine.high %v1648, %v1656
        %v1676 = vunpack.c.l.s4 1934713408
        %v1677 = vunpack.c.0.s8 %v1676
        %v1678 = vlaneseq
        %v1679 = vshrl.u32 %v1678, 7
        %v1680 = vsub.s32 %v1677, %v1679
        %v1681 = vrot.slane %v1673, %v1680
        %v1683 = vunpack.c.l.s4 1934713408
        %v1684 = vunpack.c.0.s8 %v1683
        %v1685 = vlaneseq
        %v1686 = vshrl.u32 %v1685, 7
        %v1687 = vsub.s32 %v1684, %v1686
        %v1688 = vrot.slane %v1674, %v1687
        %v1689 = vcombine.low %v1664, %v1672
        %v1690 = vcombine.high %v1664, %v1672
        %v1692 = vunpack.c.l.s4 1934713408
        %v1693 = vunpack.c.0.s8 %v1692
        %v1694 = vlaneseq
        %v1695 = vshrl.u32 %v1694, 7
        %v1696 = vsub.s32 %v1693, %v1695
        %v1697 = vrot.slane %v1689, %v1696
        %v1699 = vunpack.c.l.s4 1934713408
        %v1700 = vunpack.c.0.s8 %v1699
        %v1701 = vlaneseq
        %v1702 = vshrl.u32 %v1701, 7
        %v1703 = vsub.s32 %v1700, %v1702
        %v1704 = vrot.slane %v1690, %v1703
        %v1705 = vcombine.low %v1681, %v1697
        %v1706 = vcombine.high %v1681, %v1697
        %v1707 = vcombine.low %v1688, %v1704
        %v1708 = vcombine.high %v1688, %v1704
        %v1709 = vcombine.low %v1341, %v1348
        %v1711 = vunpack.c.l.s4 1983009808
        %v1712 = vunpack.c.0.s8 %v1711
        %v1713 = vlaneseq
        %v1714 = vshrl.u32 %v1713, 7
        %v1715 = vsub.s32 %v1712, %v1714
        %v1716 = vrot.slane %v1709, %v1715
        %v1717 = vcombine.low %v1365, %v1366
        %v1719 = vunpack.c.l.s4 1983009808
        %v1720 = vunpack.c.0.s8 %v1719
        %v1721 = vlaneseq
        %v1722 = vshrl.u32 %v1721, 7
        %v1723 = vsub.s32 %v1720, %v1722
        %v1724 = vrot.slane %v1717, %v1723
        %v1725 = vcombine.low %v1357, %v1364
        %v1727 = vunpack.c.l.s4 1983009808
        %v1728 = vunpack.c.0.s8 %v1727
        %v1729 = vlaneseq
        %v1730 = vshrl.u32 %v1729, 7
        %v1731 = vsub.s32 %v1728, %v1730
        %v1732 = vrot.slane %v1725, %v1731
        %v1733 = vcombine.low %v1367, %v1368
        %v1735 = vunpack.c.l.s4 1983009808
        %v1736 = vunpack.c.0.s8 %v1735
        %v1737 = vlaneseq
        %v1738 = vshrl.u32 %v1737, 7
        %v1739 = vsub.s32 %v1736, %v1738
        %v1740 = vrot.slane %v1733, %v1739
        %v1741 = vcombine.low %v1716, %v1724
        %v1742 = vcombine.high %v1716, %v1724
        %v1744 = vunpack.c.l.s4 1934713408
        %v1745 = vunpack.c.0.s8 %v1744
        %v1746 = vlaneseq
        %v1747 = vshrl.u32 %v1746, 7
        %v1748 = vsub.s32 %v1745, %v1747
        %v1749 = vrot.slane %v1741, %v1748
        %v1751 = vunpack.c.l.s4 1934713408
        %v1752 = vunpack.c.0.s8 %v1751
        %v1753 = vlaneseq
        %v1754 = vshrl.u32 %v1753, 7
        %v1755 = vsub.s32 %v1752, %v1754
        %v1756 = vrot.slane %v1742, %v1755
        %v1757 = vcombine.low %v1732, %v1740
        %v1758 = vcombine.high %v1732, %v1740
        %v1760 = vunpack.c.l.s4 1934713408
        %v1761 = vunpack.c.0.s8 %v1760
        %v1762 = vlaneseq
        %v1763 = vshrl.u32 %v1762, 7
        %v1764 = vsub.s32 %v1761, %v1763
        %v1765 = vrot.slane %v1757, %v1764
        %v1767 = vunpack.c.l.s4 1934713408
        %v1768 = vunpack.c.0.s8 %v1767
        %v1769 = vlaneseq
        %v1770 = vshrl.u32 %v1769, 7
        %v1771 = vsub.s32 %v1768, %v1770
        %v1772 = vrot.slane %v1758, %v1771
        %v1773 = vcombine.low %v1749, %v1765
        %v1774 = vcombine.high %v1749, %v1765
        %v1775 = vcombine.low %v1756, %v1772
        %v1776 = vcombine.high %v1756, %v1772
        %v1777 = vpack.c.bf16 %v1501, %v1433
        %v1778 = vpack.c.bf16 %v1569, %v1569
        %v1779 = vpack.c.bf16 %v1502, %v1434
        %v1780 = vpack.c.bf16 %v1570, %v1570
        %v1781 = vpack.c.bf16 %v1503, %v1435
        %v1782 = vpack.c.bf16 %v1571, %v1571
        %v1783 = vpack.c.bf16 %v1504, %v1436
        %v1784 = vpack.c.bf16 %v1572, %v1572
        %v1785 = vpack.c.bf16 %v1705, %v1637
        %v1786 = vpack.c.bf16 %v1773, %v1773
        %v1787 = vpack.c.bf16 %v1706, %v1638
        %v1788 = vpack.c.bf16 %v1774, %v1774
        %v1789 = vpack.c.bf16 %v1707, %v1639
        %v1790 = vpack.c.bf16 %v1775, %v1775
        %v1791 = vpack.c.bf16 %v1708, %v1640
        %v1792 = vpack.c.bf16 %v1776, %v1776
        %1793 = vrot.lane.b32.xlu0 %v879, 96
        %v1794 = vpop.permute.xlu0 %1793
        %1795 = vrot.lane.b32.xlu0 %v882, 96
        %v1796 = vpop.permute.xlu0 %1795
        %1797 = vrot.lane.b32.xlu0 %v887, 96
        %v1798 = vpop.permute.xlu0 %1797
        %1799 = vrot.lane.b32.xlu0 %v890, 96
        %v1800 = vpop.permute.xlu0 %1799
        %1801 = vrot.lane.b32.xlu0 %v895, 96
        %v1802 = vpop.permute.xlu0 %1801
        %1803 = vrot.lane.b32.xlu0 %v898, 96
        %v1804 = vpop.permute.xlu0 %1803
        %1805 = vrot.lane.b32.xlu0 %v908, 96
        %v1806 = vpop.permute.xlu0 %1805
        %1807 = vrot.lane.b32.xlu0 %v910, 96
        %v1808 = vpop.permute.xlu0 %1807
        %1809 = vrot.lane.b32.xlu0 %v912, 96
        %v1810 = vpop.permute.xlu0 %1809
        %1811 = vrot.lane.b32.xlu0 %v914, 96
        %v1812 = vpop.permute.xlu0 %1811
        %1813 = vrot.lane.b32.xlu0 %v916, 96
        %v1814 = vpop.permute.xlu0 %1813
        %1815 = vrot.lane.b32.xlu0 %v918, 96
        %v1816 = vpop.permute.xlu0 %1815
        %1817 = vrot.lane.b32.xlu0 %v926, 96
        %v1818 = vpop.permute.xlu0 %1817
        %1819 = vrot.lane.b32.xlu0 %v928, 96
        %v1820 = vpop.permute.xlu0 %1819
        %1821 = vrot.lane.b32.xlu0 %v930, 96
        %v1822 = vpop.permute.xlu0 %1821
        %1823 = vrot.lane.b32.xlu0 %v932, 96
        %v1824 = vpop.permute.xlu0 %1823
        %1825 = vrot.lane.b32.xlu0 %v934, 96
        %v1826 = vpop.permute.xlu0 %1825
        %1827 = vrot.lane.b32.xlu0 %v936, 96
        %v1828 = vpop.permute.xlu0 %1827
        %1829 = vrot.lane.b32.xlu0 %v944, 96
        %v1830 = vpop.permute.xlu0 %1829
        %1831 = vrot.lane.b32.xlu0 %v946, 96
        %v1832 = vpop.permute.xlu0 %1831
        %1833 = vrot.lane.b32.xlu0 %v948, 96
        %v1834 = vpop.permute.xlu0 %1833
        %1835 = vrot.lane.b32.xlu0 %v950, 96
        %v1836 = vpop.permute.xlu0 %1835
        %1837 = vrot.lane.b32.xlu0 %v952, 96
        %v1838 = vpop.permute.xlu0 %1837
        %1839 = vrot.lane.b32.xlu0 %v954, 96
        %v1840 = vpop.permute.xlu0 %1839
        %v1865 = vcombine.low %v1794, %v1818
        %v1866 = vcombine.high %v1794, %v1818
        %v1868 = vunpack.c.l.s4 1983009808
        %v1869 = vunpack.c.0.s8 %v1868
        %v1870 = vlaneseq
        %v1871 = vshrl.u32 %v1870, 7
        %v1872 = vsub.s32 %v1869, %v1871
        %v1873 = vrot.slane %v1865, %v1872
        %v1875 = vunpack.c.l.s4 1983009808
        %v1876 = vunpack.c.0.s8 %v1875
        %v1877 = vlaneseq
        %v1878 = vshrl.u32 %v1877, 7
        %v1879 = vsub.s32 %v1876, %v1878
        %v1880 = vrot.slane %v1866, %v1879
        %v1881 = vcombine.low %v1806, %v1830
        %v1882 = vcombine.high %v1806, %v1830
        %v1884 = vunpack.c.l.s4 1983009808
        %v1885 = vunpack.c.0.s8 %v1884
        %v1886 = vlaneseq
        %v1887 = vshrl.u32 %v1886, 7
        %v1888 = vsub.s32 %v1885, %v1887
        %v1889 = vrot.slane %v1881, %v1888
        %v1891 = vunpack.c.l.s4 1983009808
        %v1892 = vunpack.c.0.s8 %v1891
        %v1893 = vlaneseq
        %v1894 = vshrl.u32 %v1893, 7
        %v1895 = vsub.s32 %v1892, %v1894
        %v1896 = vrot.slane %v1882, %v1895
        %v1897 = vcombine.low %v1873, %v1889
        %v1898 = vcombine.high %v1873, %v1889
        %v1900 = vunpack.c.l.s4 1934713408
        %v1901 = vunpack.c.0.s8 %v1900
        %v1902 = vlaneseq
        %v1903 = vshrl.u32 %v1902, 7
        %v1904 = vsub.s32 %v1901, %v1903
        %v1905 = vrot.slane %v1897, %v1904
        %v1907 = vunpack.c.l.s4 1934713408
        %v1908 = vunpack.c.0.s8 %v1907
        %v1909 = vlaneseq
        %v1910 = vshrl.u32 %v1909, 7
        %v1911 = vsub.s32 %v1908, %v1910
        %v1912 = vrot.slane %v1898, %v1911
        %v1913 = vcombine.low %v1880, %v1896
        %v1914 = vcombine.high %v1880, %v1896
        %v1916 = vunpack.c.l.s4 1934713408
        %v1917 = vunpack.c.0.s8 %v1916
        %v1918 = vlaneseq
        %v1919 = vshrl.u32 %v1918, 7
        %v1920 = vsub.s32 %v1917, %v1919
        %v1921 = vrot.slane %v1913, %v1920
        %v1923 = vunpack.c.l.s4 1934713408
        %v1924 = vunpack.c.0.s8 %v1923
        %v1925 = vlaneseq
        %v1926 = vshrl.u32 %v1925, 7
        %v1927 = vsub.s32 %v1924, %v1926
        %v1928 = vrot.slane %v1914, %v1927
        %v1929 = vcombine.high %v1905, 0.0
        %v1930 = vcombine.high %v1912, 0.0
        %v1931 = vcombine.high %v1921, 0.0
        %v1932 = vcombine.high %v1928, 0.0
        %v1933 = vcombine.low %v1796, %v1820
        %v1934 = vcombine.high %v1796, %v1820
        %v1936 = vunpack.c.l.s4 1983009808
        %v1937 = vunpack.c.0.s8 %v1936
        %v1938 = vlaneseq
        %v1939 = vshrl.u32 %v1938, 7
        %v1940 = vsub.s32 %v1937, %v1939
        %v1941 = vrot.slane %v1933, %v1940
        %v1943 = vunpack.c.l.s4 1983009808
        %v1944 = vunpack.c.0.s8 %v1943
        %v1945 = vlaneseq
        %v1946 = vshrl.u32 %v1945, 7
        %v1947 = vsub.s32 %v1944, %v1946
        %v1948 = vrot.slane %v1934, %v1947
        %v1949 = vcombine.low %v1808, %v1832
        %v1950 = vcombine.high %v1808, %v1832
        %v1952 = vunpack.c.l.s4 1983009808
        %v1953 = vunpack.c.0.s8 %v1952
        %v1954 = vlaneseq
        %v1955 = vshrl.u32 %v1954, 7
        %v1956 = vsub.s32 %v1953, %v1955
        %v1957 = vrot.slane %v1949, %v1956
        %v1959 = vunpack.c.l.s4 1983009808
        %v1960 = vunpack.c.0.s8 %v1959
        %v1961 = vlaneseq
        %v1962 = vshrl.u32 %v1961, 7
        %v1963 = vsub.s32 %v1960, %v1962
        %v1964 = vrot.slane %v1950, %v1963
        %v1965 = vcombine.low %v1941, %v1957
        %v1966 = vcombine.high %v1941, %v1957
        %v1968 = vunpack.c.l.s4 1934713408
        %v1969 = vunpack.c.0.s8 %v1968
        %v1970 = vlaneseq
        %v1971 = vshrl.u32 %v1970, 7
        %v1972 = vsub.s32 %v1969, %v1971
        %v1973 = vrot.slane %v1965, %v1972
        %v1975 = vunpack.c.l.s4 1934713408
        %v1976 = vunpack.c.0.s8 %v1975
        %v1977 = vlaneseq
        %v1978 = vshrl.u32 %v1977, 7
        %v1979 = vsub.s32 %v1976, %v1978
        %v1980 = vrot.slane %v1966, %v1979
        %v1981 = vcombine.low %v1948, %v1964
        %v1982 = vcombine.high %v1948, %v1964
        %v1984 = vunpack.c.l.s4 1934713408
        %v1985 = vunpack.c.0.s8 %v1984
        %v1986 = vlaneseq
        %v1987 = vshrl.u32 %v1986, 7
        %v1988 = vsub.s32 %v1985, %v1987
        %v1989 = vrot.slane %v1981, %v1988
        %v1991 = vunpack.c.l.s4 1934713408
        %v1992 = vunpack.c.0.s8 %v1991
        %v1993 = vlaneseq
        %v1994 = vshrl.u32 %v1993, 7
        %v1995 = vsub.s32 %v1992, %v1994
        %v1996 = vrot.slane %v1982, %v1995
        %v1997 = vcombine.high %v1973, 0.0
        %v1998 = vcombine.high %v1980, 0.0
        %v1999 = vcombine.high %v1989, 0.0
        %v2000 = vcombine.high %v1996, 0.0
        %v2001 = vcombine.low %v1798, %v1822
        %v2002 = vcombine.high %v1798, %v1822
        %v2004 = vunpack.c.l.s4 1983009808
        %v2005 = vunpack.c.0.s8 %v2004
        %v2006 = vlaneseq
        %v2007 = vshrl.u32 %v2006, 7
        %v2008 = vsub.s32 %v2005, %v2007
        %v2009 = vrot.slane %v2001, %v2008
        %v2011 = vunpack.c.l.s4 1983009808
        %v2012 = vunpack.c.0.s8 %v2011
        %v2013 = vlaneseq
        %v2014 = vshrl.u32 %v2013, 7
        %v2015 = vsub.s32 %v2012, %v2014
        %v2016 = vrot.slane %v2002, %v2015
        %v2017 = vcombine.low %v1810, %v1834
        %v2018 = vcombine.high %v1810, %v1834
        %v2020 = vunpack.c.l.s4 1983009808
        %v2021 = vunpack.c.0.s8 %v2020
        %v2022 = vlaneseq
        %v2023 = vshrl.u32 %v2022, 7
        %v2024 = vsub.s32 %v2021, %v2023
        %v2025 = vrot.slane %v2017, %v2024
        %v2027 = vunpack.c.l.s4 1983009808
        %v2028 = vunpack.c.0.s8 %v2027
        %v2029 = vlaneseq
        %v2030 = vshrl.u32 %v2029, 7
        %v2031 = vsub.s32 %v2028, %v2030
        %v2032 = vrot.slane %v2018, %v2031
        %v2033 = vcombine.low %v2009, %v2025
        %v2034 = vcombine.high %v2009, %v2025
        %v2036 = vunpack.c.l.s4 1934713408
        %v2037 = vunpack.c.0.s8 %v2036
        %v2038 = vlaneseq
        %v2039 = vshrl.u32 %v2038, 7
        %v2040 = vsub.s32 %v2037, %v2039
        %v2041 = vrot.slane %v2033, %v2040
        %v2043 = vunpack.c.l.s4 1934713408
        %v2044 = vunpack.c.0.s8 %v2043
        %v2045 = vlaneseq
        %v2046 = vshrl.u32 %v2045, 7
        %v2047 = vsub.s32 %v2044, %v2046
        %v2048 = vrot.slane %v2034, %v2047
        %v2049 = vcombine.low %v2016, %v2032
        %v2050 = vcombine.high %v2016, %v2032
        %v2052 = vunpack.c.l.s4 1934713408
        %v2053 = vunpack.c.0.s8 %v2052
        %v2054 = vlaneseq
        %v2055 = vshrl.u32 %v2054, 7
        %v2056 = vsub.s32 %v2053, %v2055
        %v2057 = vrot.slane %v2049, %v2056
        %v2059 = vunpack.c.l.s4 1934713408
        %v2060 = vunpack.c.0.s8 %v2059
        %v2061 = vlaneseq
        %v2062 = vshrl.u32 %v2061, 7
        %v2063 = vsub.s32 %v2060, %v2062
        %v2064 = vrot.slane %v2050, %v2063
        %v2065 = vcombine.high %v2041, 0.0
        %v2066 = vcombine.high %v2048, 0.0
        %v2067 = vcombine.high %v2057, 0.0
        %v2068 = vcombine.high %v2064, 0.0
        %v2069 = vcombine.low %v1800, %v1824
        %v2070 = vcombine.high %v1800, %v1824
        %v2072 = vunpack.c.l.s4 1983009808
        %v2073 = vunpack.c.0.s8 %v2072
        %v2074 = vlaneseq
        %v2075 = vshrl.u32 %v2074, 7
        %v2076 = vsub.s32 %v2073, %v2075
        %v2077 = vrot.slane %v2069, %v2076
        %v2079 = vunpack.c.l.s4 1983009808
        %v2080 = vunpack.c.0.s8 %v2079
        %v2081 = vlaneseq
        %v2082 = vshrl.u32 %v2081, 7
        %v2083 = vsub.s32 %v2080, %v2082
        %v2084 = vrot.slane %v2070, %v2083
        %v2085 = vcombine.low %v1812, %v1836
        %v2086 = vcombine.high %v1812, %v1836
        %v2088 = vunpack.c.l.s4 1983009808
        %v2089 = vunpack.c.0.s8 %v2088
        %v2090 = vlaneseq
        %v2091 = vshrl.u32 %v2090, 7
        %v2092 = vsub.s32 %v2089, %v2091
        %v2093 = vrot.slane %v2085, %v2092
        %v2095 = vunpack.c.l.s4 1983009808
        %v2096 = vunpack.c.0.s8 %v2095
        %v2097 = vlaneseq
        %v2098 = vshrl.u32 %v2097, 7
        %v2099 = vsub.s32 %v2096, %v2098
        %v2100 = vrot.slane %v2086, %v2099
        %v2101 = vcombine.low %v2077, %v2093
        %v2102 = vcombine.high %v2077, %v2093
        %v2104 = vunpack.c.l.s4 1934713408
        %v2105 = vunpack.c.0.s8 %v2104
        %v2106 = vlaneseq
        %v2107 = vshrl.u32 %v2106, 7
        %v2108 = vsub.s32 %v2105, %v2107
        %v2109 = vrot.slane %v2101, %v2108
        %v2111 = vunpack.c.l.s4 1934713408
        %v2112 = vunpack.c.0.s8 %v2111
        %v2113 = vlaneseq
        %v2114 = vshrl.u32 %v2113, 7
        %v2115 = vsub.s32 %v2112, %v2114
        %v2116 = vrot.slane %v2102, %v2115
        %v2117 = vcombine.low %v2084, %v2100
        %v2118 = vcombine.high %v2084, %v2100
        %v2120 = vunpack.c.l.s4 1934713408
        %v2121 = vunpack.c.0.s8 %v2120
        %v2122 = vlaneseq
        %v2123 = vshrl.u32 %v2122, 7
        %v2124 = vsub.s32 %v2121, %v2123
        %v2125 = vrot.slane %v2117, %v2124
        %v2127 = vunpack.c.l.s4 1934713408
        %v2128 = vunpack.c.0.s8 %v2127
        %v2129 = vlaneseq
        %v2130 = vshrl.u32 %v2129, 7
        %v2131 = vsub.s32 %v2128, %v2130
        %v2132 = vrot.slane %v2118, %v2131
        %v2133 = vcombine.high %v2109, 0.0
        %v2134 = vcombine.high %v2116, 0.0
        %v2135 = vcombine.high %v2125, 0.0
        %v2136 = vcombine.high %v2132, 0.0
        %v2137 = vcombine.low %v1802, %v1826
        %v2138 = vcombine.high %v1802, %v1826
        %v2140 = vunpack.c.l.s4 1983009808
        %v2141 = vunpack.c.0.s8 %v2140
        %v2142 = vlaneseq
        %v2143 = vshrl.u32 %v2142, 7
        %v2144 = vsub.s32 %v2141, %v2143
        %v2145 = vrot.slane %v2137, %v2144
        %v2147 = vunpack.c.l.s4 1983009808
        %v2148 = vunpack.c.0.s8 %v2147
        %v2149 = vlaneseq
        %v2150 = vshrl.u32 %v2149, 7
        %v2151 = vsub.s32 %v2148, %v2150
        %v2152 = vrot.slane %v2138, %v2151
        %v2153 = vcombine.low %v1814, %v1838
        %v2154 = vcombine.high %v1814, %v1838
        %v2156 = vunpack.c.l.s4 1983009808
        %v2157 = vunpack.c.0.s8 %v2156
        %v2158 = vlaneseq
        %v2159 = vshrl.u32 %v2158, 7
        %v2160 = vsub.s32 %v2157, %v2159
        %v2161 = vrot.slane %v2153, %v2160
        %v2163 = vunpack.c.l.s4 1983009808
        %v2164 = vunpack.c.0.s8 %v2163
        %v2165 = vlaneseq
        %v2166 = vshrl.u32 %v2165, 7
        %v2167 = vsub.s32 %v2164, %v2166
        %v2168 = vrot.slane %v2154, %v2167
        %v2169 = vcombine.low %v2145, %v2161
        %v2170 = vcombine.high %v2145, %v2161
        %v2172 = vunpack.c.l.s4 1934713408
        %v2173 = vunpack.c.0.s8 %v2172
        %v2174 = vlaneseq
        %v2175 = vshrl.u32 %v2174, 7
        %v2176 = vsub.s32 %v2173, %v2175
        %v2177 = vrot.slane %v2169, %v2176
        %v2179 = vunpack.c.l.s4 1934713408
        %v2180 = vunpack.c.0.s8 %v2179
        %v2181 = vlaneseq
        %v2182 = vshrl.u32 %v2181, 7
        %v2183 = vsub.s32 %v2180, %v2182
        %v2184 = vrot.slane %v2170, %v2183
        %v2185 = vcombine.low %v2152, %v2168
        %v2186 = vcombine.high %v2152, %v2168
        %v2188 = vunpack.c.l.s4 1934713408
        %v2189 = vunpack.c.0.s8 %v2188
        %v2190 = vlaneseq
        %v2191 = vshrl.u32 %v2190, 7
        %v2192 = vsub.s32 %v2189, %v2191
        %v2193 = vrot.slane %v2185, %v2192
        %v2195 = vunpack.c.l.s4 1934713408
        %v2196 = vunpack.c.0.s8 %v2195
        %v2197 = vlaneseq
        %v2198 = vshrl.u32 %v2197, 7
        %v2199 = vsub.s32 %v2196, %v2198
        %v2200 = vrot.slane %v2186, %v2199
        %v2201 = vcombine.high %v2177, 0.0
        %v2202 = vcombine.high %v2184, 0.0
        %v2203 = vcombine.high %v2193, 0.0
        %v2204 = vcombine.high %v2200, 0.0
        %v2205 = vcombine.low %v1804, %v1828
        %v2206 = vcombine.high %v1804, %v1828
        %v2208 = vunpack.c.l.s4 1983009808
        %v2209 = vunpack.c.0.s8 %v2208
        %v2210 = vlaneseq
        %v2211 = vshrl.u32 %v2210, 7
        %v2212 = vsub.s32 %v2209, %v2211
        %v2213 = vrot.slane %v2205, %v2212
        %v2215 = vunpack.c.l.s4 1983009808
        %v2216 = vunpack.c.0.s8 %v2215
        %v2217 = vlaneseq
        %v2218 = vshrl.u32 %v2217, 7
        %v2219 = vsub.s32 %v2216, %v2218
        %v2220 = vrot.slane %v2206, %v2219
        %v2221 = vcombine.low %v1816, %v1840
        %v2222 = vcombine.high %v1816, %v1840
        %v2224 = vunpack.c.l.s4 1983009808
        %v2225 = vunpack.c.0.s8 %v2224
        %v2226 = vlaneseq
        %v2227 = vshrl.u32 %v2226, 7
        %v2228 = vsub.s32 %v2225, %v2227
        %v2229 = vrot.slane %v2221, %v2228
        %v2231 = vunpack.c.l.s4 1983009808
        %v2232 = vunpack.c.0.s8 %v2231
        %v2233 = vlaneseq
        %v2234 = vshrl.u32 %v2233, 7
        %v2235 = vsub.s32 %v2232, %v2234
        %v2236 = vrot.slane %v2222, %v2235
        %v2237 = vcombine.low %v2213, %v2229
        %v2238 = vcombine.high %v2213, %v2229
        %v2240 = vunpack.c.l.s4 1934713408
        %v2241 = vunpack.c.0.s8 %v2240
        %v2242 = vlaneseq
        %v2243 = vshrl.u32 %v2242, 7
        %v2244 = vsub.s32 %v2241, %v2243
        %v2245 = vrot.slane %v2237, %v2244
        %v2247 = vunpack.c.l.s4 1934713408
        %v2248 = vunpack.c.0.s8 %v2247
        %v2249 = vlaneseq
        %v2250 = vshrl.u32 %v2249, 7
        %v2251 = vsub.s32 %v2248, %v2250
        %v2252 = vrot.slane %v2238, %v2251
        %v2253 = vcombine.low %v2220, %v2236
        %v2254 = vcombine.high %v2220, %v2236
        %v2256 = vunpack.c.l.s4 1934713408
        %v2257 = vunpack.c.0.s8 %v2256
        %v2258 = vlaneseq
        %v2259 = vshrl.u32 %v2258, 7
        %v2260 = vsub.s32 %v2257, %v2259
        %v2261 = vrot.slane %v2253, %v2260
        %v2263 = vunpack.c.l.s4 1934713408
        %v2264 = vunpack.c.0.s8 %v2263
        %v2265 = vlaneseq
        %v2266 = vshrl.u32 %v2265, 7
        %v2267 = vsub.s32 %v2264, %v2266
        %v2268 = vrot.slane %v2254, %v2267
        %v2269 = vcombine.high %v2245, 0.0
        %v2270 = vcombine.high %v2252, 0.0
        %v2271 = vcombine.high %v2261, 0.0
        %v2272 = vcombine.high %v2268, 0.0
        %v2273 = vcombine.low %v1905, %v1912
        %v2275 = vunpack.c.l.s4 1983009808
        %v2276 = vunpack.c.0.s8 %v2275
        %v2277 = vlaneseq
        %v2278 = vshrl.u32 %v2277, 7
        %v2279 = vsub.s32 %v2276, %v2278
        %v2280 = vrot.slane %v2273, %v2279
        %v2281 = vcombine.low %v1929, %v1930
        %v2283 = vunpack.c.l.s4 1983009808
        %v2284 = vunpack.c.0.s8 %v2283
        %v2285 = vlaneseq
        %v2286 = vshrl.u32 %v2285, 7
        %v2287 = vsub.s32 %v2284, %v2286
        %v2288 = vrot.slane %v2281, %v2287
        %v2289 = vcombine.low %v1921, %v1928
        %v2291 = vunpack.c.l.s4 1983009808
        %v2292 = vunpack.c.0.s8 %v2291
        %v2293 = vlaneseq
        %v2294 = vshrl.u32 %v2293, 7
        %v2295 = vsub.s32 %v2292, %v2294
        %v2296 = vrot.slane %v2289, %v2295
        %v2297 = vcombine.low %v1931, %v1932
        %v2299 = vunpack.c.l.s4 1983009808
        %v2300 = vunpack.c.0.s8 %v2299
        %v2301 = vlaneseq
        %v2302 = vshrl.u32 %v2301, 7
        %v2303 = vsub.s32 %v2300, %v2302
        %v2304 = vrot.slane %v2297, %v2303
        %v2305 = vcombine.low %v2280, %v2288
        %v2306 = vcombine.high %v2280, %v2288
        %v2308 = vunpack.c.l.s4 1934713408
        %v2309 = vunpack.c.0.s8 %v2308
        %v2310 = vlaneseq
        %v2311 = vshrl.u32 %v2310, 7
        %v2312 = vsub.s32 %v2309, %v2311
        %v2313 = vrot.slane %v2305, %v2312
        %v2315 = vunpack.c.l.s4 1934713408
        %v2316 = vunpack.c.0.s8 %v2315
        %v2317 = vlaneseq
        %v2318 = vshrl.u32 %v2317, 7
        %v2319 = vsub.s32 %v2316, %v2318
        %v2320 = vrot.slane %v2306, %v2319
        %v2321 = vcombine.low %v2296, %v2304
        %v2322 = vcombine.high %v2296, %v2304
        %v2324 = vunpack.c.l.s4 1934713408
        %v2325 = vunpack.c.0.s8 %v2324
        %v2326 = vlaneseq
        %v2327 = vshrl.u32 %v2326, 7
        %v2328 = vsub.s32 %v2325, %v2327
        %v2329 = vrot.slane %v2321, %v2328
        %v2331 = vunpack.c.l.s4 1934713408
        %v2332 = vunpack.c.0.s8 %v2331
        %v2333 = vlaneseq
        %v2334 = vshrl.u32 %v2333, 7
        %v2335 = vsub.s32 %v2332, %v2334
        %v2336 = vrot.slane %v2322, %v2335
        %v2337 = vcombine.low %v2313, %v2329
        %v2338 = vcombine.high %v2313, %v2329
        %v2339 = vcombine.low %v2320, %v2336
        %v2340 = vcombine.high %v2320, %v2336
        %v2341 = vcombine.low %v1973, %v1980
        %v2343 = vunpack.c.l.s4 1983009808
        %v2344 = vunpack.c.0.s8 %v2343
        %v2345 = vlaneseq
        %v2346 = vshrl.u32 %v2345, 7
        %v2347 = vsub.s32 %v2344, %v2346
        %v2348 = vrot.slane %v2341, %v2347
        %v2349 = vcombine.low %v1997, %v1998
        %v2351 = vunpack.c.l.s4 1983009808
        %v2352 = vunpack.c.0.s8 %v2351
        %v2353 = vlaneseq
        %v2354 = vshrl.u32 %v2353, 7
        %v2355 = vsub.s32 %v2352, %v2354
        %v2356 = vrot.slane %v2349, %v2355
        %v2357 = vcombine.low %v1989, %v1996
        %v2359 = vunpack.c.l.s4 1983009808
        %v2360 = vunpack.c.0.s8 %v2359
        %v2361 = vlaneseq
        %v2362 = vshrl.u32 %v2361, 7
        %v2363 = vsub.s32 %v2360, %v2362
        %v2364 = vrot.slane %v2357, %v2363
        %v2365 = vcombine.low %v1999, %v2000
        %v2367 = vunpack.c.l.s4 1983009808
        %v2368 = vunpack.c.0.s8 %v2367
        %v2369 = vlaneseq
        %v2370 = vshrl.u32 %v2369, 7
        %v2371 = vsub.s32 %v2368, %v2370
        %v2372 = vrot.slane %v2365, %v2371
        %v2373 = vcombine.low %v2348, %v2356
        %v2374 = vcombine.high %v2348, %v2356
        %v2376 = vunpack.c.l.s4 1934713408
        %v2377 = vunpack.c.0.s8 %v2376
        %v2378 = vlaneseq
        %v2379 = vshrl.u32 %v2378, 7
        %v2380 = vsub.s32 %v2377, %v2379
        %v2381 = vrot.slane %v2373, %v2380
        %v2383 = vunpack.c.l.s4 1934713408
        %v2384 = vunpack.c.0.s8 %v2383
        %v2385 = vlaneseq
        %v2386 = vshrl.u32 %v2385, 7
        %v2387 = vsub.s32 %v2384, %v2386
        %v2388 = vrot.slane %v2374, %v2387
        %v2389 = vcombine.low %v2364, %v2372
        %v2390 = vcombine.high %v2364, %v2372
        %v2392 = vunpack.c.l.s4 1934713408
        %v2393 = vunpack.c.0.s8 %v2392
        %v2394 = vlaneseq
        %v2395 = vshrl.u32 %v2394, 7
        %v2396 = vsub.s32 %v2393, %v2395
        %v2397 = vrot.slane %v2389, %v2396
        %v2399 = vunpack.c.l.s4 1934713408
        %v2400 = vunpack.c.0.s8 %v2399
        %v2401 = vlaneseq
        %v2402 = vshrl.u32 %v2401, 7
        %v2403 = vsub.s32 %v2400, %v2402
        %v2404 = vrot.slane %v2390, %v2403
        %v2405 = vcombine.low %v2381, %v2397
        %v2406 = vcombine.high %v2381, %v2397
        %v2407 = vcombine.low %v2388, %v2404
        %v2408 = vcombine.high %v2388, %v2404
        %v2409 = vcombine.low %v2041, %v2048
        %v2411 = vunpack.c.l.s4 1983009808
        %v2412 = vunpack.c.0.s8 %v2411
        %v2413 = vlaneseq
        %v2414 = vshrl.u32 %v2413, 7
        %v2415 = vsub.s32 %v2412, %v2414
        %v2416 = vrot.slane %v2409, %v2415
        %v2417 = vcombine.low %v2065, %v2066
        %v2419 = vunpack.c.l.s4 1983009808
        %v2420 = vunpack.c.0.s8 %v2419
        %v2421 = vlaneseq
        %v2422 = vshrl.u32 %v2421, 7
        %v2423 = vsub.s32 %v2420, %v2422
        %v2424 = vrot.slane %v2417, %v2423
        %v2425 = vcombine.low %v2057, %v2064
        %v2427 = vunpack.c.l.s4 1983009808
        %v2428 = vunpack.c.0.s8 %v2427
        %v2429 = vlaneseq
        %v2430 = vshrl.u32 %v2429, 7
        %v2431 = vsub.s32 %v2428, %v2430
        %v2432 = vrot.slane %v2425, %v2431
        %v2433 = vcombine.low %v2067, %v2068
        %v2435 = vunpack.c.l.s4 1983009808
        %v2436 = vunpack.c.0.s8 %v2435
        %v2437 = vlaneseq
        %v2438 = vshrl.u32 %v2437, 7
        %v2439 = vsub.s32 %v2436, %v2438
        %v2440 = vrot.slane %v2433, %v2439
        %v2441 = vcombine.low %v2416, %v2424
        %v2442 = vcombine.high %v2416, %v2424
        %v2444 = vunpack.c.l.s4 1934713408
        %v2445 = vunpack.c.0.s8 %v2444
        %v2446 = vlaneseq
        %v2447 = vshrl.u32 %v2446, 7
        %v2448 = vsub.s32 %v2445, %v2447
        %v2449 = vrot.slane %v2441, %v2448
        %v2451 = vunpack.c.l.s4 1934713408
        %v2452 = vunpack.c.0.s8 %v2451
        %v2453 = vlaneseq
        %v2454 = vshrl.u32 %v2453, 7
        %v2455 = vsub.s32 %v2452, %v2454
        %v2456 = vrot.slane %v2442, %v2455
        %v2457 = vcombine.low %v2432, %v2440
        %v2458 = vcombine.high %v2432, %v2440
        %v2460 = vunpack.c.l.s4 1934713408
        %v2461 = vunpack.c.0.s8 %v2460
        %v2462 = vlaneseq
        %v2463 = vshrl.u32 %v2462, 7
        %v2464 = vsub.s32 %v2461, %v2463
        %v2465 = vrot.slane %v2457, %v2464
        %v2467 = vunpack.c.l.s4 1934713408
        %v2468 = vunpack.c.0.s8 %v2467
        %v2469 = vlaneseq
        %v2470 = vshrl.u32 %v2469, 7
        %v2471 = vsub.s32 %v2468, %v2470
        %v2472 = vrot.slane %v2458, %v2471
        %v2473 = vcombine.low %v2449, %v2465
        %v2474 = vcombine.high %v2449, %v2465
        %v2475 = vcombine.low %v2456, %v2472
        %v2476 = vcombine.high %v2456, %v2472
        %v2477 = vcombine.low %v2109, %v2116
        %v2479 = vunpack.c.l.s4 1983009808
        %v2480 = vunpack.c.0.s8 %v2479
        %v2481 = vlaneseq
        %v2482 = vshrl.u32 %v2481, 7
        %v2483 = vsub.s32 %v2480, %v2482
        %v2484 = vrot.slane %v2477, %v2483
        %v2485 = vcombine.low %v2133, %v2134
        %v2487 = vunpack.c.l.s4 1983009808
        %v2488 = vunpack.c.0.s8 %v2487
        %v2489 = vlaneseq
        %v2490 = vshrl.u32 %v2489, 7
        %v2491 = vsub.s32 %v2488, %v2490
        %v2492 = vrot.slane %v2485, %v2491
        %v2493 = vcombine.low %v2125, %v2132
        %v2495 = vunpack.c.l.s4 1983009808
        %v2496 = vunpack.c.0.s8 %v2495
        %v2497 = vlaneseq
        %v2498 = vshrl.u32 %v2497, 7
        %v2499 = vsub.s32 %v2496, %v2498
        %v2500 = vrot.slane %v2493, %v2499
        %v2501 = vcombine.low %v2135, %v2136
        %v2503 = vunpack.c.l.s4 1983009808
        %v2504 = vunpack.c.0.s8 %v2503
        %v2505 = vlaneseq
        %v2506 = vshrl.u32 %v2505, 7
        %v2507 = vsub.s32 %v2504, %v2506
        %v2508 = vrot.slane %v2501, %v2507
        %v2509 = vcombine.low %v2484, %v2492
        %v2510 = vcombine.high %v2484, %v2492
        %v2512 = vunpack.c.l.s4 1934713408
        %v2513 = vunpack.c.0.s8 %v2512
        %v2514 = vlaneseq
        %v2515 = vshrl.u32 %v2514, 7
        %v2516 = vsub.s32 %v2513, %v2515
        %v2517 = vrot.slane %v2509, %v2516
        %v2519 = vunpack.c.l.s4 1934713408
        %v2520 = vunpack.c.0.s8 %v2519
        %v2521 = vlaneseq
        %v2522 = vshrl.u32 %v2521, 7
        %v2523 = vsub.s32 %v2520, %v2522
        %v2524 = vrot.slane %v2510, %v2523
        %v2525 = vcombine.low %v2500, %v2508
        %v2526 = vcombine.high %v2500, %v2508
        %v2528 = vunpack.c.l.s4 1934713408
        %v2529 = vunpack.c.0.s8 %v2528
        %v2530 = vlaneseq
        %v2531 = vshrl.u32 %v2530, 7
        %v2532 = vsub.s32 %v2529, %v2531
        %v2533 = vrot.slane %v2525, %v2532
        %v2535 = vunpack.c.l.s4 1934713408
        %v2536 = vunpack.c.0.s8 %v2535
        %v2537 = vlaneseq
        %v2538 = vshrl.u32 %v2537, 7
        %v2539 = vsub.s32 %v2536, %v2538
        %v2540 = vrot.slane %v2526, %v2539
        %v2541 = vcombine.low %v2517, %v2533
        %v2542 = vcombine.high %v2517, %v2533
        %v2543 = vcombine.low %v2524, %v2540
        %v2544 = vcombine.high %v2524, %v2540
        %v2545 = vcombine.low %v2177, %v2184
        %v2547 = vunpack.c.l.s4 1983009808
        %v2548 = vunpack.c.0.s8 %v2547
        %v2549 = vlaneseq
        %v2550 = vshrl.u32 %v2549, 7
        %v2551 = vsub.s32 %v2548, %v2550
        %v2552 = vrot.slane %v2545, %v2551
        %v2553 = vcombine.low %v2201, %v2202
        %v2555 = vunpack.c.l.s4 1983009808
        %v2556 = vunpack.c.0.s8 %v2555
        %v2557 = vlaneseq
        %v2558 = vshrl.u32 %v2557, 7
        %v2559 = vsub.s32 %v2556, %v2558
        %v2560 = vrot.slane %v2553, %v2559
        %v2561 = vcombine.low %v2193, %v2200
        %v2563 = vunpack.c.l.s4 1983009808
        %v2564 = vunpack.c.0.s8 %v2563
        %v2565 = vlaneseq
        %v2566 = vshrl.u32 %v2565, 7
        %v2567 = vsub.s32 %v2564, %v2566
        %v2568 = vrot.slane %v2561, %v2567
        %v2569 = vcombine.low %v2203, %v2204
        %v2571 = vunpack.c.l.s4 1983009808
        %v2572 = vunpack.c.0.s8 %v2571
        %v2573 = vlaneseq
        %v2574 = vshrl.u32 %v2573, 7
        %v2575 = vsub.s32 %v2572, %v2574
        %v2576 = vrot.slane %v2569, %v2575
        %v2577 = vcombine.low %v2552, %v2560
        %v2578 = vcombine.high %v2552, %v2560
        %v2580 = vunpack.c.l.s4 1934713408
        %v2581 = vunpack.c.0.s8 %v2580
        %v2582 = vlaneseq
        %v2583 = vshrl.u32 %v2582, 7
        %v2584 = vsub.s32 %v2581, %v2583
        %v2585 = vrot.slane %v2577, %v2584
        %v2587 = vunpack.c.l.s4 1934713408
        %v2588 = vunpack.c.0.s8 %v2587
        %v2589 = vlaneseq
        %v2590 = vshrl.u32 %v2589, 7
        %v2591 = vsub.s32 %v2588, %v2590
        %v2592 = vrot.slane %v2578, %v2591
        %v2593 = vcombine.low %v2568, %v2576
        %v2594 = vcombine.high %v2568, %v2576
        %v2596 = vunpack.c.l.s4 1934713408
        %v2597 = vunpack.c.0.s8 %v2596
        %v2598 = vlaneseq
        %v2599 = vshrl.u32 %v2598, 7
        %v2600 = vsub.s32 %v2597, %v2599
        %v2601 = vrot.slane %v2593, %v2600
        %v2603 = vunpack.c.l.s4 1934713408
        %v2604 = vunpack.c.0.s8 %v2603
        %v2605 = vlaneseq
        %v2606 = vshrl.u32 %v2605, 7
        %v2607 = vsub.s32 %v2604, %v2606
        %v2608 = vrot.slane %v2594, %v2607
        %v2609 = vcombine.low %v2585, %v2601
        %v2610 = vcombine.high %v2585, %v2601
        %v2611 = vcombine.low %v2592, %v2608
        %v2612 = vcombine.high %v2592, %v2608
        %v2613 = vcombine.low %v2245, %v2252
        %v2615 = vunpack.c.l.s4 1983009808
        %v2616 = vunpack.c.0.s8 %v2615
        %v2617 = vlaneseq
        %v2618 = vshrl.u32 %v2617, 7
        %v2619 = vsub.s32 %v2616, %v2618
        %v2620 = vrot.slane %v2613, %v2619
        %v2621 = vcombine.low %v2269, %v2270
        %v2623 = vunpack.c.l.s4 1983009808
        %v2624 = vunpack.c.0.s8 %v2623
        %v2625 = vlaneseq
        %v2626 = vshrl.u32 %v2625, 7
        %v2627 = vsub.s32 %v2624, %v2626
        %v2628 = vrot.slane %v2621, %v2627
        %v2629 = vcombine.low %v2261, %v2268
        %v2631 = vunpack.c.l.s4 1983009808
        %v2632 = vunpack.c.0.s8 %v2631
        %v2633 = vlaneseq
        %v2634 = vshrl.u32 %v2633, 7
        %v2635 = vsub.s32 %v2632, %v2634
        %v2636 = vrot.slane %v2629, %v2635
        %v2637 = vcombine.low %v2271, %v2272
        %v2639 = vunpack.c.l.s4 1983009808
        %v2640 = vunpack.c.0.s8 %v2639
        %v2641 = vlaneseq
        %v2642 = vshrl.u32 %v2641, 7
        %v2643 = vsub.s32 %v2640, %v2642
        %v2644 = vrot.slane %v2637, %v2643
        %v2645 = vcombine.low %v2620, %v2628
        %v2646 = vcombine.high %v2620, %v2628
        %v2648 = vunpack.c.l.s4 1934713408
        %v2649 = vunpack.c.0.s8 %v2648
        %v2650 = vlaneseq
        %v2651 = vshrl.u32 %v2650, 7
        %v2652 = vsub.s32 %v2649, %v2651
        %v2653 = vrot.slane %v2645, %v2652
        %v2655 = vunpack.c.l.s4 1934713408
        %v2656 = vunpack.c.0.s8 %v2655
        %v2657 = vlaneseq
        %v2658 = vshrl.u32 %v2657, 7
        %v2659 = vsub.s32 %v2656, %v2658
        %v2660 = vrot.slane %v2646, %v2659
        %v2661 = vcombine.low %v2636, %v2644
        %v2662 = vcombine.high %v2636, %v2644
        %v2664 = vunpack.c.l.s4 1934713408
        %v2665 = vunpack.c.0.s8 %v2664
        %v2666 = vlaneseq
        %v2667 = vshrl.u32 %v2666, 7
        %v2668 = vsub.s32 %v2665, %v2667
        %v2669 = vrot.slane %v2661, %v2668
        %v2671 = vunpack.c.l.s4 1934713408
        %v2672 = vunpack.c.0.s8 %v2671
        %v2673 = vlaneseq
        %v2674 = vshrl.u32 %v2673, 7
        %v2675 = vsub.s32 %v2672, %v2674
        %v2676 = vrot.slane %v2662, %v2675
        %v2677 = vcombine.low %v2653, %v2669
        %v2678 = vcombine.high %v2653, %v2669
        %v2679 = vcombine.low %v2660, %v2676
        %v2680 = vcombine.high %v2660, %v2676
        %v2681 = vpack.c.bf16 %v2405, %v2337
        %v2682 = vpack.c.bf16 %v2473, %v2473
        %v2683 = vpack.c.bf16 %v2406, %v2338
        %v2684 = vpack.c.bf16 %v2474, %v2474
        %v2685 = vpack.c.bf16 %v2407, %v2339
        %v2686 = vpack.c.bf16 %v2475, %v2475
        %v2687 = vpack.c.bf16 %v2408, %v2340
        %v2688 = vpack.c.bf16 %v2476, %v2476
        %v2689 = vpack.c.bf16 %v2609, %v2541
        %v2690 = vpack.c.bf16 %v2677, %v2677
        %v2691 = vpack.c.bf16 %v2610, %v2542
        %v2692 = vpack.c.bf16 %v2678, %v2678
        %v2693 = vpack.c.bf16 %v2611, %v2543
        %v2694 = vpack.c.bf16 %v2679, %v2679
        %v2695 = vpack.c.bf16 %v2612, %v2544
        %v2696 = vpack.c.bf16 %v2680, %v2680
        %2697 = vrot.lane.b32.xlu0 %v879, 64
        %v2698 = vpop.permute.xlu0 %2697
        %2699 = vrot.lane.b32.xlu0 %v882, 64
        %v2700 = vpop.permute.xlu0 %2699
        %2701 = vrot.lane.b32.xlu0 %v887, 64
        %v2702 = vpop.permute.xlu0 %2701
        %2703 = vrot.lane.b32.xlu0 %v890, 64
        %v2704 = vpop.permute.xlu0 %2703
        %2705 = vrot.lane.b32.xlu0 %v895, 64
        %v2706 = vpop.permute.xlu0 %2705
        %2707 = vrot.lane.b32.xlu0 %v898, 64
        %v2708 = vpop.permute.xlu0 %2707
        %2709 = vrot.lane.b32.xlu0 %v908, 64
        %v2710 = vpop.permute.xlu0 %2709
        %2711 = vrot.lane.b32.xlu0 %v910, 64
        %v2712 = vpop.permute.xlu0 %2711
        %2713 = vrot.lane.b32.xlu0 %v912, 64
        %v2714 = vpop.permute.xlu0 %2713
        %2715 = vrot.lane.b32.xlu0 %v914, 64
        %v2716 = vpop.permute.xlu0 %2715
        %2717 = vrot.lane.b32.xlu0 %v916, 64
        %v2718 = vpop.permute.xlu0 %2717
        %2719 = vrot.lane.b32.xlu0 %v918, 64
        %v2720 = vpop.permute.xlu0 %2719
        %2721 = vrot.lane.b32.xlu0 %v926, 64
        %v2722 = vpop.permute.xlu0 %2721
        %2723 = vrot.lane.b32.xlu0 %v928, 64
        %v2724 = vpop.permute.xlu0 %2723
        %2725 = vrot.lane.b32.xlu0 %v930, 64
        %v2726 = vpop.permute.xlu0 %2725
        %2727 = vrot.lane.b32.xlu0 %v932, 64
        %v2728 = vpop.permute.xlu0 %2727
        %2729 = vrot.lane.b32.xlu0 %v934, 64
        %v2730 = vpop.permute.xlu0 %2729
        %2731 = vrot.lane.b32.xlu0 %v936, 64
        %v2732 = vpop.permute.xlu0 %2731
        %2733 = vrot.lane.b32.xlu0 %v944, 64
        %v2734 = vpop.permute.xlu0 %2733
        %2735 = vrot.lane.b32.xlu0 %v946, 64
        %v2736 = vpop.permute.xlu0 %2735
        %2737 = vrot.lane.b32.xlu0 %v948, 64
        %v2738 = vpop.permute.xlu0 %2737
        %2739 = vrot.lane.b32.xlu0 %v950, 64
        %v2740 = vpop.permute.xlu0 %2739
        %2741 = vrot.lane.b32.xlu0 %v952, 64
        %v2742 = vpop.permute.xlu0 %2741
        %2743 = vrot.lane.b32.xlu0 %v954, 64
        %v2744 = vpop.permute.xlu0 %2743
        %v2769 = vcombine.low %v2698, %v2722
        %v2770 = vcombine.high %v2698, %v2722
        %v2772 = vunpack.c.l.s4 1983009808
        %v2773 = vunpack.c.0.s8 %v2772
        %v2774 = vlaneseq
        %v2775 = vshrl.u32 %v2774, 7
        %v2776 = vsub.s32 %v2773, %v2775
        %v2777 = vrot.slane %v2769, %v2776
        %v2779 = vunpack.c.l.s4 1983009808
        %v2780 = vunpack.c.0.s8 %v2779
        %v2781 = vlaneseq
        %v2782 = vshrl.u32 %v2781, 7
        %v2783 = vsub.s32 %v2780, %v2782
        %v2784 = vrot.slane %v2770, %v2783
        %v2785 = vcombine.low %v2710, %v2734
        %v2786 = vcombine.high %v2710, %v2734
        %v2788 = vunpack.c.l.s4 1983009808
        %v2789 = vunpack.c.0.s8 %v2788
        %v2790 = vlaneseq
        %v2791 = vshrl.u32 %v2790, 7
        %v2792 = vsub.s32 %v2789, %v2791
        %v2793 = vrot.slane %v2785, %v2792
        %v2795 = vunpack.c.l.s4 1983009808
        %v2796 = vunpack.c.0.s8 %v2795
        %v2797 = vlaneseq
        %v2798 = vshrl.u32 %v2797, 7
        %v2799 = vsub.s32 %v2796, %v2798
        %v2800 = vrot.slane %v2786, %v2799
        %v2801 = vcombine.low %v2777, %v2793
        %v2802 = vcombine.high %v2777, %v2793
        %v2804 = vunpack.c.l.s4 1934713408
        %v2805 = vunpack.c.0.s8 %v2804
        %v2806 = vlaneseq
        %v2807 = vshrl.u32 %v2806, 7
        %v2808 = vsub.s32 %v2805, %v2807
        %v2809 = vrot.slane %v2801, %v2808
        %v2811 = vunpack.c.l.s4 1934713408
        %v2812 = vunpack.c.0.s8 %v2811
        %v2813 = vlaneseq
        %v2814 = vshrl.u32 %v2813, 7
        %v2815 = vsub.s32 %v2812, %v2814
        %v2816 = vrot.slane %v2802, %v2815
        %v2817 = vcombine.low %v2784, %v2800
        %v2818 = vcombine.high %v2784, %v2800
        %v2820 = vunpack.c.l.s4 1934713408
        %v2821 = vunpack.c.0.s8 %v2820
        %v2822 = vlaneseq
        %v2823 = vshrl.u32 %v2822, 7
        %v2824 = vsub.s32 %v2821, %v2823
        %v2825 = vrot.slane %v2817, %v2824
        %v2827 = vunpack.c.l.s4 1934713408
        %v2828 = vunpack.c.0.s8 %v2827
        %v2829 = vlaneseq
        %v2830 = vshrl.u32 %v2829, 7
        %v2831 = vsub.s32 %v2828, %v2830
        %v2832 = vrot.slane %v2818, %v2831
        %v2833 = vcombine.high %v2809, 0.0
        %v2834 = vcombine.high %v2816, 0.0
        %v2835 = vcombine.high %v2825, 0.0
        %v2836 = vcombine.high %v2832, 0.0
        %v2837 = vcombine.low %v2700, %v2724
        %v2838 = vcombine.high %v2700, %v2724
        %v2840 = vunpack.c.l.s4 1983009808
        %v2841 = vunpack.c.0.s8 %v2840
        %v2842 = vlaneseq
        %v2843 = vshrl.u32 %v2842, 7
        %v2844 = vsub.s32 %v2841, %v2843
        %v2845 = vrot.slane %v2837, %v2844
        %v2847 = vunpack.c.l.s4 1983009808
        %v2848 = vunpack.c.0.s8 %v2847
        %v2849 = vlaneseq
        %v2850 = vshrl.u32 %v2849, 7
        %v2851 = vsub.s32 %v2848, %v2850
        %v2852 = vrot.slane %v2838, %v2851
        %v2853 = vcombine.low %v2712, %v2736
        %v2854 = vcombine.high %v2712, %v2736
        %v2856 = vunpack.c.l.s4 1983009808
        %v2857 = vunpack.c.0.s8 %v2856
        %v2858 = vlaneseq
        %v2859 = vshrl.u32 %v2858, 7
        %v2860 = vsub.s32 %v2857, %v2859
        %v2861 = vrot.slane %v2853, %v2860
        %v2863 = vunpack.c.l.s4 1983009808
        %v2864 = vunpack.c.0.s8 %v2863
        %v2865 = vlaneseq
        %v2866 = vshrl.u32 %v2865, 7
        %v2867 = vsub.s32 %v2864, %v2866
        %v2868 = vrot.slane %v2854, %v2867
        %v2869 = vcombine.low %v2845, %v2861
        %v2870 = vcombine.high %v2845, %v2861
        %v2872 = vunpack.c.l.s4 1934713408
        %v2873 = vunpack.c.0.s8 %v2872
        %v2874 = vlaneseq
        %v2875 = vshrl.u32 %v2874, 7
        %v2876 = vsub.s32 %v2873, %v2875
        %v2877 = vrot.slane %v2869, %v2876
        %v2879 = vunpack.c.l.s4 1934713408
        %v2880 = vunpack.c.0.s8 %v2879
        %v2881 = vlaneseq
        %v2882 = vshrl.u32 %v2881, 7
        %v2883 = vsub.s32 %v2880, %v2882
        %v2884 = vrot.slane %v2870, %v2883
        %v2885 = vcombine.low %v2852, %v2868
        %v2886 = vcombine.high %v2852, %v2868
        %v2888 = vunpack.c.l.s4 1934713408
        %v2889 = vunpack.c.0.s8 %v2888
        %v2890 = vlaneseq
        %v2891 = vshrl.u32 %v2890, 7
        %v2892 = vsub.s32 %v2889, %v2891
        %v2893 = vrot.slane %v2885, %v2892
        %v2895 = vunpack.c.l.s4 1934713408
        %v2896 = vunpack.c.0.s8 %v2895
        %v2897 = vlaneseq
        %v2898 = vshrl.u32 %v2897, 7
        %v2899 = vsub.s32 %v2896, %v2898
        %v2900 = vrot.slane %v2886, %v2899
        %v2901 = vcombine.high %v2877, 0.0
        %v2902 = vcombine.high %v2884, 0.0
        %v2903 = vcombine.high %v2893, 0.0
        %v2904 = vcombine.high %v2900, 0.0
        %v2905 = vcombine.low %v2702, %v2726
        %v2906 = vcombine.high %v2702, %v2726
        %v2908 = vunpack.c.l.s4 1983009808
        %v2909 = vunpack.c.0.s8 %v2908
        %v2910 = vlaneseq
        %v2911 = vshrl.u32 %v2910, 7
        %v2912 = vsub.s32 %v2909, %v2911
        %v2913 = vrot.slane %v2905, %v2912
        %v2915 = vunpack.c.l.s4 1983009808
        %v2916 = vunpack.c.0.s8 %v2915
        %v2917 = vlaneseq
        %v2918 = vshrl.u32 %v2917, 7
        %v2919 = vsub.s32 %v2916, %v2918
        %v2920 = vrot.slane %v2906, %v2919
        %v2921 = vcombine.low %v2714, %v2738
        %v2922 = vcombine.high %v2714, %v2738
        %v2924 = vunpack.c.l.s4 1983009808
        %v2925 = vunpack.c.0.s8 %v2924
        %v2926 = vlaneseq
        %v2927 = vshrl.u32 %v2926, 7
        %v2928 = vsub.s32 %v2925, %v2927
        %v2929 = vrot.slane %v2921, %v2928
        %v2931 = vunpack.c.l.s4 1983009808
        %v2932 = vunpack.c.0.s8 %v2931
        %v2933 = vlaneseq
        %v2934 = vshrl.u32 %v2933, 7
        %v2935 = vsub.s32 %v2932, %v2934
        %v2936 = vrot.slane %v2922, %v2935
        %v2937 = vcombine.low %v2913, %v2929
        %v2938 = vcombine.high %v2913, %v2929
        %v2940 = vunpack.c.l.s4 1934713408
        %v2941 = vunpack.c.0.s8 %v2940
        %v2942 = vlaneseq
        %v2943 = vshrl.u32 %v2942, 7
        %v2944 = vsub.s32 %v2941, %v2943
        %v2945 = vrot.slane %v2937, %v2944
        %v2947 = vunpack.c.l.s4 1934713408
        %v2948 = vunpack.c.0.s8 %v2947
        %v2949 = vlaneseq
        %v2950 = vshrl.u32 %v2949, 7
        %v2951 = vsub.s32 %v2948, %v2950
        %v2952 = vrot.slane %v2938, %v2951
        %v2953 = vcombine.low %v2920, %v2936
        %v2954 = vcombine.high %v2920, %v2936
        %v2956 = vunpack.c.l.s4 1934713408
        %v2957 = vunpack.c.0.s8 %v2956
        %v2958 = vlaneseq
        %v2959 = vshrl.u32 %v2958, 7
        %v2960 = vsub.s32 %v2957, %v2959
        %v2961 = vrot.slane %v2953, %v2960
        %v2963 = vunpack.c.l.s4 1934713408
        %v2964 = vunpack.c.0.s8 %v2963
        %v2965 = vlaneseq
        %v2966 = vshrl.u32 %v2965, 7
        %v2967 = vsub.s32 %v2964, %v2966
        %v2968 = vrot.slane %v2954, %v2967
        %v2969 = vcombine.high %v2945, 0.0
        %v2970 = vcombine.high %v2952, 0.0
        %v2971 = vcombine.high %v2961, 0.0
        %v2972 = vcombine.high %v2968, 0.0
        %v2973 = vcombine.low %v2704, %v2728
        %v2974 = vcombine.high %v2704, %v2728
        %v2976 = vunpack.c.l.s4 1983009808
        %v2977 = vunpack.c.0.s8 %v2976
        %v2978 = vlaneseq
        %v2979 = vshrl.u32 %v2978, 7
        %v2980 = vsub.s32 %v2977, %v2979
        %v2981 = vrot.slane %v2973, %v2980
        %v2983 = vunpack.c.l.s4 1983009808
        %v2984 = vunpack.c.0.s8 %v2983
        %v2985 = vlaneseq
        %v2986 = vshrl.u32 %v2985, 7
        %v2987 = vsub.s32 %v2984, %v2986
        %v2988 = vrot.slane %v2974, %v2987
        %v2989 = vcombine.low %v2716, %v2740
        %v2990 = vcombine.high %v2716, %v2740
        %v2992 = vunpack.c.l.s4 1983009808
        %v2993 = vunpack.c.0.s8 %v2992
        %v2994 = vlaneseq
        %v2995 = vshrl.u32 %v2994, 7
        %v2996 = vsub.s32 %v2993, %v2995
        %v2997 = vrot.slane %v2989, %v2996
        %v2999 = vunpack.c.l.s4 1983009808
        %v3000 = vunpack.c.0.s8 %v2999
        %v3001 = vlaneseq
        %v3002 = vshrl.u32 %v3001, 7
        %v3003 = vsub.s32 %v3000, %v3002
        %v3004 = vrot.slane %v2990, %v3003
        %v3005 = vcombine.low %v2981, %v2997
        %v3006 = vcombine.high %v2981, %v2997
        %v3008 = vunpack.c.l.s4 1934713408
        %v3009 = vunpack.c.0.s8 %v3008
        %v3010 = vlaneseq
        %v3011 = vshrl.u32 %v3010, 7
        %v3012 = vsub.s32 %v3009, %v3011
        %v3013 = vrot.slane %v3005, %v3012
        %v3015 = vunpack.c.l.s4 1934713408
        %v3016 = vunpack.c.0.s8 %v3015
        %v3017 = vlaneseq
        %v3018 = vshrl.u32 %v3017, 7
        %v3019 = vsub.s32 %v3016, %v3018
        %v3020 = vrot.slane %v3006, %v3019
        %v3021 = vcombine.low %v2988, %v3004
        %v3022 = vcombine.high %v2988, %v3004
        %v3024 = vunpack.c.l.s4 1934713408
        %v3025 = vunpack.c.0.s8 %v3024
        %v3026 = vlaneseq
        %v3027 = vshrl.u32 %v3026, 7
        %v3028 = vsub.s32 %v3025, %v3027
        %v3029 = vrot.slane %v3021, %v3028
        %v3031 = vunpack.c.l.s4 1934713408
        %v3032 = vunpack.c.0.s8 %v3031
        %v3033 = vlaneseq
        %v3034 = vshrl.u32 %v3033, 7
        %v3035 = vsub.s32 %v3032, %v3034
        %v3036 = vrot.slane %v3022, %v3035
        %v3037 = vcombine.high %v3013, 0.0
        %v3038 = vcombine.high %v3020, 0.0
        %v3039 = vcombine.high %v3029, 0.0
        %v3040 = vcombine.high %v3036, 0.0
        %v3041 = vcombine.low %v2706, %v2730
        %v3042 = vcombine.high %v2706, %v2730
        %v3044 = vunpack.c.l.s4 1983009808
        %v3045 = vunpack.c.0.s8 %v3044
        %v3046 = vlaneseq
        %v3047 = vshrl.u32 %v3046, 7
        %v3048 = vsub.s32 %v3045, %v3047
        %v3049 = vrot.slane %v3041, %v3048
        %v3051 = vunpack.c.l.s4 1983009808
        %v3052 = vunpack.c.0.s8 %v3051
        %v3053 = vlaneseq
        %v3054 = vshrl.u32 %v3053, 7
        %v3055 = vsub.s32 %v3052, %v3054
        %v3056 = vrot.slane %v3042, %v3055
        %v3057 = vcombine.low %v2718, %v2742
        %v3058 = vcombine.high %v2718, %v2742
        %v3060 = vunpack.c.l.s4 1983009808
        %v3061 = vunpack.c.0.s8 %v3060
        %v3062 = vlaneseq
        %v3063 = vshrl.u32 %v3062, 7
        %v3064 = vsub.s32 %v3061, %v3063
        %v3065 = vrot.slane %v3057, %v3064
        %v3067 = vunpack.c.l.s4 1983009808
        %v3068 = vunpack.c.0.s8 %v3067
        %v3069 = vlaneseq
        %v3070 = vshrl.u32 %v3069, 7
        %v3071 = vsub.s32 %v3068, %v3070
        %v3072 = vrot.slane %v3058, %v3071
        %v3073 = vcombine.low %v3049, %v3065
        %v3074 = vcombine.high %v3049, %v3065
        %v3076 = vunpack.c.l.s4 1934713408
        %v3077 = vunpack.c.0.s8 %v3076
        %v3078 = vlaneseq
        %v3079 = vshrl.u32 %v3078, 7
        %v3080 = vsub.s32 %v3077, %v3079
        %v3081 = vrot.slane %v3073, %v3080
        %v3083 = vunpack.c.l.s4 1934713408
        %v3084 = vunpack.c.0.s8 %v3083
        %v3085 = vlaneseq
        %v3086 = vshrl.u32 %v3085, 7
        %v3087 = vsub.s32 %v3084, %v3086
        %v3088 = vrot.slane %v3074, %v3087
        %v3089 = vcombine.low %v3056, %v3072
        %v3090 = vcombine.high %v3056, %v3072
        %v3092 = vunpack.c.l.s4 1934713408
        %v3093 = vunpack.c.0.s8 %v3092
        %v3094 = vlaneseq
        %v3095 = vshrl.u32 %v3094, 7
        %v3096 = vsub.s32 %v3093, %v3095
        %v3097 = vrot.slane %v3089, %v3096
        %v3099 = vunpack.c.l.s4 1934713408
        %v3100 = vunpack.c.0.s8 %v3099
        %v3101 = vlaneseq
        %v3102 = vshrl.u32 %v3101, 7
        %v3103 = vsub.s32 %v3100, %v3102
        %v3104 = vrot.slane %v3090, %v3103
        %v3105 = vcombine.high %v3081, 0.0
        %v3106 = vcombine.high %v3088, 0.0
        %v3107 = vcombine.high %v3097, 0.0
        %v3108 = vcombine.high %v3104, 0.0
        %v3109 = vcombine.low %v2708, %v2732
        %v3110 = vcombine.high %v2708, %v2732
        %v3112 = vunpack.c.l.s4 1983009808
        %v3113 = vunpack.c.0.s8 %v3112
        %v3114 = vlaneseq
        %v3115 = vshrl.u32 %v3114, 7
        %v3116 = vsub.s32 %v3113, %v3115
        %v3117 = vrot.slane %v3109, %v3116
        %v3119 = vunpack.c.l.s4 1983009808
        %v3120 = vunpack.c.0.s8 %v3119
        %v3121 = vlaneseq
        %v3122 = vshrl.u32 %v3121, 7
        %v3123 = vsub.s32 %v3120, %v3122
        %v3124 = vrot.slane %v3110, %v3123
        %v3125 = vcombine.low %v2720, %v2744
        %v3126 = vcombine.high %v2720, %v2744
        %v3128 = vunpack.c.l.s4 1983009808
        %v3129 = vunpack.c.0.s8 %v3128
        %v3130 = vlaneseq
        %v3131 = vshrl.u32 %v3130, 7
        %v3132 = vsub.s32 %v3129, %v3131
        %v3133 = vrot.slane %v3125, %v3132
        %v3135 = vunpack.c.l.s4 1983009808
        %v3136 = vunpack.c.0.s8 %v3135
        %v3137 = vlaneseq
        %v3138 = vshrl.u32 %v3137, 7
        %v3139 = vsub.s32 %v3136, %v3138
        %v3140 = vrot.slane %v3126, %v3139
        %v3141 = vcombine.low %v3117, %v3133
        %v3142 = vcombine.high %v3117, %v3133
        %v3144 = vunpack.c.l.s4 1934713408
        %v3145 = vunpack.c.0.s8 %v3144
        %v3146 = vlaneseq
        %v3147 = vshrl.u32 %v3146, 7
        %v3148 = vsub.s32 %v3145, %v3147
        %v3149 = vrot.slane %v3141, %v3148
        %v3151 = vunpack.c.l.s4 1934713408
        %v3152 = vunpack.c.0.s8 %v3151
        %v3153 = vlaneseq
        %v3154 = vshrl.u32 %v3153, 7
        %v3155 = vsub.s32 %v3152, %v3154
        %v3156 = vrot.slane %v3142, %v3155
        %v3157 = vcombine.low %v3124, %v3140
        %v3158 = vcombine.high %v3124, %v3140
        %v3160 = vunpack.c.l.s4 1934713408
        %v3161 = vunpack.c.0.s8 %v3160
        %v3162 = vlaneseq
        %v3163 = vshrl.u32 %v3162, 7
        %v3164 = vsub.s32 %v3161, %v3163
        %v3165 = vrot.slane %v3157, %v3164
        %v3167 = vunpack.c.l.s4 1934713408
        %v3168 = vunpack.c.0.s8 %v3167
        %v3169 = vlaneseq
        %v3170 = vshrl.u32 %v3169, 7
        %v3171 = vsub.s32 %v3168, %v3170
        %v3172 = vrot.slane %v3158, %v3171
        %v3173 = vcombine.high %v3149, 0.0
        %v3174 = vcombine.high %v3156, 0.0
        %v3175 = vcombine.high %v3165, 0.0
        %v3176 = vcombine.high %v3172, 0.0
        %v3177 = vcombine.low %v2809, %v2816
        %v3179 = vunpack.c.l.s4 1983009808
        %v3180 = vunpack.c.0.s8 %v3179
        %v3181 = vlaneseq
        %v3182 = vshrl.u32 %v3181, 7
        %v3183 = vsub.s32 %v3180, %v3182
        %v3184 = vrot.slane %v3177, %v3183
        %v3185 = vcombine.low %v2833, %v2834
        %v3187 = vunpack.c.l.s4 1983009808
        %v3188 = vunpack.c.0.s8 %v3187
        %v3189 = vlaneseq
        %v3190 = vshrl.u32 %v3189, 7
        %v3191 = vsub.s32 %v3188, %v3190
        %v3192 = vrot.slane %v3185, %v3191
        %v3193 = vcombine.low %v2825, %v2832
        %v3195 = vunpack.c.l.s4 1983009808
        %v3196 = vunpack.c.0.s8 %v3195
        %v3197 = vlaneseq
        %v3198 = vshrl.u32 %v3197, 7
        %v3199 = vsub.s32 %v3196, %v3198
        %v3200 = vrot.slane %v3193, %v3199
        %v3201 = vcombine.low %v2835, %v2836
        %v3203 = vunpack.c.l.s4 1983009808
        %v3204 = vunpack.c.0.s8 %v3203
        %v3205 = vlaneseq
        %v3206 = vshrl.u32 %v3205, 7
        %v3207 = vsub.s32 %v3204, %v3206
        %v3208 = vrot.slane %v3201, %v3207
        %v3209 = vcombine.low %v3184, %v3192
        %v3210 = vcombine.high %v3184, %v3192
        %v3212 = vunpack.c.l.s4 1934713408
        %v3213 = vunpack.c.0.s8 %v3212
        %v3214 = vlaneseq
        %v3215 = vshrl.u32 %v3214, 7
        %v3216 = vsub.s32 %v3213, %v3215
        %v3217 = vrot.slane %v3209, %v3216
        %v3219 = vunpack.c.l.s4 1934713408
        %v3220 = vunpack.c.0.s8 %v3219
        %v3221 = vlaneseq
        %v3222 = vshrl.u32 %v3221, 7
        %v3223 = vsub.s32 %v3220, %v3222
        %v3224 = vrot.slane %v3210, %v3223
        %v3225 = vcombine.low %v3200, %v3208
        %v3226 = vcombine.high %v3200, %v3208
        %v3228 = vunpack.c.l.s4 1934713408
        %v3229 = vunpack.c.0.s8 %v3228
        %v3230 = vlaneseq
        %v3231 = vshrl.u32 %v3230, 7
        %v3232 = vsub.s32 %v3229, %v3231
        %v3233 = vrot.slane %v3225, %v3232
        %v3235 = vunpack.c.l.s4 1934713408
        %v3236 = vunpack.c.0.s8 %v3235
        %v3237 = vlaneseq
        %v3238 = vshrl.u32 %v3237, 7
        %v3239 = vsub.s32 %v3236, %v3238
        %v3240 = vrot.slane %v3226, %v3239
        %v3241 = vcombine.low %v3217, %v3233
        %v3242 = vcombine.high %v3217, %v3233
        %v3243 = vcombine.low %v3224, %v3240
        %v3244 = vcombine.high %v3224, %v3240
        %v3245 = vcombine.low %v2877, %v2884
        %v3247 = vunpack.c.l.s4 1983009808
        %v3248 = vunpack.c.0.s8 %v3247
        %v3249 = vlaneseq
        %v3250 = vshrl.u32 %v3249, 7
        %v3251 = vsub.s32 %v3248, %v3250
        %v3252 = vrot.slane %v3245, %v3251
        %v3253 = vcombine.low %v2901, %v2902
        %v3255 = vunpack.c.l.s4 1983009808
        %v3256 = vunpack.c.0.s8 %v3255
        %v3257 = vlaneseq
        %v3258 = vshrl.u32 %v3257, 7
        %v3259 = vsub.s32 %v3256, %v3258
        %v3260 = vrot.slane %v3253, %v3259
        %v3261 = vcombine.low %v2893, %v2900
        %v3263 = vunpack.c.l.s4 1983009808
        %v3264 = vunpack.c.0.s8 %v3263
        %v3265 = vlaneseq
        %v3266 = vshrl.u32 %v3265, 7
        %v3267 = vsub.s32 %v3264, %v3266
        %v3268 = vrot.slane %v3261, %v3267
        %v3269 = vcombine.low %v2903, %v2904
        %v3271 = vunpack.c.l.s4 1983009808
        %v3272 = vunpack.c.0.s8 %v3271
        %v3273 = vlaneseq
        %v3274 = vshrl.u32 %v3273, 7
        %v3275 = vsub.s32 %v3272, %v3274
        %v3276 = vrot.slane %v3269, %v3275
        %v3277 = vcombine.low %v3252, %v3260
        %v3278 = vcombine.high %v3252, %v3260
        %v3280 = vunpack.c.l.s4 1934713408
        %v3281 = vunpack.c.0.s8 %v3280
        %v3282 = vlaneseq
        %v3283 = vshrl.u32 %v3282, 7
        %v3284 = vsub.s32 %v3281, %v3283
        %v3285 = vrot.slane %v3277, %v3284
        %v3287 = vunpack.c.l.s4 1934713408
        %v3288 = vunpack.c.0.s8 %v3287
        %v3289 = vlaneseq
        %v3290 = vshrl.u32 %v3289, 7
        %v3291 = vsub.s32 %v3288, %v3290
        %v3292 = vrot.slane %v3278, %v3291
        %v3293 = vcombine.low %v3268, %v3276
        %v3294 = vcombine.high %v3268, %v3276
        %v3296 = vunpack.c.l.s4 1934713408
        %v3297 = vunpack.c.0.s8 %v3296
        %v3298 = vlaneseq
        %v3299 = vshrl.u32 %v3298, 7
        %v3300 = vsub.s32 %v3297, %v3299
        %v3301 = vrot.slane %v3293, %v3300
        %v3303 = vunpack.c.l.s4 1934713408
        %v3304 = vunpack.c.0.s8 %v3303
        %v3305 = vlaneseq
        %v3306 = vshrl.u32 %v3305, 7
        %v3307 = vsub.s32 %v3304, %v3306
        %v3308 = vrot.slane %v3294, %v3307
        %v3309 = vcombine.low %v3285, %v3301
        %v3310 = vcombine.high %v3285, %v3301
        %v3311 = vcombine.low %v3292, %v3308
        %v3312 = vcombine.high %v3292, %v3308
        %v3313 = vcombine.low %v2945, %v2952
        %v3315 = vunpack.c.l.s4 1983009808
        %v3316 = vunpack.c.0.s8 %v3315
        %v3317 = vlaneseq
        %v3318 = vshrl.u32 %v3317, 7
        %v3319 = vsub.s32 %v3316, %v3318
        %v3320 = vrot.slane %v3313, %v3319
        %v3321 = vcombine.low %v2969, %v2970
        %v3323 = vunpack.c.l.s4 1983009808
        %v3324 = vunpack.c.0.s8 %v3323
        %v3325 = vlaneseq
        %v3326 = vshrl.u32 %v3325, 7
        %v3327 = vsub.s32 %v3324, %v3326
        %v3328 = vrot.slane %v3321, %v3327
        %v3329 = vcombine.low %v2961, %v2968
        %v3331 = vunpack.c.l.s4 1983009808
        %v3332 = vunpack.c.0.s8 %v3331
        %v3333 = vlaneseq
        %v3334 = vshrl.u32 %v3333, 7
        %v3335 = vsub.s32 %v3332, %v3334
        %v3336 = vrot.slane %v3329, %v3335
        %v3337 = vcombine.low %v2971, %v2972
        %v3339 = vunpack.c.l.s4 1983009808
        %v3340 = vunpack.c.0.s8 %v3339
        %v3341 = vlaneseq
        %v3342 = vshrl.u32 %v3341, 7
        %v3343 = vsub.s32 %v3340, %v3342
        %v3344 = vrot.slane %v3337, %v3343
        %v3345 = vcombine.low %v3320, %v3328
        %v3346 = vcombine.high %v3320, %v3328
        %v3348 = vunpack.c.l.s4 1934713408
        %v3349 = vunpack.c.0.s8 %v3348
        %v3350 = vlaneseq
        %v3351 = vshrl.u32 %v3350, 7
        %v3352 = vsub.s32 %v3349, %v3351
        %v3353 = vrot.slane %v3345, %v3352
        %v3355 = vunpack.c.l.s4 1934713408
        %v3356 = vunpack.c.0.s8 %v3355
        %v3357 = vlaneseq
        %v3358 = vshrl.u32 %v3357, 7
        %v3359 = vsub.s32 %v3356, %v3358
        %v3360 = vrot.slane %v3346, %v3359
        %v3361 = vcombine.low %v3336, %v3344
        %v3362 = vcombine.high %v3336, %v3344
        %v3364 = vunpack.c.l.s4 1934713408
        %v3365 = vunpack.c.0.s8 %v3364
        %v3366 = vlaneseq
        %v3367 = vshrl.u32 %v3366, 7
        %v3368 = vsub.s32 %v3365, %v3367
        %v3369 = vrot.slane %v3361, %v3368
        %v3371 = vunpack.c.l.s4 1934713408
        %v3372 = vunpack.c.0.s8 %v3371
        %v3373 = vlaneseq
        %v3374 = vshrl.u32 %v3373, 7
        %v3375 = vsub.s32 %v3372, %v3374
        %v3376 = vrot.slane %v3362, %v3375
        %v3377 = vcombine.low %v3353, %v3369
        %v3378 = vcombine.high %v3353, %v3369
        %v3379 = vcombine.low %v3360, %v3376
        %v3380 = vcombine.high %v3360, %v3376
        %v3381 = vcombine.low %v3013, %v3020
        %v3383 = vunpack.c.l.s4 1983009808
        %v3384 = vunpack.c.0.s8 %v3383
        %v3385 = vlaneseq
        %v3386 = vshrl.u32 %v3385, 7
        %v3387 = vsub.s32 %v3384, %v3386
        %v3388 = vrot.slane %v3381, %v3387
        %v3389 = vcombine.low %v3037, %v3038
        %v3391 = vunpack.c.l.s4 1983009808
        %v3392 = vunpack.c.0.s8 %v3391
        %v3393 = vlaneseq
        %v3394 = vshrl.u32 %v3393, 7
        %v3395 = vsub.s32 %v3392, %v3394
        %v3396 = vrot.slane %v3389, %v3395
        %v3397 = vcombine.low %v3029, %v3036
        %v3399 = vunpack.c.l.s4 1983009808
        %v3400 = vunpack.c.0.s8 %v3399
        %v3401 = vlaneseq
        %v3402 = vshrl.u32 %v3401, 7
        %v3403 = vsub.s32 %v3400, %v3402
        %v3404 = vrot.slane %v3397, %v3403
        %v3405 = vcombine.low %v3039, %v3040
        %v3407 = vunpack.c.l.s4 1983009808
        %v3408 = vunpack.c.0.s8 %v3407
        %v3409 = vlaneseq
        %v3410 = vshrl.u32 %v3409, 7
        %v3411 = vsub.s32 %v3408, %v3410
        %v3412 = vrot.slane %v3405, %v3411
        %v3413 = vcombine.low %v3388, %v3396
        %v3414 = vcombine.high %v3388, %v3396
        %v3416 = vunpack.c.l.s4 1934713408
        %v3417 = vunpack.c.0.s8 %v3416
        %v3418 = vlaneseq
        %v3419 = vshrl.u32 %v3418, 7
        %v3420 = vsub.s32 %v3417, %v3419
        %v3421 = vrot.slane %v3413, %v3420
        %v3423 = vunpack.c.l.s4 1934713408
        %v3424 = vunpack.c.0.s8 %v3423
        %v3425 = vlaneseq
        %v3426 = vshrl.u32 %v3425, 7
        %v3427 = vsub.s32 %v3424, %v3426
        %v3428 = vrot.slane %v3414, %v3427
        %v3429 = vcombine.low %v3404, %v3412
        %v3430 = vcombine.high %v3404, %v3412
        %v3432 = vunpack.c.l.s4 1934713408
        %v3433 = vunpack.c.0.s8 %v3432
        %v3434 = vlaneseq
        %v3435 = vshrl.u32 %v3434, 7
        %v3436 = vsub.s32 %v3433, %v3435
        %v3437 = vrot.slane %v3429, %v3436
        %v3439 = vunpack.c.l.s4 1934713408
        %v3440 = vunpack.c.0.s8 %v3439
        %v3441 = vlaneseq
        %v3442 = vshrl.u32 %v3441, 7
        %v3443 = vsub.s32 %v3440, %v3442
        %v3444 = vrot.slane %v3430, %v3443
        %v3445 = vcombine.low %v3421, %v3437
        %v3446 = vcombine.high %v3421, %v3437
        %v3447 = vcombine.low %v3428, %v3444
        %v3448 = vcombine.high %v3428, %v3444
        %v3449 = vcombine.low %v3081, %v3088
        %v3451 = vunpack.c.l.s4 1983009808
        %v3452 = vunpack.c.0.s8 %v3451
        %v3453 = vlaneseq
        %v3454 = vshrl.u32 %v3453, 7
        %v3455 = vsub.s32 %v3452, %v3454
        %v3456 = vrot.slane %v3449, %v3455
        %v3457 = vcombine.low %v3105, %v3106
        %v3459 = vunpack.c.l.s4 1983009808
        %v3460 = vunpack.c.0.s8 %v3459
        %v3461 = vlaneseq
        %v3462 = vshrl.u32 %v3461, 7
        %v3463 = vsub.s32 %v3460, %v3462
        %v3464 = vrot.slane %v3457, %v3463
        %v3465 = vcombine.low %v3097, %v3104
        %v3467 = vunpack.c.l.s4 1983009808
        %v3468 = vunpack.c.0.s8 %v3467
        %v3469 = vlaneseq
        %v3470 = vshrl.u32 %v3469, 7
        %v3471 = vsub.s32 %v3468, %v3470
        %v3472 = vrot.slane %v3465, %v3471
        %v3473 = vcombine.low %v3107, %v3108
        %v3475 = vunpack.c.l.s4 1983009808
        %v3476 = vunpack.c.0.s8 %v3475
        %v3477 = vlaneseq
        %v3478 = vshrl.u32 %v3477, 7
        %v3479 = vsub.s32 %v3476, %v3478
        %v3480 = vrot.slane %v3473, %v3479
        %v3481 = vcombine.low %v3456, %v3464
        %v3482 = vcombine.high %v3456, %v3464
        %v3484 = vunpack.c.l.s4 1934713408
        %v3485 = vunpack.c.0.s8 %v3484
        %v3486 = vlaneseq
        %v3487 = vshrl.u32 %v3486, 7
        %v3488 = vsub.s32 %v3485, %v3487
        %v3489 = vrot.slane %v3481, %v3488
        %v3491 = vunpack.c.l.s4 1934713408
        %v3492 = vunpack.c.0.s8 %v3491
        %v3493 = vlaneseq
        %v3494 = vshrl.u32 %v3493, 7
        %v3495 = vsub.s32 %v3492, %v3494
        %v3496 = vrot.slane %v3482, %v3495
        %v3497 = vcombine.low %v3472, %v3480
        %v3498 = vcombine.high %v3472, %v3480
        %v3500 = vunpack.c.l.s4 1934713408
        %v3501 = vunpack.c.0.s8 %v3500
        %v3502 = vlaneseq
        %v3503 = vshrl.u32 %v3502, 7
        %v3504 = vsub.s32 %v3501, %v3503
        %v3505 = vrot.slane %v3497, %v3504
        %v3507 = vunpack.c.l.s4 1934713408
        %v3508 = vunpack.c.0.s8 %v3507
        %v3509 = vlaneseq
        %v3510 = vshrl.u32 %v3509, 7
        %v3511 = vsub.s32 %v3508, %v3510
        %v3512 = vrot.slane %v3498, %v3511
        %v3513 = vcombine.low %v3489, %v3505
        %v3514 = vcombine.high %v3489, %v3505
        %v3515 = vcombine.low %v3496, %v3512
        %v3516 = vcombine.high %v3496, %v3512
        %v3517 = vcombine.low %v3149, %v3156
        %v3519 = vunpack.c.l.s4 1983009808
        %v3520 = vunpack.c.0.s8 %v3519
        %v3521 = vlaneseq
        %v3522 = vshrl.u32 %v3521, 7
        %v3523 = vsub.s32 %v3520, %v3522
        %v3524 = vrot.slane %v3517, %v3523
        %v3525 = vcombine.low %v3173, %v3174
        %v3527 = vunpack.c.l.s4 1983009808
        %v3528 = vunpack.c.0.s8 %v3527
        %v3529 = vlaneseq
        %v3530 = vshrl.u32 %v3529, 7
        %v3531 = vsub.s32 %v3528, %v3530
        %v3532 = vrot.slane %v3525, %v3531
        %v3533 = vcombine.low %v3165, %v3172
        %v3535 = vunpack.c.l.s4 1983009808
        %v3536 = vunpack.c.0.s8 %v3535
        %v3537 = vlaneseq
        %v3538 = vshrl.u32 %v3537, 7
        %v3539 = vsub.s32 %v3536, %v3538
        %v3540 = vrot.slane %v3533, %v3539
        %v3541 = vcombine.low %v3175, %v3176
        %v3543 = vunpack.c.l.s4 1983009808
        %v3544 = vunpack.c.0.s8 %v3543
        %v3545 = vlaneseq
        %v3546 = vshrl.u32 %v3545, 7
        %v3547 = vsub.s32 %v3544, %v3546
        %v3548 = vrot.slane %v3541, %v3547
        %v3549 = vcombine.low %v3524, %v3532
        %v3550 = vcombine.high %v3524, %v3532
        %v3552 = vunpack.c.l.s4 1934713408
        %v3553 = vunpack.c.0.s8 %v3552
        %v3554 = vlaneseq
        %v3555 = vshrl.u32 %v3554, 7
        %v3556 = vsub.s32 %v3553, %v3555
        %v3557 = vrot.slane %v3549, %v3556
        %v3559 = vunpack.c.l.s4 1934713408
        %v3560 = vunpack.c.0.s8 %v3559
        %v3561 = vlaneseq
        %v3562 = vshrl.u32 %v3561, 7
        %v3563 = vsub.s32 %v3560, %v3562
        %v3564 = vrot.slane %v3550, %v3563
        %v3565 = vcombine.low %v3540, %v3548
        %v3566 = vcombine.high %v3540, %v3548
        %v3568 = vunpack.c.l.s4 1934713408
        %v3569 = vunpack.c.0.s8 %v3568
        %v3570 = vlaneseq
        %v3571 = vshrl.u32 %v3570, 7
        %v3572 = vsub.s32 %v3569, %v3571
        %v3573 = vrot.slane %v3565, %v3572
        %v3575 = vunpack.c.l.s4 1934713408
        %v3576 = vunpack.c.0.s8 %v3575
        %v3577 = vlaneseq
        %v3578 = vshrl.u32 %v3577, 7
        %v3579 = vsub.s32 %v3576, %v3578
        %v3580 = vrot.slane %v3566, %v3579
        %v3581 = vcombine.low %v3557, %v3573
        %v3582 = vcombine.high %v3557, %v3573
        %v3583 = vcombine.low %v3564, %v3580
        %v3584 = vcombine.high %v3564, %v3580
        %v3585 = vpack.c.bf16 %v3309, %v3241
        %v3586 = vpack.c.bf16 %v3377, %v3377
        %v3587 = vpack.c.bf16 %v3310, %v3242
        %v3588 = vpack.c.bf16 %v3378, %v3378
        %v3589 = vpack.c.bf16 %v3311, %v3243
        %v3590 = vpack.c.bf16 %v3379, %v3379
        %v3591 = vpack.c.bf16 %v3312, %v3244
        %v3592 = vpack.c.bf16 %v3380, %v3380
        %v3593 = vpack.c.bf16 %v3513, %v3445
        %v3594 = vpack.c.bf16 %v3581, %v3581
        %v3595 = vpack.c.bf16 %v3514, %v3446
        %v3596 = vpack.c.bf16 %v3582, %v3582
        %v3597 = vpack.c.bf16 %v3515, %v3447
        %v3598 = vpack.c.bf16 %v3583, %v3583
        %v3599 = vpack.c.bf16 %v3516, %v3448
        %v3600 = vpack.c.bf16 %v3584, %v3584
        %vm3601 = vcmask 64512
        %v3603 = vsel %vm3601, %v1777, 0
        %v3606 = vsel %vm3601, %v1778, 0
        %v3609 = vsel %vm3601, %v2681, 0
        %v3612 = vsel %vm3601, %v2682, 0
        %3614 = vmatprep.subr.bf16.mxu0 0
        %3615 = vmatpush1.bf16.xpose.msra.mxu0 %v3609
        %3616 = vmatprep.subr.bf16.mxu0 0
        %3617 = vmatpush1.bf16.xpose.msra.mxu0 %v3612
        %3618 = vmatprep.subr.bf16.mxu0 0
        %3619 = vmatpush1.bf16.xpose.msra.mxu0 0
        %3620 = vmatprep.subr.bf16.mxu0 0
        %3621 = vmatpush1.bf16.xpose.msra.mxu0 0
        %3622 = vmatprep.subr.bf16.mxu0 0
        %3623 = vmatpush1.bf16.xpose.msra.mxu0 0
        %3624 = vmatprep.subr.bf16.mxu0 0
        %3625 = vmatpush1.bf16.xpose.msra.mxu0 0
        %3626 = vmatprep.subr.bf16.mxu0 0
        %3627 = vmatpush1.bf16.xpose.msra.mxu0 0
        %3628 = vmatprep.subr.bf16.mxu0 0
        %3629 = vmatpush1.bf16.xpose.msra.mxu0 0
        %3630 = vmatprep.subr.bf16.mxu0 0
        %3631 = vmatpush1.bf16.xpose.msra.mxu0 0
        %3632 = vmatprep.subr.bf16.mxu0 0
        %3633 = vmatpush1.bf16.xpose.msra.mxu0 0
        %3634 = vmatprep.subr.bf16.mxu0 0
        %3635 = vmatpush1.bf16.xpose.msra.mxu0 0
        %3636 = vmatprep.subr.bf16.mxu0 0
        %3637 = vmatpush1.bf16.xpose.msra.mxu0 0
        %3638 = vmatprep.subr.bf16.mxu0 0
        %3639 = vmatpush1.bf16.xpose.msra.mxu0 0
        %3640 = vmatprep.subr.bf16.mxu0 0
        %3641 = vmatpush1.bf16.xpose.msra.mxu0 0
        %3642 = vmatprep.subr.bf16.mxu0 0
        %3643 = vmatpush1.bf16.xpose.msra.mxu0 0
        %3644 = vmatprep.subr.bf16.mxu0 0
        %3645 = vmatpush1.bf16.xpose.msra.mxu0 0
        %3646 = vmatprep.mubr.bf16.mxu0 0
        %3647 = vmatmul.mubr.bf16.gmra.mrb[0].mxu0 %v3603
        %v3648 = vpop.f32.mrb[0].mxu0
        %v3649 = vadd.f32 0.0, %v3648
        %v3650 = vpop.f32.mrb[0].mxu0
        %v3651 = vpop.f32.mrb[0].mxu0
        %v3652 = vadd.f32 0.0, %v3651
        %v3653 = vpop.f32.mrb[0].mxu0
        %3654 = vmatprep.mubr.bf16.mxu0 0
        %3655 = vmatmul.mubr.bf16.gmra.mrb[0].mxu0 %v3606
        %v3656 = vpop.f32.mrb[0].mxu0
        %v3657 = vadd.f32 0.0, %v3656
        %v3658 = vpop.f32.mrb[0].mxu0
        %v3659 = vpop.f32.mrb[0].mxu0
        %v3660 = vpop.f32.mrb[0].mxu0
        %3661 = vdwg.mxu0
        %v3663 = vsel %vm3601, %v1779, 0
        %v3666 = vsel %vm3601, %v1780, 0
        %v3669 = vsel %vm3601, %v2683, 0
        %v3672 = vsel %vm3601, %v2684, 0
        %3674 = vmatprep.subr.bf16.mxu0 0
        %3675 = vmatpush1.bf16.xpose.msra.mxu0 %v3669
        %3676 = vmatprep.subr.bf16.mxu0 0
        %3677 = vmatpush1.bf16.xpose.msra.mxu0 %v3672
        %3678 = vmatprep.subr.bf16.mxu0 0
        %3679 = vmatpush1.bf16.xpose.msra.mxu0 0
        %3680 = vmatprep.subr.bf16.mxu0 0
        %3681 = vmatpush1.bf16.xpose.msra.mxu0 0
        %3682 = vmatprep.subr.bf16.mxu0 0
        %3683 = vmatpush1.bf16.xpose.msra.mxu0 0
        %3684 = vmatprep.subr.bf16.mxu0 0
        %3685 = vmatpush1.bf16.xpose.msra.mxu0 0
        %3686 = vmatprep.subr.bf16.mxu0 0
        %3687 = vmatpush1.bf16.xpose.msra.mxu0 0
        %3688 = vmatprep.subr.bf16.mxu0 0
        %3689 = vmatpush1.bf16.xpose.msra.mxu0 0
        %3690 = vmatprep.subr.bf16.mxu0 0
        %3691 = vmatpush1.bf16.xpose.msra.mxu0 0
        %3692 = vmatprep.subr.bf16.mxu0 0
        %3693 = vmatpush1.bf16.xpose.msra.mxu0 0
        %3694 = vmatprep.subr.bf16.mxu0 0
        %3695 = vmatpush1.bf16.xpose.msra.mxu0 0
        %3696 = vmatprep.subr.bf16.mxu0 0
        %3697 = vmatpush1.bf16.xpose.msra.mxu0 0
        %3698 = vmatprep.subr.bf16.mxu0 0
        %3699 = vmatpush1.bf16.xpose.msra.mxu0 0
        %3700 = vmatprep.subr.bf16.mxu0 0
        %3701 = vmatpush1.bf16.xpose.msra.mxu0 0
        %3702 = vmatprep.subr.bf16.mxu0 0
        %3703 = vmatpush1.bf16.xpose.msra.mxu0 0
        %3704 = vmatprep.subr.bf16.mxu0 0
        %3705 = vmatpush1.bf16.xpose.msra.mxu0 0
        %3706 = vmatprep.mubr.bf16.mxu0 0
        %3707 = vmatmul.mubr.bf16.gmra.mrb[0].mxu0 %v3663
        %v3708 = vpop.f32.mrb[0].mxu0
        %v3709 = vadd.f32 0.0, %v3708
        %v3710 = vpop.f32.mrb[0].mxu0
        %v3711 = vpop.f32.mrb[0].mxu0
        %v3712 = vadd.f32 0.0, %v3711
        %v3713 = vpop.f32.mrb[0].mxu0
        %3714 = vmatprep.mubr.bf16.mxu0 0
        %3715 = vmatmul.mubr.bf16.gmra.mrb[0].mxu0 %v3666
        %v3716 = vpop.f32.mrb[0].mxu0
        %v3717 = vadd.f32 0.0, %v3716
        %v3718 = vpop.f32.mrb[0].mxu0
        %v3719 = vpop.f32.mrb[0].mxu0
        %v3720 = vpop.f32.mrb[0].mxu0
        %3721 = vdwg.mxu0
        %v3723 = vsel %vm3601, %v1781, 0
        %v3726 = vsel %vm3601, %v1782, 0
        %v3729 = vsel %vm3601, %v2685, 0
        %v3732 = vsel %vm3601, %v2686, 0
        %3734 = vmatprep.subr.bf16.mxu0 0
        %3735 = vmatpush1.bf16.xpose.msra.mxu0 %v3729
        %3736 = vmatprep.subr.bf16.mxu0 0
        %3737 = vmatpush1.bf16.xpose.msra.mxu0 %v3732
        %3738 = vmatprep.subr.bf16.mxu0 0
        %3739 = vmatpush1.bf16.xpose.msra.mxu0 0
        %3740 = vmatprep.subr.bf16.mxu0 0
        %3741 = vmatpush1.bf16.xpose.msra.mxu0 0
        %3742 = vmatprep.subr.bf16.mxu0 0
        %3743 = vmatpush1.bf16.xpose.msra.mxu0 0
        %3744 = vmatprep.subr.bf16.mxu0 0
        %3745 = vmatpush1.bf16.xpose.msra.mxu0 0
        %3746 = vmatprep.subr.bf16.mxu0 0
        %3747 = vmatpush1.bf16.xpose.msra.mxu0 0
        %3748 = vmatprep.subr.bf16.mxu0 0
        %3749 = vmatpush1.bf16.xpose.msra.mxu0 0
        %3750 = vmatprep.subr.bf16.mxu0 0
        %3751 = vmatpush1.bf16.xpose.msra.mxu0 0
        %3752 = vmatprep.subr.bf16.mxu0 0
        %3753 = vmatpush1.bf16.xpose.msra.mxu0 0
        %3754 = vmatprep.subr.bf16.mxu0 0
        %3755 = vmatpush1.bf16.xpose.msra.mxu0 0
        %3756 = vmatprep.subr.bf16.mxu0 0
        %3757 = vmatpush1.bf16.xpose.msra.mxu0 0
        %3758 = vmatprep.subr.bf16.mxu0 0
        %3759 = vmatpush1.bf16.xpose.msra.mxu0 0
        %3760 = vmatprep.subr.bf16.mxu0 0
        %3761 = vmatpush1.bf16.xpose.msra.mxu0 0
        %3762 = vmatprep.subr.bf16.mxu0 0
        %3763 = vmatpush1.bf16.xpose.msra.mxu0 0
        %3764 = vmatprep.subr.bf16.mxu0 0
        %3765 = vmatpush1.bf16.xpose.msra.mxu0 0
        %3766 = vmatprep.mubr.bf16.mxu0 0
        %3767 = vmatmul.mubr.bf16.gmra.mrb[0].mxu0 %v3723
        %v3768 = vpop.f32.mrb[0].mxu0
        %v3769 = vadd.f32 0.0, %v3768
        %v3770 = vpop.f32.mrb[0].mxu0
        %v3771 = vpop.f32.mrb[0].mxu0
        %v3772 = vadd.f32 0.0, %v3771
        %v3773 = vpop.f32.mrb[0].mxu0
        %3774 = vmatprep.mubr.bf16.mxu0 0
        %3775 = vmatmul.mubr.bf16.gmra.mrb[0].mxu0 %v3726
        %v3776 = vpop.f32.mrb[0].mxu0
        %v3777 = vadd.f32 0.0, %v3776
        %v3778 = vpop.f32.mrb[0].mxu0
        %v3779 = vpop.f32.mrb[0].mxu0
        %v3780 = vpop.f32.mrb[0].mxu0
        %3781 = vdwg.mxu0
        %v3783 = vsel %vm3601, %v1783, 0
        %v3786 = vsel %vm3601, %v1784, 0
        %v3789 = vsel %vm3601, %v2687, 0
        %v3792 = vsel %vm3601, %v2688, 0
        %3794 = vmatprep.subr.bf16.mxu0 0
        %3795 = vmatpush1.bf16.xpose.msra.mxu0 %v3789
        %3796 = vmatprep.subr.bf16.mxu0 0
        %3797 = vmatpush1.bf16.xpose.msra.mxu0 %v3792
        %3798 = vmatprep.subr.bf16.mxu0 0
        %3799 = vmatpush1.bf16.xpose.msra.mxu0 0
        %3800 = vmatprep.subr.bf16.mxu0 0
        %3801 = vmatpush1.bf16.xpose.msra.mxu0 0
        %3802 = vmatprep.subr.bf16.mxu0 0
        %3803 = vmatpush1.bf16.xpose.msra.mxu0 0
        %3804 = vmatprep.subr.bf16.mxu0 0
        %3805 = vmatpush1.bf16.xpose.msra.mxu0 0
        %3806 = vmatprep.subr.bf16.mxu0 0
        %3807 = vmatpush1.bf16.xpose.msra.mxu0 0
        %3808 = vmatprep.subr.bf16.mxu0 0
        %3809 = vmatpush1.bf16.xpose.msra.mxu0 0
        %3810 = vmatprep.subr.bf16.mxu0 0
        %3811 = vmatpush1.bf16.xpose.msra.mxu0 0
        %3812 = vmatprep.subr.bf16.mxu0 0
        %3813 = vmatpush1.bf16.xpose.msra.mxu0 0
        %3814 = vmatprep.subr.bf16.mxu0 0
        %3815 = vmatpush1.bf16.xpose.msra.mxu0 0
        %3816 = vmatprep.subr.bf16.mxu0 0
        %3817 = vmatpush1.bf16.xpose.msra.mxu0 0
        %3818 = vmatprep.subr.bf16.mxu0 0
        %3819 = vmatpush1.bf16.xpose.msra.mxu0 0
        %3820 = vmatprep.subr.bf16.mxu0 0
        %3821 = vmatpush1.bf16.xpose.msra.mxu0 0
        %3822 = vmatprep.subr.bf16.mxu0 0
        %3823 = vmatpush1.bf16.xpose.msra.mxu0 0
        %3824 = vmatprep.subr.bf16.mxu0 0
        %3825 = vmatpush1.bf16.xpose.msra.mxu0 0
        %3826 = vmatprep.mubr.bf16.mxu0 0
        %3827 = vmatmul.mubr.bf16.gmra.mrb[0].mxu0 %v3783
        %v3828 = vpop.f32.mrb[0].mxu0
        %v3829 = vadd.f32 0.0, %v3828
        %v3830 = vpop.f32.mrb[0].mxu0
        %v3831 = vpop.f32.mrb[0].mxu0
        %v3832 = vadd.f32 0.0, %v3831
        %v3833 = vpop.f32.mrb[0].mxu0
        %3834 = vmatprep.mubr.bf16.mxu0 0
        %3835 = vmatmul.mubr.bf16.gmra.mrb[0].mxu0 %v3786
        %v3836 = vpop.f32.mrb[0].mxu0
        %v3837 = vadd.f32 0.0, %v3836
        %v3838 = vpop.f32.mrb[0].mxu0
        %v3839 = vpop.f32.mrb[0].mxu0
        %v3840 = vpop.f32.mrb[0].mxu0
        %3841 = vdwg.mxu0
        %v3843 = vsel %vm3601, %v1785, 0
        %v3846 = vsel %vm3601, %v1786, 0
        %v3849 = vsel %vm3601, %v2689, 0
        %v3852 = vsel %vm3601, %v2690, 0
        %3854 = vmatprep.subr.bf16.mxu0 0
        %3855 = vmatpush1.bf16.xpose.msra.mxu0 %v3849
        %3856 = vmatprep.subr.bf16.mxu0 0
        %3857 = vmatpush1.bf16.xpose.msra.mxu0 %v3852
        %3858 = vmatprep.subr.bf16.mxu0 0
        %3859 = vmatpush1.bf16.xpose.msra.mxu0 0
        %3860 = vmatprep.subr.bf16.mxu0 0
        %3861 = vmatpush1.bf16.xpose.msra.mxu0 0
        %3862 = vmatprep.subr.bf16.mxu0 0
        %3863 = vmatpush1.bf16.xpose.msra.mxu0 0
        %3864 = vmatprep.subr.bf16.mxu0 0
        %3865 = vmatpush1.bf16.xpose.msra.mxu0 0
        %3866 = vmatprep.subr.bf16.mxu0 0
        %3867 = vmatpush1.bf16.xpose.msra.mxu0 0
        %3868 = vmatprep.subr.bf16.mxu0 0
        %3869 = vmatpush1.bf16.xpose.msra.mxu0 0
        %3870 = vmatprep.subr.bf16.mxu0 0
        %3871 = vmatpush1.bf16.xpose.msra.mxu0 0
        %3872 = vmatprep.subr.bf16.mxu0 0
        %3873 = vmatpush1.bf16.xpose.msra.mxu0 0
        %3874 = vmatprep.subr.bf16.mxu0 0
        %3875 = vmatpush1.bf16.xpose.msra.mxu0 0
        %3876 = vmatprep.subr.bf16.mxu0 0
        %3877 = vmatpush1.bf16.xpose.msra.mxu0 0
        %3878 = vmatprep.subr.bf16.mxu0 0
        %3879 = vmatpush1.bf16.xpose.msra.mxu0 0
        %3880 = vmatprep.subr.bf16.mxu0 0
        %3881 = vmatpush1.bf16.xpose.msra.mxu0 0
        %3882 = vmatprep.subr.bf16.mxu0 0
        %3883 = vmatpush1.bf16.xpose.msra.mxu0 0
        %3884 = vmatprep.subr.bf16.mxu0 0
        %3885 = vmatpush1.bf16.xpose.msra.mxu0 0
        %3886 = vmatprep.mubr.bf16.mxu0 0
        %3887 = vmatmul.mubr.bf16.gmra.mrb[0].mxu0 %v3843
        %v3888 = vpop.f32.mrb[0].mxu0
        %v3889 = vadd.f32 0.0, %v3888
        %v3890 = vpop.f32.mrb[0].mxu0
        %v3891 = vpop.f32.mrb[0].mxu0
        %v3892 = vadd.f32 0.0, %v3891
        %v3893 = vpop.f32.mrb[0].mxu0
        %3894 = vmatprep.mubr.bf16.mxu0 0
        %3895 = vmatmul.mubr.bf16.gmra.mrb[0].mxu0 %v3846
        %v3896 = vpop.f32.mrb[0].mxu0
        %v3897 = vadd.f32 0.0, %v3896
        %v3898 = vpop.f32.mrb[0].mxu0
        %v3899 = vpop.f32.mrb[0].mxu0
        %v3900 = vpop.f32.mrb[0].mxu0
        %3901 = vdwg.mxu0
        %v3903 = vsel %vm3601, %v1787, 0
        %v3906 = vsel %vm3601, %v1788, 0
        %v3909 = vsel %vm3601, %v2691, 0
        %v3912 = vsel %vm3601, %v2692, 0
        %3914 = vmatprep.subr.bf16.mxu0 0
        %3915 = vmatpush1.bf16.xpose.msra.mxu0 %v3909
        %3916 = vmatprep.subr.bf16.mxu0 0
        %3917 = vmatpush1.bf16.xpose.msra.mxu0 %v3912
        %3918 = vmatprep.subr.bf16.mxu0 0
        %3919 = vmatpush1.bf16.xpose.msra.mxu0 0
        %3920 = vmatprep.subr.bf16.mxu0 0
        %3921 = vmatpush1.bf16.xpose.msra.mxu0 0
        %3922 = vmatprep.subr.bf16.mxu0 0
        %3923 = vmatpush1.bf16.xpose.msra.mxu0 0
        %3924 = vmatprep.subr.bf16.mxu0 0
        %3925 = vmatpush1.bf16.xpose.msra.mxu0 0
        %3926 = vmatprep.subr.bf16.mxu0 0
        %3927 = vmatpush1.bf16.xpose.msra.mxu0 0
        %3928 = vmatprep.subr.bf16.mxu0 0
        %3929 = vmatpush1.bf16.xpose.msra.mxu0 0
        %3930 = vmatprep.subr.bf16.mxu0 0
        %3931 = vmatpush1.bf16.xpose.msra.mxu0 0
        %3932 = vmatprep.subr.bf16.mxu0 0
        %3933 = vmatpush1.bf16.xpose.msra.mxu0 0
        %3934 = vmatprep.subr.bf16.mxu0 0
        %3935 = vmatpush1.bf16.xpose.msra.mxu0 0
        %3936 = vmatprep.subr.bf16.mxu0 0
        %3937 = vmatpush1.bf16.xpose.msra.mxu0 0
        %3938 = vmatprep.subr.bf16.mxu0 0
        %3939 = vmatpush1.bf16.xpose.msra.mxu0 0
        %3940 = vmatprep.subr.bf16.mxu0 0
        %3941 = vmatpush1.bf16.xpose.msra.mxu0 0
        %3942 = vmatprep.subr.bf16.mxu0 0
        %3943 = vmatpush1.bf16.xpose.msra.mxu0 0
        %3944 = vmatprep.subr.bf16.mxu0 0
        %3945 = vmatpush1.bf16.xpose.msra.mxu0 0
        %3946 = vmatprep.mubr.bf16.mxu0 0
        %3947 = vmatmul.mubr.bf16.gmra.mrb[0].mxu0 %v3903
        %v3948 = vpop.f32.mrb[0].mxu0
        %v3949 = vadd.f32 0.0, %v3948
        %v3950 = vpop.f32.mrb[0].mxu0
        %v3951 = vpop.f32.mrb[0].mxu0
        %v3952 = vadd.f32 0.0, %v3951
        %v3953 = vpop.f32.mrb[0].mxu0
        %3954 = vmatprep.mubr.bf16.mxu0 0
        %3955 = vmatmul.mubr.bf16.gmra.mrb[0].mxu0 %v3906
        %v3956 = vpop.f32.mrb[0].mxu0
        %v3957 = vadd.f32 0.0, %v3956
        %v3958 = vpop.f32.mrb[0].mxu0
        %v3959 = vpop.f32.mrb[0].mxu0
        %v3960 = vpop.f32.mrb[0].mxu0
        %3961 = vdwg.mxu0
        %v3963 = vsel %vm3601, %v1789, 0
        %v3966 = vsel %vm3601, %v1790, 0
        %v3969 = vsel %vm3601, %v2693, 0
        %v3972 = vsel %vm3601, %v2694, 0
        %3974 = vmatprep.subr.bf16.mxu0 0
        %3975 = vmatpush1.bf16.xpose.msra.mxu0 %v3969
        %3976 = vmatprep.subr.bf16.mxu0 0
        %3977 = vmatpush1.bf16.xpose.msra.mxu0 %v3972
        %3978 = vmatprep.subr.bf16.mxu0 0
        %3979 = vmatpush1.bf16.xpose.msra.mxu0 0
        %3980 = vmatprep.subr.bf16.mxu0 0
        %3981 = vmatpush1.bf16.xpose.msra.mxu0 0
        %3982 = vmatprep.subr.bf16.mxu0 0
        %3983 = vmatpush1.bf16.xpose.msra.mxu0 0
        %3984 = vmatprep.subr.bf16.mxu0 0
        %3985 = vmatpush1.bf16.xpose.msra.mxu0 0
        %3986 = vmatprep.subr.bf16.mxu0 0
        %3987 = vmatpush1.bf16.xpose.msra.mxu0 0
        %3988 = vmatprep.subr.bf16.mxu0 0
        %3989 = vmatpush1.bf16.xpose.msra.mxu0 0
        %3990 = vmatprep.subr.bf16.mxu0 0
        %3991 = vmatpush1.bf16.xpose.msra.mxu0 0
        %3992 = vmatprep.subr.bf16.mxu0 0
        %3993 = vmatpush1.bf16.xpose.msra.mxu0 0
        %3994 = vmatprep.subr.bf16.mxu0 0
        %3995 = vmatpush1.bf16.xpose.msra.mxu0 0
        %3996 = vmatprep.subr.bf16.mxu0 0
        %3997 = vmatpush1.bf16.xpose.msra.mxu0 0
        %3998 = vmatprep.subr.bf16.mxu0 0
        %3999 = vmatpush1.bf16.xpose.msra.mxu0 0
        %4000 = vmatprep.subr.bf16.mxu0 0
        %4001 = vmatpush1.bf16.xpose.msra.mxu0 0
        %4002 = vmatprep.subr.bf16.mxu0 0
        %4003 = vmatpush1.bf16.xpose.msra.mxu0 0
        %4004 = vmatprep.subr.bf16.mxu0 0
        %4005 = vmatpush1.bf16.xpose.msra.mxu0 0
        %4006 = vmatprep.mubr.bf16.mxu0 0
        %4007 = vmatmul.mubr.bf16.gmra.mrb[0].mxu0 %v3963
        %v4008 = vpop.f32.mrb[0].mxu0
        %v4009 = vadd.f32 0.0, %v4008
        %v4010 = vpop.f32.mrb[0].mxu0
        %v4011 = vpop.f32.mrb[0].mxu0
        %v4012 = vadd.f32 0.0, %v4011
        %v4013 = vpop.f32.mrb[0].mxu0
        %4014 = vmatprep.mubr.bf16.mxu0 0
        %4015 = vmatmul.mubr.bf16.gmra.mrb[0].mxu0 %v3966
        %v4016 = vpop.f32.mrb[0].mxu0
        %v4017 = vadd.f32 0.0, %v4016
        %v4018 = vpop.f32.mrb[0].mxu0
        %v4019 = vpop.f32.mrb[0].mxu0
        %v4020 = vpop.f32.mrb[0].mxu0
        %4021 = vdwg.mxu0
        %v4023 = vsel %vm3601, %v1791, 0
        %v4026 = vsel %vm3601, %v1792, 0
        %v4029 = vsel %vm3601, %v2695, 0
        %v4032 = vsel %vm3601, %v2696, 0
        %4034 = vmatprep.subr.bf16.mxu0 0
        %4035 = vmatpush1.bf16.xpose.msra.mxu0 %v4029
        %4036 = vmatprep.subr.bf16.mxu0 0
        %4037 = vmatpush1.bf16.xpose.msra.mxu0 %v4032
        %4038 = vmatprep.subr.bf16.mxu0 0
        %4039 = vmatpush1.bf16.xpose.msra.mxu0 0
        %4040 = vmatprep.subr.bf16.mxu0 0
        %4041 = vmatpush1.bf16.xpose.msra.mxu0 0
        %4042 = vmatprep.subr.bf16.mxu0 0
        %4043 = vmatpush1.bf16.xpose.msra.mxu0 0
        %4044 = vmatprep.subr.bf16.mxu0 0
        %4045 = vmatpush1.bf16.xpose.msra.mxu0 0
        %4046 = vmatprep.subr.bf16.mxu0 0
        %4047 = vmatpush1.bf16.xpose.msra.mxu0 0
        %4048 = vmatprep.subr.bf16.mxu0 0
        %4049 = vmatpush1.bf16.xpose.msra.mxu0 0
        %4050 = vmatprep.subr.bf16.mxu0 0
        %4051 = vmatpush1.bf16.xpose.msra.mxu0 0
        %4052 = vmatprep.subr.bf16.mxu0 0
        %4053 = vmatpush1.bf16.xpose.msra.mxu0 0
        %4054 = vmatprep.subr.bf16.mxu0 0
        %4055 = vmatpush1.bf16.xpose.msra.mxu0 0
        %4056 = vmatprep.subr.bf16.mxu0 0
        %4057 = vmatpush1.bf16.xpose.msra.mxu0 0
        %4058 = vmatprep.subr.bf16.mxu0 0
        %4059 = vmatpush1.bf16.xpose.msra.mxu0 0
        %4060 = vmatprep.subr.bf16.mxu0 0
        %4061 = vmatpush1.bf16.xpose.msra.mxu0 0
        %4062 = vmatprep.subr.bf16.mxu0 0
        %4063 = vmatpush1.bf16.xpose.msra.mxu0 0
        %4064 = vmatprep.subr.bf16.mxu0 0
        %4065 = vmatpush1.bf16.xpose.msra.mxu0 0
        %4066 = vmatprep.mubr.bf16.mxu0 0
        %4067 = vmatmul.mubr.bf16.gmra.mrb[0].mxu0 %v4023
        %v4068 = vpop.f32.mrb[0].mxu0
        %v4069 = vadd.f32 0.0, %v4068
        %v4070 = vpop.f32.mrb[0].mxu0
        %v4071 = vpop.f32.mrb[0].mxu0
        %v4072 = vadd.f32 0.0, %v4071
        %v4073 = vpop.f32.mrb[0].mxu0
        %4074 = vmatprep.mubr.bf16.mxu0 0
        %4075 = vmatmul.mubr.bf16.gmra.mrb[0].mxu0 %v4026
        %v4076 = vpop.f32.mrb[0].mxu0
        %v4077 = vadd.f32 0.0, %v4076
        %v4078 = vpop.f32.mrb[0].mxu0
        %v4079 = vpop.f32.mrb[0].mxu0
        %v4080 = vpop.f32.mrb[0].mxu0
        %4081 = vdwg.mxu0
        %v4082 = vlaneseq
        %v4083 = vand.u32 %v4082, 127
        %vm4084 = vcmp.lt.s32.totalorder %v4083, 17
        %v4085 = vsel %vm4084, %v3649, -1e+30
        %v4086 = vsel %vm4084, %v3652, -1e+30
        %v4087 = vsel %vm4084, %v3657, -1e+30
        %v4088 = vsel %vm4084, %v3709, -1e+30
        %v4089 = vsel %vm4084, %v3712, -1e+30
        %v4090 = vsel %vm4084, %v3717, -1e+30
        %v4091 = vsel %vm4084, %v3769, -1e+30
        %v4092 = vsel %vm4084, %v3772, -1e+30
        %v4093 = vsel %vm4084, %v3777, -1e+30
        %v4094 = vsel %vm4084, %v3829, -1e+30
        %v4095 = vsel %vm4084, %v3832, -1e+30
        %v4096 = vsel %vm4084, %v3837, -1e+30
        %v4097 = vsel %vm4084, %v3889, -1e+30
        %v4098 = vsel %vm4084, %v3892, -1e+30
        %v4099 = vsel %vm4084, %v3897, -1e+30
        %v4100 = vsel %vm4084, %v3949, -1e+30
        %v4101 = vsel %vm4084, %v3952, -1e+30
        %v4102 = vsel %vm4084, %v3957, -1e+30
        %v4103 = vsel %vm4084, %v4009, -1e+30
        %v4104 = vsel %vm4084, %v4012, -1e+30
        %v4105 = vsel %vm4084, %v4017, -1e+30
        %v4106 = vsel %vm4084, %v4069, -1e+30
        %v4107 = vsel %vm4084, %v4072, -1e+30
        %v4108 = vsel %vm4084, %v4077, -1e+30
        %vm4109 = vcmask 195584
        %v4110 = vsel %vm4109, %v4085, -inf
        %4111 = vmax.xlane.f32.xlu0 %v4110
        %v4112 = vpop.xlane.xlu0 %4111
        %v4113 = vsel %vm4109, %v4086, -inf
        %4114 = vmax.xlane.f32.xlu0 %v4113
        %v4115 = vpop.xlane.xlu0 %4114
        %v4116 = vsel %vm4109, %v4087, -inf
        %4117 = vmax.xlane.f32.xlu0 %v4116
        %v4118 = vpop.xlane.xlu0 %4117
        %v4119 = vsel %vm4109, %v4088, -inf
        %4120 = vmax.xlane.f32.xlu0 %v4119
        %v4121 = vpop.xlane.xlu0 %4120
        %v4122 = vsel %vm4109, %v4089, -inf
        %4123 = vmax.xlane.f32.xlu0 %v4122
        %v4124 = vpop.xlane.xlu0 %4123
        %v4125 = vsel %vm4109, %v4090, -inf
        %4126 = vmax.xlane.f32.xlu0 %v4125
        %v4127 = vpop.xlane.xlu0 %4126
        %v4128 = vsel %vm4109, %v4091, -inf
        %4129 = vmax.xlane.f32.xlu0 %v4128
        %v4130 = vpop.xlane.xlu0 %4129
        %v4131 = vsel %vm4109, %v4092, -inf
        %4132 = vmax.xlane.f32.xlu0 %v4131
        %v4133 = vpop.xlane.xlu0 %4132
        %v4134 = vsel %vm4109, %v4093, -inf
        %4135 = vmax.xlane.f32.xlu0 %v4134
        %v4136 = vpop.xlane.xlu0 %4135
        %v4137 = vsel %vm4109, %v4094, -inf
        %4138 = vmax.xlane.f32.xlu0 %v4137
        %v4139 = vpop.xlane.xlu0 %4138
        %v4140 = vsel %vm4109, %v4095, -inf
        %4141 = vmax.xlane.f32.xlu0 %v4140
        %v4142 = vpop.xlane.xlu0 %4141
        %v4143 = vsel %vm4109, %v4096, -inf
        %4144 = vmax.xlane.f32.xlu0 %v4143
        %v4145 = vpop.xlane.xlu0 %4144
        %v4146 = vsel %vm4109, %v4097, -inf
        %4147 = vmax.xlane.f32.xlu0 %v4146
        %v4148 = vpop.xlane.xlu0 %4147
        %v4149 = vsel %vm4109, %v4098, -inf
        %4150 = vmax.xlane.f32.xlu0 %v4149
        %v4151 = vpop.xlane.xlu0 %4150
        %v4152 = vsel %vm4109, %v4099, -inf
        %4153 = vmax.xlane.f32.xlu0 %v4152
        %v4154 = vpop.xlane.xlu0 %4153
        %v4155 = vsel %vm4109, %v4100, -inf
        %4156 = vmax.xlane.f32.xlu0 %v4155
        %v4157 = vpop.xlane.xlu0 %4156
        %v4158 = vsel %vm4109, %v4101, -inf
        %4159 = vmax.xlane.f32.xlu0 %v4158
        %v4160 = vpop.xlane.xlu0 %4159
        %v4161 = vsel %vm4109, %v4102, -inf
        %4162 = vmax.xlane.f32.xlu0 %v4161
        %v4163 = vpop.xlane.xlu0 %4162
        %v4164 = vsel %vm4109, %v4103, -inf
        %4165 = vmax.xlane.f32.xlu0 %v4164
        %v4166 = vpop.xlane.xlu0 %4165
        %v4167 = vsel %vm4109, %v4104, -inf
        %4168 = vmax.xlane.f32.xlu0 %v4167
        %v4169 = vpop.xlane.xlu0 %4168
        %v4170 = vsel %vm4109, %v4105, -inf
        %4171 = vmax.xlane.f32.xlu0 %v4170
        %v4172 = vpop.xlane.xlu0 %4171
        %v4173 = vsel %vm4109, %v4106, -inf
        %4174 = vmax.xlane.f32.xlu0 %v4173
        %v4175 = vpop.xlane.xlu0 %4174
        %v4176 = vsel %vm4109, %v4107, -inf
        %4177 = vmax.xlane.f32.xlu0 %v4176
        %v4178 = vpop.xlane.xlu0 %4177
        %v4179 = vsel %vm4109, %v4108, -inf
        %4180 = vmax.xlane.f32.xlu0 %v4179
        %v4181 = vpop.xlane.xlu0 %4180
        %v4182 = vsub.f32 %v4085, %v4112
        %v4183 = vsub.f32 %v4086, %v4115
        %v4184 = vsub.f32 %v4087, %v4118
        %v4185 = vsub.f32 %v4088, %v4121
        %v4186 = vsub.f32 %v4089, %v4124
        %v4187 = vsub.f32 %v4090, %v4127
        %v4188 = vsub.f32 %v4091, %v4130
        %v4189 = vsub.f32 %v4092, %v4133
        %v4190 = vsub.f32 %v4093, %v4136
        %v4191 = vsub.f32 %v4094, %v4139
        %v4192 = vsub.f32 %v4095, %v4142
        %v4193 = vsub.f32 %v4096, %v4145
        %v4194 = vsub.f32 %v4097, %v4148
        %v4195 = vsub.f32 %v4098, %v4151
        %v4196 = vsub.f32 %v4099, %v4154
        %v4197 = vsub.f32 %v4100, %v4157
        %v4198 = vsub.f32 %v4101, %v4160
        %v4199 = vsub.f32 %v4102, %v4163
        %v4200 = vsub.f32 %v4103, %v4166
        %v4201 = vsub.f32 %v4104, %v4169
        %v4202 = vsub.f32 %v4105, %v4172
        %v4203 = vsub.f32 %v4106, %v4175
        %v4204 = vsub.f32 %v4107, %v4178
        %v4205 = vsub.f32 %v4108, %v4181
        %v4206 = vmul.f32 %v4182, 1.442695
        %v4207 = vpow.pop %v4206
        %v4208 = vmul.f32 %v4183, 1.442695
        %v4209 = vpow.pop %v4208
        %v4210 = vmul.f32 %v4184, 1.442695
        %v4211 = vpow.pop %v4210
        %v4212 = vmul.f32 %v4185, 1.442695
        %v4213 = vpow.pop %v4212
        %v4214 = vmul.f32 %v4186, 1.442695
        %v4215 = vpow.pop %v4214
        %v4216 = vmul.f32 %v4187, 1.442695
        %v4217 = vpow.pop %v4216
        %v4218 = vmul.f32 %v4188, 1.442695
        %v4219 = vpow.pop %v4218
        %v4220 = vmul.f32 %v4189, 1.442695
        %v4221 = vpow.pop %v4220
        %v4222 = vmul.f32 %v4190, 1.442695
        %v4223 = vpow.pop %v4222
        %v4224 = vmul.f32 %v4191, 1.442695
        %v4225 = vpow.pop %v4224
        %v4226 = vmul.f32 %v4192, 1.442695
        %v4227 = vpow.pop %v4226
        %v4228 = vmul.f32 %v4193, 1.442695
        %v4229 = vpow.pop %v4228
        %v4230 = vmul.f32 %v4194, 1.442695
        %v4231 = vpow.pop %v4230
        %v4232 = vmul.f32 %v4195, 1.442695
        %v4233 = vpow.pop %v4232
        %v4234 = vmul.f32 %v4196, 1.442695
        %v4235 = vpow.pop %v4234
        %v4236 = vmul.f32 %v4197, 1.442695
        %v4237 = vpow.pop %v4236
        %v4238 = vmul.f32 %v4198, 1.442695
        %v4239 = vpow.pop %v4238
        %v4240 = vmul.f32 %v4199, 1.442695
        %v4241 = vpow.pop %v4240
        %v4242 = vmul.f32 %v4200, 1.442695
        %v4243 = vpow.pop %v4242
        %v4244 = vmul.f32 %v4201, 1.442695
        %v4245 = vpow.pop %v4244
        %v4246 = vmul.f32 %v4202, 1.442695
        %v4247 = vpow.pop %v4246
        %v4248 = vmul.f32 %v4203, 1.442695
        %v4249 = vpow.pop %v4248
        %v4250 = vmul.f32 %v4204, 1.442695
        %v4251 = vpow.pop %v4250
        %v4252 = vmul.f32 %v4205, 1.442695
        %v4253 = vpow.pop %v4252
        %v4254 = vsel %vm4109, %v4207, 0.0
        %4255 = vadd.xlane.f32.xlu0 %v4254
        %v4256 = vpop.xlane.xlu0 %4255
        %v4257 = vsel %vm4109, %v4209, 0.0
        %4258 = vadd.xlane.f32.xlu0 %v4257
        %v4259 = vpop.xlane.xlu0 %4258
        %v4260 = vsel %vm4109, %v4211, 0.0
        %4261 = vadd.xlane.f32.xlu0 %v4260
        %v4262 = vpop.xlane.xlu0 %4261
        %v4263 = vsel %vm4109, %v4213, 0.0
        %4264 = vadd.xlane.f32.xlu0 %v4263
        %v4265 = vpop.xlane.xlu0 %4264
        %v4266 = vsel %vm4109, %v4215, 0.0
        %4267 = vadd.xlane.f32.xlu0 %v4266
        %v4268 = vpop.xlane.xlu0 %4267
        %v4269 = vsel %vm4109, %v4217, 0.0
        %4270 = vadd.xlane.f32.xlu0 %v4269
        %v4271 = vpop.xlane.xlu0 %4270
        %v4272 = vsel %vm4109, %v4219, 0.0
        %4273 = vadd.xlane.f32.xlu0 %v4272
        %v4274 = vpop.xlane.xlu0 %4273
        %v4275 = vsel %vm4109, %v4221, 0.0
        %4276 = vadd.xlane.f32.xlu0 %v4275
        %v4277 = vpop.xlane.xlu0 %4276
        %v4278 = vsel %vm4109, %v4223, 0.0
        %4279 = vadd.xlane.f32.xlu0 %v4278
        %v4280 = vpop.xlane.xlu0 %4279
        %v4281 = vsel %vm4109, %v4225, 0.0
        %4282 = vadd.xlane.f32.xlu0 %v4281
        %v4283 = vpop.xlane.xlu0 %4282
        %v4284 = vsel %vm4109, %v4227, 0.0
        %4285 = vadd.xlane.f32.xlu0 %v4284
        %v4286 = vpop.xlane.xlu0 %4285
        %v4287 = vsel %vm4109, %v4229, 0.0
        %4288 = vadd.xlane.f32.xlu0 %v4287
        %v4289 = vpop.xlane.xlu0 %4288
        %v4290 = vsel %vm4109, %v4231, 0.0
        %4291 = vadd.xlane.f32.xlu0 %v4290
        %v4292 = vpop.xlane.xlu0 %4291
        %v4293 = vsel %vm4109, %v4233, 0.0
        %4294 = vadd.xlane.f32.xlu0 %v4293
        %v4295 = vpop.xlane.xlu0 %4294
        %v4296 = vsel %vm4109, %v4235, 0.0
        %4297 = vadd.xlane.f32.xlu0 %v4296
        %v4298 = vpop.xlane.xlu0 %4297
        %v4299 = vsel %vm4109, %v4237, 0.0
        %4300 = vadd.xlane.f32.xlu0 %v4299
        %v4301 = vpop.xlane.xlu0 %4300
        %v4302 = vsel %vm4109, %v4239, 0.0
        %4303 = vadd.xlane.f32.xlu0 %v4302
        %v4304 = vpop.xlane.xlu0 %4303
        %v4305 = vsel %vm4109, %v4241, 0.0
        %4306 = vadd.xlane.f32.xlu0 %v4305
        %v4307 = vpop.xlane.xlu0 %4306
        %v4308 = vsel %vm4109, %v4243, 0.0
        %4309 = vadd.xlane.f32.xlu0 %v4308
        %v4310 = vpop.xlane.xlu0 %4309
        %v4311 = vsel %vm4109, %v4245, 0.0
        %4312 = vadd.xlane.f32.xlu0 %v4311
        %v4313 = vpop.xlane.xlu0 %4312
        %v4314 = vsel %vm4109, %v4247, 0.0
        %4315 = vadd.xlane.f32.xlu0 %v4314
        %v4316 = vpop.xlane.xlu0 %4315
        %v4317 = vsel %vm4109, %v4249, 0.0
        %4318 = vadd.xlane.f32.xlu0 %v4317
        %v4319 = vpop.xlane.xlu0 %4318
        %v4320 = vsel %vm4109, %v4251, 0.0
        %4321 = vadd.xlane.f32.xlu0 %v4320
        %v4322 = vpop.xlane.xlu0 %4321
        %v4323 = vsel %vm4109, %v4253, 0.0
        %4324 = vadd.xlane.f32.xlu0 %v4323
        %v4325 = vpop.xlane.xlu0 %4324
        %v4326 = vrcp.pop %v4256
        %v4327 = vrcp.pop %v4259
        %v4328 = vrcp.pop %v4262
        %v4329 = vrcp.pop %v4265
        %v4330 = vrcp.pop %v4268
        %v4331 = vrcp.pop %v4271
        %v4332 = vrcp.pop %v4274
        %v4333 = vrcp.pop %v4277
        %v4334 = vrcp.pop %v4280
        %v4335 = vrcp.pop %v4283
        %v4336 = vrcp.pop %v4286
        %v4337 = vrcp.pop %v4289
        %v4338 = vrcp.pop %v4292
        %v4339 = vrcp.pop %v4295
        %v4340 = vrcp.pop %v4298
        %v4341 = vrcp.pop %v4301
        %v4342 = vrcp.pop %v4304
        %v4343 = vrcp.pop %v4307
        %v4344 = vrcp.pop %v4310
        %v4345 = vrcp.pop %v4313
        %v4346 = vrcp.pop %v4316
        %v4347 = vrcp.pop %v4319
        %v4348 = vrcp.pop %v4322
        %v4349 = vrcp.pop %v4325
        %v4350 = vmul.f32 %v4207, %v4326
        %v4351 = vmul.f32 %v4209, %v4327
        %v4352 = vmul.f32 %v4211, %v4328
        %v4353 = vmul.f32 %v4213, %v4329
        %v4354 = vmul.f32 %v4215, %v4330
        %v4355 = vmul.f32 %v4217, %v4331
        %v4356 = vmul.f32 %v4219, %v4332
        %v4357 = vmul.f32 %v4221, %v4333
        %v4358 = vmul.f32 %v4223, %v4334
        %v4359 = vmul.f32 %v4225, %v4335
        %v4360 = vmul.f32 %v4227, %v4336
        %v4361 = vmul.f32 %v4229, %v4337
        %v4362 = vmul.f32 %v4231, %v4338
        %v4363 = vmul.f32 %v4233, %v4339
        %v4364 = vmul.f32 %v4235, %v4340
        %v4365 = vmul.f32 %v4237, %v4341
        %v4366 = vmul.f32 %v4239, %v4342
        %v4367 = vmul.f32 %v4241, %v4343
        %v4368 = vmul.f32 %v4243, %v4344
        %v4369 = vmul.f32 %v4245, %v4345
        %v4370 = vmul.f32 %v4247, %v4346
        %v4371 = vmul.f32 %v4249, %v4347
        %v4372 = vmul.f32 %v4251, %v4348
        %v4373 = vmul.f32 %v4253, %v4349
        %v4374 = vpack.c.bf16 %v4351, %v4350
        %v4375 = vpack.c.bf16 %v4352, %v4352
        %v4376 = vpack.c.bf16 %v4354, %v4353
        %v4377 = vpack.c.bf16 %v4355, %v4355
        %v4378 = vpack.c.bf16 %v4357, %v4356
        %v4379 = vpack.c.bf16 %v4358, %v4358
        %v4380 = vpack.c.bf16 %v4360, %v4359
        %v4381 = vpack.c.bf16 %v4361, %v4361
        %v4382 = vpack.c.bf16 %v4363, %v4362
        %v4383 = vpack.c.bf16 %v4364, %v4364
        %v4384 = vpack.c.bf16 %v4366, %v4365
        %v4385 = vpack.c.bf16 %v4367, %v4367
        %v4386 = vpack.c.bf16 %v4369, %v4368
        %v4387 = vpack.c.bf16 %v4370, %v4370
        %v4388 = vpack.c.bf16 %v4372, %v4371
        %v4389 = vpack.c.bf16 %v4373, %v4373
        %v4391 = vsel %vm4109, %v4374, 0
        %v4394 = vsel %vm4109, %v4375, 0
        %vm4396 = vcmask 1043456
        %v4398 = vsel %vm4396, %v3586, 0
        %4400 = vmatprep.subr.bf16.mxu0 0
        %4401 = vmatpush1.bf16.msra.mxu0 %v3585
        %4402 = vmatprep.subr.bf16.mxu0 0
        %4403 = vmatpush1.bf16.msra.mxu0 %v4398
        %4404 = vmatprep.subr.bf16.mxu0 0
        %4405 = vmatpush1.bf16.msra.mxu0 0
        %4406 = vmatprep.subr.bf16.mxu0 0
        %4407 = vmatpush1.bf16.msra.mxu0 0
        %4408 = vmatprep.subr.bf16.mxu0 0
        %4409 = vmatpush1.bf16.msra.mxu0 0
        %4410 = vmatprep.subr.bf16.mxu0 0
        %4411 = vmatpush1.bf16.msra.mxu0 0
        %4412 = vmatprep.subr.bf16.mxu0 0
        %4413 = vmatpush1.bf16.msra.mxu0 0
        %4414 = vmatprep.subr.bf16.mxu0 0
        %4415 = vmatpush1.bf16.msra.mxu0 0
        %4416 = vmatprep.subr.bf16.mxu0 0
        %4417 = vmatpush1.bf16.msra.mxu0 0
        %4418 = vmatprep.subr.bf16.mxu0 0
        %4419 = vmatpush1.bf16.msra.mxu0 0
        %4420 = vmatprep.subr.bf16.mxu0 0
        %4421 = vmatpush1.bf16.msra.mxu0 0
        %4422 = vmatprep.subr.bf16.mxu0 0
        %4423 = vmatpush1.bf16.msra.mxu0 0
        %4424 = vmatprep.subr.bf16.mxu0 0
        %4425 = vmatpush1.bf16.msra.mxu0 0
        %4426 = vmatprep.subr.bf16.mxu0 0
        %4427 = vmatpush1.bf16.msra.mxu0 0
        %4428 = vmatprep.subr.bf16.mxu0 0
        %4429 = vmatpush1.bf16.msra.mxu0 0
        %4430 = vmatprep.subr.bf16.mxu0 0
        %4431 = vmatpush1.bf16.msra.mxu0 0
        %4432 = vmatprep.mubr.bf16.mxu0 0
        %4433 = vmatmul.mubr.bf16.gmra.mrb[0].mxu0 %v4391
        %v4434 = vpop.f32.mrb[0].mxu0
        %v4435 = vadd.f32 0.0, %v4434
        %v4436 = vpop.f32.mrb[0].mxu0
        %v4437 = vpop.f32.mrb[0].mxu0
        %v4438 = vadd.f32 0.0, %v4437
        %v4439 = vpop.f32.mrb[0].mxu0
        %4440 = vmatprep.mubr.bf16.mxu0 0
        %4441 = vmatmul.mubr.bf16.gmra.mrb[0].mxu0 %v4394
        %v4442 = vpop.f32.mrb[0].mxu0
        %v4443 = vadd.f32 0.0, %v4442
        %v4444 = vpop.f32.mrb[0].mxu0
        %v4445 = vpop.f32.mrb[0].mxu0
        %v4446 = vpop.f32.mrb[0].mxu0
        %4447 = vdwg.mxu0
        %v4449 = vsel %vm4109, %v4376, 0
        %v4452 = vsel %vm4109, %v4377, 0
        %v4455 = vsel %vm4396, %v3588, 0
        %4457 = vmatprep.subr.bf16.mxu0 0
        %4458 = vmatpush1.bf16.msra.mxu0 %v3587
        %4459 = vmatprep.subr.bf16.mxu0 0
        %4460 = vmatpush1.bf16.msra.mxu0 %v4455
        %4461 = vmatprep.subr.bf16.mxu0 0
        %4462 = vmatpush1.bf16.msra.mxu0 0
        %4463 = vmatprep.subr.bf16.mxu0 0
        %4464 = vmatpush1.bf16.msra.mxu0 0
        %4465 = vmatprep.subr.bf16.mxu0 0
        %4466 = vmatpush1.bf16.msra.mxu0 0
        %4467 = vmatprep.subr.bf16.mxu0 0
        %4468 = vmatpush1.bf16.msra.mxu0 0
        %4469 = vmatprep.subr.bf16.mxu0 0
        %4470 = vmatpush1.bf16.msra.mxu0 0
        %4471 = vmatprep.subr.bf16.mxu0 0
        %4472 = vmatpush1.bf16.msra.mxu0 0
        %4473 = vmatprep.subr.bf16.mxu0 0
        %4474 = vmatpush1.bf16.msra.mxu0 0
        %4475 = vmatprep.subr.bf16.mxu0 0
        %4476 = vmatpush1.bf16.msra.mxu0 0
        %4477 = vmatprep.subr.bf16.mxu0 0
        %4478 = vmatpush1.bf16.msra.mxu0 0
        %4479 = vmatprep.subr.bf16.mxu0 0
        %4480 = vmatpush1.bf16.msra.mxu0 0
        %4481 = vmatprep.subr.bf16.mxu0 0
        %4482 = vmatpush1.bf16.msra.mxu0 0
        %4483 = vmatprep.subr.bf16.mxu0 0
        %4484 = vmatpush1.bf16.msra.mxu0 0
        %4485 = vmatprep.subr.bf16.mxu0 0
        %4486 = vmatpush1.bf16.msra.mxu0 0
        %4487 = vmatprep.subr.bf16.mxu0 0
        %4488 = vmatpush1.bf16.msra.mxu0 0
        %4489 = vmatprep.mubr.bf16.mxu0 0
        %4490 = vmatmul.mubr.bf16.gmra.mrb[0].mxu0 %v4449
        %v4491 = vpop.f32.mrb[0].mxu0
        %v4492 = vadd.f32 0.0, %v4491
        %v4493 = vpop.f32.mrb[0].mxu0
        %v4494 = vpop.f32.mrb[0].mxu0
        %v4495 = vadd.f32 0.0, %v4494
        %v4496 = vpop.f32.mrb[0].mxu0
        %4497 = vmatprep.mubr.bf16.mxu0 0
        %4498 = vmatmul.mubr.bf16.gmra.mrb[0].mxu0 %v4452
        %v4499 = vpop.f32.mrb[0].mxu0
        %v4500 = vadd.f32 0.0, %v4499
        %v4501 = vpop.f32.mrb[0].mxu0
        %v4502 = vpop.f32.mrb[0].mxu0
        %v4503 = vpop.f32.mrb[0].mxu0
        %4504 = vdwg.mxu0
        %v4506 = vsel %vm4109, %v4378, 0
        %v4509 = vsel %vm4109, %v4379, 0
        %v4512 = vsel %vm4396, %v3590, 0
        %4514 = vmatprep.subr.bf16.mxu0 0
        %4515 = vmatpush1.bf16.msra.mxu0 %v3589
        %4516 = vmatprep.subr.bf16.mxu0 0
        %4517 = vmatpush1.bf16.msra.mxu0 %v4512
        %4518 = vmatprep.subr.bf16.mxu0 0
        %4519 = vmatpush1.bf16.msra.mxu0 0
        %4520 = vmatprep.subr.bf16.mxu0 0
        %4521 = vmatpush1.bf16.msra.mxu0 0
        %4522 = vmatprep.subr.bf16.mxu0 0
        %4523 = vmatpush1.bf16.msra.mxu0 0
        %4524 = vmatprep.subr.bf16.mxu0 0
        %4525 = vmatpush1.bf16.msra.mxu0 0
        %4526 = vmatprep.subr.bf16.mxu0 0
        %4527 = vmatpush1.bf16.msra.mxu0 0
        %4528 = vmatprep.subr.bf16.mxu0 0
        %4529 = vmatpush1.bf16.msra.mxu0 0
        %4530 = vmatprep.subr.bf16.mxu0 0
        %4531 = vmatpush1.bf16.msra.mxu0 0
        %4532 = vmatprep.subr.bf16.mxu0 0
        %4533 = vmatpush1.bf16.msra.mxu0 0
        %4534 = vmatprep.subr.bf16.mxu0 0
        %4535 = vmatpush1.bf16.msra.mxu0 0
        %4536 = vmatprep.subr.bf16.mxu0 0
        %4537 = vmatpush1.bf16.msra.mxu0 0
        %4538 = vmatprep.subr.bf16.mxu0 0
        %4539 = vmatpush1.bf16.msra.mxu0 0
        %4540 = vmatprep.subr.bf16.mxu0 0
        %4541 = vmatpush1.bf16.msra.mxu0 0
        %4542 = vmatprep.subr.bf16.mxu0 0
        %4543 = vmatpush1.bf16.msra.mxu0 0
        %4544 = vmatprep.subr.bf16.mxu0 0
        %4545 = vmatpush1.bf16.msra.mxu0 0
        %4546 = vmatprep.mubr.bf16.mxu0 0
        %4547 = vmatmul.mubr.bf16.gmra.mrb[0].mxu0 %v4506
        %v4548 = vpop.f32.mrb[0].mxu0
        %v4549 = vadd.f32 0.0, %v4548
        %v4550 = vpop.f32.mrb[0].mxu0
        %v4551 = vpop.f32.mrb[0].mxu0
        %v4552 = vadd.f32 0.0, %v4551
        %v4553 = vpop.f32.mrb[0].mxu0
        %4554 = vmatprep.mubr.bf16.mxu0 0
        %4555 = vmatmul.mubr.bf16.gmra.mrb[0].mxu0 %v4509
        %v4556 = vpop.f32.mrb[0].mxu0
        %v4557 = vadd.f32 0.0, %v4556
        %v4558 = vpop.f32.mrb[0].mxu0
        %v4559 = vpop.f32.mrb[0].mxu0
        %v4560 = vpop.f32.mrb[0].mxu0
        %4561 = vdwg.mxu0
        %v4563 = vsel %vm4109, %v4380, 0
        %v4566 = vsel %vm4109, %v4381, 0
        %v4569 = vsel %vm4396, %v3592, 0
        %4571 = vmatprep.subr.bf16.mxu0 0
        %4572 = vmatpush1.bf16.msra.mxu0 %v3591
        %4573 = vmatprep.subr.bf16.mxu0 0
        %4574 = vmatpush1.bf16.msra.mxu0 %v4569
        %4575 = vmatprep.subr.bf16.mxu0 0
        %4576 = vmatpush1.bf16.msra.mxu0 0
        %4577 = vmatprep.subr.bf16.mxu0 0
        %4578 = vmatpush1.bf16.msra.mxu0 0
        %4579 = vmatprep.subr.bf16.mxu0 0
        %4580 = vmatpush1.bf16.msra.mxu0 0
        %4581 = vmatprep.subr.bf16.mxu0 0
        %4582 = vmatpush1.bf16.msra.mxu0 0
        %4583 = vmatprep.subr.bf16.mxu0 0
        %4584 = vmatpush1.bf16.msra.mxu0 0
        %4585 = vmatprep.subr.bf16.mxu0 0
        %4586 = vmatpush1.bf16.msra.mxu0 0
        %4587 = vmatprep.subr.bf16.mxu0 0
        %4588 = vmatpush1.bf16.msra.mxu0 0
        %4589 = vmatprep.subr.bf16.mxu0 0
        %4590 = vmatpush1.bf16.msra.mxu0 0
        %4591 = vmatprep.subr.bf16.mxu0 0
        %4592 = vmatpush1.bf16.msra.mxu0 0
        %4593 = vmatprep.subr.bf16.mxu0 0
        %4594 = vmatpush1.bf16.msra.mxu0 0
        %4595 = vmatprep.subr.bf16.mxu0 0
        %4596 = vmatpush1.bf16.msra.mxu0 0
        %4597 = vmatprep.subr.bf16.mxu0 0
        %4598 = vmatpush1.bf16.msra.mxu0 0
        %4599 = vmatprep.subr.bf16.mxu0 0
        %4600 = vmatpush1.bf16.msra.mxu0 0
        %4601 = vmatprep.subr.bf16.mxu0 0
        %4602 = vmatpush1.bf16.msra.mxu0 0
        %4603 = vmatprep.mubr.bf16.mxu0 0
        %4604 = vmatmul.mubr.bf16.gmra.mrb[0].mxu0 %v4563
        %v4605 = vpop.f32.mrb[0].mxu0
        %v4606 = vadd.f32 0.0, %v4605
        %v4607 = vpop.f32.mrb[0].mxu0
        %v4608 = vpop.f32.mrb[0].mxu0
        %v4609 = vadd.f32 0.0, %v4608
        %v4610 = vpop.f32.mrb[0].mxu0
        %4611 = vmatprep.mubr.bf16.mxu0 0
        %4612 = vmatmul.mubr.bf16.gmra.mrb[0].mxu0 %v4566
        %v4613 = vpop.f32.mrb[0].mxu0
        %v4614 = vadd.f32 0.0, %v4613
        %v4615 = vpop.f32.mrb[0].mxu0
        %v4616 = vpop.f32.mrb[0].mxu0
        %v4617 = vpop.f32.mrb[0].mxu0
        %4618 = vdwg.mxu0
        %v4620 = vsel %vm4109, %v4382, 0
        %v4623 = vsel %vm4109, %v4383, 0
        %v4626 = vsel %vm4396, %v3594, 0
        %4628 = vmatprep.subr.bf16.mxu0 0
        %4629 = vmatpush1.bf16.msra.mxu0 %v3593
        %4630 = vmatprep.subr.bf16.mxu0 0
        %4631 = vmatpush1.bf16.msra.mxu0 %v4626
        %4632 = vmatprep.subr.bf16.mxu0 0
        %4633 = vmatpush1.bf16.msra.mxu0 0
        %4634 = vmatprep.subr.bf16.mxu0 0
        %4635 = vmatpush1.bf16.msra.mxu0 0
        %4636 = vmatprep.subr.bf16.mxu0 0
        %4637 = vmatpush1.bf16.msra.mxu0 0
        %4638 = vmatprep.subr.bf16.mxu0 0
        %4639 = vmatpush1.bf16.msra.mxu0 0
        %4640 = vmatprep.subr.bf16.mxu0 0
        %4641 = vmatpush1.bf16.msra.mxu0 0
        %4642 = vmatprep.subr.bf16.mxu0 0
        %4643 = vmatpush1.bf16.msra.mxu0 0
        %4644 = vmatprep.subr.bf16.mxu0 0
        %4645 = vmatpush1.bf16.msra.mxu0 0
        %4646 = vmatprep.subr.bf16.mxu0 0
        %4647 = vmatpush1.bf16.msra.mxu0 0
        %4648 = vmatprep.subr.bf16.mxu0 0
        %4649 = vmatpush1.bf16.msra.mxu0 0
        %4650 = vmatprep.subr.bf16.mxu0 0
        %4651 = vmatpush1.bf16.msra.mxu0 0
        %4652 = vmatprep.subr.bf16.mxu0 0
        %4653 = vmatpush1.bf16.msra.mxu0 0
        %4654 = vmatprep.subr.bf16.mxu0 0
        %4655 = vmatpush1.bf16.msra.mxu0 0
        %4656 = vmatprep.subr.bf16.mxu0 0
        %4657 = vmatpush1.bf16.msra.mxu0 0
        %4658 = vmatprep.subr.bf16.mxu0 0
        %4659 = vmatpush1.bf16.msra.mxu0 0
        %4660 = vmatprep.mubr.bf16.mxu0 0
        %4661 = vmatmul.mubr.bf16.gmra.mrb[0].mxu0 %v4620
        %v4662 = vpop.f32.mrb[0].mxu0
        %v4663 = vadd.f32 0.0, %v4662
        %v4664 = vpop.f32.mrb[0].mxu0
        %v4665 = vpop.f32.mrb[0].mxu0
        %v4666 = vadd.f32 0.0, %v4665
        %v4667 = vpop.f32.mrb[0].mxu0
        %4668 = vmatprep.mubr.bf16.mxu0 0
        %4669 = vmatmul.mubr.bf16.gmra.mrb[0].mxu0 %v4623
        %v4670 = vpop.f32.mrb[0].mxu0
        %v4671 = vadd.f32 0.0, %v4670
        %v4672 = vpop.f32.mrb[0].mxu0
        %v4673 = vpop.f32.mrb[0].mxu0
        %v4674 = vpop.f32.mrb[0].mxu0
        %4675 = vdwg.mxu0
        %v4677 = vsel %vm4109, %v4384, 0
        %v4680 = vsel %vm4109, %v4385, 0
        %v4683 = vsel %vm4396, %v3596, 0
        %4685 = vmatprep.subr.bf16.mxu0 0
        %4686 = vmatpush1.bf16.msra.mxu0 %v3595
        %4687 = vmatprep.subr.bf16.mxu0 0
        %4688 = vmatpush1.bf16.msra.mxu0 %v4683
        %4689 = vmatprep.subr.bf16.mxu0 0
        %4690 = vmatpush1.bf16.msra.mxu0 0
        %4691 = vmatprep.subr.bf16.mxu0 0
        %4692 = vmatpush1.bf16.msra.mxu0 0
        %4693 = vmatprep.subr.bf16.mxu0 0
        %4694 = vmatpush1.bf16.msra.mxu0 0
        %4695 = vmatprep.subr.bf16.mxu0 0
        %4696 = vmatpush1.bf16.msra.mxu0 0
        %4697 = vmatprep.subr.bf16.mxu0 0
        %4698 = vmatpush1.bf16.msra.mxu0 0
        %4699 = vmatprep.subr.bf16.mxu0 0
        %4700 = vmatpush1.bf16.msra.mxu0 0
        %4701 = vmatprep.subr.bf16.mxu0 0
        %4702 = vmatpush1.bf16.msra.mxu0 0
        %4703 = vmatprep.subr.bf16.mxu0 0
        %4704 = vmatpush1.bf16.msra.mxu0 0
        %4705 = vmatprep.subr.bf16.mxu0 0
        %4706 = vmatpush1.bf16.msra.mxu0 0
        %4707 = vmatprep.subr.bf16.mxu0 0
        %4708 = vmatpush1.bf16.msra.mxu0 0
        %4709 = vmatprep.subr.bf16.mxu0 0
        %4710 = vmatpush1.bf16.msra.mxu0 0
        %4711 = vmatprep.subr.bf16.mxu0 0
        %4712 = vmatpush1.bf16.msra.mxu0 0
        %4713 = vmatprep.subr.bf16.mxu0 0
        %4714 = vmatpush1.bf16.msra.mxu0 0
        %4715 = vmatprep.subr.bf16.mxu0 0
        %4716 = vmatpush1.bf16.msra.mxu0 0
        %4717 = vmatprep.mubr.bf16.mxu0 0
        %4718 = vmatmul.mubr.bf16.gmra.mrb[0].mxu0 %v4677
        %v4719 = vpop.f32.mrb[0].mxu0
        %v4720 = vadd.f32 0.0, %v4719
        %v4721 = vpop.f32.mrb[0].mxu0
        %v4722 = vpop.f32.mrb[0].mxu0
        %v4723 = vadd.f32 0.0, %v4722
        %v4724 = vpop.f32.mrb[0].mxu0
        %4725 = vmatprep.mubr.bf16.mxu0 0
        %4726 = vmatmul.mubr.bf16.gmra.mrb[0].mxu0 %v4680
        %v4727 = vpop.f32.mrb[0].mxu0
        %v4728 = vadd.f32 0.0, %v4727
        %v4729 = vpop.f32.mrb[0].mxu0
        %v4730 = vpop.f32.mrb[0].mxu0
        %v4731 = vpop.f32.mrb[0].mxu0
        %4732 = vdwg.mxu0
        %v4734 = vsel %vm4109, %v4386, 0
        %v4737 = vsel %vm4109, %v4387, 0
        %v4740 = vsel %vm4396, %v3598, 0
        %4742 = vmatprep.subr.bf16.mxu0 0
        %4743 = vmatpush1.bf16.msra.mxu0 %v3597
        %4744 = vmatprep.subr.bf16.mxu0 0
        %4745 = vmatpush1.bf16.msra.mxu0 %v4740
        %4746 = vmatprep.subr.bf16.mxu0 0
        %4747 = vmatpush1.bf16.msra.mxu0 0
        %4748 = vmatprep.subr.bf16.mxu0 0
        %4749 = vmatpush1.bf16.msra.mxu0 0
        %4750 = vmatprep.subr.bf16.mxu0 0
        %4751 = vmatpush1.bf16.msra.mxu0 0
        %4752 = vmatprep.subr.bf16.mxu0 0
        %4753 = vmatpush1.bf16.msra.mxu0 0
        %4754 = vmatprep.subr.bf16.mxu0 0
        %4755 = vmatpush1.bf16.msra.mxu0 0
        %4756 = vmatprep.subr.bf16.mxu0 0
        %4757 = vmatpush1.bf16.msra.mxu0 0
        %4758 = vmatprep.subr.bf16.mxu0 0
        %4759 = vmatpush1.bf16.msra.mxu0 0
        %4760 = vmatprep.subr.bf16.mxu0 0
        %4761 = vmatpush1.bf16.msra.mxu0 0
        %4762 = vmatprep.subr.bf16.mxu0 0
        %4763 = vmatpush1.bf16.msra.mxu0 0
        %4764 = vmatprep.subr.bf16.mxu0 0
        %4765 = vmatpush1.bf16.msra.mxu0 0
        %4766 = vmatprep.subr.bf16.mxu0 0
        %4767 = vmatpush1.bf16.msra.mxu0 0
        %4768 = vmatprep.subr.bf16.mxu0 0
        %4769 = vmatpush1.bf16.msra.mxu0 0
        %4770 = vmatprep.subr.bf16.mxu0 0
        %4771 = vmatpush1.bf16.msra.mxu0 0
        %4772 = vmatprep.subr.bf16.mxu0 0
        %4773 = vmatpush1.bf16.msra.mxu0 0
        %4774 = vmatprep.mubr.bf16.mxu0 0
        %4775 = vmatmul.mubr.bf16.gmra.mrb[0].mxu0 %v4734
        %v4776 = vpop.f32.mrb[0].mxu0
        %v4777 = vadd.f32 0.0, %v4776
        %v4778 = vpop.f32.mrb[0].mxu0
        %v4779 = vpop.f32.mrb[0].mxu0
        %v4780 = vadd.f32 0.0, %v4779
        %v4781 = vpop.f32.mrb[0].mxu0
        %4782 = vmatprep.mubr.bf16.mxu0 0
        %4783 = vmatmul.mubr.bf16.gmra.mrb[0].mxu0 %v4737
        %v4784 = vpop.f32.mrb[0].mxu0
        %v4785 = vadd.f32 0.0, %v4784
        %v4786 = vpop.f32.mrb[0].mxu0
        %v4787 = vpop.f32.mrb[0].mxu0
        %v4788 = vpop.f32.mrb[0].mxu0
        %4789 = vdwg.mxu0
        %v4791 = vsel %vm4109, %v4388, 0
        %v4794 = vsel %vm4109, %v4389, 0
        %v4797 = vsel %vm4396, %v3600, 0
        %4799 = vmatprep.subr.bf16.mxu0 0
        %4800 = vmatpush1.bf16.msra.mxu0 %v3599
        %4801 = vmatprep.subr.bf16.mxu0 0
        %4802 = vmatpush1.bf16.msra.mxu0 %v4797
        %4803 = vmatprep.subr.bf16.mxu0 0
        %4804 = vmatpush1.bf16.msra.mxu0 0
        %4805 = vmatprep.subr.bf16.mxu0 0
        %4806 = vmatpush1.bf16.msra.mxu0 0
        %4807 = vmatprep.subr.bf16.mxu0 0
        %4808 = vmatpush1.bf16.msra.mxu0 0
        %4809 = vmatprep.subr.bf16.mxu0 0
        %4810 = vmatpush1.bf16.msra.mxu0 0
        %4811 = vmatprep.subr.bf16.mxu0 0
        %4812 = vmatpush1.bf16.msra.mxu0 0
        %4813 = vmatprep.subr.bf16.mxu0 0
        %4814 = vmatpush1.bf16.msra.mxu0 0
        %4815 = vmatprep.subr.bf16.mxu0 0
        %4816 = vmatpush1.bf16.msra.mxu0 0
        %4817 = vmatprep.subr.bf16.mxu0 0
        %4818 = vmatpush1.bf16.msra.mxu0 0
        %4819 = vmatprep.subr.bf16.mxu0 0
        %4820 = vmatpush1.bf16.msra.mxu0 0
        %4821 = vmatprep.subr.bf16.mxu0 0
        %4822 = vmatpush1.bf16.msra.mxu0 0
        %4823 = vmatprep.subr.bf16.mxu0 0
        %4824 = vmatpush1.bf16.msra.mxu0 0
        %4825 = vmatprep.subr.bf16.mxu0 0
        %4826 = vmatpush1.bf16.msra.mxu0 0
        %4827 = vmatprep.subr.bf16.mxu0 0
        %4828 = vmatpush1.bf16.msra.mxu0 0
        %4829 = vmatprep.subr.bf16.mxu0 0
        %4830 = vmatpush1.bf16.msra.mxu0 0
        %4831 = vmatprep.mubr.bf16.mxu0 0
        %4832 = vmatmul.mubr.bf16.gmra.mrb[0].mxu0 %v4791
        %v4833 = vpop.f32.mrb[0].mxu0
        %v4834 = vadd.f32 0.0, %v4833
        %v4835 = vpop.f32.mrb[0].mxu0
        %v4836 = vpop.f32.mrb[0].mxu0
        %v4837 = vadd.f32 0.0, %v4836
        %v4838 = vpop.f32.mrb[0].mxu0
        %4839 = vmatprep.mubr.bf16.mxu0 0
        %4840 = vmatmul.mubr.bf16.gmra.mrb[0].mxu0 %v4794
        %v4841 = vpop.f32.mrb[0].mxu0
        %v4842 = vadd.f32 0.0, %v4841
        %v4843 = vpop.f32.mrb[0].mxu0
        %v4844 = vpop.f32.mrb[0].mxu0
        %v4845 = vpop.f32.mrb[0].mxu0
        %4846 = vdwg.mxu0
        %v4847 = vcombine.low %v4435, %v4549
        %v4848 = vcombine.high %v4435, %v4549
        %v4850 = vunpack.c.l.s4 1983009808
        %v4851 = vunpack.c.0.s8 %v4850
        %v4852 = vlaneseq
        %v4853 = vshrl.u32 %v4852, 7
        %v4854 = vsub.s32 %v4851, %v4853
        %v4855 = vrot.slane %v4847, %v4854
        %v4857 = vunpack.c.l.s4 1983009808
        %v4858 = vunpack.c.0.s8 %v4857
        %v4859 = vlaneseq
        %v4860 = vshrl.u32 %v4859, 7
        %v4861 = vsub.s32 %v4858, %v4860
        %v4862 = vrot.slane %v4848, %v4861
        %v4863 = vcombine.low %v4492, %v4606
        %v4864 = vcombine.high %v4492, %v4606
        %v4866 = vunpack.c.l.s4 1983009808
        %v4867 = vunpack.c.0.s8 %v4866
        %v4868 = vlaneseq
        %v4869 = vshrl.u32 %v4868, 7
        %v4870 = vsub.s32 %v4867, %v4869
        %v4871 = vrot.slane %v4863, %v4870
        %v4873 = vunpack.c.l.s4 1983009808
        %v4874 = vunpack.c.0.s8 %v4873
        %v4875 = vlaneseq
        %v4876 = vshrl.u32 %v4875, 7
        %v4877 = vsub.s32 %v4874, %v4876
        %v4878 = vrot.slane %v4864, %v4877
        %v4879 = vcombine.low %v4855, %v4871
        %v4880 = vcombine.high %v4855, %v4871
        %v4882 = vunpack.c.l.s4 1934713408
        %v4883 = vunpack.c.0.s8 %v4882
        %v4884 = vlaneseq
        %v4885 = vshrl.u32 %v4884, 7
        %v4886 = vsub.s32 %v4883, %v4885
        %v4887 = vrot.slane %v4879, %v4886
        %v4889 = vunpack.c.l.s4 1934713408
        %v4890 = vunpack.c.0.s8 %v4889
        %v4891 = vlaneseq
        %v4892 = vshrl.u32 %v4891, 7
        %v4893 = vsub.s32 %v4890, %v4892
        %v4894 = vrot.slane %v4880, %v4893
        %v4895 = vcombine.low %v4862, %v4878
        %v4896 = vcombine.high %v4862, %v4878
        %v4898 = vunpack.c.l.s4 1934713408
        %v4899 = vunpack.c.0.s8 %v4898
        %v4900 = vlaneseq
        %v4901 = vshrl.u32 %v4900, 7
        %v4902 = vsub.s32 %v4899, %v4901
        %v4903 = vrot.slane %v4895, %v4902
        %v4905 = vunpack.c.l.s4 1934713408
        %v4906 = vunpack.c.0.s8 %v4905
        %v4907 = vlaneseq
        %v4908 = vshrl.u32 %v4907, 7
        %v4909 = vsub.s32 %v4906, %v4908
        %v4910 = vrot.slane %v4896, %v4909
        %v4911 = vcombine.high %v4887, 0.0
        %v4912 = vcombine.high %v4894, 0.0
        %v4913 = vcombine.high %v4903, 0.0
        %v4914 = vcombine.high %v4910, 0.0
        %v4915 = vcombine.low %v4438, %v4552
        %v4916 = vcombine.high %v4438, %v4552
        %v4918 = vunpack.c.l.s4 1983009808
        %v4919 = vunpack.c.0.s8 %v4918
        %v4920 = vlaneseq
        %v4921 = vshrl.u32 %v4920, 7
        %v4922 = vsub.s32 %v4919, %v4921
        %v4923 = vrot.slane %v4915, %v4922
        %v4925 = vunpack.c.l.s4 1983009808
        %v4926 = vunpack.c.0.s8 %v4925
        %v4927 = vlaneseq
        %v4928 = vshrl.u32 %v4927, 7
        %v4929 = vsub.s32 %v4926, %v4928
        %v4930 = vrot.slane %v4916, %v4929
        %v4931 = vcombine.low %v4495, %v4609
        %v4932 = vcombine.high %v4495, %v4609
        %v4934 = vunpack.c.l.s4 1983009808
        %v4935 = vunpack.c.0.s8 %v4934
        %v4936 = vlaneseq
        %v4937 = vshrl.u32 %v4936, 7
        %v4938 = vsub.s32 %v4935, %v4937
        %v4939 = vrot.slane %v4931, %v4938
        %v4941 = vunpack.c.l.s4 1983009808
        %v4942 = vunpack.c.0.s8 %v4941
        %v4943 = vlaneseq
        %v4944 = vshrl.u32 %v4943, 7
        %v4945 = vsub.s32 %v4942, %v4944
        %v4946 = vrot.slane %v4932, %v4945
        %v4947 = vcombine.low %v4923, %v4939
        %v4948 = vcombine.high %v4923, %v4939
        %v4950 = vunpack.c.l.s4 1934713408
        %v4951 = vunpack.c.0.s8 %v4950
        %v4952 = vlaneseq
        %v4953 = vshrl.u32 %v4952, 7
        %v4954 = vsub.s32 %v4951, %v4953
        %v4955 = vrot.slane %v4947, %v4954
        %v4957 = vunpack.c.l.s4 1934713408
        %v4958 = vunpack.c.0.s8 %v4957
        %v4959 = vlaneseq
        %v4960 = vshrl.u32 %v4959, 7
        %v4961 = vsub.s32 %v4958, %v4960
        %v4962 = vrot.slane %v4948, %v4961
        %v4963 = vcombine.low %v4930, %v4946
        %v4964 = vcombine.high %v4930, %v4946
        %v4966 = vunpack.c.l.s4 1934713408
        %v4967 = vunpack.c.0.s8 %v4966
        %v4968 = vlaneseq
        %v4969 = vshrl.u32 %v4968, 7
        %v4970 = vsub.s32 %v4967, %v4969
        %v4971 = vrot.slane %v4963, %v4970
        %v4973 = vunpack.c.l.s4 1934713408
        %v4974 = vunpack.c.0.s8 %v4973
        %v4975 = vlaneseq
        %v4976 = vshrl.u32 %v4975, 7
        %v4977 = vsub.s32 %v4974, %v4976
        %v4978 = vrot.slane %v4964, %v4977
        %v4979 = vcombine.high %v4955, 0.0
        %v4980 = vcombine.high %v4962, 0.0
        %v4981 = vcombine.high %v4971, 0.0
        %v4982 = vcombine.high %v4978, 0.0
        %v4983 = vcombine.low %v4443, %v4557
        %v4984 = vcombine.high %v4443, %v4557
        %v4986 = vunpack.c.l.s4 1983009808
        %v4987 = vunpack.c.0.s8 %v4986
        %v4988 = vlaneseq
        %v4989 = vshrl.u32 %v4988, 7
        %v4990 = vsub.s32 %v4987, %v4989
        %v4991 = vrot.slane %v4983, %v4990
        %v4993 = vunpack.c.l.s4 1983009808
        %v4994 = vunpack.c.0.s8 %v4993
        %v4995 = vlaneseq
        %v4996 = vshrl.u32 %v4995, 7
        %v4997 = vsub.s32 %v4994, %v4996
        %v4998 = vrot.slane %v4984, %v4997
        %v4999 = vcombine.low %v4500, %v4614
        %v5000 = vcombine.high %v4500, %v4614
        %v5002 = vunpack.c.l.s4 1983009808
        %v5003 = vunpack.c.0.s8 %v5002
        %v5004 = vlaneseq
        %v5005 = vshrl.u32 %v5004, 7
        %v5006 = vsub.s32 %v5003, %v5005
        %v5007 = vrot.slane %v4999, %v5006
        %v5009 = vunpack.c.l.s4 1983009808
        %v5010 = vunpack.c.0.s8 %v5009
        %v5011 = vlaneseq
        %v5012 = vshrl.u32 %v5011, 7
        %v5013 = vsub.s32 %v5010, %v5012
        %v5014 = vrot.slane %v5000, %v5013
        %v5015 = vcombine.low %v4991, %v5007
        %v5016 = vcombine.high %v4991, %v5007
        %v5018 = vunpack.c.l.s4 1934713408
        %v5019 = vunpack.c.0.s8 %v5018
        %v5020 = vlaneseq
        %v5021 = vshrl.u32 %v5020, 7
        %v5022 = vsub.s32 %v5019, %v5021
        %v5023 = vrot.slane %v5015, %v5022
        %v5025 = vunpack.c.l.s4 1934713408
        %v5026 = vunpack.c.0.s8 %v5025
        %v5027 = vlaneseq
        %v5028 = vshrl.u32 %v5027, 7
        %v5029 = vsub.s32 %v5026, %v5028
        %v5030 = vrot.slane %v5016, %v5029
        %v5031 = vcombine.low %v4998, %v5014
        %v5032 = vcombine.high %v4998, %v5014
        %v5034 = vunpack.c.l.s4 1934713408
        %v5035 = vunpack.c.0.s8 %v5034
        %v5036 = vlaneseq
        %v5037 = vshrl.u32 %v5036, 7
        %v5038 = vsub.s32 %v5035, %v5037
        %v5039 = vrot.slane %v5031, %v5038
        %v5041 = vunpack.c.l.s4 1934713408
        %v5042 = vunpack.c.0.s8 %v5041
        %v5043 = vlaneseq
        %v5044 = vshrl.u32 %v5043, 7
        %v5045 = vsub.s32 %v5042, %v5044
        %v5046 = vrot.slane %v5032, %v5045
        %v5047 = vcombine.high %v5023, 0.0
        %v5048 = vcombine.high %v5030, 0.0
        %v5049 = vcombine.high %v5039, 0.0
        %v5050 = vcombine.high %v5046, 0.0
        %v5051 = vcombine.low %v4663, %v4777
        %v5052 = vcombine.high %v4663, %v4777
        %v5054 = vunpack.c.l.s4 1983009808
        %v5055 = vunpack.c.0.s8 %v5054
        %v5056 = vlaneseq
        %v5057 = vshrl.u32 %v5056, 7
        %v5058 = vsub.s32 %v5055, %v5057
        %v5059 = vrot.slane %v5051, %v5058
        %v5061 = vunpack.c.l.s4 1983009808
        %v5062 = vunpack.c.0.s8 %v5061
        %v5063 = vlaneseq
        %v5064 = vshrl.u32 %v5063, 7
        %v5065 = vsub.s32 %v5062, %v5064
        %v5066 = vrot.slane %v5052, %v5065
        %v5067 = vcombine.low %v4720, %v4834
        %v5068 = vcombine.high %v4720, %v4834
        %v5070 = vunpack.c.l.s4 1983009808
        %v5071 = vunpack.c.0.s8 %v5070
        %v5072 = vlaneseq
        %v5073 = vshrl.u32 %v5072, 7
        %v5074 = vsub.s32 %v5071, %v5073
        %v5075 = vrot.slane %v5067, %v5074
        %v5077 = vunpack.c.l.s4 1983009808
        %v5078 = vunpack.c.0.s8 %v5077
        %v5079 = vlaneseq
        %v5080 = vshrl.u32 %v5079, 7
        %v5081 = vsub.s32 %v5078, %v5080
        %v5082 = vrot.slane %v5068, %v5081
        %v5083 = vcombine.low %v5059, %v5075
        %v5084 = vcombine.high %v5059, %v5075
        %v5086 = vunpack.c.l.s4 1934713408
        %v5087 = vunpack.c.0.s8 %v5086
        %v5088 = vlaneseq
        %v5089 = vshrl.u32 %v5088, 7
        %v5090 = vsub.s32 %v5087, %v5089
        %v5091 = vrot.slane %v5083, %v5090
        %v5093 = vunpack.c.l.s4 1934713408
        %v5094 = vunpack.c.0.s8 %v5093
        %v5095 = vlaneseq
        %v5096 = vshrl.u32 %v5095, 7
        %v5097 = vsub.s32 %v5094, %v5096
        %v5098 = vrot.slane %v5084, %v5097
        %v5099 = vcombine.low %v5066, %v5082
        %v5100 = vcombine.high %v5066, %v5082
        %v5102 = vunpack.c.l.s4 1934713408
        %v5103 = vunpack.c.0.s8 %v5102
        %v5104 = vlaneseq
        %v5105 = vshrl.u32 %v5104, 7
        %v5106 = vsub.s32 %v5103, %v5105
        %v5107 = vrot.slane %v5099, %v5106
        %v5109 = vunpack.c.l.s4 1934713408
        %v5110 = vunpack.c.0.s8 %v5109
        %v5111 = vlaneseq
        %v5112 = vshrl.u32 %v5111, 7
        %v5113 = vsub.s32 %v5110, %v5112
        %v5114 = vrot.slane %v5100, %v5113
        %v5115 = vcombine.high %v5091, 0.0
        %v5116 = vcombine.high %v5098, 0.0
        %v5117 = vcombine.high %v5107, 0.0
        %v5118 = vcombine.high %v5114, 0.0
        %v5119 = vcombine.low %v4666, %v4780
        %v5120 = vcombine.high %v4666, %v4780
        %v5122 = vunpack.c.l.s4 1983009808
        %v5123 = vunpack.c.0.s8 %v5122
        %v5124 = vlaneseq
        %v5125 = vshrl.u32 %v5124, 7
        %v5126 = vsub.s32 %v5123, %v5125
        %v5127 = vrot.slane %v5119, %v5126
        %v5129 = vunpack.c.l.s4 1983009808
        %v5130 = vunpack.c.0.s8 %v5129
        %v5131 = vlaneseq
        %v5132 = vshrl.u32 %v5131, 7
        %v5133 = vsub.s32 %v5130, %v5132
        %v5134 = vrot.slane %v5120, %v5133
        %v5135 = vcombine.low %v4723, %v4837
        %v5136 = vcombine.high %v4723, %v4837
        %v5138 = vunpack.c.l.s4 1983009808
        %v5139 = vunpack.c.0.s8 %v5138
        %v5140 = vlaneseq
        %v5141 = vshrl.u32 %v5140, 7
        %v5142 = vsub.s32 %v5139, %v5141
        %v5143 = vrot.slane %v5135, %v5142
        %v5145 = vunpack.c.l.s4 1983009808
        %v5146 = vunpack.c.0.s8 %v5145
        %v5147 = vlaneseq
        %v5148 = vshrl.u32 %v5147, 7
        %v5149 = vsub.s32 %v5146, %v5148
        %v5150 = vrot.slane %v5136, %v5149
        %v5151 = vcombine.low %v5127, %v5143
        %v5152 = vcombine.high %v5127, %v5143
        %v5154 = vunpack.c.l.s4 1934713408
        %v5155 = vunpack.c.0.s8 %v5154
        %v5156 = vlaneseq
        %v5157 = vshrl.u32 %v5156, 7
        %v5158 = vsub.s32 %v5155, %v5157
        %v5159 = vrot.slane %v5151, %v5158
        %v5161 = vunpack.c.l.s4 1934713408
        %v5162 = vunpack.c.0.s8 %v5161
        %v5163 = vlaneseq
        %v5164 = vshrl.u32 %v5163, 7
        %v5165 = vsub.s32 %v5162, %v5164
        %v5166 = vrot.slane %v5152, %v5165
        %v5167 = vcombine.low %v5134, %v5150
        %v5168 = vcombine.high %v5134, %v5150
        %v5170 = vunpack.c.l.s4 1934713408
        %v5171 = vunpack.c.0.s8 %v5170
        %v5172 = vlaneseq
        %v5173 = vshrl.u32 %v5172, 7
        %v5174 = vsub.s32 %v5171, %v5173
        %v5175 = vrot.slane %v5167, %v5174
        %v5177 = vunpack.c.l.s4 1934713408
        %v5178 = vunpack.c.0.s8 %v5177
        %v5179 = vlaneseq
        %v5180 = vshrl.u32 %v5179, 7
        %v5181 = vsub.s32 %v5178, %v5180
        %v5182 = vrot.slane %v5168, %v5181
        %v5183 = vcombine.high %v5159, 0.0
        %v5184 = vcombine.high %v5166, 0.0
        %v5185 = vcombine.high %v5175, 0.0
        %v5186 = vcombine.high %v5182, 0.0
        %v5187 = vcombine.low %v4671, %v4785
        %v5188 = vcombine.high %v4671, %v4785
        %v5190 = vunpack.c.l.s4 1983009808
        %v5191 = vunpack.c.0.s8 %v5190
        %v5192 = vlaneseq
        %v5193 = vshrl.u32 %v5192, 7
        %v5194 = vsub.s32 %v5191, %v5193
        %v5195 = vrot.slane %v5187, %v5194
        %v5197 = vunpack.c.l.s4 1983009808
        %v5198 = vunpack.c.0.s8 %v5197
        %v5199 = vlaneseq
        %v5200 = vshrl.u32 %v5199, 7
        %v5201 = vsub.s32 %v5198, %v5200
        %v5202 = vrot.slane %v5188, %v5201
        %v5203 = vcombine.low %v4728, %v4842
        %v5204 = vcombine.high %v4728, %v4842
        %v5206 = vunpack.c.l.s4 1983009808
        %v5207 = vunpack.c.0.s8 %v5206
        %v5208 = vlaneseq
        %v5209 = vshrl.u32 %v5208, 7
        %v5210 = vsub.s32 %v5207, %v5209
        %v5211 = vrot.slane %v5203, %v5210
        %v5213 = vunpack.c.l.s4 1983009808
        %v5214 = vunpack.c.0.s8 %v5213
        %v5215 = vlaneseq
        %v5216 = vshrl.u32 %v5215, 7
        %v5217 = vsub.s32 %v5214, %v5216
        %v5218 = vrot.slane %v5204, %v5217
        %v5219 = vcombine.low %v5195, %v5211
        %v5220 = vcombine.high %v5195, %v5211
        %v5222 = vunpack.c.l.s4 1934713408
        %v5223 = vunpack.c.0.s8 %v5222
        %v5224 = vlaneseq
        %v5225 = vshrl.u32 %v5224, 7
        %v5226 = vsub.s32 %v5223, %v5225
        %v5227 = vrot.slane %v5219, %v5226
        %v5229 = vunpack.c.l.s4 1934713408
        %v5230 = vunpack.c.0.s8 %v5229
        %v5231 = vlaneseq
        %v5232 = vshrl.u32 %v5231, 7
        %v5233 = vsub.s32 %v5230, %v5232
        %v5234 = vrot.slane %v5220, %v5233
        %v5235 = vcombine.low %v5202, %v5218
        %v5236 = vcombine.high %v5202, %v5218
        %v5238 = vunpack.c.l.s4 1934713408
        %v5239 = vunpack.c.0.s8 %v5238
        %v5240 = vlaneseq
        %v5241 = vshrl.u32 %v5240, 7
        %v5242 = vsub.s32 %v5239, %v5241
        %v5243 = vrot.slane %v5235, %v5242
        %v5245 = vunpack.c.l.s4 1934713408
        %v5246 = vunpack.c.0.s8 %v5245
        %v5247 = vlaneseq
        %v5248 = vshrl.u32 %v5247, 7
        %v5249 = vsub.s32 %v5246, %v5248
        %v5250 = vrot.slane %v5236, %v5249
        %v5251 = vcombine.high %v5227, 0.0
        %v5252 = vcombine.high %v5234, 0.0
        %v5253 = vcombine.high %v5243, 0.0
        %v5254 = vcombine.high %v5250, 0.0
        %v5255 = vcombine.low %v4887, %v4894
        %v5257 = vunpack.c.l.s4 1983009808
        %v5258 = vunpack.c.0.s8 %v5257
        %v5259 = vlaneseq
        %v5260 = vshrl.u32 %v5259, 7
        %v5261 = vsub.s32 %v5258, %v5260
        %v5262 = vrot.slane %v5255, %v5261
        %v5263 = vcombine.low %v4911, %v4912
        %v5265 = vunpack.c.l.s4 1983009808
        %v5266 = vunpack.c.0.s8 %v5265
        %v5267 = vlaneseq
        %v5268 = vshrl.u32 %v5267, 7
        %v5269 = vsub.s32 %v5266, %v5268
        %v5270 = vrot.slane %v5263, %v5269
        %v5271 = vcombine.low %v4903, %v4910
        %v5273 = vunpack.c.l.s4 1983009808
        %v5274 = vunpack.c.0.s8 %v5273
        %v5275 = vlaneseq
        %v5276 = vshrl.u32 %v5275, 7
        %v5277 = vsub.s32 %v5274, %v5276
        %v5278 = vrot.slane %v5271, %v5277
        %v5279 = vcombine.low %v4913, %v4914
        %v5281 = vunpack.c.l.s4 1983009808
        %v5282 = vunpack.c.0.s8 %v5281
        %v5283 = vlaneseq
        %v5284 = vshrl.u32 %v5283, 7
        %v5285 = vsub.s32 %v5282, %v5284
        %v5286 = vrot.slane %v5279, %v5285
        %v5287 = vcombine.low %v5262, %v5270
        %v5288 = vcombine.high %v5262, %v5270
        %v5290 = vunpack.c.l.s4 1934713408
        %v5291 = vunpack.c.0.s8 %v5290
        %v5292 = vlaneseq
        %v5293 = vshrl.u32 %v5292, 7
        %v5294 = vsub.s32 %v5291, %v5293
        %v5295 = vrot.slane %v5287, %v5294
        %v5297 = vunpack.c.l.s4 1934713408
        %v5298 = vunpack.c.0.s8 %v5297
        %v5299 = vlaneseq
        %v5300 = vshrl.u32 %v5299, 7
        %v5301 = vsub.s32 %v5298, %v5300
        %v5302 = vrot.slane %v5288, %v5301
        %v5303 = vcombine.low %v5278, %v5286
        %v5304 = vcombine.high %v5278, %v5286
        %v5306 = vunpack.c.l.s4 1934713408
        %v5307 = vunpack.c.0.s8 %v5306
        %v5308 = vlaneseq
        %v5309 = vshrl.u32 %v5308, 7
        %v5310 = vsub.s32 %v5307, %v5309
        %v5311 = vrot.slane %v5303, %v5310
        %v5313 = vunpack.c.l.s4 1934713408
        %v5314 = vunpack.c.0.s8 %v5313
        %v5315 = vlaneseq
        %v5316 = vshrl.u32 %v5315, 7
        %v5317 = vsub.s32 %v5314, %v5316
        %v5318 = vrot.slane %v5304, %v5317
        %v5319 = vcombine.low %v5295, %v5311
        %v5320 = vcombine.high %v5295, %v5311
        %v5321 = vcombine.low %v5302, %v5318
        %v5322 = vcombine.high %v5302, %v5318
        %v5323 = vcombine.low %v4955, %v4962
        %v5325 = vunpack.c.l.s4 1983009808
        %v5326 = vunpack.c.0.s8 %v5325
        %v5327 = vlaneseq
        %v5328 = vshrl.u32 %v5327, 7
        %v5329 = vsub.s32 %v5326, %v5328
        %v5330 = vrot.slane %v5323, %v5329
        %v5331 = vcombine.low %v4979, %v4980
        %v5333 = vunpack.c.l.s4 1983009808
        %v5334 = vunpack.c.0.s8 %v5333
        %v5335 = vlaneseq
        %v5336 = vshrl.u32 %v5335, 7
        %v5337 = vsub.s32 %v5334, %v5336
        %v5338 = vrot.slane %v5331, %v5337
        %v5339 = vcombine.low %v4971, %v4978
        %v5341 = vunpack.c.l.s4 1983009808
        %v5342 = vunpack.c.0.s8 %v5341
        %v5343 = vlaneseq
        %v5344 = vshrl.u32 %v5343, 7
        %v5345 = vsub.s32 %v5342, %v5344
        %v5346 = vrot.slane %v5339, %v5345
        %v5347 = vcombine.low %v4981, %v4982
        %v5349 = vunpack.c.l.s4 1983009808
        %v5350 = vunpack.c.0.s8 %v5349
        %v5351 = vlaneseq
        %v5352 = vshrl.u32 %v5351, 7
        %v5353 = vsub.s32 %v5350, %v5352
        %v5354 = vrot.slane %v5347, %v5353
        %v5355 = vcombine.low %v5330, %v5338
        %v5356 = vcombine.high %v5330, %v5338
        %v5358 = vunpack.c.l.s4 1934713408
        %v5359 = vunpack.c.0.s8 %v5358
        %v5360 = vlaneseq
        %v5361 = vshrl.u32 %v5360, 7
        %v5362 = vsub.s32 %v5359, %v5361
        %v5363 = vrot.slane %v5355, %v5362
        %v5365 = vunpack.c.l.s4 1934713408
        %v5366 = vunpack.c.0.s8 %v5365
        %v5367 = vlaneseq
        %v5368 = vshrl.u32 %v5367, 7
        %v5369 = vsub.s32 %v5366, %v5368
        %v5370 = vrot.slane %v5356, %v5369
        %v5371 = vcombine.low %v5346, %v5354
        %v5372 = vcombine.high %v5346, %v5354
        %v5374 = vunpack.c.l.s4 1934713408
        %v5375 = vunpack.c.0.s8 %v5374
        %v5376 = vlaneseq
        %v5377 = vshrl.u32 %v5376, 7
        %v5378 = vsub.s32 %v5375, %v5377
        %v5379 = vrot.slane %v5371, %v5378
        %v5381 = vunpack.c.l.s4 1934713408
        %v5382 = vunpack.c.0.s8 %v5381
        %v5383 = vlaneseq
        %v5384 = vshrl.u32 %v5383, 7
        %v5385 = vsub.s32 %v5382, %v5384
        %v5386 = vrot.slane %v5372, %v5385
        %v5387 = vcombine.low %v5363, %v5379
        %v5388 = vcombine.high %v5363, %v5379
        %v5389 = vcombine.low %v5370, %v5386
        %v5390 = vcombine.high %v5370, %v5386
        %v5391 = vcombine.low %v5023, %v5030
        %v5393 = vunpack.c.l.s4 1983009808
        %v5394 = vunpack.c.0.s8 %v5393
        %v5395 = vlaneseq
        %v5396 = vshrl.u32 %v5395, 7
        %v5397 = vsub.s32 %v5394, %v5396
        %v5398 = vrot.slane %v5391, %v5397
        %v5399 = vcombine.low %v5047, %v5048
        %v5401 = vunpack.c.l.s4 1983009808
        %v5402 = vunpack.c.0.s8 %v5401
        %v5403 = vlaneseq
        %v5404 = vshrl.u32 %v5403, 7
        %v5405 = vsub.s32 %v5402, %v5404
        %v5406 = vrot.slane %v5399, %v5405
        %v5407 = vcombine.low %v5039, %v5046
        %v5409 = vunpack.c.l.s4 1983009808
        %v5410 = vunpack.c.0.s8 %v5409
        %v5411 = vlaneseq
        %v5412 = vshrl.u32 %v5411, 7
        %v5413 = vsub.s32 %v5410, %v5412
        %v5414 = vrot.slane %v5407, %v5413
        %v5415 = vcombine.low %v5049, %v5050
        %v5417 = vunpack.c.l.s4 1983009808
        %v5418 = vunpack.c.0.s8 %v5417
        %v5419 = vlaneseq
        %v5420 = vshrl.u32 %v5419, 7
        %v5421 = vsub.s32 %v5418, %v5420
        %v5422 = vrot.slane %v5415, %v5421
        %v5423 = vcombine.low %v5398, %v5406
        %v5424 = vcombine.high %v5398, %v5406
        %v5426 = vunpack.c.l.s4 1934713408
        %v5427 = vunpack.c.0.s8 %v5426
        %v5428 = vlaneseq
        %v5429 = vshrl.u32 %v5428, 7
        %v5430 = vsub.s32 %v5427, %v5429
        %v5431 = vrot.slane %v5423, %v5430
        %v5433 = vunpack.c.l.s4 1934713408
        %v5434 = vunpack.c.0.s8 %v5433
        %v5435 = vlaneseq
        %v5436 = vshrl.u32 %v5435, 7
        %v5437 = vsub.s32 %v5434, %v5436
        %v5438 = vrot.slane %v5424, %v5437
        %v5439 = vcombine.low %v5414, %v5422
        %v5440 = vcombine.high %v5414, %v5422
        %v5442 = vunpack.c.l.s4 1934713408
        %v5443 = vunpack.c.0.s8 %v5442
        %v5444 = vlaneseq
        %v5445 = vshrl.u32 %v5444, 7
        %v5446 = vsub.s32 %v5443, %v5445
        %v5447 = vrot.slane %v5439, %v5446
        %v5449 = vunpack.c.l.s4 1934713408
        %v5450 = vunpack.c.0.s8 %v5449
        %v5451 = vlaneseq
        %v5452 = vshrl.u32 %v5451, 7
        %v5453 = vsub.s32 %v5450, %v5452
        %v5454 = vrot.slane %v5440, %v5453
        %v5455 = vcombine.low %v5431, %v5447
        %v5456 = vcombine.high %v5431, %v5447
        %v5457 = vcombine.low %v5438, %v5454
        %v5458 = vcombine.high %v5438, %v5454
        %v5459 = vcombine.low %v5091, %v5098
        %v5461 = vunpack.c.l.s4 1983009808
        %v5462 = vunpack.c.0.s8 %v5461
        %v5463 = vlaneseq
        %v5464 = vshrl.u32 %v5463, 7
        %v5465 = vsub.s32 %v5462, %v5464
        %v5466 = vrot.slane %v5459, %v5465
        %v5467 = vcombine.low %v5115, %v5116
        %v5469 = vunpack.c.l.s4 1983009808
        %v5470 = vunpack.c.0.s8 %v5469
        %v5471 = vlaneseq
        %v5472 = vshrl.u32 %v5471, 7
        %v5473 = vsub.s32 %v5470, %v5472
        %v5474 = vrot.slane %v5467, %v5473
        %v5475 = vcombine.low %v5107, %v5114
        %v5477 = vunpack.c.l.s4 1983009808
        %v5478 = vunpack.c.0.s8 %v5477
        %v5479 = vlaneseq
        %v5480 = vshrl.u32 %v5479, 7
        %v5481 = vsub.s32 %v5478, %v5480
        %v5482 = vrot.slane %v5475, %v5481
        %v5483 = vcombine.low %v5117, %v5118
        %v5485 = vunpack.c.l.s4 1983009808
        %v5486 = vunpack.c.0.s8 %v5485
        %v5487 = vlaneseq
        %v5488 = vshrl.u32 %v5487, 7
        %v5489 = vsub.s32 %v5486, %v5488
        %v5490 = vrot.slane %v5483, %v5489
        %v5491 = vcombine.low %v5466, %v5474
        %v5492 = vcombine.high %v5466, %v5474
        %v5494 = vunpack.c.l.s4 1934713408
        %v5495 = vunpack.c.0.s8 %v5494
        %v5496 = vlaneseq
        %v5497 = vshrl.u32 %v5496, 7
        %v5498 = vsub.s32 %v5495, %v5497
        %v5499 = vrot.slane %v5491, %v5498
        %v5501 = vunpack.c.l.s4 1934713408
        %v5502 = vunpack.c.0.s8 %v5501
        %v5503 = vlaneseq
        %v5504 = vshrl.u32 %v5503, 7
        %v5505 = vsub.s32 %v5502, %v5504
        %v5506 = vrot.slane %v5492, %v5505
        %v5507 = vcombine.low %v5482, %v5490
        %v5508 = vcombine.high %v5482, %v5490
        %v5510 = vunpack.c.l.s4 1934713408
        %v5511 = vunpack.c.0.s8 %v5510
        %v5512 = vlaneseq
        %v5513 = vshrl.u32 %v5512, 7
        %v5514 = vsub.s32 %v5511, %v5513
        %v5515 = vrot.slane %v5507, %v5514
        %v5517 = vunpack.c.l.s4 1934713408
        %v5518 = vunpack.c.0.s8 %v5517
        %v5519 = vlaneseq
        %v5520 = vshrl.u32 %v5519, 7
        %v5521 = vsub.s32 %v5518, %v5520
        %v5522 = vrot.slane %v5508, %v5521
        %v5523 = vcombine.low %v5499, %v5515
        %v5524 = vcombine.high %v5499, %v5515
        %v5525 = vcombine.low %v5506, %v5522
        %v5526 = vcombine.high %v5506, %v5522
        %v5527 = vcombine.low %v5159, %v5166
        %v5529 = vunpack.c.l.s4 1983009808
        %v5530 = vunpack.c.0.s8 %v5529
        %v5531 = vlaneseq
        %v5532 = vshrl.u32 %v5531, 7
        %v5533 = vsub.s32 %v5530, %v5532
        %v5534 = vrot.slane %v5527, %v5533
        %v5535 = vcombine.low %v5183, %v5184
        %v5537 = vunpack.c.l.s4 1983009808
        %v5538 = vunpack.c.0.s8 %v5537
        %v5539 = vlaneseq
        %v5540 = vshrl.u32 %v5539, 7
        %v5541 = vsub.s32 %v5538, %v5540
        %v5542 = vrot.slane %v5535, %v5541
        %v5543 = vcombine.low %v5175, %v5182
        %v5545 = vunpack.c.l.s4 1983009808
        %v5546 = vunpack.c.0.s8 %v5545
        %v5547 = vlaneseq
        %v5548 = vshrl.u32 %v5547, 7
        %v5549 = vsub.s32 %v5546, %v5548
        %v5550 = vrot.slane %v5543, %v5549
        %v5551 = vcombine.low %v5185, %v5186
        %v5553 = vunpack.c.l.s4 1983009808
        %v5554 = vunpack.c.0.s8 %v5553
        %v5555 = vlaneseq
        %v5556 = vshrl.u32 %v5555, 7
        %v5557 = vsub.s32 %v5554, %v5556
        %v5558 = vrot.slane %v5551, %v5557
        %v5559 = vcombine.low %v5534, %v5542
        %v5560 = vcombine.high %v5534, %v5542
        %v5562 = vunpack.c.l.s4 1934713408
        %v5563 = vunpack.c.0.s8 %v5562
        %v5564 = vlaneseq
        %v5565 = vshrl.u32 %v5564, 7
        %v5566 = vsub.s32 %v5563, %v5565
        %v5567 = vrot.slane %v5559, %v5566
        %v5569 = vunpack.c.l.s4 1934713408
        %v5570 = vunpack.c.0.s8 %v5569
        %v5571 = vlaneseq
        %v5572 = vshrl.u32 %v5571, 7
        %v5573 = vsub.s32 %v5570, %v5572
        %v5574 = vrot.slane %v5560, %v5573
        %v5575 = vcombine.low %v5550, %v5558
        %v5576 = vcombine.high %v5550, %v5558
        %v5578 = vunpack.c.l.s4 1934713408
        %v5579 = vunpack.c.0.s8 %v5578
        %v5580 = vlaneseq
        %v5581 = vshrl.u32 %v5580, 7
        %v5582 = vsub.s32 %v5579, %v5581
        %v5583 = vrot.slane %v5575, %v5582
        %v5585 = vunpack.c.l.s4 1934713408
        %v5586 = vunpack.c.0.s8 %v5585
        %v5587 = vlaneseq
        %v5588 = vshrl.u32 %v5587, 7
        %v5589 = vsub.s32 %v5586, %v5588
        %v5590 = vrot.slane %v5576, %v5589
        %v5591 = vcombine.low %v5567, %v5583
        %v5592 = vcombine.high %v5567, %v5583
        %v5593 = vcombine.low %v5574, %v5590
        %v5594 = vcombine.high %v5574, %v5590
        %v5595 = vcombine.low %v5227, %v5234
        %v5597 = vunpack.c.l.s4 1983009808
        %v5598 = vunpack.c.0.s8 %v5597
        %v5599 = vlaneseq
        %v5600 = vshrl.u32 %v5599, 7
        %v5601 = vsub.s32 %v5598, %v5600
        %v5602 = vrot.slane %v5595, %v5601
        %v5603 = vcombine.low %v5251, %v5252
        %v5605 = vunpack.c.l.s4 1983009808
        %v5606 = vunpack.c.0.s8 %v5605
        %v5607 = vlaneseq
        %v5608 = vshrl.u32 %v5607, 7
        %v5609 = vsub.s32 %v5606, %v5608
        %v5610 = vrot.slane %v5603, %v5609
        %v5611 = vcombine.low %v5243, %v5250
        %v5613 = vunpack.c.l.s4 1983009808
        %v5614 = vunpack.c.0.s8 %v5613
        %v5615 = vlaneseq
        %v5616 = vshrl.u32 %v5615, 7
        %v5617 = vsub.s32 %v5614, %v5616
        %v5618 = vrot.slane %v5611, %v5617
        %v5619 = vcombine.low %v5253, %v5254
        %v5621 = vunpack.c.l.s4 1983009808
        %v5622 = vunpack.c.0.s8 %v5621
        %v5623 = vlaneseq
        %v5624 = vshrl.u32 %v5623, 7
        %v5625 = vsub.s32 %v5622, %v5624
        %v5626 = vrot.slane %v5619, %v5625
        %v5627 = vcombine.low %v5602, %v5610
        %v5628 = vcombine.high %v5602, %v5610
        %v5630 = vunpack.c.l.s4 1934713408
        %v5631 = vunpack.c.0.s8 %v5630
        %v5632 = vlaneseq
        %v5633 = vshrl.u32 %v5632, 7
        %v5634 = vsub.s32 %v5631, %v5633
        %v5635 = vrot.slane %v5627, %v5634
        %v5637 = vunpack.c.l.s4 1934713408
        %v5638 = vunpack.c.0.s8 %v5637
        %v5639 = vlaneseq
        %v5640 = vshrl.u32 %v5639, 7
        %v5641 = vsub.s32 %v5638, %v5640
        %v5642 = vrot.slane %v5628, %v5641
        %v5643 = vcombine.low %v5618, %v5626
        %v5644 = vcombine.high %v5618, %v5626
        %v5646 = vunpack.c.l.s4 1934713408
        %v5647 = vunpack.c.0.s8 %v5646
        %v5648 = vlaneseq
        %v5649 = vshrl.u32 %v5648, 7
        %v5650 = vsub.s32 %v5647, %v5649
        %v5651 = vrot.slane %v5643, %v5650
        %v5653 = vunpack.c.l.s4 1934713408
        %v5654 = vunpack.c.0.s8 %v5653
        %v5655 = vlaneseq
        %v5656 = vshrl.u32 %v5655, 7
        %v5657 = vsub.s32 %v5654, %v5656
        %v5658 = vrot.slane %v5644, %v5657
        %v5659 = vcombine.low %v5635, %v5651
        %v5660 = vcombine.high %v5635, %v5651
        %v5661 = vcombine.low %v5642, %v5658
        %v5662 = vcombine.high %v5642, %v5658
        %5669 = vrot.lane.b32.xlu0 %v5320, 8
        %v5670 = vpop.permute.xlu0 %5669
        %5671 = vrot.lane.b32.xlu0 %v5388, 8
        %v5672 = vpop.permute.xlu0 %5671
        %5673 = vrot.lane.b32.xlu0 %v5456, 8
        %v5674 = vpop.permute.xlu0 %5673
        %5675 = vrot.lane.b32.xlu0 %v5524, 8
        %v5676 = vpop.permute.xlu0 %5675
        %5677 = vrot.lane.b32.xlu0 %v5592, 8
        %v5678 = vpop.permute.xlu0 %5677
        %5679 = vrot.lane.b32.xlu0 %v5660, 8
        %v5680 = vpop.permute.xlu0 %5679
        %5693 = vrot.lane.b32.xlu0 %v5321, 16
        %v5694 = vpop.permute.xlu0 %5693
        %5695 = vrot.lane.b32.xlu0 %v5389, 16
        %v5696 = vpop.permute.xlu0 %5695
        %5697 = vrot.lane.b32.xlu0 %v5457, 16
        %v5698 = vpop.permute.xlu0 %5697
        %5699 = vrot.lane.b32.xlu0 %v5525, 16
        %v5700 = vpop.permute.xlu0 %5699
        %5701 = vrot.lane.b32.xlu0 %v5593, 16
        %v5702 = vpop.permute.xlu0 %5701
        %5703 = vrot.lane.b32.xlu0 %v5661, 16
        %v5704 = vpop.permute.xlu0 %5703
        %5717 = vrot.lane.b32.xlu0 %v5322, 24
        %v5718 = vpop.permute.xlu0 %5717
        %5719 = vrot.lane.b32.xlu0 %v5390, 24
        %v5720 = vpop.permute.xlu0 %5719
        %5721 = vrot.lane.b32.xlu0 %v5458, 24
        %v5722 = vpop.permute.xlu0 %5721
        %5723 = vrot.lane.b32.xlu0 %v5526, 24
        %v5724 = vpop.permute.xlu0 %5723
        %5725 = vrot.lane.b32.xlu0 %v5594, 24
        %v5726 = vpop.permute.xlu0 %5725
        %5727 = vrot.lane.b32.xlu0 %v5662, 24
        %v5728 = vpop.permute.xlu0 %5727
        %v5735 = vsel %vm3601, %v5319, %v5670
        %v5736 = vsel %vm3601, %v5387, %v5672
        %v5737 = vsel %vm3601, %v5455, %v5674
        %v5738 = vsel %vm3601, %v5523, %v5676
        %v5739 = vsel %vm3601, %v5591, %v5678
        %v5740 = vsel %vm3601, %v5659, %v5680
        %vm5741 = vcmask 130048
        %v5742 = vsel %vm5741, %v5735, %v5694
        %v5743 = vsel %vm5741, %v5736, %v5696
        %v5744 = vsel %vm5741, %v5737, %v5698
        %v5745 = vsel %vm5741, %v5738, %v5700
        %v5746 = vsel %vm5741, %v5739, %v5702
        %v5747 = vsel %vm5741, %v5740, %v5704
        %v5748 = vsel %vm4109, %v5742, %v5718
        %v5749 = vsel %vm4109, %v5743, %v5720
        %v5750 = vsel %vm4109, %v5744, %v5722
        %v5751 = vsel %vm4109, %v5745, %v5724
        %v5752 = vsel %vm4109, %v5746, %v5726
        %v5753 = vsel %vm4109, %v5747, %v5728
        %v5754 = vpack.c.bf16 %v5749, %v5748
        %v5755 = vpack.c.bf16 %v5751, %v5750
        %v5756 = vpack.c.bf16 %v5753, %v5752
        %v5757 = vld [vmem:[%s588] sm:$0xf]
        %v5758 = vld [vmem:[%s588 + $0x4] sm:$0xf]
        %v5759 = vld [vmem:[%s588 + $0x8] sm:$0xf]
        %v5760 = vld [vmem:[%s588 + $0xc] sm:$0xf]
        %v5765 = vunpack.c.l.b16 %v5757
        %v5766 = vunpack.c.l.b16 %v5758
        %v5767 = vunpack.c.l.b16 %v5759
        %v5768 = vunpack.c.l.b16 %v5760
        %v5769 = vpack.c.b16 %v5766, %v5765
        %v5770 = vpack.c.b16 %v5768, %v5767
        %v5774 = vsel %vm729, %v5754, 0
        %v5777 = vsel %vm729, %v5755, 0
        %v5780 = vsel %vm729, %v5756, 0
        %5782 = vmatprep.subr.bf16.mxu0 0
        %5783 = vmatpush1.bf16.msra.mxu0 %v5769
        %5784 = vmatprep.subr.bf16.mxu0 0
        %5785 = vmatpush1.bf16.msra.mxu0 %v5770
        %5786 = vmatprep.subr.bf16.mxu0 0
        %5787 = vmatpush1.bf16.msra.mxu0 0
        %5788 = vmatprep.subr.bf16.mxu0 0
        %5789 = vmatpush1.bf16.msra.mxu0 0
        %5790 = vmatprep.subr.bf16.mxu0 0
        %5791 = vmatpush1.bf16.msra.mxu0 0
        %5792 = vmatprep.subr.bf16.mxu0 0
        %5793 = vmatpush1.bf16.msra.mxu0 0
        %5794 = vmatprep.subr.bf16.mxu0 0
        %5795 = vmatpush1.bf16.msra.mxu0 0
        %5796 = vmatprep.subr.bf16.mxu0 0
        %5797 = vmatpush1.bf16.msra.mxu0 0
        %5798 = vmatprep.subr.bf16.mxu0 0
        %5799 = vmatpush1.bf16.msra.mxu0 0
        %5800 = vmatprep.subr.bf16.mxu0 0
        %5801 = vmatpush1.bf16.msra.mxu0 0
        %5802 = vmatprep.subr.bf16.mxu0 0
        %5803 = vmatpush1.bf16.msra.mxu0 0
        %5804 = vmatprep.subr.bf16.mxu0 0
        %5805 = vmatpush1.bf16.msra.mxu0 0
        %5806 = vmatprep.subr.bf16.mxu0 0
        %5807 = vmatpush1.bf16.msra.mxu0 0
        %5808 = vmatprep.subr.bf16.mxu0 0
        %5809 = vmatpush1.bf16.msra.mxu0 0
        %5810 = vmatprep.subr.bf16.mxu0 0
        %5811 = vmatpush1.bf16.msra.mxu0 0
        %5812 = vmatprep.subr.bf16.mxu0 0
        %5813 = vmatpush1.bf16.msra.mxu0 0
        %5814 = vmatprep.mubr.bf16.mxu0 0
        %5815 = vmatmul.mubr.bf16.gmra.mrb[0].mxu0 %v5774
        %v5816 = vpop.f32.mrb[0].mxu0
        %v5817 = vadd.f32 0.0, %v5816
        %v5818 = vpop.f32.mrb[0].mxu0
        %v5819 = vpop.f32.mrb[0].mxu0
        %v5820 = vadd.f32 0.0, %v5819
        %v5821 = vpop.f32.mrb[0].mxu0
        %5822 = vmatprep.mubr.bf16.mxu0 0
        %5823 = vmatmul.mubr.bf16.gmra.mrb[0].mxu0 %v5777
        %v5824 = vpop.f32.mrb[0].mxu0
        %v5825 = vadd.f32 0.0, %v5824
        %v5826 = vpop.f32.mrb[0].mxu0
        %v5827 = vpop.f32.mrb[0].mxu0
        %v5828 = vadd.f32 0.0, %v5827
        %v5829 = vpop.f32.mrb[0].mxu0
        %5830 = vmatprep.mubr.bf16.mxu0 0
        %5831 = vmatmul.mubr.bf16.gmra.mrb[0].mxu0 %v5780
        %v5832 = vpop.f32.mrb[0].mxu0
        %v5833 = vadd.f32 0.0, %v5832
        %v5834 = vpop.f32.mrb[0].mxu0
        %v5835 = vpop.f32.mrb[0].mxu0
        %v5836 = vadd.f32 0.0, %v5835
        %v5837 = vpop.f32.mrb[0].mxu0
        %5838 = vdwg.mxu0
        %v5839 = vadd.f32 %v723, %v5817
        %v5840 = vadd.f32 %v724, %v5820
        %v5841 = vadd.f32 %v725, %v5825
        %v5842 = vadd.f32 %v726, %v5828
        %v5843 = vadd.f32 %v727, %v5833
        %v5844 = vadd.f32 %v728, %v5836
        %v5845 = vld [vmem:[%s596] sm:$0x1]
        %v5847 = vlaneseq
        %v5848 = vshrl.u32 %v5847, 7
        %v5849 = vsub.s32 0, %v5848
        %v5850 = vrot.slane %v5845, %v5849
        %v5852 = vadd.f32 %v5839, %v5850
        %v5853 = vadd.f32 %v5840, %v5850
        %v5854 = vadd.f32 %v5841, %v5850
        %v5855 = vadd.f32 %v5842, %v5850
        %v5856 = vadd.f32 %v5843, %v5850
        %v5857 = vadd.f32 %v5844, %v5850
        %v5858 = vsel %vm729, %v5852, 0.0
        %5859 = vadd.xlane.f32.xlu0 %v5858
        %v5860 = vpop.xlane.xlu0 %5859
        %v5861 = vsel %vm729, %v5853, 0.0
        %5862 = vadd.xlane.f32.xlu0 %v5861
        %v5863 = vpop.xlane.xlu0 %5862
        %v5864 = vsel %vm729, %v5854, 0.0
        %5865 = vadd.xlane.f32.xlu0 %v5864
        %v5866 = vpop.xlane.xlu0 %5865
        %v5867 = vsel %vm729, %v5855, 0.0
        %5868 = vadd.xlane.f32.xlu0 %v5867
        %v5869 = vpop.xlane.xlu0 %5868
        %v5870 = vsel %vm729, %v5856, 0.0
        %5871 = vadd.xlane.f32.xlu0 %v5870
        %v5872 = vpop.xlane.xlu0 %5871
        %v5873 = vsel %vm729, %v5857, 0.0
        %5874 = vadd.xlane.f32.xlu0 %v5873
        %v5875 = vpop.xlane.xlu0 %5874
        %v5876 = vmul.f32 %v5860, %v748
        %v5877 = vmul.f32 %v5863, %v748
        %v5878 = vmul.f32 %v5866, %v748
        %v5879 = vmul.f32 %v5869, %v748
        %v5880 = vmul.f32 %v5872, %v748
        %v5881 = vmul.f32 %v5875, %v748
        %v5882 = vsub.f32 %v5852, %v5876
        %v5883 = vsub.f32 %v5853, %v5877
        %v5884 = vsub.f32 %v5854, %v5878
        %v5885 = vsub.f32 %v5855, %v5879
        %v5886 = vsub.f32 %v5856, %v5880
        %v5887 = vsub.f32 %v5857, %v5881
        %v5888 = vmul.f32 %v5882, %v5882
        %v5889 = vmul.f32 %v5883, %v5883
        %v5890 = vmul.f32 %v5884, %v5884
        %v5891 = vmul.f32 %v5885, %v5885
        %v5892 = vmul.f32 %v5886, %v5886
        %v5893 = vmul.f32 %v5887, %v5887
        %v5894 = vsel %vm729, %v5888, 0.0
        %5895 = vadd.xlane.f32.xlu0 %v5894
        %v5896 = vpop.xlane.xlu0 %5895
        %v5897 = vsel %vm729, %v5889, 0.0
        %5898 = vadd.xlane.f32.xlu0 %v5897
        %v5899 = vpop.xlane.xlu0 %5898
        %v5900 = vsel %vm729, %v5890, 0.0
        %5901 = vadd.xlane.f32.xlu0 %v5900
        %v5902 = vpop.xlane.xlu0 %5901
        %v5903 = vsel %vm729, %v5891, 0.0
        %5904 = vadd.xlane.f32.xlu0 %v5903
        %v5905 = vpop.xlane.xlu0 %5904
        %v5906 = vsel %vm729, %v5892, 0.0
        %5907 = vadd.xlane.f32.xlu0 %v5906
        %v5908 = vpop.xlane.xlu0 %5907
        %v5909 = vsel %vm729, %v5893, 0.0
        %5910 = vadd.xlane.f32.xlu0 %v5909
        %v5911 = vpop.xlane.xlu0 %5910
        %v5912 = vmul.f32 %v5896, %v748
        %v5913 = vmul.f32 %v5899, %v748
        %v5914 = vmul.f32 %v5902, %v748
        %v5915 = vmul.f32 %v5905, %v748
        %v5916 = vmul.f32 %v5908, %v748
        %v5917 = vmul.f32 %v5911, %v748
        %v5918 = vadd.f32 %v5912, 1e-05
        %v5919 = vadd.f32 %v5913, 1e-05
        %v5920 = vadd.f32 %v5914, 1e-05
        %v5921 = vadd.f32 %v5915, 1e-05
        %v5922 = vadd.f32 %v5916, 1e-05
        %v5923 = vadd.f32 %v5917, 1e-05
        %v5924 = vrsqrt.pop %v5918
        %v5925 = vrsqrt.pop %v5919
        %v5926 = vrsqrt.pop %v5920
        %v5927 = vrsqrt.pop %v5921
        %v5928 = vrsqrt.pop %v5922
        %v5929 = vrsqrt.pop %v5923
        %v5930 = vmul.f32 %v5882, %v5924
        %v5931 = vmul.f32 %v5883, %v5925
        %v5932 = vmul.f32 %v5884, %v5926
        %v5933 = vmul.f32 %v5885, %v5927
        %v5934 = vmul.f32 %v5886, %v5928
        %v5935 = vmul.f32 %v5887, %v5929
        %v5936 = vpack.c.bf16 %v5931, %v5930
        %v5937 = vpack.c.bf16 %v5933, %v5932
        %v5938 = vpack.c.bf16 %v5935, %v5934
        %v5939 = vld [vmem:[%s613] sm:$0x1]
        %v5940 = vld [vmem:[%s605] sm:$0xf]
        %v5941 = vld [vmem:[%s605 + $0x4] sm:$0xf]
        %v5942 = vld [vmem:[%s605 + $0x8] sm:$0xf]
        %v5943 = vld [vmem:[%s605 + $0xc] sm:$0xf]
        %v5945 = vlaneseq
        %v5946 = vshrl.u32 %v5945, 7
        %v5947 = vsub.s32 0, %v5946
        %v5948 = vrot.slane %v5939, %v5947
        %v5954 = vunpack.c.l.b16 %v5940
        %v5955 = vunpack.c.l.b16 %v5941
        %v5956 = vunpack.c.l.b16 %v5942
        %v5957 = vunpack.c.l.b16 %v5943
        %v5958 = vpack.c.b16 %v5955, %v5954
        %v5959 = vpack.c.b16 %v5957, %v5956
        %v5963 = vsel %vm729, %v5936, 0
        %v5966 = vsel %vm729, %v5937, 0
        %v5969 = vsel %vm729, %v5938, 0
        %5971 = vmatprep.subr.bf16.mxu0 0
        %5972 = vmatpush1.bf16.msra.mxu0 %v5958
        %5973 = vmatprep.subr.bf16.mxu0 0
        %5974 = vmatpush1.bf16.msra.mxu0 %v5959
        %5975 = vmatprep.subr.bf16.mxu0 0
        %5976 = vmatpush1.bf16.msra.mxu0 0
        %5977 = vmatprep.subr.bf16.mxu0 0
        %5978 = vmatpush1.bf16.msra.mxu0 0
        %5979 = vmatprep.subr.bf16.mxu0 0
        %5980 = vmatpush1.bf16.msra.mxu0 0
        %5981 = vmatprep.subr.bf16.mxu0 0
        %5982 = vmatpush1.bf16.msra.mxu0 0
        %5983 = vmatprep.subr.bf16.mxu0 0
        %5984 = vmatpush1.bf16.msra.mxu0 0
        %5985 = vmatprep.subr.bf16.mxu0 0
        %5986 = vmatpush1.bf16.msra.mxu0 0
        %5987 = vmatprep.subr.bf16.mxu0 0
        %5988 = vmatpush1.bf16.msra.mxu0 0
        %5989 = vmatprep.subr.bf16.mxu0 0
        %5990 = vmatpush1.bf16.msra.mxu0 0
        %5991 = vmatprep.subr.bf16.mxu0 0
        %5992 = vmatpush1.bf16.msra.mxu0 0
        %5993 = vmatprep.subr.bf16.mxu0 0
        %5994 = vmatpush1.bf16.msra.mxu0 0
        %5995 = vmatprep.subr.bf16.mxu0 0
        %5996 = vmatpush1.bf16.msra.mxu0 0
        %5997 = vmatprep.subr.bf16.mxu0 0
        %5998 = vmatpush1.bf16.msra.mxu0 0
        %5999 = vmatprep.subr.bf16.mxu0 0
        %6000 = vmatpush1.bf16.msra.mxu0 0
        %6001 = vmatprep.subr.bf16.mxu0 0
        %6002 = vmatpush1.bf16.msra.mxu0 0
        %6003 = vmatprep.mubr.bf16.mxu0 0
        %6004 = vmatmul.mubr.bf16.gmra.mrb[0].mxu0 %v5963
        %v6005 = vpop.f32.mrb[0].mxu0
        %v6006 = vadd.f32 %v5948, %v6005
        %v6007 = vpop.f32.mrb[0].mxu0
        %v6008 = vpop.f32.mrb[0].mxu0
        %v6009 = vadd.f32 %v5948, %v6008
        %v6010 = vpop.f32.mrb[0].mxu0
        %6011 = vmatprep.mubr.bf16.mxu0 0
        %6012 = vmatmul.mubr.bf16.gmra.mrb[0].mxu0 %v5966
        %v6013 = vpop.f32.mrb[0].mxu0
        %v6014 = vadd.f32 %v5948, %v6013
        %v6015 = vpop.f32.mrb[0].mxu0
        %v6016 = vpop.f32.mrb[0].mxu0
        %v6017 = vadd.f32 %v5948, %v6016
        %v6018 = vpop.f32.mrb[0].mxu0
        %6019 = vmatprep.mubr.bf16.mxu0 0
        %6020 = vmatmul.mubr.bf16.gmra.mrb[0].mxu0 %v5969
        %v6021 = vpop.f32.mrb[0].mxu0
        %v6022 = vadd.f32 %v5948, %v6021
        %v6023 = vpop.f32.mrb[0].mxu0
        %v6024 = vpop.f32.mrb[0].mxu0
        %v6025 = vadd.f32 %v5948, %v6024
        %v6026 = vpop.f32.mrb[0].mxu0
        %6027 = vdwg.mxu0
        %v6028 = vmul.f32 %v6006, 0.5
        %v6029 = vmul.f32 %v6009, 0.5
        %v6030 = vmul.f32 %v6014, 0.5
        %v6031 = vmul.f32 %v6017, 0.5
        %v6032 = vmul.f32 %v6022, 0.5
        %v6033 = vmul.f32 %v6025, 0.5
        %v6034 = vmul.f32 %v6006, 0.70710677
        %v6035 = vmul.f32 %v6009, 0.70710677
        %v6036 = vmul.f32 %v6014, 0.70710677
        %v6037 = vmul.f32 %v6017, 0.70710677
        %v6038 = vmul.f32 %v6022, 0.70710677
        %v6039 = vmul.f32 %v6025, 0.70710677
        %v6040 = verf.f32.pop %v6034
        %v6041 = verf.f32.pop %v6035
        %v6042 = verf.f32.pop %v6036
        %v6043 = verf.f32.pop %v6037
        %v6044 = verf.f32.pop %v6038
        %v6045 = verf.f32.pop %v6039
        %v6046 = vadd.f32 %v6040, 1.0
        %v6047 = vadd.f32 %v6041, 1.0
        %v6048 = vadd.f32 %v6042, 1.0
        %v6049 = vadd.f32 %v6043, 1.0
        %v6050 = vadd.f32 %v6044, 1.0
        %v6051 = vadd.f32 %v6045, 1.0
        %v6052 = vmul.f32 %v6028, %v6046
        %v6053 = vmul.f32 %v6029, %v6047
        %v6054 = vmul.f32 %v6030, %v6048
        %v6055 = vmul.f32 %v6031, %v6049
        %v6056 = vmul.f32 %v6032, %v6050
        %v6057 = vmul.f32 %v6033, %v6051
        %v6058 = vpack.c.bf16 %v6053, %v6052
        %v6059 = vpack.c.bf16 %v6055, %v6054
        %v6060 = vpack.c.bf16 %v6057, %v6056
        %v6061 = vld [vmem:[%s622] sm:$0xf]
        %v6062 = vld [vmem:[%s622 + $0x4] sm:$0xf]
        %v6063 = vld [vmem:[%s622 + $0x8] sm:$0xf]
        %v6064 = vld [vmem:[%s622 + $0xc] sm:$0xf]
        %v6065 = vld [vmem:[%s622 + $0x10] sm:$0xf]
        %v6066 = vld [vmem:[%s622 + $0x14] sm:$0xf]
        %v6067 = vld [vmem:[%s622 + $0x18] sm:$0xf]
        %v6068 = vld [vmem:[%s622 + $0x1c] sm:$0xf]
        %v6077 = vunpack.c.l.b16 %v6061
        %v6078 = vunpack.c.l.b16 %v6062
        %v6079 = vunpack.c.l.b16 %v6063
        %v6080 = vunpack.c.l.b16 %v6064
        %v6081 = vunpack.c.l.b16 %v6065
        %v6082 = vunpack.c.l.b16 %v6066
        %v6083 = vunpack.c.l.b16 %v6067
        %v6084 = vunpack.c.l.b16 %v6068
        %v6085 = vpack.c.b16 %v6078, %v6077
        %v6086 = vpack.c.b16 %v6080, %v6079
        %v6087 = vpack.c.b16 %v6082, %v6081
        %v6088 = vpack.c.b16 %v6084, %v6083
        %vm6093 = vcmask 523264
        %v6095 = vsel %vm6093, %v6058, 0
        %v6098 = vsel %vm6093, %v6059, 0
        %v6101 = vsel %vm6093, %v6060, 0
        %6103 = vmatprep.subr.bf16.mxu0 0
        %6104 = vmatpush1.bf16.msra.mxu0 %v6085
        %6105 = vmatprep.subr.bf16.mxu0 0
        %6106 = vmatpush1.bf16.msra.mxu0 %v6086
        %6107 = vmatprep.subr.bf16.mxu0 0
        %6108 = vmatpush1.bf16.msra.mxu0 %v6087
        %6109 = vmatprep.subr.bf16.mxu0 0
        %6110 = vmatpush1.bf16.msra.mxu0 %v6088
        %6111 = vmatprep.subr.bf16.mxu0 0
        %6112 = vmatpush1.bf16.msra.mxu0 0
        %6113 = vmatprep.subr.bf16.mxu0 0
        %6114 = vmatpush1.bf16.msra.mxu0 0
        %6115 = vmatprep.subr.bf16.mxu0 0
        %6116 = vmatpush1.bf16.msra.mxu0 0
        %6117 = vmatprep.subr.bf16.mxu0 0
        %6118 = vmatpush1.bf16.msra.mxu0 0
        %6119 = vmatprep.subr.bf16.mxu0 0
        %6120 = vmatpush1.bf16.msra.mxu0 0
        %6121 = vmatprep.subr.bf16.mxu0 0
        %6122 = vmatpush1.bf16.msra.mxu0 0
        %6123 = vmatprep.subr.bf16.mxu0 0
        %6124 = vmatpush1.bf16.msra.mxu0 0
        %6125 = vmatprep.subr.bf16.mxu0 0
        %6126 = vmatpush1.bf16.msra.mxu0 0
        %6127 = vmatprep.subr.bf16.mxu0 0
        %6128 = vmatpush1.bf16.msra.mxu0 0
        %6129 = vmatprep.subr.bf16.mxu0 0
        %6130 = vmatpush1.bf16.msra.mxu0 0
        %6131 = vmatprep.subr.bf16.mxu0 0
        %6132 = vmatpush1.bf16.msra.mxu0 0
        %6133 = vmatprep.subr.bf16.mxu0 0
        %6134 = vmatpush1.bf16.msra.mxu0 0
        %6135 = vmatprep.mubr.bf16.mxu0 0
        %6136 = vmatmul.mubr.bf16.gmra.mrb[0].mxu0 %v6095
        %v6137 = vpop.f32.mrb[0].mxu0
        %v6138 = vadd.f32 0.0, %v6137
        %v6139 = vpop.f32.mrb[0].mxu0
        %v6140 = vpop.f32.mrb[0].mxu0
        %v6141 = vadd.f32 0.0, %v6140
        %v6142 = vpop.f32.mrb[0].mxu0
        %6143 = vmatprep.mubr.bf16.mxu0 0
        %6144 = vmatmul.mubr.bf16.gmra.mrb[0].mxu0 %v6098
        %v6145 = vpop.f32.mrb[0].mxu0
        %v6146 = vadd.f32 0.0, %v6145
        %v6147 = vpop.f32.mrb[0].mxu0
        %v6148 = vpop.f32.mrb[0].mxu0
        %v6149 = vadd.f32 0.0, %v6148
        %v6150 = vpop.f32.mrb[0].mxu0
        %6151 = vmatprep.mubr.bf16.mxu0 0
        %6152 = vmatmul.mubr.bf16.gmra.mrb[0].mxu0 %v6101
        %v6153 = vpop.f32.mrb[0].mxu0
        %v6154 = vadd.f32 0.0, %v6153
        %v6155 = vpop.f32.mrb[0].mxu0
        %v6156 = vpop.f32.mrb[0].mxu0
        %v6157 = vadd.f32 0.0, %v6156
        %v6158 = vpop.f32.mrb[0].mxu0
        %6159 = vdwg.mxu0
        %v6160 = vadd.f32 %v5852, %v6138
        %v6161 = vadd.f32 %v5853, %v6141
        %v6162 = vadd.f32 %v5854, %v6146
        %v6163 = vadd.f32 %v5855, %v6149
        %v6164 = vadd.f32 %v5856, %v6154
        %v6165 = vadd.f32 %v5857, %v6157
        %v6166 = vld [vmem:[%s630] sm:$0x1]
        %v6168 = vlaneseq
        %v6169 = vshrl.u32 %v6168, 7
        %v6170 = vsub.s32 0, %v6169
        %v6171 = vrot.slane %v6166, %v6170
        %v6173 = vadd.f32 %v6160, %v6171
        %v6174 = vadd.f32 %v6161, %v6171
        %v6175 = vadd.f32 %v6162, %v6171
        %v6176 = vadd.f32 %v6163, %v6171
        %v6177 = vadd.f32 %v6164, %v6171
        %v6178 = vadd.f32 %v6165, %v6171
        %6179 = vst.msk [vmem:[#allocation2] sm:$0xff] %vm729, %v6173
        %6180 = vst.msk [vmem:[#allocation2 + $0x8] sm:$0xff] %vm729, %v6174
        %6181 = vst.msk [vmem:[#allocation2 + $0x10] sm:$0xff] %vm729, %v6175
        %6182 = vst.msk [vmem:[#allocation2 + $0x18] sm:$0xff] %vm729, %v6176
        %6183 = vst.msk [vmem:[#allocation2 + $0x20] sm:$0xff] %vm729, %v6177
        %6184 = vst.msk [vmem:[#allocation2 + $0x28] sm:$0xff] %vm729, %v6178
        %p6185 = scmp.eq.s32.totalorder %s42, 1
        // Predicated region
        $region113: #{vit_encoder_forward.3} parent=63 // pred_check
          %p6186 = pneg %p6185
        $region114: #{vit_encoder_forward.3} parent=63 // pred_check_branch
          %6188 = sbr.rel (%p6186) target = $region116
        $region115: #{vit_encoder_forward.3} parent=63 // pred_region
          %v6189 = vld [vmem:[#allocation18] sm:$0x1]
          %v6190 = vld [vmem:[#allocation20] sm:$0x1]
          %v6191 = vsel %vm729, %v6173, 0.0
          %6192 = vadd.xlane.f32.xlu0 %v6191
          %v6193 = vpop.xlane.xlu0 %6192
          %v6194 = vsel %vm729, %v6174, 0.0
          %6195 = vadd.xlane.f32.xlu0 %v6194
          %v6196 = vpop.xlane.xlu0 %6195
          %v6197 = vsel %vm729, %v6175, 0.0
          %6198 = vadd.xlane.f32.xlu0 %v6197
          %v6199 = vpop.xlane.xlu0 %6198
          %v6200 = vsel %vm729, %v6176, 0.0
          %6201 = vadd.xlane.f32.xlu0 %v6200
          %v6202 = vpop.xlane.xlu0 %6201
          %v6203 = vsel %vm729, %v6177, 0.0
          %6204 = vadd.xlane.f32.xlu0 %v6203
          %v6205 = vpop.xlane.xlu0 %6204
          %v6206 = vsel %vm729, %v6178, 0.0
          %6207 = vadd.xlane.f32.xlu0 %v6206
          %v6208 = vpop.xlane.xlu0 %6207
          %v6209 = vmul.f32 %v6193, %v748
          %v6210 = vmul.f32 %v6196, %v748
          %v6211 = vmul.f32 %v6199, %v748
          %v6212 = vmul.f32 %v6202, %v748
          %v6213 = vmul.f32 %v6205, %v748
          %v6214 = vmul.f32 %v6208, %v748
          %v6215 = vsub.f32 %v6173, %v6209
          %v6216 = vsub.f32 %v6174, %v6210
          %v6217 = vsub.f32 %v6175, %v6211
          %v6218 = vsub.f32 %v6176, %v6212
          %v6219 = vsub.f32 %v6177, %v6213
          %v6220 = vsub.f32 %v6178, %v6214
          %v6221 = vmul.f32 %v6215, %v6215
          %v6222 = vmul.f32 %v6216, %v6216
          %v6223 = vmul.f32 %v6217, %v6217
          %v6224 = vmul.f32 %v6218, %v6218
          %v6225 = vmul.f32 %v6219, %v6219
          %v6226 = vmul.f32 %v6220, %v6220
          %v6227 = vsel %vm729, %v6221, 0.0
          %6228 = vadd.xlane.f32.xlu0 %v6227
          %v6229 = vpop.xlane.xlu0 %6228
          %v6230 = vsel %vm729, %v6222, 0.0
          %6231 = vadd.xlane.f32.xlu0 %v6230
          %v6232 = vpop.xlane.xlu0 %6231
          %v6233 = vsel %vm729, %v6223, 0.0
          %6234 = vadd.xlane.f32.xlu0 %v6233
          %v6235 = vpop.xlane.xlu0 %6234
          %v6236 = vsel %vm729, %v6224, 0.0
          %6237 = vadd.xlane.f32.xlu0 %v6236
          %v6238 = vpop.xlane.xlu0 %6237
          %v6239 = vsel %vm729, %v6225, 0.0
          %6240 = vadd.xlane.f32.xlu0 %v6239
          %v6241 = vpop.xlane.xlu0 %6240
          %v6242 = vsel %vm729, %v6226, 0.0
          %6243 = vadd.xlane.f32.xlu0 %v6242
          %v6244 = vpop.xlane.xlu0 %6243
          %v6245 = vmul.f32 %v6229, %v748
          %v6246 = vmul.f32 %v6232, %v748
          %v6247 = vmul.f32 %v6235, %v748
          %v6248 = vmul.f32 %v6238, %v748
          %v6249 = vmul.f32 %v6241, %v748
          %v6250 = vmul.f32 %v6244, %v748
          %v6251 = vadd.f32 %v6245, 1e-05
          %v6252 = vadd.f32 %v6246, 1e-05
          %v6253 = vadd.f32 %v6247, 1e-05
          %v6254 = vadd.f32 %v6248, 1e-05
          %v6255 = vadd.f32 %v6249, 1e-05
          %v6256 = vadd.f32 %v6250, 1e-05
          %v6257 = vrsqrt.pop %v6251
          %v6258 = vrsqrt.pop %v6252
          %v6259 = vrsqrt.pop %v6253
          %v6260 = vrsqrt.pop %v6254
          %v6261 = vrsqrt.pop %v6255
          %v6262 = vrsqrt.pop %v6256
          %v6263 = vmul.f32 %v6215, %v6257
          %v6264 = vmul.f32 %v6216, %v6258
          %v6265 = vmul.f32 %v6217, %v6259
          %v6266 = vmul.f32 %v6218, %v6260
          %v6267 = vmul.f32 %v6219, %v6261
          %v6268 = vmul.f32 %v6220, %v6262
          %v6270 = vlaneseq
          %v6271 = vshrl.u32 %v6270, 7
          %v6272 = vsub.s32 0, %v6271
          %v6273 = vrot.slane %v6189, %v6272
          %v6275 = vmul.f32 %v6263, %v6273
          %v6276 = vmul.f32 %v6264, %v6273
          %v6277 = vmul.f32 %v6265, %v6273
          %v6278 = vmul.f32 %v6266, %v6273
          %v6279 = vmul.f32 %v6267, %v6273
          %v6280 = vmul.f32 %v6268, %v6273
          %v6282 = vlaneseq
          %v6283 = vshrl.u32 %v6282, 7
          %v6284 = vsub.s32 0, %v6283
          %v6285 = vrot.slane %v6190, %v6284
          %v6287 = vadd.f32 %v6275, %v6285
          %v6288 = vadd.f32 %v6276, %v6285
          %v6289 = vadd.f32 %v6277, %v6285
          %v6290 = vadd.f32 %v6278, %v6285
          %v6291 = vadd.f32 %v6279, %v6285
          %v6292 = vadd.f32 %v6280, %v6285
          %6293 = vst.msk [vmem:[#allocation21] sm:$0xff] %vm729, %v6287
          %6294 = vst.msk [vmem:[#allocation21 + $0x8] sm:$0xff] %vm729, %v6288
          %6295 = vst.msk [vmem:[#allocation21 + $0x10] sm:$0xff] %vm729, %v6289
          %6296 = vst.msk [vmem:[#allocation21 + $0x18] sm:$0xff] %vm729, %v6290
          %6297 = vst.msk [vmem:[#allocation21 + $0x20] sm:$0xff] %vm729, %v6291
          %6298 = vst.msk [vmem:[#allocation21 + $0x28] sm:$0xff] %vm729, %v6292
        $region116: #{vit_encoder_forward.3} parent=63 // pred_fallthru
          _
        // Predicated region
        $region117: #{vit_encoder_forward.3} parent=63 // pred_check
          %p6299 = pneg %p343
        $region118: #{vit_encoder_forward.3} parent=63 // pred_check_branch
          %6301 = sbr.rel (%p6299) target = $region120
        $region119: #{vit_encoder_forward.3} parent=63 // pred_region
          %s6302 = smul.u32 2, %s41
          %s6304 = ssub.s32 768, 768
          %6305 = vsyncadd [#allocation5], %s6304
          %s6306 = smul.addr %s6302, 3
          %s6307 = smul.addr %s6306, 128
          %s6308 = scalar_lea.hbm %s11, %s6307
          %s6309 = sshll.u32 [#allocation21], 4
          %s6310 = int_to_ptr.vmem [resolvable:$true] %s6309
          %6315 = dma.vmem_to_hbm [thread:$0]  %s6310, 768, %s6308, [#allocation5], 128, 128, 8
        $region120: #{vit_encoder_forward.3} parent=63 // pred_fallthru
          _
        // Predicated region
        $region121: #{vit_encoder_forward.3} parent=63 // pred_check
          %p6316 = pneg %p343
        $region122: #{vit_encoder_forward.3} parent=63 // pred_check_branch
          %6318 = sbr.rel (%p6316) target = $region124
        $region123: #{vit_encoder_forward.3} parent=63 // pred_region
          %6319 = dma.done [#allocation5], 768
        $region124: #{vit_encoder_forward.3} parent=63 // pred_fallthru
          _
      $region64: #{vit_encoder_forward.3} parent=5 // pred_fallthru
        _
      %p6320 = scmp.le.s32.totalorder 2, %s32
      // Predicated region
      $region125: #{vit_encoder_forward.3} parent=5 // pred_check
        %p6321 = pneg %p6320
      $region126: #{vit_encoder_forward.3} parent=5 // pred_check_branch
        %6323 = sbr.rel (%p6321) target = $region128
      $region127: #{vit_encoder_forward.3} parent=5 // pred_region
        %s6324 = ssub.s32 %s32, 2
      $region128: #{vit_encoder_forward.3} parent=5 // pred_fallthru
        _
    $region6: #{vit_encoder_forward.3} parent=1 // loop_footer
      %s36 = sadd.s32 1, %s32
    $region7: #{vit_encoder_forward.3} parent=1 // loop_footer_branch
      %31 = sbr.rel target = $region3
    $region8: #{vit_encoder_forward.3} parent=1 // loop_exit
      _
    %6325 = vsyncpa [#allocation4], 1
    %s6326 = scalar_lea.sflag [#allocation4], 1
    %6327 = vsyncpa %s6326, 1
    %6328 = vsyncpa [#allocation7], 1
    %s6329 = scalar_lea.sflag [#allocation7], 1
    %6330 = vsyncpa %s6329, 1
    %6331 = vsyncpa [#allocation10], 1
    %s6332 = scalar_lea.sflag [#allocation10], 1
    %6333 = vsyncpa %s6332, 1
    %6334 = vsyncpa [#allocation13], 1
    %s6335 = scalar_lea.sflag [#allocation13], 1
    %6336 = vsyncpa %s6335, 1
    %6337 = vsyncpa [#allocation16], 1
    %s6338 = scalar_lea.sflag [#allocation16], 1
    %6339 = vsyncpa %s6338, 1
    %6340 = vsyncpa [#allocation19], 1
    %6341 = vsyncpa [#allocation5], 1
    %s6342 = scalar_lea.sflag [#allocation5], 1
    %6343 = vsyncpa %s6342, 1

</llo_original>
